<compile_context>
chip_gen: v7x
topology: tpu7x:2x2x1
jax: 0.10.0
libtpu: 0.0.40
codegen_flags: <defaults>
</compile_context>

<pallas_src>
import math
from functools import partial

import jax
import jax.numpy as jnp
from jax.experimental import pallas as pl
from jax.experimental.pallas import tpu as pltpu

# ----------------------------- "HP" hyperparameters -------------------------
PHONEME_SIZE = 32
DECODER_DIM = 32
NHEAD = 4
HEAD_DIM = DECODER_DIM // NHEAD
PFF_DIM = 64
N_LAYERS = 2
MAX_DECODE_STEP = 64
LN_EPS = 1e-5  # torch.nn.LayerNorm default


# ----------------------------- slab layouts ---------------------------------
def _build_weight_layout():
    """Row offsets into the single bf16 weight slab (rows x 128 lanes)."""
    off, r = {}, 0
    for l in range(N_LAYERS):
        for a in range(2):                       # 0 = self attn, 1 = cross attn
            off[("qkv", l, a)] = r; r += DECODER_DIM   # (32, 96)  [Wq|Wk|Wv]
            off[("o", l, a)] = r;   r += DECODER_DIM   # (32, 32)  Wo
        off[("w1", l)] = r; r += DECODER_DIM           # (32, 64)
        off[("w2", l)] = r; r += PFF_DIM               # (64, 32)
    off[("fc",)] = r; r += DECODER_DIM                 # (32, 32)
    return off, r


def _build_const_layout():
    """Row offsets into the single f32 bias / LayerNorm slab (rows x 128)."""
    off, r = {}, 0
    for l in range(N_LAYERS):
        for a in range(2):
            off[("bqkv", l, a)] = r; r += 1            # width 96
            off[("bo", l, a)] = r;   r += 1            # width 32
        off[("b1", l)] = r; r += 1                     # width 64
        off[("b2", l)] = r; r += 1                     # width 32
        for i in range(3):                             # self / cross / pff LN
            off[("lng", l, i)] = r; r += 1
            off[("lnb", l, i)] = r; r += 1
    off[("fcb",)] = r; r += 1
    return off, r


W_OFF, W_ROWS = _build_weight_layout()                 # 480 rows
C_OFF, C_ROWS = _build_const_layout()                  # 25 rows
C_ROWS_PAD = ((C_ROWS + 7) // 8) * 8                   # 32 rows


# ----------------------------- fused Pallas kernel --------------------------
def _decoder_kernel(x_ref, enc_ref, tneg_ref, sneg_ref, w_ref, c_ref,
                    out_ref, att_ref, *, n, tq, tk):
    """Whole decoder forward on VMEM-resident data.

    x_ref:    (n*tq, D) f32   scaled token embedding + positional encoding
    enc_ref:  (n*tk, D) f32   encoder output (tk is padded to a multiple of 8)
    tneg/sneg:(n, tq, tq/tk)  additive masks (0 keep, -1e10 drop)
    w_ref:    (W_ROWS, 128) bf16  all matmul weights (static row/col offsets)
    c_ref:    (C_ROWS_PAD, 128) f32  all biases + LayerNorm gammas/betas
    out_ref:  (n*tq, P) f32
    att_ref:  (n, H, tq, tk) f32  cross-attention probs of the LAST layer
    """
    f32, bf16 = jnp.float32, jnp.bfloat16
    D, H, HD, PFF, P = DECODER_DIM, NHEAD, HEAD_DIM, PFF_DIM, PHONEME_SIZE

    def wblk(key_, nrows, c0, c1):                 # bf16 weight block
        r0 = W_OFF[key_]
        return w_ref[r0:r0 + nrows, c0:c1]

    def crow(key_, c0, c1):                        # f32 (1, width) const row
        r0 = C_OFF[key_]
        return c_ref[r0:r0 + 1, c0:c1]

    x = x_ref[...]                                 # (n*tq, D) f32 residual stream
    enc_b = enc_ref[...].astype(bf16)              # used only as MXU input

    # additive masks, expanded ONCE over the (head-uniform) head axis.
    # batch ordering everywhere is head-major: flat batch index = h * n + b.
    tneg = jnp.broadcast_to(tneg_ref[...][None], (H, n, tq, tq)).reshape(H * n, tq, tq)
    sneg = jnp.broadcast_to(sneg_ref[...][None], (H, n, tq, tk)).reshape(H * n, tq, tk)

    def split_heads(y, t):
        # (n*t, H*HD) -> (H*n, t, HD) using only 2-D transpose / last-two swap /
        # leading-dim reshapes (t is a multiple of 8, so reshapes are tile-aligned)
        yt = y.T                                   # (H*HD, n*t)
        yt = yt.reshape(H, HD, n * t)              # leading split
        yt = jnp.swapaxes(yt, 1, 2)                # (H, n*t, HD)
        return yt.reshape(H * n, t, HD)

    def merge_heads(o):
        # (H*n, tq, HD) -> (n*tq, H*HD)
        o = o.reshape(H, n * tq, HD)
        o = jnp.swapaxes(o, 1, 2)                  # (H, HD, n*tq)
        return o.reshape(H * HD, n * tq).T         # (n*tq, D)

    def layer_norm(y, l, i):                       # f32 VPU math (v5e-safe)
        mu = jnp.mean(y, axis=-1, keepdims=True)
        var = jnp.mean(jnp.square(y - mu), axis=-1, keepdims=True)
        yn = (y - mu) * jax.lax.rsqrt(var + LN_EPS)
        return yn * crow(("lng", l, i), 0, D) + crow(("lnb", l, i), 0, D)

    def attention(l, a, q, k, v, neg, t_kv, store_att):
        # q/k/v: (rows, D) f32; the 1/sqrt(hid_dim) scale is folded into Wq/bq.
        q3 = split_heads(q, tq).astype(bf16)
        k3 = split_heads(k, t_kv).astype(bf16)
        v3 = split_heads(v, t_kv).astype(bf16)
        s = jnp.einsum('bqd,bkd->bqk', q3, k3,
                       preferred_element_type=f32) + neg          # (H*n, tq, t_kv)
        m = jnp.max(s, axis=-1, keepdims=True)
        p = jnp.exp(s - m)
        att = p * pl.reciprocal(jnp.sum(p, axis=-1, keepdims=True), approx=True)
        if store_att:          # cross-attention probs of the LAST layer only
            att_ref[...] = jnp.swapaxes(att.reshape(H, n, tq, t_kv), 0, 1
                                        ).astype(att_ref.dtype)
        o = jnp.einsum('bqk,bkd->bqd', att.astype(bf16), v3,
                       preferred_element_type=f32)                # (H*n, tq, HD)
        o = merge_heads(o)                                        # (n*tq, D)
        return (jnp.dot(o.astype(bf16), wblk(("o", l, a), D, 0, D),
                        preferred_element_type=f32)
                + crow(("bo", l, a), 0, D))

    for l in range(N_LAYERS):
        # -- masked self attention: one fused (rows,32)x(32,96) Q|K|V matmul
        qkv = (jnp.dot(x.astype(bf16), wblk(("qkv", l, 0), D, 0, 3 * D),
                       preferred_element_type=f32)
               + crow(("bqkv", l, 0), 0, 3 * D))
        t = attention(l, 0, qkv[:, 0:D], qkv[:, D:2 * D], qkv[:, 2 * D:3 * D],
                      tneg, tq, store_att=False)
        x = layer_norm(x + t, l, 0)

        # -- cross attention: Q from x, fused K|V from the encoder output
        q = (jnp.dot(x.astype(bf16), wblk(("qkv", l, 1), D, 0, D),
                     preferred_element_type=f32)
             + crow(("bqkv", l, 1), 0, D))
        kv = (jnp.dot(enc_b, wblk(("qkv", l, 1), D, D, 3 * D),
                      preferred_element_type=f32)
              + crow(("bqkv", l, 1), D, 3 * D))
        t = attention(l, 1, q, kv[:, 0:D], kv[:, D:2 * D],
                      sneg, tk, store_att=(l == N_LAYERS - 1))
        x = layer_norm(x + t, l, 1)

        # -- position-wise feed forward (dropout = identity in eval mode)
        h1 = jnp.maximum(
            jnp.dot(x.astype(bf16), wblk(("w1", l), D, 0, PFF),
                    preferred_element_type=f32) + crow(("b1", l), 0, PFF), 0.0)
        t = (jnp.dot(h1.astype(bf16), wblk(("w2", l), PFF, 0, D),
                     preferred_element_type=f32) + crow(("b2", l), 0, D))
        x = layer_norm(x + t, l, 2)

    logits = (jnp.dot(x.astype(bf16), wblk(("fc",), D, 0, P),
                      preferred_element_type=f32) + crow(("fcb",), 0, P))
    out_ref[...] = logits.astype(out_ref.dtype)


def _fullspec(shape):
    zeros = (0,) * len(shape)
    return pl.BlockSpec(tuple(int(s) for s in shape), lambda i, z=zeros: z)


# ----------------------------- model forward --------------------------------
def decoder_forward(params, trg_ids, enc_src, trg_mask, src_mask):
    """trg_ids: (N,T) int; enc_src: (N,S,D); trg_mask broadcastable to
    (N,1,T,T); src_mask broadcastable to (N,1,1,S) (head-uniform masks)."""
    N, T = trg_ids.shape
    S = enc_src.shape[1]
    D = DECODER_DIM
    Tp = ((T + 7) // 8) * 8        # pad sequence lengths to sublane multiples
    Sp = ((S + 7) // 8) * 8

    # token embedding * sqrt(D) + positional encoding (tiny XLA glue)
    tok = jnp.take(params["emb"], trg_ids, axis=0)                  # (N,T,D)
    x = tok * jnp.float32(math.sqrt(D)) + params["pe"][:, :T, :]
    x = jnp.pad(x.astype(jnp.float32), ((0, 0), (0, Tp - T), (0, 0)))
    enc = jnp.pad(enc_src.astype(jnp.float32), ((0, 0), (0, Sp - S), (0, 0)))
    x2 = x.reshape(N * Tp, D)
    enc2 = enc.reshape(N * Sp, D)

    # head-uniform ADDITIVE masks: 0 where attended, -1e10 where masked/padded
    tm = jnp.broadcast_to(trg_mask, (N, 1, T, T))[:, 0].astype(jnp.float32)
    sm = jnp.broadcast_to(src_mask, (N, 1, T, S))[:, 0].astype(jnp.float32)
    tneg = (jnp.pad(tm, ((0, 0), (0, Tp - T), (0, Tp - T))) - 1.0) * 1e10
    sneg = (jnp.pad(sm, ((0, 0), (0, Tp - T), (0, Sp - S))) - 1.0) * 1e10

    operands = (x2, enc2, tneg, sneg, params["wslab"], params["cslab"])

    out2, att = pl.pallas_call(
        partial(_decoder_kernel, n=N, tq=Tp, tk=Sp),
        out_shape=(jax.ShapeDtypeStruct((N * Tp, PHONEME_SIZE), jnp.float32),
                   jax.ShapeDtypeStruct((N, NHEAD, Tp, Sp), jnp.float32)),
        grid=(1,),
        in_specs=[_fullspec(op.shape) for op in operands],
        out_specs=(_fullspec((N * Tp, PHONEME_SIZE)),
                   _fullspec((N, NHEAD, Tp, Sp))),
        compiler_params=pltpu.CompilerParams(
            dimension_semantics=("arbitrary",)),
    )(*operands)

    out = out2.reshape(N, Tp, PHONEME_SIZE)[:, :T]
    attention = att[:, :, :T, :S]
    return out, attention


# ----------------------------- deterministic params -------------------------
def _make_positional_encoding(d_model, max_len):
    position = jnp.arange(max_len, dtype=jnp.float32)[:, None]
    div_term = jnp.exp(jnp.arange(0, d_model, 2, dtype=jnp.float32)
                       * (-math.log(10000.0) / d_model))
    pe = jnp.zeros((max_len, d_model), dtype=jnp.float32)
    pe = pe.at[:, 0::2].set(jnp.sin(position * div_term))
    pe = pe.at[:, 1::2].set(jnp.cos(position * div_term))
    return pe[None, :, :]                                  # (1, max_len, d_model)


def init_params(key):
    """Torch defaults (Linear: U(+-1/sqrt(fan_in)); LayerNorm: gamma=1, beta=0),
    packed into one bf16 weight slab + one f32 bias/LN slab.  The 1/sqrt(hid_dim)
    attention scale is folded into the Q weights/bias (equivalent to dividing
    the energies as the PyTorch module does)."""
    def lin(k, fan_in, fan_out):
        kw, kb = jax.random.split(k)
        bound = 1.0 / math.sqrt(fan_in)
        w = jax.random.uniform(kw, (fan_in, fan_out), jnp.float32, -bound, bound)
        b = jax.random.uniform(kb, (fan_out,), jnp.float32, -bound, bound)
        return w, b

    D = DECODER_DIM
    inv_scale = 1.0 / math.sqrt(D)
    keys = iter(jax.random.split(key, 32))

    params = {
        "emb": jax.random.normal(next(keys), (PHONEME_SIZE, D), jnp.float32),
        "pe": _make_positional_encoding(D, MAX_DECODE_STEP),
    }

    wslab = jnp.zeros((W_ROWS, 128), jnp.float32)
    cslab = jnp.zeros((C_ROWS_PAD, 128), jnp.float32)

    def put_w(k_, block):
        nonlocal wslab
        r0 = W_OFF[k_]
        wslab = wslab.at[r0:r0 + block.shape[0], :block.shape[1]].set(block)

    def put_c(k_, vec):
        nonlocal cslab
        r0 = C_OFF[k_]
        cslab = cslab.at[r0, :vec.shape[0]].set(vec)

    for l in range(N_LAYERS):
        for a in range(2):                       # 0 = masked self attn, 1 = cross
            wq, bq = lin(next(keys), D, D)
            wk, bk = lin(next(keys), D, D)
            wv, bv = lin(next(keys), D, D)
            wo, bo = lin(next(keys), D, D)
            put_w(("qkv", l, a), jnp.concatenate([wq * inv_scale, wk, wv], axis=1))
            put_c(("bqkv", l, a), jnp.concatenate([bq * inv_scale, bk, bv]))
            put_w(("o", l, a), wo)
            put_c(("bo", l, a), bo)
        w1, b1 = lin(next(keys), D, PFF_DIM)
        w2, b2 = lin(next(keys), PFF_DIM, D)
        put_w(("w1", l), w1); put_c(("b1", l), b1)
        put_w(("w2", l), w2); put_c(("b2", l), b2)
        for i in range(3):
            put_c(("lng", l, i), jnp.ones((D,), jnp.float32))
            put_c(("lnb", l, i), jnp.zeros((D,), jnp.float32))

    fcw, fcb = lin(next(keys), D, PHONEME_SIZE)
    put_w(("fc",), fcw)
    put_c(("fcb",), fcb)

    params["wslab"] = wslab.astype(jnp.bfloat16)   # bf16 MXU weight slab
    params["cslab"] = cslab                        # f32 biases / LayerNorm params
    return params


# ----------------------------- main ------------------------------------------
if __name__ == "__main__":
    key = jax.random.PRNGKey(0)
    k_par, k_ids, k_enc = jax.random.split(key, 3)

    N, T_TRG, T_SRC = 2, 8, 10
    params = init_params(k_par)

    trg_ids = jax.random.randint(k_ids, (N, T_TRG), 0, PHONEME_SIZE, jnp.int32)
    enc_src = jax.random.normal(k_enc, (N, T_SRC, DECODER_DIM), jnp.float32)

    # causal target mask (N,1,T,T) and all-ones source mask (N,1,1,T_src)
    causal = jnp.tril(jnp.ones((T_TRG, T_TRG), jnp.float32))
    trg_mask = jnp.broadcast_to(causal[None, None], (N, 1, T_TRG, T_TRG))
    src_mask = jnp.ones((N, 1, 1, T_SRC), jnp.float32)

    fwd = jax.jit(decoder_forward)
    out, attention = fwd(params, trg_ids, enc_src, trg_mask, src_mask)
    jax.block_until_ready((out, attention))

    assert out.shape == (N, T_TRG, PHONEME_SIZE)
    assert attention.shape == (N, NHEAD, T_TRG, T_SRC)
    assert bool(jnp.all(jnp.isfinite(out))) and bool(jnp.all(jnp.isfinite(attention)))
    # attention rows sum to ~1 over the real source positions
    assert bool(jnp.all(jnp.abs(jnp.sum(attention, axis=-1) - 1.0) < 1e-2))
    print("KERNEL_OK")
</pallas_src>

<mosaic_0001>
module attributes {stable_mosaic.version = 11 : i64} {
  func.func @_decoder_kernel(%arg0: i32, %arg1: memref<16x32xf32, #tpu.memory_space<vmem>>, %arg2: memref<32x32xf32, #tpu.memory_space<vmem>>, %arg3: memref<2x8x8xf32, #tpu.memory_space<vmem>>, %arg4: memref<2x8x16xf32, #tpu.memory_space<vmem>>, %arg5: memref<480x128xbf16, #tpu.memory_space<vmem>>, %arg6: memref<32x128xf32, #tpu.memory_space<vmem>>, %arg7: memref<16x32xf32, #tpu.memory_space<vmem>>, %arg8: memref<2x4x8x16xf32, #tpu.memory_space<vmem>>) attributes {dimension_semantics = [#tpu.dimension_semantics<arbitrary>], iteration_bounds = array<i64: 1>, scalar_prefetch = 0 : i64, scratch_operands = 0 : i64, tpu.core_type = #tpu.core_type<tc>, window_params = [{pipeline_mode = #tpu.pipeline_mode<synchronous>, transform_indices = @transform_0, window_bounds = array<i64: 16, 32>}, {pipeline_mode = #tpu.pipeline_mode<synchronous>, transform_indices = @transform_1, window_bounds = array<i64: 32, 32>}, {pipeline_mode = #tpu.pipeline_mode<synchronous>, transform_indices = @transform_2, window_bounds = array<i64: 2, 8, 8>}, {pipeline_mode = #tpu.pipeline_mode<synchronous>, transform_indices = @transform_3, window_bounds = array<i64: 2, 8, 16>}, {pipeline_mode = #tpu.pipeline_mode<synchronous>, transform_indices = @transform_4, window_bounds = array<i64: 480, 128>}, {pipeline_mode = #tpu.pipeline_mode<synchronous>, transform_indices = @transform_5, window_bounds = array<i64: 32, 128>}, {pipeline_mode = #tpu.pipeline_mode<synchronous>, transform_indices = @transform_6, window_bounds = array<i64: 16, 32>}, {pipeline_mode = #tpu.pipeline_mode<synchronous>, transform_indices = @transform_7, window_bounds = array<i64: 2, 4, 8, 16>}]} {
    %c0 = arith.constant 0 : index
    %c0_0 = arith.constant 0 : index
    %0 = vector.load %arg1[%c0, %c0_0] : memref<16x32xf32, #tpu.memory_space<vmem>>, vector<16x32xf32>
    %c0_1 = arith.constant 0 : index
    %c0_2 = arith.constant 0 : index
    %1 = vector.load %arg2[%c0_1, %c0_2] : memref<32x32xf32, #tpu.memory_space<vmem>>, vector<32x32xf32>
    %2 = arith.truncf %1 : vector<32x32xf32> to vector<32x32xbf16>
    %c0_3 = arith.constant 0 : index
    %c0_4 = arith.constant 0 : index
    %c0_5 = arith.constant 0 : index
    %3 = vector.load %arg3[%c0_3, %c0_4, %c0_5] : memref<2x8x8xf32, #tpu.memory_space<vmem>>, vector<2x8x8xf32>
    %4 = vector.shape_cast %3 : vector<2x8x8xf32> to vector<1x2x8x8xf32>
    %5 = vector.shape_cast %4 : vector<1x2x8x8xf32> to vector<1x2x8x8xf32>
    %6 = vector.broadcast %5 : vector<1x2x8x8xf32> to vector<4x2x8x8xf32>
    %7 = vector.shape_cast %6 : vector<4x2x8x8xf32> to vector<8x8x8xf32>
    %c0_6 = arith.constant 0 : index
    %c0_7 = arith.constant 0 : index
    %c0_8 = arith.constant 0 : index
    %8 = vector.load %arg4[%c0_6, %c0_7, %c0_8] : memref<2x8x16xf32, #tpu.memory_space<vmem>>, vector<2x8x16xf32>
    %9 = vector.shape_cast %8 : vector<2x8x16xf32> to vector<1x2x8x16xf32>
    %10 = vector.shape_cast %9 : vector<1x2x8x16xf32> to vector<1x2x8x16xf32>
    %11 = vector.broadcast %10 : vector<1x2x8x16xf32> to vector<4x2x8x16xf32>
    %12 = vector.shape_cast %11 : vector<4x2x8x16xf32> to vector<8x8x16xf32>
    %13 = arith.truncf %0 : vector<16x32xf32> to vector<16x32xbf16>
    %c0_9 = arith.constant 0 : index
    %c0_10 = arith.constant 0 : index
    %14 = vector.load %arg5[%c0_9, %c0_10] : memref<480x128xbf16, #tpu.memory_space<vmem>>, vector<32x96xbf16>
    %cst = arith.constant dense<0.000000e+00> : vector<16x96xf32>
    %15 = tpu.matmul %13, %14, %cst {dimension_numbers = #tpu.dot_dimension_numbers<[1], [0], [0], [1], [0, 0, 1, 1], [], []>} : vector<16x32xbf16>, vector<32x96xbf16>, vector<16x96xf32> -> vector<16x96xf32>
    %c0_11 = arith.constant 0 : index
    %c0_12 = arith.constant 0 : index
    %16 = vector.load %arg6[%c0_11, %c0_12] : memref<32x128xf32, #tpu.memory_space<vmem>>, vector<1x96xf32>
    %17 = vector.broadcast %16 : vector<1x96xf32> to vector<16x96xf32>
    %18 = arith.addf %15, %17 : vector<16x96xf32>
    %19 = vector.extract_strided_slice %18 {offsets = [0, 0], sizes = [16, 32], strides = [1, 1]} : vector<16x96xf32> to vector<16x32xf32>
    %20 = vector.extract_strided_slice %18 {offsets = [0, 32], sizes = [16, 32], strides = [1, 1]} : vector<16x96xf32> to vector<16x32xf32>
    %21 = vector.extract_strided_slice %18 {offsets = [0, 64], sizes = [16, 32], strides = [1, 1]} : vector<16x96xf32> to vector<16x32xf32>
    %22 = tpu.transpose %19, [1, 0] : vector<16x32xf32> -> vector<32x16xf32>
    %23 = vector.shape_cast %22 : vector<32x16xf32> to vector<4x8x16xf32>
    %24 = tpu.transpose %23, [0, 2, 1] : vector<4x8x16xf32> -> vector<4x16x8xf32>
    %25 = vector.shape_cast %24 : vector<4x16x8xf32> to vector<8x8x8xf32>
    %26 = arith.truncf %25 : vector<8x8x8xf32> to vector<8x8x8xbf16>
    %27 = tpu.transpose %20, [1, 0] : vector<16x32xf32> -> vector<32x16xf32>
    %28 = vector.shape_cast %27 : vector<32x16xf32> to vector<4x8x16xf32>
    %29 = tpu.transpose %28, [0, 2, 1] : vector<4x8x16xf32> -> vector<4x16x8xf32>
    %30 = vector.shape_cast %29 : vector<4x16x8xf32> to vector<8x8x8xf32>
    %31 = arith.truncf %30 : vector<8x8x8xf32> to vector<8x8x8xbf16>
    %32 = tpu.transpose %21, [1, 0] : vector<16x32xf32> -> vector<32x16xf32>
    %33 = vector.shape_cast %32 : vector<32x16xf32> to vector<4x8x16xf32>
    %34 = tpu.transpose %33, [0, 2, 1] : vector<4x8x16xf32> -> vector<4x16x8xf32>
    %35 = vector.shape_cast %34 : vector<4x16x8xf32> to vector<8x8x8xf32>
    %36 = arith.truncf %35 : vector<8x8x8xf32> to vector<8x8x8xbf16>
    "tpu.trace_start"() <{level = 10 : i32, message = "bqd,bkd->bqk"}> : () -> ()
    %cst_13 = arith.constant dense<0.000000e+00> : vector<8x8x8xf32>
    %37 = tpu.matmul %26, %31, %cst_13 {dimension_numbers = #tpu.dot_dimension_numbers<[2], [2], [1], [1], [0, 0, 0, 1, 1, 1], [0], [0]>} : vector<8x8x8xbf16>, vector<8x8x8xbf16>, vector<8x8x8xf32> -> vector<8x8x8xf32>
    "tpu.trace_stop"() : () -> ()
    %38 = arith.addf %37, %7 : vector<8x8x8xf32>
    %cst_14 = arith.constant dense<0xFF800000> : vector<8x8xf32>
    %39 = vector.multi_reduction <maximumf>, %38, %cst_14 [2] : vector<8x8x8xf32> to vector<8x8xf32>
    %40 = vector.shape_cast %39 : vector<8x8xf32> to vector<8x8x1xf32>
    %41 = vector.broadcast %40 : vector<8x8x1xf32> to vector<8x8x8xf32>
    %42 = arith.subf %38, %41 : vector<8x8x8xf32>
    %43 = math.exp %42 : vector<8x8x8xf32>
    %cst_15 = arith.constant dense<0.000000e+00> : vector<8x8xf32>
    %44 = vector.multi_reduction <add>, %43, %cst_15 [2] : vector<8x8x8xf32> to vector<8x8xf32>
    %45 = vector.shape_cast %44 : vector<8x8xf32> to vector<8x8x1xf32>
    %46 = tpu.reciprocal %45 {approx = true} : vector<8x8x1xf32> -> vector<8x8x1xf32>
    %47 = vector.broadcast %46 : vector<8x8x1xf32> to vector<8x8x8xf32>
    %48 = arith.mulf %43, %47 : vector<8x8x8xf32>
    %49 = arith.truncf %48 : vector<8x8x8xf32> to vector<8x8x8xbf16>
    "tpu.trace_start"() <{level = 10 : i32, message = "bqk,bkd->bqd"}> : () -> ()
    %cst_16 = arith.constant dense<0.000000e+00> : vector<8x8x8xf32>
    %50 = tpu.matmul %49, %36, %cst_16 {dimension_numbers = #tpu.dot_dimension_numbers<[2], [1], [1], [2], [0, 0, 0, 1, 1, 2], [0], [0]>} : vector<8x8x8xbf16>, vector<8x8x8xbf16>, vector<8x8x8xf32> -> vector<8x8x8xf32>
    "tpu.trace_stop"() : () -> ()
    %51 = vector.shape_cast %50 : vector<8x8x8xf32> to vector<4x16x8xf32>
    %52 = tpu.transpose %51, [0, 2, 1] : vector<4x16x8xf32> -> vector<4x8x16xf32>
    %53 = vector.shape_cast %52 : vector<4x8x16xf32> to vector<32x16xf32>
    %54 = tpu.transpose %53, [1, 0] : vector<32x16xf32> -> vector<16x32xf32>
    %55 = arith.truncf %54 : vector<16x32xf32> to vector<16x32xbf16>
    %c32 = arith.constant 32 : index
    %c0_17 = arith.constant 0 : index
    %56 = vector.load %arg5[%c32, %c0_17] : memref<480x128xbf16, #tpu.memory_space<vmem>>, vector<32x32xbf16>
    %cst_18 = arith.constant dense<0.000000e+00> : vector<16x32xf32>
    %57 = tpu.matmul %55, %56, %cst_18 {dimension_numbers = #tpu.dot_dimension_numbers<[1], [0], [0], [1], [0, 0, 1, 1], [], []>} : vector<16x32xbf16>, vector<32x32xbf16>, vector<16x32xf32> -> vector<16x32xf32>
    %c1 = arith.constant 1 : index
    %c0_19 = arith.constant 0 : index
    %58 = vector.load %arg6[%c1, %c0_19] : memref<32x128xf32, #tpu.memory_space<vmem>>, vector<1x32xf32>
    %59 = vector.broadcast %58 : vector<1x32xf32> to vector<16x32xf32>
    %60 = arith.addf %57, %59 : vector<16x32xf32>
    %61 = arith.addf %0, %60 : vector<16x32xf32>
    %cst_20 = arith.constant dense<0.000000e+00> : vector<16xf32>
    %62 = vector.multi_reduction <add>, %61, %cst_20 [1] : vector<16x32xf32> to vector<16xf32>
    %63 = vector.shape_cast %62 : vector<16xf32> to vector<16x1xf32>
    %cst_21 = arith.constant 3.200000e+01 : f32
    %64 = vector.broadcast %cst_21 : f32 to vector<16x1xf32>
    %65 = arith.divf %63, %64 : vector<16x1xf32>
    %66 = vector.broadcast %65 : vector<16x1xf32> to vector<16x32xf32>
    %67 = arith.subf %61, %66 : vector<16x32xf32>
    %68 = arith.mulf %67, %67 : vector<16x32xf32>
    %cst_22 = arith.constant dense<0.000000e+00> : vector<16xf32>
    %69 = vector.multi_reduction <add>, %68, %cst_22 [1] : vector<16x32xf32> to vector<16xf32>
    %70 = vector.shape_cast %69 : vector<16xf32> to vector<16x1xf32>
    %cst_23 = arith.constant 3.200000e+01 : f32
    %71 = vector.broadcast %cst_23 : f32 to vector<16x1xf32>
    %72 = arith.divf %70, %71 : vector<16x1xf32>
    %73 = vector.broadcast %65 : vector<16x1xf32> to vector<16x32xf32>
    %74 = arith.subf %61, %73 : vector<16x32xf32>
    %cst_24 = arith.constant 9.99999974E-6 : f32
    %75 = vector.broadcast %cst_24 : f32 to vector<16x1xf32>
    %76 = arith.addf %72, %75 : vector<16x1xf32>
    %77 = math.rsqrt %76 : vector<16x1xf32>
    %78 = vector.broadcast %77 : vector<16x1xf32> to vector<16x32xf32>
    %79 = arith.mulf %74, %78 : vector<16x32xf32>
    %c6 = arith.constant 6 : index
    %c0_25 = arith.constant 0 : index
    %80 = vector.load %arg6[%c6, %c0_25] : memref<32x128xf32, #tpu.memory_space<vmem>>, vector<1x32xf32>
    %81 = vector.broadcast %80 : vector<1x32xf32> to vector<16x32xf32>
    %82 = arith.mulf %79, %81 : vector<16x32xf32>
    %c7 = arith.constant 7 : index
    %c0_26 = arith.constant 0 : index
    %83 = vector.load %arg6[%c7, %c0_26] : memref<32x128xf32, #tpu.memory_space<vmem>>, vector<1x32xf32>
    %84 = vector.broadcast %83 : vector<1x32xf32> to vector<16x32xf32>
    %85 = arith.addf %82, %84 : vector<16x32xf32>
    %86 = arith.truncf %85 : vector<16x32xf32> to vector<16x32xbf16>
    %c64 = arith.constant 64 : index
    %c0_27 = arith.constant 0 : index
    %87 = vector.load %arg5[%c64, %c0_27] : memref<480x128xbf16, #tpu.memory_space<vmem>>, vector<32x32xbf16>
    %cst_28 = arith.constant dense<0.000000e+00> : vector<16x32xf32>
    %88 = tpu.matmul %86, %87, %cst_28 {dimension_numbers = #tpu.dot_dimension_numbers<[1], [0], [0], [1], [0, 0, 1, 1], [], []>} : vector<16x32xbf16>, vector<32x32xbf16>, vector<16x32xf32> -> vector<16x32xf32>
    %c2 = arith.constant 2 : index
    %c0_29 = arith.constant 0 : index
    %89 = vector.load %arg6[%c2, %c0_29] : memref<32x128xf32, #tpu.memory_space<vmem>>, vector<1x32xf32>
    %90 = vector.broadcast %89 : vector<1x32xf32> to vector<16x32xf32>
    %91 = arith.addf %88, %90 : vector<16x32xf32>
    %c64_30 = arith.constant 64 : index
    %c32_31 = arith.constant 32 : index
    %92 = vector.load %arg5[%c64_30, %c32_31] : memref<480x128xbf16, #tpu.memory_space<vmem>>, vector<32x64xbf16>
    %cst_32 = arith.constant dense<0.000000e+00> : vector<32x64xf32>
    %93 = tpu.matmul %2, %92, %cst_32 {dimension_numbers = #tpu.dot_dimension_numbers<[1], [0], [0], [1], [0, 0, 1, 1], [], []>} : vector<32x32xbf16>, vector<32x64xbf16>, vector<32x64xf32> -> vector<32x64xf32>
    %c2_33 = arith.constant 2 : index
    %c32_34 = arith.constant 32 : index
    %94 = vector.load %arg6[%c2_33, %c32_34] : memref<32x128xf32, #tpu.memory_space<vmem>>, vector<1x64xf32>
    %95 = vector.broadcast %94 : vector<1x64xf32> to vector<32x64xf32>
    %96 = arith.addf %93, %95 : vector<32x64xf32>
    %97 = vector.extract_strided_slice %96 {offsets = [0, 0], sizes = [32, 32], strides = [1, 1]} : vector<32x64xf32> to vector<32x32xf32>
    %98 = vector.extract_strided_slice %96 {offsets = [0, 32], sizes = [32, 32], strides = [1, 1]} : vector<32x64xf32> to vector<32x32xf32>
    %99 = tpu.transpose %91, [1, 0] : vector<16x32xf32> -> vector<32x16xf32>
    %100 = vector.shape_cast %99 : vector<32x16xf32> to vector<4x8x16xf32>
    %101 = tpu.transpose %100, [0, 2, 1] : vector<4x8x16xf32> -> vector<4x16x8xf32>
    %102 = vector.shape_cast %101 : vector<4x16x8xf32> to vector<8x8x8xf32>
    %103 = arith.truncf %102 : vector<8x8x8xf32> to vector<8x8x8xbf16>
    %104 = tpu.transpose %97, [1, 0] : vector<32x32xf32> -> vector<32x32xf32>
    %105 = vector.shape_cast %104 : vector<32x32xf32> to vector<4x8x32xf32>
    %106 = tpu.transpose %105, [0, 2, 1] : vector<4x8x32xf32> -> vector<4x32x8xf32>
    %107 = vector.shape_cast %106 : vector<4x32x8xf32> to vector<8x16x8xf32>
    %108 = arith.truncf %107 : vector<8x16x8xf32> to vector<8x16x8xbf16>
    %109 = tpu.transpose %98, [1, 0] : vector<32x32xf32> -> vector<32x32xf32>
    %110 = vector.shape_cast %109 : vector<32x32xf32> to vector<4x8x32xf32>
    %111 = tpu.transpose %110, [0, 2, 1] : vector<4x8x32xf32> -> vector<4x32x8xf32>
    %112 = vector.shape_cast %111 : vector<4x32x8xf32> to vector<8x16x8xf32>
    %113 = arith.truncf %112 : vector<8x16x8xf32> to vector<8x16x8xbf16>
    "tpu.trace_start"() <{level = 10 : i32, message = "bqd,bkd->bqk"}> : () -> ()
    %cst_35 = arith.constant dense<0.000000e+00> : vector<8x8x16xf32>
    %114 = tpu.matmul %103, %108, %cst_35 {dimension_numbers = #tpu.dot_dimension_numbers<[2], [2], [1], [1], [0, 0, 0, 1, 1, 1], [0], [0]>} : vector<8x8x8xbf16>, vector<8x16x8xbf16>, vector<8x8x16xf32> -> vector<8x8x16xf32>
    "tpu.trace_stop"() : () -> ()
    %115 = arith.addf %114, %12 : vector<8x8x16xf32>
    %cst_36 = arith.constant dense<0xFF800000> : vector<8x8xf32>
    %116 = vector.multi_reduction <maximumf>, %115, %cst_36 [2] : vector<8x8x16xf32> to vector<8x8xf32>
    %117 = vector.shape_cast %116 : vector<8x8xf32> to vector<8x8x1xf32>
    %118 = vector.broadcast %117 : vector<8x8x1xf32> to vector<8x8x16xf32>
    %119 = arith.subf %115, %118 : vector<8x8x16xf32>
    %120 = math.exp %119 : vector<8x8x16xf32>
    %cst_37 = arith.constant dense<0.000000e+00> : vector<8x8xf32>
    %121 = vector.multi_reduction <add>, %120, %cst_37 [2] : vector<8x8x16xf32> to vector<8x8xf32>
    %122 = vector.shape_cast %121 : vector<8x8xf32> to vector<8x8x1xf32>
    %123 = tpu.reciprocal %122 {approx = true} : vector<8x8x1xf32> -> vector<8x8x1xf32>
    %124 = vector.broadcast %123 : vector<8x8x1xf32> to vector<8x8x16xf32>
    %125 = arith.mulf %120, %124 : vector<8x8x16xf32>
    %126 = arith.truncf %125 : vector<8x8x16xf32> to vector<8x8x16xbf16>
    "tpu.trace_start"() <{level = 10 : i32, message = "bqk,bkd->bqd"}> : () -> ()
    %cst_38 = arith.constant dense<0.000000e+00> : vector<8x8x8xf32>
    %127 = tpu.matmul %126, %113, %cst_38 {dimension_numbers = #tpu.dot_dimension_numbers<[2], [1], [1], [2], [0, 0, 0, 1, 1, 2], [0], [0]>} : vector<8x8x16xbf16>, vector<8x16x8xbf16>, vector<8x8x8xf32> -> vector<8x8x8xf32>
    "tpu.trace_stop"() : () -> ()
    %128 = vector.shape_cast %127 : vector<8x8x8xf32> to vector<4x16x8xf32>
    %129 = tpu.transpose %128, [0, 2, 1] : vector<4x16x8xf32> -> vector<4x8x16xf32>
    %130 = vector.shape_cast %129 : vector<4x8x16xf32> to vector<32x16xf32>
    %131 = tpu.transpose %130, [1, 0] : vector<32x16xf32> -> vector<16x32xf32>
    %132 = arith.truncf %131 : vector<16x32xf32> to vector<16x32xbf16>
    %c96 = arith.constant 96 : index
    %c0_39 = arith.constant 0 : index
    %133 = vector.load %arg5[%c96, %c0_39] : memref<480x128xbf16, #tpu.memory_space<vmem>>, vector<32x32xbf16>
    %cst_40 = arith.constant dense<0.000000e+00> : vector<16x32xf32>
    %134 = tpu.matmul %132, %133, %cst_40 {dimension_numbers = #tpu.dot_dimension_numbers<[1], [0], [0], [1], [0, 0, 1, 1], [], []>} : vector<16x32xbf16>, vector<32x32xbf16>, vector<16x32xf32> -> vector<16x32xf32>
    %c3 = arith.constant 3 : index
    %c0_41 = arith.constant 0 : index
    %135 = vector.load %arg6[%c3, %c0_41] : memref<32x128xf32, #tpu.memory_space<vmem>>, vector<1x32xf32>
    %136 = vector.broadcast %135 : vector<1x32xf32> to vector<16x32xf32>
    %137 = arith.addf %134, %136 : vector<16x32xf32>
    %138 = arith.addf %85, %137 : vector<16x32xf32>
    %cst_42 = arith.constant dense<0.000000e+00> : vector<16xf32>
    %139 = vector.multi_reduction <add>, %138, %cst_42 [1] : vector<16x32xf32> to vector<16xf32>
    %140 = vector.shape_cast %139 : vector<16xf32> to vector<16x1xf32>
    %cst_43 = arith.constant 3.200000e+01 : f32
    %141 = vector.broadcast %cst_43 : f32 to vector<16x1xf32>
    %142 = arith.divf %140, %141 : vector<16x1xf32>
    %143 = vector.broadcast %142 : vector<16x1xf32> to vector<16x32xf32>
    %144 = arith.subf %138, %143 : vector<16x32xf32>
    %145 = arith.mulf %144, %144 : vector<16x32xf32>
    %cst_44 = arith.constant dense<0.000000e+00> : vector<16xf32>
    %146 = vector.multi_reduction <add>, %145, %cst_44 [1] : vector<16x32xf32> to vector<16xf32>
    %147 = vector.shape_cast %146 : vector<16xf32> to vector<16x1xf32>
    %cst_45 = arith.constant 3.200000e+01 : f32
    %148 = vector.broadcast %cst_45 : f32 to vector<16x1xf32>
    %149 = arith.divf %147, %148 : vector<16x1xf32>
    %150 = vector.broadcast %142 : vector<16x1xf32> to vector<16x32xf32>
    %151 = arith.subf %138, %150 : vector<16x32xf32>
    %cst_46 = arith.constant 9.99999974E-6 : f32
    %152 = vector.broadcast %cst_46 : f32 to vector<16x1xf32>
    %153 = arith.addf %149, %152 : vector<16x1xf32>
    %154 = math.rsqrt %153 : vector<16x1xf32>
    %155 = vector.broadcast %154 : vector<16x1xf32> to vector<16x32xf32>
    %156 = arith.mulf %151, %155 : vector<16x32xf32>
    %c8 = arith.constant 8 : index
    %c0_47 = arith.constant 0 : index
    %157 = vector.load %arg6[%c8, %c0_47] : memref<32x128xf32, #tpu.memory_space<vmem>>, vector<1x32xf32>
    %158 = vector.broadcast %157 : vector<1x32xf32> to vector<16x32xf32>
    %159 = arith.mulf %156, %158 : vector<16x32xf32>
    %c9 = arith.constant 9 : index
    %c0_48 = arith.constant 0 : index
    %160 = vector.load %arg6[%c9, %c0_48] : memref<32x128xf32, #tpu.memory_space<vmem>>, vector<1x32xf32>
    %161 = vector.broadcast %160 : vector<1x32xf32> to vector<16x32xf32>
    %162 = arith.addf %159, %161 : vector<16x32xf32>
    %163 = arith.truncf %162 : vector<16x32xf32> to vector<16x32xbf16>
    %c128 = arith.constant 128 : index
    %c0_49 = arith.constant 0 : index
    %164 = vector.load %arg5[%c128, %c0_49] : memref<480x128xbf16, #tpu.memory_space<vmem>>, vector<32x64xbf16>
    %cst_50 = arith.constant dense<0.000000e+00> : vector<16x64xf32>
    %165 = tpu.matmul %163, %164, %cst_50 {dimension_numbers = #tpu.dot_dimension_numbers<[1], [0], [0], [1], [0, 0, 1, 1], [], []>} : vector<16x32xbf16>, vector<32x64xbf16>, vector<16x64xf32> -> vector<16x64xf32>
    %c4 = arith.constant 4 : index
    %c0_51 = arith.constant 0 : index
    %166 = vector.load %arg6[%c4, %c0_51] : memref<32x128xf32, #tpu.memory_space<vmem>>, vector<1x64xf32>
    %167 = vector.broadcast %166 : vector<1x64xf32> to vector<16x64xf32>
    %168 = arith.addf %165, %167 : vector<16x64xf32>
    %cst_52 = arith.constant 0.000000e+00 : f32
    %169 = vector.broadcast %cst_52 : f32 to vector<16x64xf32>
    %170 = arith.maximumf %168, %169 : vector<16x64xf32>
    %171 = arith.truncf %170 : vector<16x64xf32> to vector<16x64xbf16>
    %c160 = arith.constant 160 : index
    %c0_53 = arith.constant 0 : index
    %172 = vector.load %arg5[%c160, %c0_53] : memref<480x128xbf16, #tpu.memory_space<vmem>>, vector<64x32xbf16>
    %cst_54 = arith.constant dense<0.000000e+00> : vector<16x32xf32>
    %173 = tpu.matmul %171, %172, %cst_54 {dimension_numbers = #tpu.dot_dimension_numbers<[1], [0], [0], [1], [0, 0, 1, 1], [], []>} : vector<16x64xbf16>, vector<64x32xbf16>, vector<16x32xf32> -> vector<16x32xf32>
    %c5 = arith.constant 5 : index
    %c0_55 = arith.constant 0 : index
    %174 = vector.load %arg6[%c5, %c0_55] : memref<32x128xf32, #tpu.memory_space<vmem>>, vector<1x32xf32>
    %175 = vector.broadcast %174 : vector<1x32xf32> to vector<16x32xf32>
    %176 = arith.addf %173, %175 : vector<16x32xf32>
    %177 = arith.addf %162, %176 : vector<16x32xf32>
    %cst_56 = arith.constant dense<0.000000e+00> : vector<16xf32>
    %178 = vector.multi_reduction <add>, %177, %cst_56 [1] : vector<16x32xf32> to vector<16xf32>
    %179 = vector.shape_cast %178 : vector<16xf32> to vector<16x1xf32>
    %cst_57 = arith.constant 3.200000e+01 : f32
    %180 = vector.broadcast %cst_57 : f32 to vector<16x1xf32>
    %181 = arith.divf %179, %180 : vector<16x1xf32>
    %182 = vector.broadcast %181 : vector<16x1xf32> to vector<16x32xf32>
    %183 = arith.subf %177, %182 : vector<16x32xf32>
    %184 = arith.mulf %183, %183 : vector<16x32xf32>
    %cst_58 = arith.constant dense<0.000000e+00> : vector<16xf32>
    %185 = vector.multi_reduction <add>, %184, %cst_58 [1] : vector<16x32xf32> to vector<16xf32>
    %186 = vector.shape_cast %185 : vector<16xf32> to vector<16x1xf32>
    %cst_59 = arith.constant 3.200000e+01 : f32
    %187 = vector.broadcast %cst_59 : f32 to vector<16x1xf32>
    %188 = arith.divf %186, %187 : vector<16x1xf32>
    %189 = vector.broadcast %181 : vector<16x1xf32> to vector<16x32xf32>
    %190 = arith.subf %177, %189 : vector<16x32xf32>
    %cst_60 = arith.constant 9.99999974E-6 : f32
    %191 = vector.broadcast %cst_60 : f32 to vector<16x1xf32>
    %192 = arith.addf %188, %191 : vector<16x1xf32>
    %193 = math.rsqrt %192 : vector<16x1xf32>
    %194 = vector.broadcast %193 : vector<16x1xf32> to vector<16x32xf32>
    %195 = arith.mulf %190, %194 : vector<16x32xf32>
    %c10 = arith.constant 10 : index
    %c0_61 = arith.constant 0 : index
    %196 = vector.load %arg6[%c10, %c0_61] : memref<32x128xf32, #tpu.memory_space<vmem>>, vector<1x32xf32>
    %197 = vector.broadcast %196 : vector<1x32xf32> to vector<16x32xf32>
    %198 = arith.mulf %195, %197 : vector<16x32xf32>
    %c11 = arith.constant 11 : index
    %c0_62 = arith.constant 0 : index
    %199 = vector.load %arg6[%c11, %c0_62] : memref<32x128xf32, #tpu.memory_space<vmem>>, vector<1x32xf32>
    %200 = vector.broadcast %199 : vector<1x32xf32> to vector<16x32xf32>
    %201 = arith.addf %198, %200 : vector<16x32xf32>
    %202 = arith.truncf %201 : vector<16x32xf32> to vector<16x32xbf16>
    %c224 = arith.constant 224 : index
    %c0_63 = arith.constant 0 : index
    %203 = vector.load %arg5[%c224, %c0_63] : memref<480x128xbf16, #tpu.memory_space<vmem>>, vector<32x96xbf16>
    %cst_64 = arith.constant dense<0.000000e+00> : vector<16x96xf32>
    %204 = tpu.matmul %202, %203, %cst_64 {dimension_numbers = #tpu.dot_dimension_numbers<[1], [0], [0], [1], [0, 0, 1, 1], [], []>} : vector<16x32xbf16>, vector<32x96xbf16>, vector<16x96xf32> -> vector<16x96xf32>
    %c12 = arith.constant 12 : index
    %c0_65 = arith.constant 0 : index
    %205 = vector.load %arg6[%c12, %c0_65] : memref<32x128xf32, #tpu.memory_space<vmem>>, vector<1x96xf32>
    %206 = vector.broadcast %205 : vector<1x96xf32> to vector<16x96xf32>
    %207 = arith.addf %204, %206 : vector<16x96xf32>
    %208 = vector.extract_strided_slice %207 {offsets = [0, 0], sizes = [16, 32], strides = [1, 1]} : vector<16x96xf32> to vector<16x32xf32>
    %209 = vector.extract_strided_slice %207 {offsets = [0, 32], sizes = [16, 32], strides = [1, 1]} : vector<16x96xf32> to vector<16x32xf32>
    %210 = vector.extract_strided_slice %207 {offsets = [0, 64], sizes = [16, 32], strides = [1, 1]} : vector<16x96xf32> to vector<16x32xf32>
    %211 = tpu.transpose %208, [1, 0] : vector<16x32xf32> -> vector<32x16xf32>
    %212 = vector.shape_cast %211 : vector<32x16xf32> to vector<4x8x16xf32>
    %213 = tpu.transpose %212, [0, 2, 1] : vector<4x8x16xf32> -> vector<4x16x8xf32>
    %214 = vector.shape_cast %213 : vector<4x16x8xf32> to vector<8x8x8xf32>
    %215 = arith.truncf %214 : vector<8x8x8xf32> to vector<8x8x8xbf16>
    %216 = tpu.transpose %209, [1, 0] : vector<16x32xf32> -> vector<32x16xf32>
    %217 = vector.shape_cast %216 : vector<32x16xf32> to vector<4x8x16xf32>
    %218 = tpu.transpose %217, [0, 2, 1] : vector<4x8x16xf32> -> vector<4x16x8xf32>
    %219 = vector.shape_cast %218 : vector<4x16x8xf32> to vector<8x8x8xf32>
    %220 = arith.truncf %219 : vector<8x8x8xf32> to vector<8x8x8xbf16>
    %221 = tpu.transpose %210, [1, 0] : vector<16x32xf32> -> vector<32x16xf32>
    %222 = vector.shape_cast %221 : vector<32x16xf32> to vector<4x8x16xf32>
    %223 = tpu.transpose %222, [0, 2, 1] : vector<4x8x16xf32> -> vector<4x16x8xf32>
    %224 = vector.shape_cast %223 : vector<4x16x8xf32> to vector<8x8x8xf32>
    %225 = arith.truncf %224 : vector<8x8x8xf32> to vector<8x8x8xbf16>
    "tpu.trace_start"() <{level = 10 : i32, message = "bqd,bkd->bqk"}> : () -> ()
    %cst_66 = arith.constant dense<0.000000e+00> : vector<8x8x8xf32>
    %226 = tpu.matmul %215, %220, %cst_66 {dimension_numbers = #tpu.dot_dimension_numbers<[2], [2], [1], [1], [0, 0, 0, 1, 1, 1], [0], [0]>} : vector<8x8x8xbf16>, vector<8x8x8xbf16>, vector<8x8x8xf32> -> vector<8x8x8xf32>
    "tpu.trace_stop"() : () -> ()
    %227 = arith.addf %226, %7 : vector<8x8x8xf32>
    %cst_67 = arith.constant dense<0xFF800000> : vector<8x8xf32>
    %228 = vector.multi_reduction <maximumf>, %227, %cst_67 [2] : vector<8x8x8xf32> to vector<8x8xf32>
    %229 = vector.shape_cast %228 : vector<8x8xf32> to vector<8x8x1xf32>
    %230 = vector.broadcast %229 : vector<8x8x1xf32> to vector<8x8x8xf32>
    %231 = arith.subf %227, %230 : vector<8x8x8xf32>
    %232 = math.exp %231 : vector<8x8x8xf32>
    %cst_68 = arith.constant dense<0.000000e+00> : vector<8x8xf32>
    %233 = vector.multi_reduction <add>, %232, %cst_68 [2] : vector<8x8x8xf32> to vector<8x8xf32>
    %234 = vector.shape_cast %233 : vector<8x8xf32> to vector<8x8x1xf32>
    %235 = tpu.reciprocal %234 {approx = true} : vector<8x8x1xf32> -> vector<8x8x1xf32>
    %236 = vector.broadcast %235 : vector<8x8x1xf32> to vector<8x8x8xf32>
    %237 = arith.mulf %232, %236 : vector<8x8x8xf32>
    %238 = arith.truncf %237 : vector<8x8x8xf32> to vector<8x8x8xbf16>
    "tpu.trace_start"() <{level = 10 : i32, message = "bqk,bkd->bqd"}> : () -> ()
    %cst_69 = arith.constant dense<0.000000e+00> : vector<8x8x8xf32>
    %239 = tpu.matmul %238, %225, %cst_69 {dimension_numbers = #tpu.dot_dimension_numbers<[2], [1], [1], [2], [0, 0, 0, 1, 1, 2], [0], [0]>} : vector<8x8x8xbf16>, vector<8x8x8xbf16>, vector<8x8x8xf32> -> vector<8x8x8xf32>
    "tpu.trace_stop"() : () -> ()
    %240 = vector.shape_cast %239 : vector<8x8x8xf32> to vector<4x16x8xf32>
    %241 = tpu.transpose %240, [0, 2, 1] : vector<4x16x8xf32> -> vector<4x8x16xf32>
    %242 = vector.shape_cast %241 : vector<4x8x16xf32> to vector<32x16xf32>
    %243 = tpu.transpose %242, [1, 0] : vector<32x16xf32> -> vector<16x32xf32>
    %244 = arith.truncf %243 : vector<16x32xf32> to vector<16x32xbf16>
    %c256 = arith.constant 256 : index
    %c0_70 = arith.constant 0 : index
    %245 = vector.load %arg5[%c256, %c0_70] : memref<480x128xbf16, #tpu.memory_space<vmem>>, vector<32x32xbf16>
    %cst_71 = arith.constant dense<0.000000e+00> : vector<16x32xf32>
    %246 = tpu.matmul %244, %245, %cst_71 {dimension_numbers = #tpu.dot_dimension_numbers<[1], [0], [0], [1], [0, 0, 1, 1], [], []>} : vector<16x32xbf16>, vector<32x32xbf16>, vector<16x32xf32> -> vector<16x32xf32>
    %c13 = arith.constant 13 : index
    %c0_72 = arith.constant 0 : index
    %247 = vector.load %arg6[%c13, %c0_72] : memref<32x128xf32, #tpu.memory_space<vmem>>, vector<1x32xf32>
    %248 = vector.broadcast %247 : vector<1x32xf32> to vector<16x32xf32>
    %249 = arith.addf %246, %248 : vector<16x32xf32>
    %250 = arith.addf %201, %249 : vector<16x32xf32>
    %cst_73 = arith.constant dense<0.000000e+00> : vector<16xf32>
    %251 = vector.multi_reduction <add>, %250, %cst_73 [1] : vector<16x32xf32> to vector<16xf32>
    %252 = vector.shape_cast %251 : vector<16xf32> to vector<16x1xf32>
    %cst_74 = arith.constant 3.200000e+01 : f32
    %253 = vector.broadcast %cst_74 : f32 to vector<16x1xf32>
    %254 = arith.divf %252, %253 : vector<16x1xf32>
    %255 = vector.broadcast %254 : vector<16x1xf32> to vector<16x32xf32>
    %256 = arith.subf %250, %255 : vector<16x32xf32>
    %257 = arith.mulf %256, %256 : vector<16x32xf32>
    %cst_75 = arith.constant dense<0.000000e+00> : vector<16xf32>
    %258 = vector.multi_reduction <add>, %257, %cst_75 [1] : vector<16x32xf32> to vector<16xf32>
    %259 = vector.shape_cast %258 : vector<16xf32> to vector<16x1xf32>
    %cst_76 = arith.constant 3.200000e+01 : f32
    %260 = vector.broadcast %cst_76 : f32 to vector<16x1xf32>
    %261 = arith.divf %259, %260 : vector<16x1xf32>
    %262 = vector.broadcast %254 : vector<16x1xf32> to vector<16x32xf32>
    %263 = arith.subf %250, %262 : vector<16x32xf32>
    %cst_77 = arith.constant 9.99999974E-6 : f32
    %264 = vector.broadcast %cst_77 : f32 to vector<16x1xf32>
    %265 = arith.addf %261, %264 : vector<16x1xf32>
    %266 = math.rsqrt %265 : vector<16x1xf32>
    %267 = vector.broadcast %266 : vector<16x1xf32> to vector<16x32xf32>
    %268 = arith.mulf %263, %267 : vector<16x32xf32>
    %c18 = arith.constant 18 : index
    %c0_78 = arith.constant 0 : index
    %269 = vector.load %arg6[%c18, %c0_78] : memref<32x128xf32, #tpu.memory_space<vmem>>, vector<1x32xf32>
    %270 = vector.broadcast %269 : vector<1x32xf32> to vector<16x32xf32>
    %271 = arith.mulf %268, %270 : vector<16x32xf32>
    %c19 = arith.constant 19 : index
    %c0_79 = arith.constant 0 : index
    %272 = vector.load %arg6[%c19, %c0_79] : memref<32x128xf32, #tpu.memory_space<vmem>>, vector<1x32xf32>
    %273 = vector.broadcast %272 : vector<1x32xf32> to vector<16x32xf32>
    %274 = arith.addf %271, %273 : vector<16x32xf32>
    %275 = arith.truncf %274 : vector<16x32xf32> to vector<16x32xbf16>
    %c288 = arith.constant 288 : index
    %c0_80 = arith.constant 0 : index
    %276 = vector.load %arg5[%c288, %c0_80] : memref<480x128xbf16, #tpu.memory_space<vmem>>, vector<32x32xbf16>
    %cst_81 = arith.constant dense<0.000000e+00> : vector<16x32xf32>
    %277 = tpu.matmul %275, %276, %cst_81 {dimension_numbers = #tpu.dot_dimension_numbers<[1], [0], [0], [1], [0, 0, 1, 1], [], []>} : vector<16x32xbf16>, vector<32x32xbf16>, vector<16x32xf32> -> vector<16x32xf32>
    %c14 = arith.constant 14 : index
    %c0_82 = arith.constant 0 : index
    %278 = vector.load %arg6[%c14, %c0_82] : memref<32x128xf32, #tpu.memory_space<vmem>>, vector<1x32xf32>
    %279 = vector.broadcast %278 : vector<1x32xf32> to vector<16x32xf32>
    %280 = arith.addf %277, %279 : vector<16x32xf32>
    %c288_83 = arith.constant 288 : index
    %c32_84 = arith.constant 32 : index
    %281 = vector.load %arg5[%c288_83, %c32_84] : memref<480x128xbf16, #tpu.memory_space<vmem>>, vector<32x64xbf16>
    %cst_85 = arith.constant dense<0.000000e+00> : vector<32x64xf32>
    %282 = tpu.matmul %2, %281, %cst_85 {dimension_numbers = #tpu.dot_dimension_numbers<[1], [0], [0], [1], [0, 0, 1, 1], [], []>} : vector<32x32xbf16>, vector<32x64xbf16>, vector<32x64xf32> -> vector<32x64xf32>
    %c14_86 = arith.constant 14 : index
    %c32_87 = arith.constant 32 : index
    %283 = vector.load %arg6[%c14_86, %c32_87] : memref<32x128xf32, #tpu.memory_space<vmem>>, vector<1x64xf32>
    %284 = vector.broadcast %283 : vector<1x64xf32> to vector<32x64xf32>
    %285 = arith.addf %282, %284 : vector<32x64xf32>
    %286 = vector.extract_strided_slice %285 {offsets = [0, 0], sizes = [32, 32], strides = [1, 1]} : vector<32x64xf32> to vector<32x32xf32>
    %287 = vector.extract_strided_slice %285 {offsets = [0, 32], sizes = [32, 32], strides = [1, 1]} : vector<32x64xf32> to vector<32x32xf32>
    %288 = tpu.transpose %280, [1, 0] : vector<16x32xf32> -> vector<32x16xf32>
    %289 = vector.shape_cast %288 : vector<32x16xf32> to vector<4x8x16xf32>
    %290 = tpu.transpose %289, [0, 2, 1] : vector<4x8x16xf32> -> vector<4x16x8xf32>
    %291 = vector.shape_cast %290 : vector<4x16x8xf32> to vector<8x8x8xf32>
    %292 = arith.truncf %291 : vector<8x8x8xf32> to vector<8x8x8xbf16>
    %293 = tpu.transpose %286, [1, 0] : vector<32x32xf32> -> vector<32x32xf32>
    %294 = vector.shape_cast %293 : vector<32x32xf32> to vector<4x8x32xf32>
    %295 = tpu.transpose %294, [0, 2, 1] : vector<4x8x32xf32> -> vector<4x32x8xf32>
    %296 = vector.shape_cast %295 : vector<4x32x8xf32> to vector<8x16x8xf32>
    %297 = arith.truncf %296 : vector<8x16x8xf32> to vector<8x16x8xbf16>
    %298 = tpu.transpose %287, [1, 0] : vector<32x32xf32> -> vector<32x32xf32>
    %299 = vector.shape_cast %298 : vector<32x32xf32> to vector<4x8x32xf32>
    %300 = tpu.transpose %299, [0, 2, 1] : vector<4x8x32xf32> -> vector<4x32x8xf32>
    %301 = vector.shape_cast %300 : vector<4x32x8xf32> to vector<8x16x8xf32>
    %302 = arith.truncf %301 : vector<8x16x8xf32> to vector<8x16x8xbf16>
    "tpu.trace_start"() <{level = 10 : i32, message = "bqd,bkd->bqk"}> : () -> ()
    %cst_88 = arith.constant dense<0.000000e+00> : vector<8x8x16xf32>
    %303 = tpu.matmul %292, %297, %cst_88 {dimension_numbers = #tpu.dot_dimension_numbers<[2], [2], [1], [1], [0, 0, 0, 1, 1, 1], [0], [0]>} : vector<8x8x8xbf16>, vector<8x16x8xbf16>, vector<8x8x16xf32> -> vector<8x8x16xf32>
    "tpu.trace_stop"() : () -> ()
    %304 = arith.addf %303, %12 : vector<8x8x16xf32>
    %cst_89 = arith.constant dense<0xFF800000> : vector<8x8xf32>
    %305 = vector.multi_reduction <maximumf>, %304, %cst_89 [2] : vector<8x8x16xf32> to vector<8x8xf32>
    %306 = vector.shape_cast %305 : vector<8x8xf32> to vector<8x8x1xf32>
    %307 = vector.broadcast %306 : vector<8x8x1xf32> to vector<8x8x16xf32>
    %308 = arith.subf %304, %307 : vector<8x8x16xf32>
    %309 = math.exp %308 : vector<8x8x16xf32>
    %cst_90 = arith.constant dense<0.000000e+00> : vector<8x8xf32>
    %310 = vector.multi_reduction <add>, %309, %cst_90 [2] : vector<8x8x16xf32> to vector<8x8xf32>
    %311 = vector.shape_cast %310 : vector<8x8xf32> to vector<8x8x1xf32>
    %312 = tpu.reciprocal %311 {approx = true} : vector<8x8x1xf32> -> vector<8x8x1xf32>
    %313 = vector.broadcast %312 : vector<8x8x1xf32> to vector<8x8x16xf32>
    %314 = arith.mulf %309, %313 : vector<8x8x16xf32>
    %315 = vector.shape_cast %314 : vector<8x8x16xf32> to vector<4x2x8x16xf32>
    %316 = tpu.transpose %315, [1, 0, 2, 3] : vector<4x2x8x16xf32> -> vector<2x4x8x16xf32>
    %c0_91 = arith.constant 0 : index
    %c0_92 = arith.constant 0 : index
    %c0_93 = arith.constant 0 : index
    %c0_94 = arith.constant 0 : index
    %317 = vector.load %arg8[%c0_91, %c0_92, %c0_93, %c0_94] : memref<2x4x8x16xf32, #tpu.memory_space<vmem>>, vector<2x4x8x16xf32>
    tpu.vector_store %arg8[%c0_91, %c0_92, %c0_93, %c0_94], %316 {strides = array<i32>} : memref<2x4x8x16xf32, #tpu.memory_space<vmem>>, vector<2x4x8x16xf32>,
    %318 = arith.truncf %314 : vector<8x8x16xf32> to vector<8x8x16xbf16>
    "tpu.trace_start"() <{level = 10 : i32, message = "bqk,bkd->bqd"}> : () -> ()
    %cst_95 = arith.constant dense<0.000000e+00> : vector<8x8x8xf32>
    %319 = tpu.matmul %318, %302, %cst_95 {dimension_numbers = #tpu.dot_dimension_numbers<[2], [1], [1], [2], [0, 0, 0, 1, 1, 2], [0], [0]>} : vector<8x8x16xbf16>, vector<8x16x8xbf16>, vector<8x8x8xf32> -> vector<8x8x8xf32>
    "tpu.trace_stop"() : () -> ()
    %320 = vector.shape_cast %319 : vector<8x8x8xf32> to vector<4x16x8xf32>
    %321 = tpu.transpose %320, [0, 2, 1] : vector<4x16x8xf32> -> vector<4x8x16xf32>
    %322 = vector.shape_cast %321 : vector<4x8x16xf32> to vector<32x16xf32>
    %323 = tpu.transpose %322, [1, 0] : vector<32x16xf32> -> vector<16x32xf32>
    %324 = arith.truncf %323 : vector<16x32xf32> to vector<16x32xbf16>
    %c320 = arith.constant 320 : index
    %c0_96 = arith.constant 0 : index
    %325 = vector.load %arg5[%c320, %c0_96] : memref<480x128xbf16, #tpu.memory_space<vmem>>, vector<32x32xbf16>
    %cst_97 = arith.constant dense<0.000000e+00> : vector<16x32xf32>
    %326 = tpu.matmul %324, %325, %cst_97 {dimension_numbers = #tpu.dot_dimension_numbers<[1], [0], [0], [1], [0, 0, 1, 1], [], []>} : vector<16x32xbf16>, vector<32x32xbf16>, vector<16x32xf32> -> vector<16x32xf32>
    %c15 = arith.constant 15 : index
    %c0_98 = arith.constant 0 : index
    %327 = vector.load %arg6[%c15, %c0_98] : memref<32x128xf32, #tpu.memory_space<vmem>>, vector<1x32xf32>
    %328 = vector.broadcast %327 : vector<1x32xf32> to vector<16x32xf32>
    %329 = arith.addf %326, %328 : vector<16x32xf32>
    %330 = arith.addf %274, %329 : vector<16x32xf32>
    %cst_99 = arith.constant dense<0.000000e+00> : vector<16xf32>
    %331 = vector.multi_reduction <add>, %330, %cst_99 [1] : vector<16x32xf32> to vector<16xf32>
    %332 = vector.shape_cast %331 : vector<16xf32> to vector<16x1xf32>
    %cst_100 = arith.constant 3.200000e+01 : f32
    %333 = vector.broadcast %cst_100 : f32 to vector<16x1xf32>
    %334 = arith.divf %332, %333 : vector<16x1xf32>
    %335 = vector.broadcast %334 : vector<16x1xf32> to vector<16x32xf32>
    %336 = arith.subf %330, %335 : vector<16x32xf32>
    %337 = arith.mulf %336, %336 : vector<16x32xf32>
    %cst_101 = arith.constant dense<0.000000e+00> : vector<16xf32>
    %338 = vector.multi_reduction <add>, %337, %cst_101 [1] : vector<16x32xf32> to vector<16xf32>
    %339 = vector.shape_cast %338 : vector<16xf32> to vector<16x1xf32>
    %cst_102 = arith.constant 3.200000e+01 : f32
    %340 = vector.broadcast %cst_102 : f32 to vector<16x1xf32>
    %341 = arith.divf %339, %340 : vector<16x1xf32>
    %342 = vector.broadcast %334 : vector<16x1xf32> to vector<16x32xf32>
    %343 = arith.subf %330, %342 : vector<16x32xf32>
    %cst_103 = arith.constant 9.99999974E-6 : f32
    %344 = vector.broadcast %cst_103 : f32 to vector<16x1xf32>
    %345 = arith.addf %341, %344 : vector<16x1xf32>
    %346 = math.rsqrt %345 : vector<16x1xf32>
    %347 = vector.broadcast %346 : vector<16x1xf32> to vector<16x32xf32>
    %348 = arith.mulf %343, %347 : vector<16x32xf32>
    %c20 = arith.constant 20 : index
    %c0_104 = arith.constant 0 : index
    %349 = vector.load %arg6[%c20, %c0_104] : memref<32x128xf32, #tpu.memory_space<vmem>>, vector<1x32xf32>
    %350 = vector.broadcast %349 : vector<1x32xf32> to vector<16x32xf32>
    %351 = arith.mulf %348, %350 : vector<16x32xf32>
    %c21 = arith.constant 21 : index
    %c0_105 = arith.constant 0 : index
    %352 = vector.load %arg6[%c21, %c0_105] : memref<32x128xf32, #tpu.memory_space<vmem>>, vector<1x32xf32>
    %353 = vector.broadcast %352 : vector<1x32xf32> to vector<16x32xf32>
    %354 = arith.addf %351, %353 : vector<16x32xf32>
    %355 = arith.truncf %354 : vector<16x32xf32> to vector<16x32xbf16>
    %c352 = arith.constant 352 : index
    %c0_106 = arith.constant 0 : index
    %356 = vector.load %arg5[%c352, %c0_106] : memref<480x128xbf16, #tpu.memory_space<vmem>>, vector<32x64xbf16>
    %cst_107 = arith.constant dense<0.000000e+00> : vector<16x64xf32>
    %357 = tpu.matmul %355, %356, %cst_107 {dimension_numbers = #tpu.dot_dimension_numbers<[1], [0], [0], [1], [0, 0, 1, 1], [], []>} : vector<16x32xbf16>, vector<32x64xbf16>, vector<16x64xf32> -> vector<16x64xf32>
    %c16 = arith.constant 16 : index
    %c0_108 = arith.constant 0 : index
    %358 = vector.load %arg6[%c16, %c0_108] : memref<32x128xf32, #tpu.memory_space<vmem>>, vector<1x64xf32>
    %359 = vector.broadcast %358 : vector<1x64xf32> to vector<16x64xf32>
    %360 = arith.addf %357, %359 : vector<16x64xf32>
    %cst_109 = arith.constant 0.000000e+00 : f32
    %361 = vector.broadcast %cst_109 : f32 to vector<16x64xf32>
    %362 = arith.maximumf %360, %361 : vector<16x64xf32>
    %363 = arith.truncf %362 : vector<16x64xf32> to vector<16x64xbf16>
    %c384 = arith.constant 384 : index
    %c0_110 = arith.constant 0 : index
    %364 = vector.load %arg5[%c384, %c0_110] : memref<480x128xbf16, #tpu.memory_space<vmem>>, vector<64x32xbf16>
    %cst_111 = arith.constant dense<0.000000e+00> : vector<16x32xf32>
    %365 = tpu.matmul %363, %364, %cst_111 {dimension_numbers = #tpu.dot_dimension_numbers<[1], [0], [0], [1], [0, 0, 1, 1], [], []>} : vector<16x64xbf16>, vector<64x32xbf16>, vector<16x32xf32> -> vector<16x32xf32>
    %c17 = arith.constant 17 : index
    %c0_112 = arith.constant 0 : index
    %366 = vector.load %arg6[%c17, %c0_112] : memref<32x128xf32, #tpu.memory_space<vmem>>, vector<1x32xf32>
    %367 = vector.broadcast %366 : vector<1x32xf32> to vector<16x32xf32>
    %368 = arith.addf %365, %367 : vector<16x32xf32>
    %369 = arith.addf %354, %368 : vector<16x32xf32>
    %cst_113 = arith.constant dense<0.000000e+00> : vector<16xf32>
    %370 = vector.multi_reduction <add>, %369, %cst_113 [1] : vector<16x32xf32> to vector<16xf32>
    %371 = vector.shape_cast %370 : vector<16xf32> to vector<16x1xf32>
    %cst_114 = arith.constant 3.200000e+01 : f32
    %372 = vector.broadcast %cst_114 : f32 to vector<16x1xf32>
    %373 = arith.divf %371, %372 : vector<16x1xf32>
    %374 = vector.broadcast %373 : vector<16x1xf32> to vector<16x32xf32>
    %375 = arith.subf %369, %374 : vector<16x32xf32>
    %376 = arith.mulf %375, %375 : vector<16x32xf32>
    %cst_115 = arith.constant dense<0.000000e+00> : vector<16xf32>
    %377 = vector.multi_reduction <add>, %376, %cst_115 [1] : vector<16x32xf32> to vector<16xf32>
    %378 = vector.shape_cast %377 : vector<16xf32> to vector<16x1xf32>
    %cst_116 = arith.constant 3.200000e+01 : f32
    %379 = vector.broadcast %cst_116 : f32 to vector<16x1xf32>
    %380 = arith.divf %378, %379 : vector<16x1xf32>
    %381 = vector.broadcast %373 : vector<16x1xf32> to vector<16x32xf32>
    %382 = arith.subf %369, %381 : vector<16x32xf32>
    %cst_117 = arith.constant 9.99999974E-6 : f32
    %383 = vector.broadcast %cst_117 : f32 to vector<16x1xf32>
    %384 = arith.addf %380, %383 : vector<16x1xf32>
    %385 = math.rsqrt %384 : vector<16x1xf32>
    %386 = vector.broadcast %385 : vector<16x1xf32> to vector<16x32xf32>
    %387 = arith.mulf %382, %386 : vector<16x32xf32>
    %c22 = arith.constant 22 : index
    %c0_118 = arith.constant 0 : index
    %388 = vector.load %arg6[%c22, %c0_118] : memref<32x128xf32, #tpu.memory_space<vmem>>, vector<1x32xf32>
    %389 = vector.broadcast %388 : vector<1x32xf32> to vector<16x32xf32>
    %390 = arith.mulf %387, %389 : vector<16x32xf32>
    %c23 = arith.constant 23 : index
    %c0_119 = arith.constant 0 : index
    %391 = vector.load %arg6[%c23, %c0_119] : memref<32x128xf32, #tpu.memory_space<vmem>>, vector<1x32xf32>
    %392 = vector.broadcast %391 : vector<1x32xf32> to vector<16x32xf32>
    %393 = arith.addf %390, %392 : vector<16x32xf32>
    %394 = arith.truncf %393 : vector<16x32xf32> to vector<16x32xbf16>
    %c448 = arith.constant 448 : index
    %c0_120 = arith.constant 0 : index
    %395 = vector.load %arg5[%c448, %c0_120] : memref<480x128xbf16, #tpu.memory_space<vmem>>, vector<32x32xbf16>
    %cst_121 = arith.constant dense<0.000000e+00> : vector<16x32xf32>
    %396 = tpu.matmul %394, %395, %cst_121 {dimension_numbers = #tpu.dot_dimension_numbers<[1], [0], [0], [1], [0, 0, 1, 1], [], []>} : vector<16x32xbf16>, vector<32x32xbf16>, vector<16x32xf32> -> vector<16x32xf32>
    %c24 = arith.constant 24 : index
    %c0_122 = arith.constant 0 : index
    %397 = vector.load %arg6[%c24, %c0_122] : memref<32x128xf32, #tpu.memory_space<vmem>>, vector<1x32xf32>
    %398 = vector.broadcast %397 : vector<1x32xf32> to vector<16x32xf32>
    %399 = arith.addf %396, %398 : vector<16x32xf32>
    %c0_123 = arith.constant 0 : index
    %c0_124 = arith.constant 0 : index
    %400 = vector.load %arg7[%c0_123, %c0_124] : memref<16x32xf32, #tpu.memory_space<vmem>>, vector<16x32xf32>
    tpu.vector_store %arg7[%c0_123, %c0_124], %399 {strides = array<i32>} : memref<16x32xf32, #tpu.memory_space<vmem>>, vector<16x32xf32>,
    return
  }
  func.func @transform_0(%arg0: i32) -> (i32, i32) {
    %c0_i32 = arith.constant 0 : i32
    %c0_i32_0 = arith.constant 0 : i32
    %c0_i32_1 = arith.constant 0 : i32
    return %c0_i32, %c0_i32_0 : i32, i32
  }
  func.func @transform_1(%arg0: i32) -> (i32, i32) {
    %c0_i32 = arith.constant 0 : i32
    %c0_i32_0 = arith.constant 0 : i32
    %c0_i32_1 = arith.constant 0 : i32
    return %c0_i32, %c0_i32_0 : i32, i32
  }
  func.func @transform_2(%arg0: i32) -> (i32, i32, i32) {
    %c0_i32 = arith.constant 0 : i32
    %c0_i32_0 = arith.constant 0 : i32
    %c0_i32_1 = arith.constant 0 : i32
    %c0_i32_2 = arith.constant 0 : i32
    return %c0_i32, %c0_i32_0, %c0_i32_1 : i32, i32, i32
  }
  func.func @transform_3(%arg0: i32) -> (i32, i32, i32) {
    %c0_i32 = arith.constant 0 : i32
    %c0_i32_0 = arith.constant 0 : i32
    %c0_i32_1 = arith.constant 0 : i32
    %c0_i32_2 = arith.constant 0 : i32
    return %c0_i32, %c0_i32_0, %c0_i32_1 : i32, i32, i32
  }
  func.func @transform_4(%arg0: i32) -> (i32, i32) {
    %c0_i32 = arith.constant 0 : i32
    %c0_i32_0 = arith.constant 0 : i32
    %c0_i32_1 = arith.constant 0 : i32
    return %c0_i32, %c0_i32_0 : i32, i32
  }
  func.func @transform_5(%arg0: i32) -> (i32, i32) {
    %c0_i32 = arith.constant 0 : i32
    %c0_i32_0 = arith.constant 0 : i32
    %c0_i32_1 = arith.constant 0 : i32
    return %c0_i32, %c0_i32_0 : i32, i32
  }
  func.func @transform_6(%arg0: i32) -> (i32, i32) {
    %c0_i32 = arith.constant 0 : i32
    %c0_i32_0 = arith.constant 0 : i32
    %c0_i32_1 = arith.constant 0 : i32
    return %c0_i32, %c0_i32_0 : i32, i32
  }
  func.func @transform_7(%arg0: i32) -> (i32, i32, i32, i32) {
    %c0_i32 = arith.constant 0 : i32
    %c0_i32_0 = arith.constant 0 : i32
    %c0_i32_1 = arith.constant 0 : i32
    %c0_i32_2 = arith.constant 0 : i32
    %c0_i32_3 = arith.constant 0 : i32
    return %c0_i32, %c0_i32_0, %c0_i32_1, %c0_i32_2 : i32, i32, i32, i32
  }
}

</mosaic_0001>

<llo_original>
// kernel: decoder_forward.1
$region0: #{decoder_forward.1}
  #allocation0 [shape = 'u32[]', space=smem, size = 0x4, offset = 0x4, fixed_abs, tag = 'smem constant byte address 0x4 - core index']
  #allocation1 [shape = 'u32[144,128]{1,0:T(1,128)}', space=vmem, size = 0x12000, scoped, tag = 'internal scratch']
  %s0 = inlined_call_operand.vmem [shape: f32[16,32], index: 0, kind: input, shape index: {}]
  %s1 = inlined_call_operand.vmem [shape: f32[32,32], index: 1, kind: input, shape index: {}]
  %s2 = inlined_call_operand.vmem [shape: f32[2,8,8], index: 2, kind: input, shape index: {}]
  %s3 = inlined_call_operand.vmem [shape: f32[2,8,16], index: 3, kind: input, shape index: {}]
  %s4 = inlined_call_operand.vmem [shape: bf16[480,128], index: 4, kind: input, shape index: {}]
  %s5 = inlined_call_operand.vmem [shape: f32[32,128], index: 5, kind: input, shape index: {}]
  %s6 = inlined_call_operand.hbm [shape: f32[16,32], index: 6, kind: output, shape index: {0}]
  %s7 = inlined_call_operand.hbm [shape: f32[2,4,8,16], index: 7, kind: output, shape index: {1}]
  %8 = xla_tuple %s6, %s7
  %s9 = sld [smem:[#allocation0]]
  $region42: #{decoder_forward.1} parent=0
    _
  %s11 = ssub.s32 1, %s9
  %s12 = scalar_select 0, %s11, %s9
  $region1: #{decoder_forward.1} parent=0
    #allocation2 [shape = 'u8[8192]{0}', space=vmem, size = 0x2000, scoped, tag = 'output window, operand 0, single buffered']
    #allocation3 [shape = 's32[1]{0}', space=sflag, size = 0x4, scoped, tag = 'scoped memory for decoder_forward.1']
    #allocation4 [shape = 'u8[32768]{0}', space=vmem, size = 0x8000, scoped, tag = 'output window, operand 1, single buffered']
    #allocation5 [shape = 's32[1]{0}', space=sflag, size = 0x4, scoped, tag = 'scoped memory for decoder_forward.1']
    %13 = vsyncpa [#allocation3], 0
    %14 = vsyncpa [#allocation5], 0
    // Predicated region
    $region2: #{decoder_forward.1} parent=1 // pred_check
      _
    $region3: #{decoder_forward.1} parent=1 // pred_check_branch
      %16 = sbr.rel (0) target = $region5
    $region4: #{decoder_forward.1} parent=1 // pred_region
      _
    $region5: #{decoder_forward.1} parent=1 // pred_fallthru
      _
    // Predicated region
    $region6: #{decoder_forward.1} parent=1 // pred_check
      _
    $region7: #{decoder_forward.1} parent=1 // pred_check_branch
      %18 = sbr.rel (0) target = $region9
    $region8: #{decoder_forward.1} parent=1 // pred_region
      _
    $region9: #{decoder_forward.1} parent=1 // pred_fallthru
      _
    // Predicated region
    $region10: #{decoder_forward.1} parent=1 // pred_check
      _
    $region11: #{decoder_forward.1} parent=1 // pred_check_branch
      %20 = sbr.rel (0) target = $region13
    $region12: #{decoder_forward.1} parent=1 // pred_region
      _
    $region13: #{decoder_forward.1} parent=1 // pred_fallthru
      _
    // Predicated region
    $region14: #{decoder_forward.1} parent=1 // pred_check
      _
    $region15: #{decoder_forward.1} parent=1 // pred_check_branch
      %22 = sbr.rel (0) target = $region17
    $region16: #{decoder_forward.1} parent=1 // pred_region
      _
    $region17: #{decoder_forward.1} parent=1 // pred_fallthru
      _
    // Predicated region
    $region18: #{decoder_forward.1} parent=1 // pred_check
      _
    $region19: #{decoder_forward.1} parent=1 // pred_check_branch
      %24 = sbr.rel (0) target = $region21
    $region20: #{decoder_forward.1} parent=1 // pred_region
      _
    $region21: #{decoder_forward.1} parent=1 // pred_fallthru
      _
    // Predicated region
    $region22: #{decoder_forward.1} parent=1 // pred_check
      _
    $region23: #{decoder_forward.1} parent=1 // pred_check_branch
      %26 = sbr.rel (0) target = $region25
    $region24: #{decoder_forward.1} parent=1 // pred_region
      _
    $region25: #{decoder_forward.1} parent=1 // pred_fallthru
      _
    %v28 = vld [vmem:[%s0] sm:$0xff]
    %v29 = vld [vmem:[%s0 + $0x8] sm:$0xff]
    %v30 = vld [vmem:[%s1] sm:$0xff]
    %v31 = vld [vmem:[%s1 + $0x8] sm:$0xff]
    %v32 = vld [vmem:[%s1 + $0x10] sm:$0xff]
    %v33 = vld [vmem:[%s1 + $0x18] sm:$0xff]
    %v34 = vpack.c.bf16 %v31, %v30
    %v35 = vpack.c.bf16 %v33, %v32
    %v36 = vld [vmem:[%s2] sm:$0xff]
    %v37 = vld [vmem:[%s2 + $0x8] sm:$0xff]
    %v38 = vld [vmem:[%s3] sm:$0xff]
    %v39 = vld [vmem:[%s3 + $0x8] sm:$0xff]
    %v40 = vpack.c.bf16 %v29, %v28
    %v41 = vld [vmem:[%s4] sm:$0xf]
    %v42 = vld [vmem:[%s4 + $0x4] sm:$0xf]
    %v43 = vld [vmem:[%s4 + $0x8] sm:$0xf]
    %v44 = vld [vmem:[%s4 + $0xc] sm:$0xf]
    %v45 = vld [vmem:[%s5] sm:$0x1]
    %v46 = vlaneseq
    %v47 = vshrl.u32 %v46, 7
    %v48 = vsub.s32 0, %v47
    %v49 = vrot.slane %v45, %v48
    %v54 = vunpack.c.l.b16 %v41
    %v55 = vunpack.c.l.b16 %v42
    %v56 = vunpack.c.l.b16 %v43
    %v57 = vunpack.c.l.b16 %v44
    %v58 = vpack.c.b16 %v55, %v54
    %v59 = vpack.c.b16 %v57, %v56
    %vm62 = vcmask 261120
    %v64 = vsel %vm62, %v40, 0
    %66 = vmatprep.subr.bf16.mxu0 0
    %67 = vmatpush1.bf16.msra.mxu0 %v58
    %68 = vmatprep.subr.bf16.mxu0 0
    %69 = vmatpush1.bf16.msra.mxu0 %v59
    %70 = vmatprep.subr.bf16.mxu0 0
    %71 = vmatpush1.bf16.msra.mxu0 0
    %72 = vmatprep.subr.bf16.mxu0 0
    %73 = vmatpush1.bf16.msra.mxu0 0
    %74 = vmatprep.subr.bf16.mxu0 0
    %75 = vmatpush1.bf16.msra.mxu0 0
    %76 = vmatprep.subr.bf16.mxu0 0
    %77 = vmatpush1.bf16.msra.mxu0 0
    %78 = vmatprep.subr.bf16.mxu0 0
    %79 = vmatpush1.bf16.msra.mxu0 0
    %80 = vmatprep.subr.bf16.mxu0 0
    %81 = vmatpush1.bf16.msra.mxu0 0
    %82 = vmatprep.subr.bf16.mxu0 0
    %83 = vmatpush1.bf16.msra.mxu0 0
    %84 = vmatprep.subr.bf16.mxu0 0
    %85 = vmatpush1.bf16.msra.mxu0 0
    %86 = vmatprep.subr.bf16.mxu0 0
    %87 = vmatpush1.bf16.msra.mxu0 0
    %88 = vmatprep.subr.bf16.mxu0 0
    %89 = vmatpush1.bf16.msra.mxu0 0
    %90 = vmatprep.subr.bf16.mxu0 0
    %91 = vmatpush1.bf16.msra.mxu0 0
    %92 = vmatprep.subr.bf16.mxu0 0
    %93 = vmatpush1.bf16.msra.mxu0 0
    %94 = vmatprep.subr.bf16.mxu0 0
    %95 = vmatpush1.bf16.msra.mxu0 0
    %96 = vmatprep.subr.bf16.mxu0 0
    %97 = vmatpush1.bf16.msra.mxu0 0
    %98 = vmatprep.mubr.bf16.mxu0 0
    %99 = vmatmul.mubr.bf16.gmra.mrb[0].mxu0 %v64
    %v100 = vpop.f32.mrb[0].mxu0
    %v101 = vadd.f32 %v49, %v100
    %v102 = vpop.f32.mrb[0].mxu0
    %v103 = vpop.f32.mrb[0].mxu0
    %v104 = vadd.f32 %v49, %v103
    %v105 = vpop.f32.mrb[0].mxu0
    %106 = vdwg.mxu0
    %107 = vxpose.xlu0.b32.start [1/16] %v101, 128
    %108 = vxpose.xlu0.b32.cont [2/16] %v104, 128
    %109 = vxpose.xlu0.b32.cont [3/16] 0.0, 128
    %110 = vxpose.xlu0.b32.cont [4/16] 0.0, 128
    %111 = vxpose.xlu0.b32.cont [5/16] 0.0, 128
    %112 = vxpose.xlu0.b32.cont [6/16] 0.0, 128
    %113 = vxpose.xlu0.b32.cont [7/16] 0.0, 128
    %114 = vxpose.xlu0.b32.cont [8/16] 0.0, 128
    %115 = vxpose.xlu0.b32.cont [9/16] 0.0, 128
    %116 = vxpose.xlu0.b32.cont [10/16] 0.0, 128
    %117 = vxpose.xlu0.b32.cont [11/16] 0.0, 128
    %118 = vxpose.xlu0.b32.cont [12/16] 0.0, 128
    %119 = vxpose.xlu0.b32.cont [13/16] 0.0, 128
    %120 = vxpose.xlu0.b32.cont [14/16] 0.0, 128
    %121 = vxpose.xlu0.b32.cont [15/16] 0.0, 128
    %122 = vxpose.xlu0.b32.end [16/16] 0.0, 128
    %v123 = vpop.trf.xlu0
    %v124 = vpop.trf.xlu0
    %v125 = vpop.trf.xlu0
    %v126 = vpop.trf.xlu0
    %v127 = vpop.trf.xlu0
    %v128 = vpop.trf.xlu0
    %v129 = vpop.trf.xlu0
    %v130 = vpop.trf.xlu0
    %v131 = vpop.trf.xlu0
    %v132 = vpop.trf.xlu0
    %v133 = vpop.trf.xlu0
    %v134 = vpop.trf.xlu0
    %v135 = vpop.trf.xlu0
    %v136 = vpop.trf.xlu0
    %v137 = vpop.trf.xlu0
    %v138 = vpop.trf.xlu0
    %139 = vxpose.xlu0.b32.start [1/16] %v123, 128
    %140 = vxpose.xlu0.b32.cont [2/16] 0.0, 128
    %141 = vxpose.xlu0.b32.cont [3/16] 0.0, 128
    %142 = vxpose.xlu0.b32.cont [4/16] 0.0, 128
    %143 = vxpose.xlu0.b32.cont [5/16] 0.0, 128
    %144 = vxpose.xlu0.b32.cont [6/16] 0.0, 128
    %145 = vxpose.xlu0.b32.cont [7/16] 0.0, 128
    %146 = vxpose.xlu0.b32.cont [8/16] 0.0, 128
    %147 = vxpose.xlu0.b32.cont [9/16] 0.0, 128
    %148 = vxpose.xlu0.b32.cont [10/16] 0.0, 128
    %149 = vxpose.xlu0.b32.cont [11/16] 0.0, 128
    %150 = vxpose.xlu0.b32.cont [12/16] 0.0, 128
    %151 = vxpose.xlu0.b32.cont [13/16] 0.0, 128
    %152 = vxpose.xlu0.b32.cont [14/16] 0.0, 128
    %153 = vxpose.xlu0.b32.cont [15/16] 0.0, 128
    %154 = vxpose.xlu0.b32.end [16/16] 0.0, 128
    %v155 = vpop.trf.xlu0
    %v156 = vpop.trf.xlu0
    %v157 = vpop.trf.xlu0
    %v158 = vpop.trf.xlu0
    %v159 = vpop.trf.xlu0
    %v160 = vpop.trf.xlu0
    %v161 = vpop.trf.xlu0
    %v162 = vpop.trf.xlu0
    %v163 = vpop.trf.xlu0
    %v164 = vpop.trf.xlu0
    %v165 = vpop.trf.xlu0
    %v166 = vpop.trf.xlu0
    %v167 = vpop.trf.xlu0
    %v168 = vpop.trf.xlu0
    %v169 = vpop.trf.xlu0
    %v170 = vpop.trf.xlu0
    %171 = vxpose.xlu0.b32.start [1/16] %v124, 128
    %172 = vxpose.xlu0.b32.cont [2/16] 0.0, 128
    %173 = vxpose.xlu0.b32.cont [3/16] 0.0, 128
    %174 = vxpose.xlu0.b32.cont [4/16] 0.0, 128
    %175 = vxpose.xlu0.b32.cont [5/16] 0.0, 128
    %176 = vxpose.xlu0.b32.cont [6/16] 0.0, 128
    %177 = vxpose.xlu0.b32.cont [7/16] 0.0, 128
    %178 = vxpose.xlu0.b32.cont [8/16] 0.0, 128
    %179 = vxpose.xlu0.b32.cont [9/16] 0.0, 128
    %180 = vxpose.xlu0.b32.cont [10/16] 0.0, 128
    %181 = vxpose.xlu0.b32.cont [11/16] 0.0, 128
    %182 = vxpose.xlu0.b32.cont [12/16] 0.0, 128
    %183 = vxpose.xlu0.b32.cont [13/16] 0.0, 128
    %184 = vxpose.xlu0.b32.cont [14/16] 0.0, 128
    %185 = vxpose.xlu0.b32.cont [15/16] 0.0, 128
    %186 = vxpose.xlu0.b32.end [16/16] 0.0, 128
    %v187 = vpop.trf.xlu0
    %v188 = vpop.trf.xlu0
    %v189 = vpop.trf.xlu0
    %v190 = vpop.trf.xlu0
    %v191 = vpop.trf.xlu0
    %v192 = vpop.trf.xlu0
    %v193 = vpop.trf.xlu0
    %v194 = vpop.trf.xlu0
    %v195 = vpop.trf.xlu0
    %v196 = vpop.trf.xlu0
    %v197 = vpop.trf.xlu0
    %v198 = vpop.trf.xlu0
    %v199 = vpop.trf.xlu0
    %v200 = vpop.trf.xlu0
    %v201 = vpop.trf.xlu0
    %v202 = vpop.trf.xlu0
    %203 = vxpose.xlu0.b32.start [1/16] %v125, 128
    %204 = vxpose.xlu0.b32.cont [2/16] 0.0, 128
    %205 = vxpose.xlu0.b32.cont [3/16] 0.0, 128
    %206 = vxpose.xlu0.b32.cont [4/16] 0.0, 128
    %207 = vxpose.xlu0.b32.cont [5/16] 0.0, 128
    %208 = vxpose.xlu0.b32.cont [6/16] 0.0, 128
    %209 = vxpose.xlu0.b32.cont [7/16] 0.0, 128
    %210 = vxpose.xlu0.b32.cont [8/16] 0.0, 128
    %211 = vxpose.xlu0.b32.cont [9/16] 0.0, 128
    %212 = vxpose.xlu0.b32.cont [10/16] 0.0, 128
    %213 = vxpose.xlu0.b32.cont [11/16] 0.0, 128
    %214 = vxpose.xlu0.b32.cont [12/16] 0.0, 128
    %215 = vxpose.xlu0.b32.cont [13/16] 0.0, 128
    %216 = vxpose.xlu0.b32.cont [14/16] 0.0, 128
    %217 = vxpose.xlu0.b32.cont [15/16] 0.0, 128
    %218 = vxpose.xlu0.b32.end [16/16] 0.0, 128
    %v219 = vpop.trf.xlu0
    %v220 = vpop.trf.xlu0
    %v221 = vpop.trf.xlu0
    %v222 = vpop.trf.xlu0
    %v223 = vpop.trf.xlu0
    %v224 = vpop.trf.xlu0
    %v225 = vpop.trf.xlu0
    %v226 = vpop.trf.xlu0
    %v227 = vpop.trf.xlu0
    %v228 = vpop.trf.xlu0
    %v229 = vpop.trf.xlu0
    %v230 = vpop.trf.xlu0
    %v231 = vpop.trf.xlu0
    %v232 = vpop.trf.xlu0
    %v233 = vpop.trf.xlu0
    %v234 = vpop.trf.xlu0
    %235 = vxpose.xlu0.b32.start [1/16] %v126, 128
    %236 = vxpose.xlu0.b32.cont [2/16] 0.0, 128
    %237 = vxpose.xlu0.b32.cont [3/16] 0.0, 128
    %238 = vxpose.xlu0.b32.cont [4/16] 0.0, 128
    %239 = vxpose.xlu0.b32.cont [5/16] 0.0, 128
    %240 = vxpose.xlu0.b32.cont [6/16] 0.0, 128
    %241 = vxpose.xlu0.b32.cont [7/16] 0.0, 128
    %242 = vxpose.xlu0.b32.cont [8/16] 0.0, 128
    %243 = vxpose.xlu0.b32.cont [9/16] 0.0, 128
    %244 = vxpose.xlu0.b32.cont [10/16] 0.0, 128
    %245 = vxpose.xlu0.b32.cont [11/16] 0.0, 128
    %246 = vxpose.xlu0.b32.cont [12/16] 0.0, 128
    %247 = vxpose.xlu0.b32.cont [13/16] 0.0, 128
    %248 = vxpose.xlu0.b32.cont [14/16] 0.0, 128
    %249 = vxpose.xlu0.b32.cont [15/16] 0.0, 128
    %250 = vxpose.xlu0.b32.end [16/16] 0.0, 128
    %v251 = vpop.trf.xlu0
    %v252 = vpop.trf.xlu0
    %v253 = vpop.trf.xlu0
    %v254 = vpop.trf.xlu0
    %v255 = vpop.trf.xlu0
    %v256 = vpop.trf.xlu0
    %v257 = vpop.trf.xlu0
    %v258 = vpop.trf.xlu0
    %v259 = vpop.trf.xlu0
    %v260 = vpop.trf.xlu0
    %v261 = vpop.trf.xlu0
    %v262 = vpop.trf.xlu0
    %v263 = vpop.trf.xlu0
    %v264 = vpop.trf.xlu0
    %v265 = vpop.trf.xlu0
    %v266 = vpop.trf.xlu0
    %v267 = vpack.c.bf16 %v155, %v155
    %v268 = vpack.c.bf16 %v156, %v156
    %v269 = vpack.c.bf16 %v187, %v187
    %v270 = vpack.c.bf16 %v188, %v188
    %v271 = vpack.c.bf16 %v219, %v219
    %v272 = vpack.c.bf16 %v220, %v220
    %v273 = vpack.c.bf16 %v251, %v251
    %v274 = vpack.c.bf16 %v252, %v252
    %277 = vrot.lane.b32.xlu0 %v101, 96
    %v278 = vpop.permute.xlu0 %277
    %279 = vrot.lane.b32.xlu0 %v104, 96
    %v280 = vpop.permute.xlu0 %279
    %283 = vxpose.xlu0.b32.start [1/16] %v278, 128
    %284 = vxpose.xlu0.b32.cont [2/16] %v280, 128
    %285 = vxpose.xlu0.b32.cont [3/16] 0.0, 128
    %286 = vxpose.xlu0.b32.cont [4/16] 0.0, 128
    %287 = vxpose.xlu0.b32.cont [5/16] 0.0, 128
    %288 = vxpose.xlu0.b32.cont [6/16] 0.0, 128
    %289 = vxpose.xlu0.b32.cont [7/16] 0.0, 128
    %290 = vxpose.xlu0.b32.cont [8/16] 0.0, 128
    %291 = vxpose.xlu0.b32.cont [9/16] 0.0, 128
    %292 = vxpose.xlu0.b32.cont [10/16] 0.0, 128
    %293 = vxpose.xlu0.b32.cont [11/16] 0.0, 128
    %294 = vxpose.xlu0.b32.cont [12/16] 0.0, 128
    %295 = vxpose.xlu0.b32.cont [13/16] 0.0, 128
    %296 = vxpose.xlu0.b32.cont [14/16] 0.0, 128
    %297 = vxpose.xlu0.b32.cont [15/16] 0.0, 128
    %298 = vxpose.xlu0.b32.end [16/16] 0.0, 128
    %v299 = vpop.trf.xlu0
    %v300 = vpop.trf.xlu0
    %v301 = vpop.trf.xlu0
    %v302 = vpop.trf.xlu0
    %v303 = vpop.trf.xlu0
    %v304 = vpop.trf.xlu0
    %v305 = vpop.trf.xlu0
    %v306 = vpop.trf.xlu0
    %v307 = vpop.trf.xlu0
    %v308 = vpop.trf.xlu0
    %v309 = vpop.trf.xlu0
    %v310 = vpop.trf.xlu0
    %v311 = vpop.trf.xlu0
    %v312 = vpop.trf.xlu0
    %v313 = vpop.trf.xlu0
    %v314 = vpop.trf.xlu0
    %315 = vxpose.xlu0.b32.start [1/16] %v299, 128
    %316 = vxpose.xlu0.b32.cont [2/16] 0.0, 128
    %317 = vxpose.xlu0.b32.cont [3/16] 0.0, 128
    %318 = vxpose.xlu0.b32.cont [4/16] 0.0, 128
    %319 = vxpose.xlu0.b32.cont [5/16] 0.0, 128
    %320 = vxpose.xlu0.b32.cont [6/16] 0.0, 128
    %321 = vxpose.xlu0.b32.cont [7/16] 0.0, 128
    %322 = vxpose.xlu0.b32.cont [8/16] 0.0, 128
    %323 = vxpose.xlu0.b32.cont [9/16] 0.0, 128
    %324 = vxpose.xlu0.b32.cont [10/16] 0.0, 128
    %325 = vxpose.xlu0.b32.cont [11/16] 0.0, 128
    %326 = vxpose.xlu0.b32.cont [12/16] 0.0, 128
    %327 = vxpose.xlu0.b32.cont [13/16] 0.0, 128
    %328 = vxpose.xlu0.b32.cont [14/16] 0.0, 128
    %329 = vxpose.xlu0.b32.cont [15/16] 0.0, 128
    %330 = vxpose.xlu0.b32.end [16/16] 0.0, 128
    %v331 = vpop.trf.xlu0
    %v332 = vpop.trf.xlu0
    %v333 = vpop.trf.xlu0
    %v334 = vpop.trf.xlu0
    %v335 = vpop.trf.xlu0
    %v336 = vpop.trf.xlu0
    %v337 = vpop.trf.xlu0
    %v338 = vpop.trf.xlu0
    %v339 = vpop.trf.xlu0
    %v340 = vpop.trf.xlu0
    %v341 = vpop.trf.xlu0
    %v342 = vpop.trf.xlu0
    %v343 = vpop.trf.xlu0
    %v344 = vpop.trf.xlu0
    %v345 = vpop.trf.xlu0
    %v346 = vpop.trf.xlu0
    %347 = vxpose.xlu0.b32.start [1/16] %v300, 128
    %348 = vxpose.xlu0.b32.cont [2/16] 0.0, 128
    %349 = vxpose.xlu0.b32.cont [3/16] 0.0, 128
    %350 = vxpose.xlu0.b32.cont [4/16] 0.0, 128
    %351 = vxpose.xlu0.b32.cont [5/16] 0.0, 128
    %352 = vxpose.xlu0.b32.cont [6/16] 0.0, 128
    %353 = vxpose.xlu0.b32.cont [7/16] 0.0, 128
    %354 = vxpose.xlu0.b32.cont [8/16] 0.0, 128
    %355 = vxpose.xlu0.b32.cont [9/16] 0.0, 128
    %356 = vxpose.xlu0.b32.cont [10/16] 0.0, 128
    %357 = vxpose.xlu0.b32.cont [11/16] 0.0, 128
    %358 = vxpose.xlu0.b32.cont [12/16] 0.0, 128
    %359 = vxpose.xlu0.b32.cont [13/16] 0.0, 128
    %360 = vxpose.xlu0.b32.cont [14/16] 0.0, 128
    %361 = vxpose.xlu0.b32.cont [15/16] 0.0, 128
    %362 = vxpose.xlu0.b32.end [16/16] 0.0, 128
    %v363 = vpop.trf.xlu0
    %v364 = vpop.trf.xlu0
    %v365 = vpop.trf.xlu0
    %v366 = vpop.trf.xlu0
    %v367 = vpop.trf.xlu0
    %v368 = vpop.trf.xlu0
    %v369 = vpop.trf.xlu0
    %v370 = vpop.trf.xlu0
    %v371 = vpop.trf.xlu0
    %v372 = vpop.trf.xlu0
    %v373 = vpop.trf.xlu0
    %v374 = vpop.trf.xlu0
    %v375 = vpop.trf.xlu0
    %v376 = vpop.trf.xlu0
    %v377 = vpop.trf.xlu0
    %v378 = vpop.trf.xlu0
    %379 = vxpose.xlu0.b32.start [1/16] %v301, 128
    %380 = vxpose.xlu0.b32.cont [2/16] 0.0, 128
    %381 = vxpose.xlu0.b32.cont [3/16] 0.0, 128
    %382 = vxpose.xlu0.b32.cont [4/16] 0.0, 128
    %383 = vxpose.xlu0.b32.cont [5/16] 0.0, 128
    %384 = vxpose.xlu0.b32.cont [6/16] 0.0, 128
    %385 = vxpose.xlu0.b32.cont [7/16] 0.0, 128
    %386 = vxpose.xlu0.b32.cont [8/16] 0.0, 128
    %387 = vxpose.xlu0.b32.cont [9/16] 0.0, 128
    %388 = vxpose.xlu0.b32.cont [10/16] 0.0, 128
    %389 = vxpose.xlu0.b32.cont [11/16] 0.0, 128
    %390 = vxpose.xlu0.b32.cont [12/16] 0.0, 128
    %391 = vxpose.xlu0.b32.cont [13/16] 0.0, 128
    %392 = vxpose.xlu0.b32.cont [14/16] 0.0, 128
    %393 = vxpose.xlu0.b32.cont [15/16] 0.0, 128
    %394 = vxpose.xlu0.b32.end [16/16] 0.0, 128
    %v395 = vpop.trf.xlu0
    %v396 = vpop.trf.xlu0
    %v397 = vpop.trf.xlu0
    %v398 = vpop.trf.xlu0
    %v399 = vpop.trf.xlu0
    %v400 = vpop.trf.xlu0
    %v401 = vpop.trf.xlu0
    %v402 = vpop.trf.xlu0
    %v403 = vpop.trf.xlu0
    %v404 = vpop.trf.xlu0
    %v405 = vpop.trf.xlu0
    %v406 = vpop.trf.xlu0
    %v407 = vpop.trf.xlu0
    %v408 = vpop.trf.xlu0
    %v409 = vpop.trf.xlu0
    %v410 = vpop.trf.xlu0
    %411 = vxpose.xlu0.b32.start [1/16] %v302, 128
    %412 = vxpose.xlu0.b32.cont [2/16] 0.0, 128
    %413 = vxpose.xlu0.b32.cont [3/16] 0.0, 128
    %414 = vxpose.xlu0.b32.cont [4/16] 0.0, 128
    %415 = vxpose.xlu0.b32.cont [5/16] 0.0, 128
    %416 = vxpose.xlu0.b32.cont [6/16] 0.0, 128
    %417 = vxpose.xlu0.b32.cont [7/16] 0.0, 128
    %418 = vxpose.xlu0.b32.cont [8/16] 0.0, 128
    %419 = vxpose.xlu0.b32.cont [9/16] 0.0, 128
    %420 = vxpose.xlu0.b32.cont [10/16] 0.0, 128
    %421 = vxpose.xlu0.b32.cont [11/16] 0.0, 128
    %422 = vxpose.xlu0.b32.cont [12/16] 0.0, 128
    %423 = vxpose.xlu0.b32.cont [13/16] 0.0, 128
    %424 = vxpose.xlu0.b32.cont [14/16] 0.0, 128
    %425 = vxpose.xlu0.b32.cont [15/16] 0.0, 128
    %426 = vxpose.xlu0.b32.end [16/16] 0.0, 128
    %v427 = vpop.trf.xlu0
    %v428 = vpop.trf.xlu0
    %v429 = vpop.trf.xlu0
    %v430 = vpop.trf.xlu0
    %v431 = vpop.trf.xlu0
    %v432 = vpop.trf.xlu0
    %v433 = vpop.trf.xlu0
    %v434 = vpop.trf.xlu0
    %v435 = vpop.trf.xlu0
    %v436 = vpop.trf.xlu0
    %v437 = vpop.trf.xlu0
    %v438 = vpop.trf.xlu0
    %v439 = vpop.trf.xlu0
    %v440 = vpop.trf.xlu0
    %v441 = vpop.trf.xlu0
    %v442 = vpop.trf.xlu0
    %v443 = vpack.c.bf16 %v331, %v331
    %v444 = vpack.c.bf16 %v332, %v332
    %v445 = vpack.c.bf16 %v363, %v363
    %v446 = vpack.c.bf16 %v364, %v364
    %v447 = vpack.c.bf16 %v395, %v395
    %v448 = vpack.c.bf16 %v396, %v396
    %v449 = vpack.c.bf16 %v427, %v427
    %v450 = vpack.c.bf16 %v428, %v428
    %451 = vrot.lane.b32.xlu0 %v101, 64
    %v452 = vpop.permute.xlu0 %451
    %453 = vrot.lane.b32.xlu0 %v104, 64
    %v454 = vpop.permute.xlu0 %453
    %457 = vxpose.xlu0.b32.start [1/16] %v452, 128
    %458 = vxpose.xlu0.b32.cont [2/16] %v454, 128
    %459 = vxpose.xlu0.b32.cont [3/16] 0.0, 128
    %460 = vxpose.xlu0.b32.cont [4/16] 0.0, 128
    %461 = vxpose.xlu0.b32.cont [5/16] 0.0, 128
    %462 = vxpose.xlu0.b32.cont [6/16] 0.0, 128
    %463 = vxpose.xlu0.b32.cont [7/16] 0.0, 128
    %464 = vxpose.xlu0.b32.cont [8/16] 0.0, 128
    %465 = vxpose.xlu0.b32.cont [9/16] 0.0, 128
    %466 = vxpose.xlu0.b32.cont [10/16] 0.0, 128
    %467 = vxpose.xlu0.b32.cont [11/16] 0.0, 128
    %468 = vxpose.xlu0.b32.cont [12/16] 0.0, 128
    %469 = vxpose.xlu0.b32.cont [13/16] 0.0, 128
    %470 = vxpose.xlu0.b32.cont [14/16] 0.0, 128
    %471 = vxpose.xlu0.b32.cont [15/16] 0.0, 128
    %472 = vxpose.xlu0.b32.end [16/16] 0.0, 128
    %v473 = vpop.trf.xlu0
    %v474 = vpop.trf.xlu0
    %v475 = vpop.trf.xlu0
    %v476 = vpop.trf.xlu0
    %v477 = vpop.trf.xlu0
    %v478 = vpop.trf.xlu0
    %v479 = vpop.trf.xlu0
    %v480 = vpop.trf.xlu0
    %v481 = vpop.trf.xlu0
    %v482 = vpop.trf.xlu0
    %v483 = vpop.trf.xlu0
    %v484 = vpop.trf.xlu0
    %v485 = vpop.trf.xlu0
    %v486 = vpop.trf.xlu0
    %v487 = vpop.trf.xlu0
    %v488 = vpop.trf.xlu0
    %489 = vxpose.xlu0.b32.start [1/16] %v473, 128
    %490 = vxpose.xlu0.b32.cont [2/16] 0.0, 128
    %491 = vxpose.xlu0.b32.cont [3/16] 0.0, 128
    %492 = vxpose.xlu0.b32.cont [4/16] 0.0, 128
    %493 = vxpose.xlu0.b32.cont [5/16] 0.0, 128
    %494 = vxpose.xlu0.b32.cont [6/16] 0.0, 128
    %495 = vxpose.xlu0.b32.cont [7/16] 0.0, 128
    %496 = vxpose.xlu0.b32.cont [8/16] 0.0, 128
    %497 = vxpose.xlu0.b32.cont [9/16] 0.0, 128
    %498 = vxpose.xlu0.b32.cont [10/16] 0.0, 128
    %499 = vxpose.xlu0.b32.cont [11/16] 0.0, 128
    %500 = vxpose.xlu0.b32.cont [12/16] 0.0, 128
    %501 = vxpose.xlu0.b32.cont [13/16] 0.0, 128
    %502 = vxpose.xlu0.b32.cont [14/16] 0.0, 128
    %503 = vxpose.xlu0.b32.cont [15/16] 0.0, 128
    %504 = vxpose.xlu0.b32.end [16/16] 0.0, 128
    %v505 = vpop.trf.xlu0
    %v506 = vpop.trf.xlu0
    %v507 = vpop.trf.xlu0
    %v508 = vpop.trf.xlu0
    %v509 = vpop.trf.xlu0
    %v510 = vpop.trf.xlu0
    %v511 = vpop.trf.xlu0
    %v512 = vpop.trf.xlu0
    %v513 = vpop.trf.xlu0
    %v514 = vpop.trf.xlu0
    %v515 = vpop.trf.xlu0
    %v516 = vpop.trf.xlu0
    %v517 = vpop.trf.xlu0
    %v518 = vpop.trf.xlu0
    %v519 = vpop.trf.xlu0
    %v520 = vpop.trf.xlu0
    %521 = vxpose.xlu0.b32.start [1/16] %v474, 128
    %522 = vxpose.xlu0.b32.cont [2/16] 0.0, 128
    %523 = vxpose.xlu0.b32.cont [3/16] 0.0, 128
    %524 = vxpose.xlu0.b32.cont [4/16] 0.0, 128
    %525 = vxpose.xlu0.b32.cont [5/16] 0.0, 128
    %526 = vxpose.xlu0.b32.cont [6/16] 0.0, 128
    %527 = vxpose.xlu0.b32.cont [7/16] 0.0, 128
    %528 = vxpose.xlu0.b32.cont [8/16] 0.0, 128
    %529 = vxpose.xlu0.b32.cont [9/16] 0.0, 128
    %530 = vxpose.xlu0.b32.cont [10/16] 0.0, 128
    %531 = vxpose.xlu0.b32.cont [11/16] 0.0, 128
    %532 = vxpose.xlu0.b32.cont [12/16] 0.0, 128
    %533 = vxpose.xlu0.b32.cont [13/16] 0.0, 128
    %534 = vxpose.xlu0.b32.cont [14/16] 0.0, 128
    %535 = vxpose.xlu0.b32.cont [15/16] 0.0, 128
    %536 = vxpose.xlu0.b32.end [16/16] 0.0, 128
    %v537 = vpop.trf.xlu0
    %v538 = vpop.trf.xlu0
    %v539 = vpop.trf.xlu0
    %v540 = vpop.trf.xlu0
    %v541 = vpop.trf.xlu0
    %v542 = vpop.trf.xlu0
    %v543 = vpop.trf.xlu0
    %v544 = vpop.trf.xlu0
    %v545 = vpop.trf.xlu0
    %v546 = vpop.trf.xlu0
    %v547 = vpop.trf.xlu0
    %v548 = vpop.trf.xlu0
    %v549 = vpop.trf.xlu0
    %v550 = vpop.trf.xlu0
    %v551 = vpop.trf.xlu0
    %v552 = vpop.trf.xlu0
    %553 = vxpose.xlu0.b32.start [1/16] %v475, 128
    %554 = vxpose.xlu0.b32.cont [2/16] 0.0, 128
    %555 = vxpose.xlu0.b32.cont [3/16] 0.0, 128
    %556 = vxpose.xlu0.b32.cont [4/16] 0.0, 128
    %557 = vxpose.xlu0.b32.cont [5/16] 0.0, 128
    %558 = vxpose.xlu0.b32.cont [6/16] 0.0, 128
    %559 = vxpose.xlu0.b32.cont [7/16] 0.0, 128
    %560 = vxpose.xlu0.b32.cont [8/16] 0.0, 128
    %561 = vxpose.xlu0.b32.cont [9/16] 0.0, 128
    %562 = vxpose.xlu0.b32.cont [10/16] 0.0, 128
    %563 = vxpose.xlu0.b32.cont [11/16] 0.0, 128
    %564 = vxpose.xlu0.b32.cont [12/16] 0.0, 128
    %565 = vxpose.xlu0.b32.cont [13/16] 0.0, 128
    %566 = vxpose.xlu0.b32.cont [14/16] 0.0, 128
    %567 = vxpose.xlu0.b32.cont [15/16] 0.0, 128
    %568 = vxpose.xlu0.b32.end [16/16] 0.0, 128
    %v569 = vpop.trf.xlu0
    %v570 = vpop.trf.xlu0
    %v571 = vpop.trf.xlu0
    %v572 = vpop.trf.xlu0
    %v573 = vpop.trf.xlu0
    %v574 = vpop.trf.xlu0
    %v575 = vpop.trf.xlu0
    %v576 = vpop.trf.xlu0
    %v577 = vpop.trf.xlu0
    %v578 = vpop.trf.xlu0
    %v579 = vpop.trf.xlu0
    %v580 = vpop.trf.xlu0
    %v581 = vpop.trf.xlu0
    %v582 = vpop.trf.xlu0
    %v583 = vpop.trf.xlu0
    %v584 = vpop.trf.xlu0
    %585 = vxpose.xlu0.b32.start [1/16] %v476, 128
    %586 = vxpose.xlu0.b32.cont [2/16] 0.0, 128
    %587 = vxpose.xlu0.b32.cont [3/16] 0.0, 128
    %588 = vxpose.xlu0.b32.cont [4/16] 0.0, 128
    %589 = vxpose.xlu0.b32.cont [5/16] 0.0, 128
    %590 = vxpose.xlu0.b32.cont [6/16] 0.0, 128
    %591 = vxpose.xlu0.b32.cont [7/16] 0.0, 128
    %592 = vxpose.xlu0.b32.cont [8/16] 0.0, 128
    %593 = vxpose.xlu0.b32.cont [9/16] 0.0, 128
    %594 = vxpose.xlu0.b32.cont [10/16] 0.0, 128
    %595 = vxpose.xlu0.b32.cont [11/16] 0.0, 128
    %596 = vxpose.xlu0.b32.cont [12/16] 0.0, 128
    %597 = vxpose.xlu0.b32.cont [13/16] 0.0, 128
    %598 = vxpose.xlu0.b32.cont [14/16] 0.0, 128
    %599 = vxpose.xlu0.b32.cont [15/16] 0.0, 128
    %600 = vxpose.xlu0.b32.end [16/16] 0.0, 128
    %v601 = vpop.trf.xlu0
    %v602 = vpop.trf.xlu0
    %v603 = vpop.trf.xlu0
    %v604 = vpop.trf.xlu0
    %v605 = vpop.trf.xlu0
    %v606 = vpop.trf.xlu0
    %v607 = vpop.trf.xlu0
    %v608 = vpop.trf.xlu0
    %v609 = vpop.trf.xlu0
    %v610 = vpop.trf.xlu0
    %v611 = vpop.trf.xlu0
    %v612 = vpop.trf.xlu0
    %v613 = vpop.trf.xlu0
    %v614 = vpop.trf.xlu0
    %v615 = vpop.trf.xlu0
    %v616 = vpop.trf.xlu0
    %v617 = vpack.c.bf16 %v505, %v505
    %v618 = vpack.c.bf16 %v506, %v506
    %v619 = vpack.c.bf16 %v537, %v537
    %v620 = vpack.c.bf16 %v538, %v538
    %v621 = vpack.c.bf16 %v569, %v569
    %v622 = vpack.c.bf16 %v570, %v570
    %v623 = vpack.c.bf16 %v601, %v601
    %v624 = vpack.c.bf16 %v602, %v602
    %vm625 = vcmask 64512
    %v627 = vsel %vm625, %v267, 0
    %v630 = vsel %vm625, %v443, 0
    %632 = vmatprep.subr.bf16.mxu0 0
    %633 = vmatpush1.bf16.xpose.msra.mxu0 %v630
    %634 = vmatprep.subr.bf16.mxu0 0
    %635 = vmatpush1.bf16.xpose.msra.mxu0 0
    %636 = vmatprep.subr.bf16.mxu0 0
    %637 = vmatpush1.bf16.xpose.msra.mxu0 0
    %638 = vmatprep.subr.bf16.mxu0 0
    %639 = vmatpush1.bf16.xpose.msra.mxu0 0
    %640 = vmatprep.subr.bf16.mxu0 0
    %641 = vmatpush1.bf16.xpose.msra.mxu0 0
    %642 = vmatprep.subr.bf16.mxu0 0
    %643 = vmatpush1.bf16.xpose.msra.mxu0 0
    %644 = vmatprep.subr.bf16.mxu0 0
    %645 = vmatpush1.bf16.xpose.msra.mxu0 0
    %646 = vmatprep.subr.bf16.mxu0 0
    %647 = vmatpush1.bf16.xpose.msra.mxu0 0
    %648 = vmatprep.subr.bf16.mxu0 0
    %649 = vmatpush1.bf16.xpose.msra.mxu0 0
    %650 = vmatprep.subr.bf16.mxu0 0
    %651 = vmatpush1.bf16.xpose.msra.mxu0 0
    %652 = vmatprep.subr.bf16.mxu0 0
    %653 = vmatpush1.bf16.xpose.msra.mxu0 0
    %654 = vmatprep.subr.bf16.mxu0 0
    %655 = vmatpush1.bf16.xpose.msra.mxu0 0
    %656 = vmatprep.subr.bf16.mxu0 0
    %657 = vmatpush1.bf16.xpose.msra.mxu0 0
    %658 = vmatprep.subr.bf16.mxu0 0
    %659 = vmatpush1.bf16.xpose.msra.mxu0 0
    %660 = vmatprep.subr.bf16.mxu0 0
    %661 = vmatpush1.bf16.xpose.msra.mxu0 0
    %662 = vmatprep.subr.bf16.mxu0 0
    %663 = vmatpush1.bf16.xpose.msra.mxu0 0
    %664 = vmatprep.mubr.bf16.mxu0 0
    %665 = vmatmul.mubr.bf16.gmra.mrb[0].mxu0 %v627
    %v666 = vpop.f32.mrb[0].mxu0
    %v667 = vadd.f32 %v36, %v666
    %v668 = vpop.f32.mrb[0].mxu0
    %v669 = vpop.f32.mrb[0].mxu0
    %v670 = vpop.f32.mrb[0].mxu0
    %671 = vdwg.mxu0
    %v673 = vsel %vm625, %v268, 0
    %v676 = vsel %vm625, %v444, 0
    %678 = vmatprep.subr.bf16.mxu0 0
    %679 = vmatpush1.bf16.xpose.msra.mxu0 %v676
    %680 = vmatprep.subr.bf16.mxu0 0
    %681 = vmatpush1.bf16.xpose.msra.mxu0 0
    %682 = vmatprep.subr.bf16.mxu0 0
    %683 = vmatpush1.bf16.xpose.msra.mxu0 0
    %684 = vmatprep.subr.bf16.mxu0 0
    %685 = vmatpush1.bf16.xpose.msra.mxu0 0
    %686 = vmatprep.subr.bf16.mxu0 0
    %687 = vmatpush1.bf16.xpose.msra.mxu0 0
    %688 = vmatprep.subr.bf16.mxu0 0
    %689 = vmatpush1.bf16.xpose.msra.mxu0 0
    %690 = vmatprep.subr.bf16.mxu0 0
    %691 = vmatpush1.bf16.xpose.msra.mxu0 0
    %692 = vmatprep.subr.bf16.mxu0 0
    %693 = vmatpush1.bf16.xpose.msra.mxu0 0
    %694 = vmatprep.subr.bf16.mxu0 0
    %695 = vmatpush1.bf16.xpose.msra.mxu0 0
    %696 = vmatprep.subr.bf16.mxu0 0
    %697 = vmatpush1.bf16.xpose.msra.mxu0 0
    %698 = vmatprep.subr.bf16.mxu0 0
    %699 = vmatpush1.bf16.xpose.msra.mxu0 0
    %700 = vmatprep.subr.bf16.mxu0 0
    %701 = vmatpush1.bf16.xpose.msra.mxu0 0
    %702 = vmatprep.subr.bf16.mxu0 0
    %703 = vmatpush1.bf16.xpose.msra.mxu0 0
    %704 = vmatprep.subr.bf16.mxu0 0
    %705 = vmatpush1.bf16.xpose.msra.mxu0 0
    %706 = vmatprep.subr.bf16.mxu0 0
    %707 = vmatpush1.bf16.xpose.msra.mxu0 0
    %708 = vmatprep.subr.bf16.mxu0 0
    %709 = vmatpush1.bf16.xpose.msra.mxu0 0
    %710 = vmatprep.mubr.bf16.mxu0 0
    %711 = vmatmul.mubr.bf16.gmra.mrb[0].mxu0 %v673
    %v712 = vpop.f32.mrb[0].mxu0
    %v713 = vadd.f32 %v37, %v712
    %v714 = vpop.f32.mrb[0].mxu0
    %v715 = vpop.f32.mrb[0].mxu0
    %v716 = vpop.f32.mrb[0].mxu0
    %717 = vdwg.mxu0
    %v719 = vsel %vm625, %v269, 0
    %v722 = vsel %vm625, %v445, 0
    %724 = vmatprep.subr.bf16.mxu0 0
    %725 = vmatpush1.bf16.xpose.msra.mxu0 %v722
    %726 = vmatprep.subr.bf16.mxu0 0
    %727 = vmatpush1.bf16.xpose.msra.mxu0 0
    %728 = vmatprep.subr.bf16.mxu0 0
    %729 = vmatpush1.bf16.xpose.msra.mxu0 0
    %730 = vmatprep.subr.bf16.mxu0 0
    %731 = vmatpush1.bf16.xpose.msra.mxu0 0
    %732 = vmatprep.subr.bf16.mxu0 0
    %733 = vmatpush1.bf16.xpose.msra.mxu0 0
    %734 = vmatprep.subr.bf16.mxu0 0
    %735 = vmatpush1.bf16.xpose.msra.mxu0 0
    %736 = vmatprep.subr.bf16.mxu0 0
    %737 = vmatpush1.bf16.xpose.msra.mxu0 0
    %738 = vmatprep.subr.bf16.mxu0 0
    %739 = vmatpush1.bf16.xpose.msra.mxu0 0
    %740 = vmatprep.subr.bf16.mxu0 0
    %741 = vmatpush1.bf16.xpose.msra.mxu0 0
    %742 = vmatprep.subr.bf16.mxu0 0
    %743 = vmatpush1.bf16.xpose.msra.mxu0 0
    %744 = vmatprep.subr.bf16.mxu0 0
    %745 = vmatpush1.bf16.xpose.msra.mxu0 0
    %746 = vmatprep.subr.bf16.mxu0 0
    %747 = vmatpush1.bf16.xpose.msra.mxu0 0
    %748 = vmatprep.subr.bf16.mxu0 0
    %749 = vmatpush1.bf16.xpose.msra.mxu0 0
    %750 = vmatprep.subr.bf16.mxu0 0
    %751 = vmatpush1.bf16.xpose.msra.mxu0 0
    %752 = vmatprep.subr.bf16.mxu0 0
    %753 = vmatpush1.bf16.xpose.msra.mxu0 0
    %754 = vmatprep.subr.bf16.mxu0 0
    %755 = vmatpush1.bf16.xpose.msra.mxu0 0
    %756 = vmatprep.mubr.bf16.mxu0 0
    %757 = vmatmul.mubr.bf16.gmra.mrb[0].mxu0 %v719
    %v758 = vpop.f32.mrb[0].mxu0
    %v759 = vadd.f32 %v36, %v758
    %v760 = vpop.f32.mrb[0].mxu0
    %v761 = vpop.f32.mrb[0].mxu0
    %v762 = vpop.f32.mrb[0].mxu0
    %763 = vdwg.mxu0
    %v765 = vsel %vm625, %v270, 0
    %v768 = vsel %vm625, %v446, 0
    %770 = vmatprep.subr.bf16.mxu0 0
    %771 = vmatpush1.bf16.xpose.msra.mxu0 %v768
    %772 = vmatprep.subr.bf16.mxu0 0
    %773 = vmatpush1.bf16.xpose.msra.mxu0 0
    %774 = vmatprep.subr.bf16.mxu0 0
    %775 = vmatpush1.bf16.xpose.msra.mxu0 0
    %776 = vmatprep.subr.bf16.mxu0 0
    %777 = vmatpush1.bf16.xpose.msra.mxu0 0
    %778 = vmatprep.subr.bf16.mxu0 0
    %779 = vmatpush1.bf16.xpose.msra.mxu0 0
    %780 = vmatprep.subr.bf16.mxu0 0
    %781 = vmatpush1.bf16.xpose.msra.mxu0 0
    %782 = vmatprep.subr.bf16.mxu0 0
    %783 = vmatpush1.bf16.xpose.msra.mxu0 0
    %784 = vmatprep.subr.bf16.mxu0 0
    %785 = vmatpush1.bf16.xpose.msra.mxu0 0
    %786 = vmatprep.subr.bf16.mxu0 0
    %787 = vmatpush1.bf16.xpose.msra.mxu0 0
    %788 = vmatprep.subr.bf16.mxu0 0
    %789 = vmatpush1.bf16.xpose.msra.mxu0 0
    %790 = vmatprep.subr.bf16.mxu0 0
    %791 = vmatpush1.bf16.xpose.msra.mxu0 0
    %792 = vmatprep.subr.bf16.mxu0 0
    %793 = vmatpush1.bf16.xpose.msra.mxu0 0
    %794 = vmatprep.subr.bf16.mxu0 0
    %795 = vmatpush1.bf16.xpose.msra.mxu0 0
    %796 = vmatprep.subr.bf16.mxu0 0
    %797 = vmatpush1.bf16.xpose.msra.mxu0 0
    %798 = vmatprep.subr.bf16.mxu0 0
    %799 = vmatpush1.bf16.xpose.msra.mxu0 0
    %800 = vmatprep.subr.bf16.mxu0 0
    %801 = vmatpush1.bf16.xpose.msra.mxu0 0
    %802 = vmatprep.mubr.bf16.mxu0 0
    %803 = vmatmul.mubr.bf16.gmra.mrb[0].mxu0 %v765
    %v804 = vpop.f32.mrb[0].mxu0
    %v805 = vadd.f32 %v37, %v804
    %v806 = vpop.f32.mrb[0].mxu0
    %v807 = vpop.f32.mrb[0].mxu0
    %v808 = vpop.f32.mrb[0].mxu0
    %809 = vdwg.mxu0
    %v811 = vsel %vm625, %v271, 0
    %v814 = vsel %vm625, %v447, 0
    %816 = vmatprep.subr.bf16.mxu0 0
    %817 = vmatpush1.bf16.xpose.msra.mxu0 %v814
    %818 = vmatprep.subr.bf16.mxu0 0
    %819 = vmatpush1.bf16.xpose.msra.mxu0 0
    %820 = vmatprep.subr.bf16.mxu0 0
    %821 = vmatpush1.bf16.xpose.msra.mxu0 0
    %822 = vmatprep.subr.bf16.mxu0 0
    %823 = vmatpush1.bf16.xpose.msra.mxu0 0
    %824 = vmatprep.subr.bf16.mxu0 0
    %825 = vmatpush1.bf16.xpose.msra.mxu0 0
    %826 = vmatprep.subr.bf16.mxu0 0
    %827 = vmatpush1.bf16.xpose.msra.mxu0 0
    %828 = vmatprep.subr.bf16.mxu0 0
    %829 = vmatpush1.bf16.xpose.msra.mxu0 0
    %830 = vmatprep.subr.bf16.mxu0 0
    %831 = vmatpush1.bf16.xpose.msra.mxu0 0
    %832 = vmatprep.subr.bf16.mxu0 0
    %833 = vmatpush1.bf16.xpose.msra.mxu0 0
    %834 = vmatprep.subr.bf16.mxu0 0
    %835 = vmatpush1.bf16.xpose.msra.mxu0 0
    %836 = vmatprep.subr.bf16.mxu0 0
    %837 = vmatpush1.bf16.xpose.msra.mxu0 0
    %838 = vmatprep.subr.bf16.mxu0 0
    %839 = vmatpush1.bf16.xpose.msra.mxu0 0
    %840 = vmatprep.subr.bf16.mxu0 0
    %841 = vmatpush1.bf16.xpose.msra.mxu0 0
    %842 = vmatprep.subr.bf16.mxu0 0
    %843 = vmatpush1.bf16.xpose.msra.mxu0 0
    %844 = vmatprep.subr.bf16.mxu0 0
    %845 = vmatpush1.bf16.xpose.msra.mxu0 0
    %846 = vmatprep.subr.bf16.mxu0 0
    %847 = vmatpush1.bf16.xpose.msra.mxu0 0
    %848 = vmatprep.mubr.bf16.mxu0 0
    %849 = vmatmul.mubr.bf16.gmra.mrb[0].mxu0 %v811
    %v850 = vpop.f32.mrb[0].mxu0
    %v851 = vadd.f32 %v36, %v850
    %v852 = vpop.f32.mrb[0].mxu0
    %v853 = vpop.f32.mrb[0].mxu0
    %v854 = vpop.f32.mrb[0].mxu0
    %855 = vdwg.mxu0
    %v857 = vsel %vm625, %v272, 0
    %v860 = vsel %vm625, %v448, 0
    %862 = vmatprep.subr.bf16.mxu0 0
    %863 = vmatpush1.bf16.xpose.msra.mxu0 %v860
    %864 = vmatprep.subr.bf16.mxu0 0
    %865 = vmatpush1.bf16.xpose.msra.mxu0 0
    %866 = vmatprep.subr.bf16.mxu0 0
    %867 = vmatpush1.bf16.xpose.msra.mxu0 0
    %868 = vmatprep.subr.bf16.mxu0 0
    %869 = vmatpush1.bf16.xpose.msra.mxu0 0
    %870 = vmatprep.subr.bf16.mxu0 0
    %871 = vmatpush1.bf16.xpose.msra.mxu0 0
    %872 = vmatprep.subr.bf16.mxu0 0
    %873 = vmatpush1.bf16.xpose.msra.mxu0 0
    %874 = vmatprep.subr.bf16.mxu0 0
    %875 = vmatpush1.bf16.xpose.msra.mxu0 0
    %876 = vmatprep.subr.bf16.mxu0 0
    %877 = vmatpush1.bf16.xpose.msra.mxu0 0
    %878 = vmatprep.subr.bf16.mxu0 0
    %879 = vmatpush1.bf16.xpose.msra.mxu0 0
    %880 = vmatprep.subr.bf16.mxu0 0
    %881 = vmatpush1.bf16.xpose.msra.mxu0 0
    %882 = vmatprep.subr.bf16.mxu0 0
    %883 = vmatpush1.bf16.xpose.msra.mxu0 0
    %884 = vmatprep.subr.bf16.mxu0 0
    %885 = vmatpush1.bf16.xpose.msra.mxu0 0
    %886 = vmatprep.subr.bf16.mxu0 0
    %887 = vmatpush1.bf16.xpose.msra.mxu0 0
    %888 = vmatprep.subr.bf16.mxu0 0
    %889 = vmatpush1.bf16.xpose.msra.mxu0 0
    %890 = vmatprep.subr.bf16.mxu0 0
    %891 = vmatpush1.bf16.xpose.msra.mxu0 0
    %892 = vmatprep.subr.bf16.mxu0 0
    %893 = vmatpush1.bf16.xpose.msra.mxu0 0
    %894 = vmatprep.mubr.bf16.mxu0 0
    %895 = vmatmul.mubr.bf16.gmra.mrb[0].mxu0 %v857
    %v896 = vpop.f32.mrb[0].mxu0
    %v897 = vadd.f32 %v37, %v896
    %v898 = vpop.f32.mrb[0].mxu0
    %v899 = vpop.f32.mrb[0].mxu0
    %v900 = vpop.f32.mrb[0].mxu0
    %901 = vdwg.mxu0
    %v903 = vsel %vm625, %v273, 0
    %v906 = vsel %vm625, %v449, 0
    %908 = vmatprep.subr.bf16.mxu0 0
    %909 = vmatpush1.bf16.xpose.msra.mxu0 %v906
    %910 = vmatprep.subr.bf16.mxu0 0
    %911 = vmatpush1.bf16.xpose.msra.mxu0 0
    %912 = vmatprep.subr.bf16.mxu0 0
    %913 = vmatpush1.bf16.xpose.msra.mxu0 0
    %914 = vmatprep.subr.bf16.mxu0 0
    %915 = vmatpush1.bf16.xpose.msra.mxu0 0
    %916 = vmatprep.subr.bf16.mxu0 0
    %917 = vmatpush1.bf16.xpose.msra.mxu0 0
    %918 = vmatprep.subr.bf16.mxu0 0
    %919 = vmatpush1.bf16.xpose.msra.mxu0 0
    %920 = vmatprep.subr.bf16.mxu0 0
    %921 = vmatpush1.bf16.xpose.msra.mxu0 0
    %922 = vmatprep.subr.bf16.mxu0 0
    %923 = vmatpush1.bf16.xpose.msra.mxu0 0
    %924 = vmatprep.subr.bf16.mxu0 0
    %925 = vmatpush1.bf16.xpose.msra.mxu0 0
    %926 = vmatprep.subr.bf16.mxu0 0
    %927 = vmatpush1.bf16.xpose.msra.mxu0 0
    %928 = vmatprep.subr.bf16.mxu0 0
    %929 = vmatpush1.bf16.xpose.msra.mxu0 0
    %930 = vmatprep.subr.bf16.mxu0 0
    %931 = vmatpush1.bf16.xpose.msra.mxu0 0
    %932 = vmatprep.subr.bf16.mxu0 0
    %933 = vmatpush1.bf16.xpose.msra.mxu0 0
    %934 = vmatprep.subr.bf16.mxu0 0
    %935 = vmatpush1.bf16.xpose.msra.mxu0 0
    %936 = vmatprep.subr.bf16.mxu0 0
    %937 = vmatpush1.bf16.xpose.msra.mxu0 0
    %938 = vmatprep.subr.bf16.mxu0 0
    %939 = vmatpush1.bf16.xpose.msra.mxu0 0
    %940 = vmatprep.mubr.bf16.mxu0 0
    %941 = vmatmul.mubr.bf16.gmra.mrb[0].mxu0 %v903
    %v942 = vpop.f32.mrb[0].mxu0
    %v943 = vadd.f32 %v36, %v942
    %v944 = vpop.f32.mrb[0].mxu0
    %v945 = vpop.f32.mrb[0].mxu0
    %v946 = vpop.f32.mrb[0].mxu0
    %947 = vdwg.mxu0
    %v949 = vsel %vm625, %v274, 0
    %v952 = vsel %vm625, %v450, 0
    %954 = vmatprep.subr.bf16.mxu0 0
    %955 = vmatpush1.bf16.xpose.msra.mxu0 %v952
    %956 = vmatprep.subr.bf16.mxu0 0
    %957 = vmatpush1.bf16.xpose.msra.mxu0 0
    %958 = vmatprep.subr.bf16.mxu0 0
    %959 = vmatpush1.bf16.xpose.msra.mxu0 0
    %960 = vmatprep.subr.bf16.mxu0 0
    %961 = vmatpush1.bf16.xpose.msra.mxu0 0
    %962 = vmatprep.subr.bf16.mxu0 0
    %963 = vmatpush1.bf16.xpose.msra.mxu0 0
    %964 = vmatprep.subr.bf16.mxu0 0
    %965 = vmatpush1.bf16.xpose.msra.mxu0 0
    %966 = vmatprep.subr.bf16.mxu0 0
    %967 = vmatpush1.bf16.xpose.msra.mxu0 0
    %968 = vmatprep.subr.bf16.mxu0 0
    %969 = vmatpush1.bf16.xpose.msra.mxu0 0
    %970 = vmatprep.subr.bf16.mxu0 0
    %971 = vmatpush1.bf16.xpose.msra.mxu0 0
    %972 = vmatprep.subr.bf16.mxu0 0
    %973 = vmatpush1.bf16.xpose.msra.mxu0 0
    %974 = vmatprep.subr.bf16.mxu0 0
    %975 = vmatpush1.bf16.xpose.msra.mxu0 0
    %976 = vmatprep.subr.bf16.mxu0 0
    %977 = vmatpush1.bf16.xpose.msra.mxu0 0
    %978 = vmatprep.subr.bf16.mxu0 0
    %979 = vmatpush1.bf16.xpose.msra.mxu0 0
    %980 = vmatprep.subr.bf16.mxu0 0
    %981 = vmatpush1.bf16.xpose.msra.mxu0 0
    %982 = vmatprep.subr.bf16.mxu0 0
    %983 = vmatpush1.bf16.xpose.msra.mxu0 0
    %984 = vmatprep.subr.bf16.mxu0 0
    %985 = vmatpush1.bf16.xpose.msra.mxu0 0
    %986 = vmatprep.mubr.bf16.mxu0 0
    %987 = vmatmul.mubr.bf16.gmra.mrb[0].mxu0 %v949
    %v988 = vpop.f32.mrb[0].mxu0
    %v989 = vadd.f32 %v37, %v988
    %v990 = vpop.f32.mrb[0].mxu0
    %v991 = vpop.f32.mrb[0].mxu0
    %v992 = vpop.f32.mrb[0].mxu0
    %993 = vdwg.mxu0
    %v994 = vsel %vm625, %v667, -inf
    %995 = vmax.xlane.f32.xlu0 %v994
    %v996 = vpop.xlane.xlu0 %995
    %v997 = vsel %vm625, %v713, -inf
    %998 = vmax.xlane.f32.xlu0 %v997
    %v999 = vpop.xlane.xlu0 %998
    %v1000 = vsel %vm625, %v759, -inf
    %1001 = vmax.xlane.f32.xlu0 %v1000
    %v1002 = vpop.xlane.xlu0 %1001
    %v1003 = vsel %vm625, %v805, -inf
    %1004 = vmax.xlane.f32.xlu0 %v1003
    %v1005 = vpop.xlane.xlu0 %1004
    %v1006 = vsel %vm625, %v851, -inf
    %1007 = vmax.xlane.f32.xlu0 %v1006
    %v1008 = vpop.xlane.xlu0 %1007
    %v1009 = vsel %vm625, %v897, -inf
    %1010 = vmax.xlane.f32.xlu0 %v1009
    %v1011 = vpop.xlane.xlu0 %1010
    %v1012 = vsel %vm625, %v943, -inf
    %1013 = vmax.xlane.f32.xlu0 %v1012
    %v1014 = vpop.xlane.xlu0 %1013
    %v1015 = vsel %vm625, %v989, -inf
    %1016 = vmax.xlane.f32.xlu0 %v1015
    %v1017 = vpop.xlane.xlu0 %1016
    %v1018 = vsub.f32 %v667, %v996
    %v1019 = vsub.f32 %v713, %v999
    %v1020 = vsub.f32 %v759, %v1002
    %v1021 = vsub.f32 %v805, %v1005
    %v1022 = vsub.f32 %v851, %v1008
    %v1023 = vsub.f32 %v897, %v1011
    %v1024 = vsub.f32 %v943, %v1014
    %v1025 = vsub.f32 %v989, %v1017
    %v1026 = vmul.f32 %v1018, 1.442695
    %v1027 = vpow.pop %v1026
    %v1028 = vmul.f32 %v1019, 1.442695
    %v1029 = vpow.pop %v1028
    %v1030 = vmul.f32 %v1020, 1.442695
    %v1031 = vpow.pop %v1030
    %v1032 = vmul.f32 %v1021, 1.442695
    %v1033 = vpow.pop %v1032
    %v1034 = vmul.f32 %v1022, 1.442695
    %v1035 = vpow.pop %v1034
    %v1036 = vmul.f32 %v1023, 1.442695
    %v1037 = vpow.pop %v1036
    %v1038 = vmul.f32 %v1024, 1.442695
    %v1039 = vpow.pop %v1038
    %v1040 = vmul.f32 %v1025, 1.442695
    %v1041 = vpow.pop %v1040
    %v1042 = vsel %vm625, %v1027, 0.0
    %1043 = vadd.xlane.f32.xlu0 %v1042
    %v1044 = vpop.xlane.xlu0 %1043
    %v1045 = vsel %vm625, %v1029, 0.0
    %1046 = vadd.xlane.f32.xlu0 %v1045
    %v1047 = vpop.xlane.xlu0 %1046
    %v1048 = vsel %vm625, %v1031, 0.0
    %1049 = vadd.xlane.f32.xlu0 %v1048
    %v1050 = vpop.xlane.xlu0 %1049
    %v1051 = vsel %vm625, %v1033, 0.0
    %1052 = vadd.xlane.f32.xlu0 %v1051
    %v1053 = vpop.xlane.xlu0 %1052
    %v1054 = vsel %vm625, %v1035, 0.0
    %1055 = vadd.xlane.f32.xlu0 %v1054
    %v1056 = vpop.xlane.xlu0 %1055
    %v1057 = vsel %vm625, %v1037, 0.0
    %1058 = vadd.xlane.f32.xlu0 %v1057
    %v1059 = vpop.xlane.xlu0 %1058
    %v1060 = vsel %vm625, %v1039, 0.0
    %1061 = vadd.xlane.f32.xlu0 %v1060
    %v1062 = vpop.xlane.xlu0 %1061
    %v1063 = vsel %vm625, %v1041, 0.0
    %1064 = vadd.xlane.f32.xlu0 %v1063
    %v1065 = vpop.xlane.xlu0 %1064
    %v1066 = vrcp.pop %v1044
    %v1067 = vrcp.pop %v1047
    %v1068 = vrcp.pop %v1050
    %v1069 = vrcp.pop %v1053
    %v1070 = vrcp.pop %v1056
    %v1071 = vrcp.pop %v1059
    %v1072 = vrcp.pop %v1062
    %v1073 = vrcp.pop %v1065
    %v1074 = vmul.f32 %v1027, %v1066
    %v1075 = vmul.f32 %v1029, %v1067
    %v1076 = vmul.f32 %v1031, %v1068
    %v1077 = vmul.f32 %v1033, %v1069
    %v1078 = vmul.f32 %v1035, %v1070
    %v1079 = vmul.f32 %v1037, %v1071
    %v1080 = vmul.f32 %v1039, %v1072
    %v1081 = vmul.f32 %v1041, %v1073
    %v1082 = vpack.c.bf16 %v1074, %v1074
    %v1083 = vpack.c.bf16 %v1075, %v1075
    %v1084 = vpack.c.bf16 %v1076, %v1076
    %v1085 = vpack.c.bf16 %v1077, %v1077
    %v1086 = vpack.c.bf16 %v1078, %v1078
    %v1087 = vpack.c.bf16 %v1079, %v1079
    %v1088 = vpack.c.bf16 %v1080, %v1080
    %v1089 = vpack.c.bf16 %v1081, %v1081
    %v1091 = vsel %vm625, %v1082, 0
    %vm1093 = vcmask 1043456
    %v1095 = vsel %vm1093, %v617, 0
    %1097 = vmatprep.subr.bf16.mxu0 0
    %1098 = vmatpush1.bf16.msra.mxu0 %v1095
    %1099 = vmatprep.subr.bf16.mxu0 0
    %1100 = vmatpush1.bf16.msra.mxu0 0
    %1101 = vmatprep.subr.bf16.mxu0 0
    %1102 = vmatpush1.bf16.msra.mxu0 0
    %1103 = vmatprep.subr.bf16.mxu0 0
    %1104 = vmatpush1.bf16.msra.mxu0 0
    %1105 = vmatprep.subr.bf16.mxu0 0
    %1106 = vmatpush1.bf16.msra.mxu0 0
    %1107 = vmatprep.subr.bf16.mxu0 0
    %1108 = vmatpush1.bf16.msra.mxu0 0
    %1109 = vmatprep.subr.bf16.mxu0 0
    %1110 = vmatpush1.bf16.msra.mxu0 0
    %1111 = vmatprep.subr.bf16.mxu0 0
    %1112 = vmatpush1.bf16.msra.mxu0 0
    %1113 = vmatprep.subr.bf16.mxu0 0
    %1114 = vmatpush1.bf16.msra.mxu0 0
    %1115 = vmatprep.subr.bf16.mxu0 0
    %1116 = vmatpush1.bf16.msra.mxu0 0
    %1117 = vmatprep.subr.bf16.mxu0 0
    %1118 = vmatpush1.bf16.msra.mxu0 0
    %1119 = vmatprep.subr.bf16.mxu0 0
    %1120 = vmatpush1.bf16.msra.mxu0 0
    %1121 = vmatprep.subr.bf16.mxu0 0
    %1122 = vmatpush1.bf16.msra.mxu0 0
    %1123 = vmatprep.subr.bf16.mxu0 0
    %1124 = vmatpush1.bf16.msra.mxu0 0
    %1125 = vmatprep.subr.bf16.mxu0 0
    %1126 = vmatpush1.bf16.msra.mxu0 0
    %1127 = vmatprep.subr.bf16.mxu0 0
    %1128 = vmatpush1.bf16.msra.mxu0 0
    %1129 = vmatprep.mubr.bf16.mxu0 0
    %1130 = vmatmul.mubr.bf16.gmra.mrb[0].mxu0 %v1091
    %v1131 = vpop.f32.mrb[0].mxu0
    %v1132 = vadd.f32 0.0, %v1131
    %v1133 = vpop.f32.mrb[0].mxu0
    %v1134 = vpop.f32.mrb[0].mxu0
    %v1135 = vpop.f32.mrb[0].mxu0
    %1136 = vdwg.mxu0
    %v1138 = vsel %vm625, %v1083, 0
    %v1141 = vsel %vm1093, %v618, 0
    %1143 = vmatprep.subr.bf16.mxu0 0
    %1144 = vmatpush1.bf16.msra.mxu0 %v1141
    %1145 = vmatprep.subr.bf16.mxu0 0
    %1146 = vmatpush1.bf16.msra.mxu0 0
    %1147 = vmatprep.subr.bf16.mxu0 0
    %1148 = vmatpush1.bf16.msra.mxu0 0
    %1149 = vmatprep.subr.bf16.mxu0 0
    %1150 = vmatpush1.bf16.msra.mxu0 0
    %1151 = vmatprep.subr.bf16.mxu0 0
    %1152 = vmatpush1.bf16.msra.mxu0 0
    %1153 = vmatprep.subr.bf16.mxu0 0
    %1154 = vmatpush1.bf16.msra.mxu0 0
    %1155 = vmatprep.subr.bf16.mxu0 0
    %1156 = vmatpush1.bf16.msra.mxu0 0
    %1157 = vmatprep.subr.bf16.mxu0 0
    %1158 = vmatpush1.bf16.msra.mxu0 0
    %1159 = vmatprep.subr.bf16.mxu0 0
    %1160 = vmatpush1.bf16.msra.mxu0 0
    %1161 = vmatprep.subr.bf16.mxu0 0
    %1162 = vmatpush1.bf16.msra.mxu0 0
    %1163 = vmatprep.subr.bf16.mxu0 0
    %1164 = vmatpush1.bf16.msra.mxu0 0
    %1165 = vmatprep.subr.bf16.mxu0 0
    %1166 = vmatpush1.bf16.msra.mxu0 0
    %1167 = vmatprep.subr.bf16.mxu0 0
    %1168 = vmatpush1.bf16.msra.mxu0 0
    %1169 = vmatprep.subr.bf16.mxu0 0
    %1170 = vmatpush1.bf16.msra.mxu0 0
    %1171 = vmatprep.subr.bf16.mxu0 0
    %1172 = vmatpush1.bf16.msra.mxu0 0
    %1173 = vmatprep.subr.bf16.mxu0 0
    %1174 = vmatpush1.bf16.msra.mxu0 0
    %1175 = vmatprep.mubr.bf16.mxu0 0
    %1176 = vmatmul.mubr.bf16.gmra.mrb[0].mxu0 %v1138
    %v1177 = vpop.f32.mrb[0].mxu0
    %v1178 = vadd.f32 0.0, %v1177
    %v1179 = vpop.f32.mrb[0].mxu0
    %v1180 = vpop.f32.mrb[0].mxu0
    %v1181 = vpop.f32.mrb[0].mxu0
    %1182 = vdwg.mxu0
    %v1184 = vsel %vm625, %v1084, 0
    %v1187 = vsel %vm1093, %v619, 0
    %1189 = vmatprep.subr.bf16.mxu0 0
    %1190 = vmatpush1.bf16.msra.mxu0 %v1187
    %1191 = vmatprep.subr.bf16.mxu0 0
    %1192 = vmatpush1.bf16.msra.mxu0 0
    %1193 = vmatprep.subr.bf16.mxu0 0
    %1194 = vmatpush1.bf16.msra.mxu0 0
    %1195 = vmatprep.subr.bf16.mxu0 0
    %1196 = vmatpush1.bf16.msra.mxu0 0
    %1197 = vmatprep.subr.bf16.mxu0 0
    %1198 = vmatpush1.bf16.msra.mxu0 0
    %1199 = vmatprep.subr.bf16.mxu0 0
    %1200 = vmatpush1.bf16.msra.mxu0 0
    %1201 = vmatprep.subr.bf16.mxu0 0
    %1202 = vmatpush1.bf16.msra.mxu0 0
    %1203 = vmatprep.subr.bf16.mxu0 0
    %1204 = vmatpush1.bf16.msra.mxu0 0
    %1205 = vmatprep.subr.bf16.mxu0 0
    %1206 = vmatpush1.bf16.msra.mxu0 0
    %1207 = vmatprep.subr.bf16.mxu0 0
    %1208 = vmatpush1.bf16.msra.mxu0 0
    %1209 = vmatprep.subr.bf16.mxu0 0
    %1210 = vmatpush1.bf16.msra.mxu0 0
    %1211 = vmatprep.subr.bf16.mxu0 0
    %1212 = vmatpush1.bf16.msra.mxu0 0
    %1213 = vmatprep.subr.bf16.mxu0 0
    %1214 = vmatpush1.bf16.msra.mxu0 0
    %1215 = vmatprep.subr.bf16.mxu0 0
    %1216 = vmatpush1.bf16.msra.mxu0 0
    %1217 = vmatprep.subr.bf16.mxu0 0
    %1218 = vmatpush1.bf16.msra.mxu0 0
    %1219 = vmatprep.subr.bf16.mxu0 0
    %1220 = vmatpush1.bf16.msra.mxu0 0
    %1221 = vmatprep.mubr.bf16.mxu0 0
    %1222 = vmatmul.mubr.bf16.gmra.mrb[0].mxu0 %v1184
    %v1223 = vpop.f32.mrb[0].mxu0
    %v1224 = vadd.f32 0.0, %v1223
    %v1225 = vpop.f32.mrb[0].mxu0
    %v1226 = vpop.f32.mrb[0].mxu0
    %v1227 = vpop.f32.mrb[0].mxu0
    %1228 = vdwg.mxu0
    %v1230 = vsel %vm625, %v1085, 0
    %v1233 = vsel %vm1093, %v620, 0
    %1235 = vmatprep.subr.bf16.mxu0 0
    %1236 = vmatpush1.bf16.msra.mxu0 %v1233
    %1237 = vmatprep.subr.bf16.mxu0 0
    %1238 = vmatpush1.bf16.msra.mxu0 0
    %1239 = vmatprep.subr.bf16.mxu0 0
    %1240 = vmatpush1.bf16.msra.mxu0 0
    %1241 = vmatprep.subr.bf16.mxu0 0
    %1242 = vmatpush1.bf16.msra.mxu0 0
    %1243 = vmatprep.subr.bf16.mxu0 0
    %1244 = vmatpush1.bf16.msra.mxu0 0
    %1245 = vmatprep.subr.bf16.mxu0 0
    %1246 = vmatpush1.bf16.msra.mxu0 0
    %1247 = vmatprep.subr.bf16.mxu0 0
    %1248 = vmatpush1.bf16.msra.mxu0 0
    %1249 = vmatprep.subr.bf16.mxu0 0
    %1250 = vmatpush1.bf16.msra.mxu0 0
    %1251 = vmatprep.subr.bf16.mxu0 0
    %1252 = vmatpush1.bf16.msra.mxu0 0
    %1253 = vmatprep.subr.bf16.mxu0 0
    %1254 = vmatpush1.bf16.msra.mxu0 0
    %1255 = vmatprep.subr.bf16.mxu0 0
    %1256 = vmatpush1.bf16.msra.mxu0 0
    %1257 = vmatprep.subr.bf16.mxu0 0
    %1258 = vmatpush1.bf16.msra.mxu0 0
    %1259 = vmatprep.subr.bf16.mxu0 0
    %1260 = vmatpush1.bf16.msra.mxu0 0
    %1261 = vmatprep.subr.bf16.mxu0 0
    %1262 = vmatpush1.bf16.msra.mxu0 0
    %1263 = vmatprep.subr.bf16.mxu0 0
    %1264 = vmatpush1.bf16.msra.mxu0 0
    %1265 = vmatprep.subr.bf16.mxu0 0
    %1266 = vmatpush1.bf16.msra.mxu0 0
    %1267 = vmatprep.mubr.bf16.mxu0 0
    %1268 = vmatmul.mubr.bf16.gmra.mrb[0].mxu0 %v1230
    %v1269 = vpop.f32.mrb[0].mxu0
    %v1270 = vadd.f32 0.0, %v1269
    %v1271 = vpop.f32.mrb[0].mxu0
    %v1272 = vpop.f32.mrb[0].mxu0
    %v1273 = vpop.f32.mrb[0].mxu0
    %1274 = vdwg.mxu0
    %v1276 = vsel %vm625, %v1086, 0
    %v1279 = vsel %vm1093, %v621, 0
    %1281 = vmatprep.subr.bf16.mxu0 0
    %1282 = vmatpush1.bf16.msra.mxu0 %v1279
    %1283 = vmatprep.subr.bf16.mxu0 0
    %1284 = vmatpush1.bf16.msra.mxu0 0
    %1285 = vmatprep.subr.bf16.mxu0 0
    %1286 = vmatpush1.bf16.msra.mxu0 0
    %1287 = vmatprep.subr.bf16.mxu0 0
    %1288 = vmatpush1.bf16.msra.mxu0 0
    %1289 = vmatprep.subr.bf16.mxu0 0
    %1290 = vmatpush1.bf16.msra.mxu0 0
    %1291 = vmatprep.subr.bf16.mxu0 0
    %1292 = vmatpush1.bf16.msra.mxu0 0
    %1293 = vmatprep.subr.bf16.mxu0 0
    %1294 = vmatpush1.bf16.msra.mxu0 0
    %1295 = vmatprep.subr.bf16.mxu0 0
    %1296 = vmatpush1.bf16.msra.mxu0 0
    %1297 = vmatprep.subr.bf16.mxu0 0
    %1298 = vmatpush1.bf16.msra.mxu0 0
    %1299 = vmatprep.subr.bf16.mxu0 0
    %1300 = vmatpush1.bf16.msra.mxu0 0
    %1301 = vmatprep.subr.bf16.mxu0 0
    %1302 = vmatpush1.bf16.msra.mxu0 0
    %1303 = vmatprep.subr.bf16.mxu0 0
    %1304 = vmatpush1.bf16.msra.mxu0 0
    %1305 = vmatprep.subr.bf16.mxu0 0
    %1306 = vmatpush1.bf16.msra.mxu0 0
    %1307 = vmatprep.subr.bf16.mxu0 0
    %1308 = vmatpush1.bf16.msra.mxu0 0
    %1309 = vmatprep.subr.bf16.mxu0 0
    %1310 = vmatpush1.bf16.msra.mxu0 0
    %1311 = vmatprep.subr.bf16.mxu0 0
    %1312 = vmatpush1.bf16.msra.mxu0 0
    %1313 = vmatprep.mubr.bf16.mxu0 0
    %1314 = vmatmul.mubr.bf16.gmra.mrb[0].mxu0 %v1276
    %v1315 = vpop.f32.mrb[0].mxu0
    %v1316 = vadd.f32 0.0, %v1315
    %v1317 = vpop.f32.mrb[0].mxu0
    %v1318 = vpop.f32.mrb[0].mxu0
    %v1319 = vpop.f32.mrb[0].mxu0
    %1320 = vdwg.mxu0
    %v1322 = vsel %vm625, %v1087, 0
    %v1325 = vsel %vm1093, %v622, 0
    %1327 = vmatprep.subr.bf16.mxu0 0
    %1328 = vmatpush1.bf16.msra.mxu0 %v1325
    %1329 = vmatprep.subr.bf16.mxu0 0
    %1330 = vmatpush1.bf16.msra.mxu0 0
    %1331 = vmatprep.subr.bf16.mxu0 0
    %1332 = vmatpush1.bf16.msra.mxu0 0
    %1333 = vmatprep.subr.bf16.mxu0 0
    %1334 = vmatpush1.bf16.msra.mxu0 0
    %1335 = vmatprep.subr.bf16.mxu0 0
    %1336 = vmatpush1.bf16.msra.mxu0 0
    %1337 = vmatprep.subr.bf16.mxu0 0
    %1338 = vmatpush1.bf16.msra.mxu0 0
    %1339 = vmatprep.subr.bf16.mxu0 0
    %1340 = vmatpush1.bf16.msra.mxu0 0
    %1341 = vmatprep.subr.bf16.mxu0 0
    %1342 = vmatpush1.bf16.msra.mxu0 0
    %1343 = vmatprep.subr.bf16.mxu0 0
    %1344 = vmatpush1.bf16.msra.mxu0 0
    %1345 = vmatprep.subr.bf16.mxu0 0
    %1346 = vmatpush1.bf16.msra.mxu0 0
    %1347 = vmatprep.subr.bf16.mxu0 0
    %1348 = vmatpush1.bf16.msra.mxu0 0
    %1349 = vmatprep.subr.bf16.mxu0 0
    %1350 = vmatpush1.bf16.msra.mxu0 0
    %1351 = vmatprep.subr.bf16.mxu0 0
    %1352 = vmatpush1.bf16.msra.mxu0 0
    %1353 = vmatprep.subr.bf16.mxu0 0
    %1354 = vmatpush1.bf16.msra.mxu0 0
    %1355 = vmatprep.subr.bf16.mxu0 0
    %1356 = vmatpush1.bf16.msra.mxu0 0
    %1357 = vmatprep.subr.bf16.mxu0 0
    %1358 = vmatpush1.bf16.msra.mxu0 0
    %1359 = vmatprep.mubr.bf16.mxu0 0
    %1360 = vmatmul.mubr.bf16.gmra.mrb[0].mxu0 %v1322
    %v1361 = vpop.f32.mrb[0].mxu0
    %v1362 = vadd.f32 0.0, %v1361
    %v1363 = vpop.f32.mrb[0].mxu0
    %v1364 = vpop.f32.mrb[0].mxu0
    %v1365 = vpop.f32.mrb[0].mxu0
    %1366 = vdwg.mxu0
    %v1368 = vsel %vm625, %v1088, 0
    %v1371 = vsel %vm1093, %v623, 0
    %1373 = vmatprep.subr.bf16.mxu0 0
    %1374 = vmatpush1.bf16.msra.mxu0 %v1371
    %1375 = vmatprep.subr.bf16.mxu0 0
    %1376 = vmatpush1.bf16.msra.mxu0 0
    %1377 = vmatprep.subr.bf16.mxu0 0
    %1378 = vmatpush1.bf16.msra.mxu0 0
    %1379 = vmatprep.subr.bf16.mxu0 0
    %1380 = vmatpush1.bf16.msra.mxu0 0
    %1381 = vmatprep.subr.bf16.mxu0 0
    %1382 = vmatpush1.bf16.msra.mxu0 0
    %1383 = vmatprep.subr.bf16.mxu0 0
    %1384 = vmatpush1.bf16.msra.mxu0 0
    %1385 = vmatprep.subr.bf16.mxu0 0
    %1386 = vmatpush1.bf16.msra.mxu0 0
    %1387 = vmatprep.subr.bf16.mxu0 0
    %1388 = vmatpush1.bf16.msra.mxu0 0
    %1389 = vmatprep.subr.bf16.mxu0 0
    %1390 = vmatpush1.bf16.msra.mxu0 0
    %1391 = vmatprep.subr.bf16.mxu0 0
    %1392 = vmatpush1.bf16.msra.mxu0 0
    %1393 = vmatprep.subr.bf16.mxu0 0
    %1394 = vmatpush1.bf16.msra.mxu0 0
    %1395 = vmatprep.subr.bf16.mxu0 0
    %1396 = vmatpush1.bf16.msra.mxu0 0
    %1397 = vmatprep.subr.bf16.mxu0 0
    %1398 = vmatpush1.bf16.msra.mxu0 0
    %1399 = vmatprep.subr.bf16.mxu0 0
    %1400 = vmatpush1.bf16.msra.mxu0 0
    %1401 = vmatprep.subr.bf16.mxu0 0
    %1402 = vmatpush1.bf16.msra.mxu0 0
    %1403 = vmatprep.subr.bf16.mxu0 0
    %1404 = vmatpush1.bf16.msra.mxu0 0
    %1405 = vmatprep.mubr.bf16.mxu0 0
    %1406 = vmatmul.mubr.bf16.gmra.mrb[0].mxu0 %v1368
    %v1407 = vpop.f32.mrb[0].mxu0
    %v1408 = vadd.f32 0.0, %v1407
    %v1409 = vpop.f32.mrb[0].mxu0
    %v1410 = vpop.f32.mrb[0].mxu0
    %v1411 = vpop.f32.mrb[0].mxu0
    %1412 = vdwg.mxu0
    %v1414 = vsel %vm625, %v1089, 0
    %v1417 = vsel %vm1093, %v624, 0
    %1419 = vmatprep.subr.bf16.mxu0 0
    %1420 = vmatpush1.bf16.msra.mxu0 %v1417
    %1421 = vmatprep.subr.bf16.mxu0 0
    %1422 = vmatpush1.bf16.msra.mxu0 0
    %1423 = vmatprep.subr.bf16.mxu0 0
    %1424 = vmatpush1.bf16.msra.mxu0 0
    %1425 = vmatprep.subr.bf16.mxu0 0
    %1426 = vmatpush1.bf16.msra.mxu0 0
    %1427 = vmatprep.subr.bf16.mxu0 0
    %1428 = vmatpush1.bf16.msra.mxu0 0
    %1429 = vmatprep.subr.bf16.mxu0 0
    %1430 = vmatpush1.bf16.msra.mxu0 0
    %1431 = vmatprep.subr.bf16.mxu0 0
    %1432 = vmatpush1.bf16.msra.mxu0 0
    %1433 = vmatprep.subr.bf16.mxu0 0
    %1434 = vmatpush1.bf16.msra.mxu0 0
    %1435 = vmatprep.subr.bf16.mxu0 0
    %1436 = vmatpush1.bf16.msra.mxu0 0
    %1437 = vmatprep.subr.bf16.mxu0 0
    %1438 = vmatpush1.bf16.msra.mxu0 0
    %1439 = vmatprep.subr.bf16.mxu0 0
    %1440 = vmatpush1.bf16.msra.mxu0 0
    %1441 = vmatprep.subr.bf16.mxu0 0
    %1442 = vmatpush1.bf16.msra.mxu0 0
    %1443 = vmatprep.subr.bf16.mxu0 0
    %1444 = vmatpush1.bf16.msra.mxu0 0
    %1445 = vmatprep.subr.bf16.mxu0 0
    %1446 = vmatpush1.bf16.msra.mxu0 0
    %1447 = vmatprep.subr.bf16.mxu0 0
    %1448 = vmatpush1.bf16.msra.mxu0 0
    %1449 = vmatprep.subr.bf16.mxu0 0
    %1450 = vmatpush1.bf16.msra.mxu0 0
    %1451 = vmatprep.mubr.bf16.mxu0 0
    %1452 = vmatmul.mubr.bf16.gmra.mrb[0].mxu0 %v1414
    %v1453 = vpop.f32.mrb[0].mxu0
    %v1454 = vadd.f32 0.0, %v1453
    %v1455 = vpop.f32.mrb[0].mxu0
    %v1456 = vpop.f32.mrb[0].mxu0
    %v1457 = vpop.f32.mrb[0].mxu0
    %1458 = vdwg.mxu0
    %1459 = vxpose.xlu0.b32.start [1/16] %v1132, 128
    %1460 = vxpose.xlu0.b32.cont [2/16] %v1178, 128
    %1461 = vxpose.xlu0.b32.cont [3/16] 0.0, 128
    %1462 = vxpose.xlu0.b32.cont [4/16] 0.0, 128
    %1463 = vxpose.xlu0.b32.cont [5/16] 0.0, 128
    %1464 = vxpose.xlu0.b32.cont [6/16] 0.0, 128
    %1465 = vxpose.xlu0.b32.cont [7/16] 0.0, 128
    %1466 = vxpose.xlu0.b32.cont [8/16] 0.0, 128
    %1467 = vxpose.xlu0.b32.cont [9/16] 0.0, 128
    %1468 = vxpose.xlu0.b32.cont [10/16] 0.0, 128
    %1469 = vxpose.xlu0.b32.cont [11/16] 0.0, 128
    %1470 = vxpose.xlu0.b32.cont [12/16] 0.0, 128
    %1471 = vxpose.xlu0.b32.cont [13/16] 0.0, 128
    %1472 = vxpose.xlu0.b32.cont [14/16] 0.0, 128
    %1473 = vxpose.xlu0.b32.cont [15/16] 0.0, 128
    %1474 = vxpose.xlu0.b32.end [16/16] 0.0, 128
    %v1475 = vpop.trf.xlu0
    %v1476 = vpop.trf.xlu0
    %v1477 = vpop.trf.xlu0
    %v1478 = vpop.trf.xlu0
    %v1479 = vpop.trf.xlu0
    %v1480 = vpop.trf.xlu0
    %v1481 = vpop.trf.xlu0
    %v1482 = vpop.trf.xlu0
    %v1483 = vpop.trf.xlu0
    %v1484 = vpop.trf.xlu0
    %v1485 = vpop.trf.xlu0
    %v1486 = vpop.trf.xlu0
    %v1487 = vpop.trf.xlu0
    %v1488 = vpop.trf.xlu0
    %v1489 = vpop.trf.xlu0
    %v1490 = vpop.trf.xlu0
    %1491 = vxpose.xlu0.b32.start [1/16] %v1224, 128
    %1492 = vxpose.xlu0.b32.cont [2/16] %v1270, 128
    %1493 = vxpose.xlu0.b32.cont [3/16] 0.0, 128
    %1494 = vxpose.xlu0.b32.cont [4/16] 0.0, 128
    %1495 = vxpose.xlu0.b32.cont [5/16] 0.0, 128
    %1496 = vxpose.xlu0.b32.cont [6/16] 0.0, 128
    %1497 = vxpose.xlu0.b32.cont [7/16] 0.0, 128
    %1498 = vxpose.xlu0.b32.cont [8/16] 0.0, 128
    %1499 = vxpose.xlu0.b32.cont [9/16] 0.0, 128
    %1500 = vxpose.xlu0.b32.cont [10/16] 0.0, 128
    %1501 = vxpose.xlu0.b32.cont [11/16] 0.0, 128
    %1502 = vxpose.xlu0.b32.cont [12/16] 0.0, 128
    %1503 = vxpose.xlu0.b32.cont [13/16] 0.0, 128
    %1504 = vxpose.xlu0.b32.cont [14/16] 0.0, 128
    %1505 = vxpose.xlu0.b32.cont [15/16] 0.0, 128
    %1506 = vxpose.xlu0.b32.end [16/16] 0.0, 128
    %v1507 = vpop.trf.xlu0
    %v1508 = vpop.trf.xlu0
    %v1509 = vpop.trf.xlu0
    %v1510 = vpop.trf.xlu0
    %v1511 = vpop.trf.xlu0
    %v1512 = vpop.trf.xlu0
    %v1513 = vpop.trf.xlu0
    %v1514 = vpop.trf.xlu0
    %v1515 = vpop.trf.xlu0
    %v1516 = vpop.trf.xlu0
    %v1517 = vpop.trf.xlu0
    %v1518 = vpop.trf.xlu0
    %v1519 = vpop.trf.xlu0
    %v1520 = vpop.trf.xlu0
    %v1521 = vpop.trf.xlu0
    %v1522 = vpop.trf.xlu0
    %1523 = vxpose.xlu0.b32.start [1/16] %v1316, 128
    %1524 = vxpose.xlu0.b32.cont [2/16] %v1362, 128
    %1525 = vxpose.xlu0.b32.cont [3/16] 0.0, 128
    %1526 = vxpose.xlu0.b32.cont [4/16] 0.0, 128
    %1527 = vxpose.xlu0.b32.cont [5/16] 0.0, 128
    %1528 = vxpose.xlu0.b32.cont [6/16] 0.0, 128
    %1529 = vxpose.xlu0.b32.cont [7/16] 0.0, 128
    %1530 = vxpose.xlu0.b32.cont [8/16] 0.0, 128
    %1531 = vxpose.xlu0.b32.cont [9/16] 0.0, 128
    %1532 = vxpose.xlu0.b32.cont [10/16] 0.0, 128
    %1533 = vxpose.xlu0.b32.cont [11/16] 0.0, 128
    %1534 = vxpose.xlu0.b32.cont [12/16] 0.0, 128
    %1535 = vxpose.xlu0.b32.cont [13/16] 0.0, 128
    %1536 = vxpose.xlu0.b32.cont [14/16] 0.0, 128
    %1537 = vxpose.xlu0.b32.cont [15/16] 0.0, 128
    %1538 = vxpose.xlu0.b32.end [16/16] 0.0, 128
    %v1539 = vpop.trf.xlu0
    %v1540 = vpop.trf.xlu0
    %v1541 = vpop.trf.xlu0
    %v1542 = vpop.trf.xlu0
    %v1543 = vpop.trf.xlu0
    %v1544 = vpop.trf.xlu0
    %v1545 = vpop.trf.xlu0
    %v1546 = vpop.trf.xlu0
    %v1547 = vpop.trf.xlu0
    %v1548 = vpop.trf.xlu0
    %v1549 = vpop.trf.xlu0
    %v1550 = vpop.trf.xlu0
    %v1551 = vpop.trf.xlu0
    %v1552 = vpop.trf.xlu0
    %v1553 = vpop.trf.xlu0
    %v1554 = vpop.trf.xlu0
    %1555 = vxpose.xlu0.b32.start [1/16] %v1408, 128
    %1556 = vxpose.xlu0.b32.cont [2/16] %v1454, 128
    %1557 = vxpose.xlu0.b32.cont [3/16] 0.0, 128
    %1558 = vxpose.xlu0.b32.cont [4/16] 0.0, 128
    %1559 = vxpose.xlu0.b32.cont [5/16] 0.0, 128
    %1560 = vxpose.xlu0.b32.cont [6/16] 0.0, 128
    %1561 = vxpose.xlu0.b32.cont [7/16] 0.0, 128
    %1562 = vxpose.xlu0.b32.cont [8/16] 0.0, 128
    %1563 = vxpose.xlu0.b32.cont [9/16] 0.0, 128
    %1564 = vxpose.xlu0.b32.cont [10/16] 0.0, 128
    %1565 = vxpose.xlu0.b32.cont [11/16] 0.0, 128
    %1566 = vxpose.xlu0.b32.cont [12/16] 0.0, 128
    %1567 = vxpose.xlu0.b32.cont [13/16] 0.0, 128
    %1568 = vxpose.xlu0.b32.cont [14/16] 0.0, 128
    %1569 = vxpose.xlu0.b32.cont [15/16] 0.0, 128
    %1570 = vxpose.xlu0.b32.end [16/16] 0.0, 128
    %v1571 = vpop.trf.xlu0
    %v1572 = vpop.trf.xlu0
    %v1573 = vpop.trf.xlu0
    %v1574 = vpop.trf.xlu0
    %v1575 = vpop.trf.xlu0
    %v1576 = vpop.trf.xlu0
    %v1577 = vpop.trf.xlu0
    %v1578 = vpop.trf.xlu0
    %v1579 = vpop.trf.xlu0
    %v1580 = vpop.trf.xlu0
    %v1581 = vpop.trf.xlu0
    %v1582 = vpop.trf.xlu0
    %v1583 = vpop.trf.xlu0
    %v1584 = vpop.trf.xlu0
    %v1585 = vpop.trf.xlu0
    %v1586 = vpop.trf.xlu0
    %1587 = vxpose.xlu0.b32.start [1/16] %v1475, 128
    %1588 = vxpose.xlu0.b32.cont [2/16] %v1507, 128
    %1589 = vxpose.xlu0.b32.cont [3/16] %v1539, 128
    %1590 = vxpose.xlu0.b32.cont [4/16] %v1571, 128
    %1591 = vxpose.xlu0.b32.cont [5/16] 0.0, 128
    %1592 = vxpose.xlu0.b32.cont [6/16] 0.0, 128
    %1593 = vxpose.xlu0.b32.cont [7/16] 0.0, 128
    %1594 = vxpose.xlu0.b32.cont [8/16] 0.0, 128
    %1595 = vxpose.xlu0.b32.cont [9/16] 0.0, 128
    %1596 = vxpose.xlu0.b32.cont [10/16] 0.0, 128
    %1597 = vxpose.xlu0.b32.cont [11/16] 0.0, 128
    %1598 = vxpose.xlu0.b32.cont [12/16] 0.0, 128
    %1599 = vxpose.xlu0.b32.cont [13/16] 0.0, 128
    %1600 = vxpose.xlu0.b32.cont [14/16] 0.0, 128
    %1601 = vxpose.xlu0.b32.cont [15/16] 0.0, 128
    %1602 = vxpose.xlu0.b32.end [16/16] 0.0, 128
    %v1603 = vpop.trf.xlu0
    %v1604 = vpop.trf.xlu0
    %v1605 = vpop.trf.xlu0
    %v1606 = vpop.trf.xlu0
    %v1607 = vpop.trf.xlu0
    %v1608 = vpop.trf.xlu0
    %v1609 = vpop.trf.xlu0
    %v1610 = vpop.trf.xlu0
    %v1611 = vpop.trf.xlu0
    %v1612 = vpop.trf.xlu0
    %v1613 = vpop.trf.xlu0
    %v1614 = vpop.trf.xlu0
    %v1615 = vpop.trf.xlu0
    %v1616 = vpop.trf.xlu0
    %v1617 = vpop.trf.xlu0
    %v1618 = vpop.trf.xlu0
    %v1619 = vpack.c.bf16 %v1604, %v1603
    %v1620 = vld [vmem:[%s4 + $0x10] sm:$0xf]
    %v1621 = vld [vmem:[%s4 + $0x14] sm:$0xf]
    %v1622 = vld [vmem:[%s4 + $0x18] sm:$0xf]
    %v1623 = vld [vmem:[%s4 + $0x1c] sm:$0xf]
    %v1624 = vld [vmem:[%s5 + $0x1] sm:$0x1]
    %v1625 = vlaneseq
    %v1626 = vshrl.u32 %v1625, 7
    %v1627 = vsub.s32 0, %v1626
    %v1628 = vrot.slane %v1624, %v1627
    %v1633 = vunpack.c.l.b16 %v1620
    %v1634 = vunpack.c.l.b16 %v1621
    %v1635 = vunpack.c.l.b16 %v1622
    %v1636 = vunpack.c.l.b16 %v1623
    %v1637 = vpack.c.b16 %v1634, %v1633
    %v1638 = vpack.c.b16 %v1636, %v1635
    %v1642 = vsel %vm62, %v1619, 0
    %1644 = vmatprep.subr.bf16.mxu0 0
    %1645 = vmatpush1.bf16.msra.mxu0 %v1637
    %1646 = vmatprep.subr.bf16.mxu0 0
    %1647 = vmatpush1.bf16.msra.mxu0 %v1638
    %1648 = vmatprep.subr.bf16.mxu0 0
    %1649 = vmatpush1.bf16.msra.mxu0 0
    %1650 = vmatprep.subr.bf16.mxu0 0
    %1651 = vmatpush1.bf16.msra.mxu0 0
    %1652 = vmatprep.subr.bf16.mxu0 0
    %1653 = vmatpush1.bf16.msra.mxu0 0
    %1654 = vmatprep.subr.bf16.mxu0 0
    %1655 = vmatpush1.bf16.msra.mxu0 0
    %1656 = vmatprep.subr.bf16.mxu0 0
    %1657 = vmatpush1.bf16.msra.mxu0 0
    %1658 = vmatprep.subr.bf16.mxu0 0
    %1659 = vmatpush1.bf16.msra.mxu0 0
    %1660 = vmatprep.subr.bf16.mxu0 0
    %1661 = vmatpush1.bf16.msra.mxu0 0
    %1662 = vmatprep.subr.bf16.mxu0 0
    %1663 = vmatpush1.bf16.msra.mxu0 0
    %1664 = vmatprep.subr.bf16.mxu0 0
    %1665 = vmatpush1.bf16.msra.mxu0 0
    %1666 = vmatprep.subr.bf16.mxu0 0
    %1667 = vmatpush1.bf16.msra.mxu0 0
    %1668 = vmatprep.subr.bf16.mxu0 0
    %1669 = vmatpush1.bf16.msra.mxu0 0
    %1670 = vmatprep.subr.bf16.mxu0 0
    %1671 = vmatpush1.bf16.msra.mxu0 0
    %1672 = vmatprep.subr.bf16.mxu0 0
    %1673 = vmatpush1.bf16.msra.mxu0 0
    %1674 = vmatprep.subr.bf16.mxu0 0
    %1675 = vmatpush1.bf16.msra.mxu0 0
    %1676 = vmatprep.mubr.bf16.mxu0 0
    %1677 = vmatmul.mubr.bf16.gmra.mrb[0].mxu0 %v1642
    %v1678 = vpop.f32.mrb[0].mxu0
    %v1679 = vadd.f32 %v1628, %v1678
    %v1680 = vpop.f32.mrb[0].mxu0
    %v1681 = vpop.f32.mrb[0].mxu0
    %v1682 = vadd.f32 %v1628, %v1681
    %v1683 = vpop.f32.mrb[0].mxu0
    %1684 = vdwg.mxu0
    %v1685 = vadd.f32 %v28, %v1679
    %v1686 = vadd.f32 %v29, %v1682
    %v1687 = vsel %vm62, %v1685, 0.0
    %1688 = vadd.xlane.f32.xlu0 %v1687
    %v1689 = vpop.xlane.xlu0 %1688
    %v1690 = vsel %vm62, %v1686, 0.0
    %1691 = vadd.xlane.f32.xlu0 %v1690
    %v1692 = vpop.xlane.xlu0 %1691
    %v1693 = vrcp.pop 32.0
    %v1694 = vmul.f32 %v1689, %v1693
    %v1695 = vmul.f32 %v1692, %v1693
    %v1696 = vsub.f32 %v1685, %v1694
    %v1697 = vsub.f32 %v1686, %v1695
    %v1698 = vmul.f32 %v1696, %v1696
    %v1699 = vmul.f32 %v1697, %v1697
    %v1700 = vsel %vm62, %v1698, 0.0
    %1701 = vadd.xlane.f32.xlu0 %v1700
    %v1702 = vpop.xlane.xlu0 %1701
    %v1703 = vsel %vm62, %v1699, 0.0
    %1704 = vadd.xlane.f32.xlu0 %v1703
    %v1705 = vpop.xlane.xlu0 %1704
    %v1706 = vmul.f32 %v1702, %v1693
    %v1707 = vmul.f32 %v1705, %v1693
    %v1708 = vadd.f32 %v1706, 1e-05
    %v1709 = vadd.f32 %v1707, 1e-05
    %v1710 = vrsqrt.pop %v1708
    %v1711 = vrsqrt.pop %v1709
    %v1712 = vmul.f32 %v1696, %v1710
    %v1713 = vmul.f32 %v1697, %v1711
    %v1714 = vld [vmem:[%s5 + $0x6] sm:$0x1]
    %v1715 = vlaneseq
    %v1716 = vshrl.u32 %v1715, 7
    %v1717 = vsub.s32 0, %v1716
    %v1718 = vrot.slane %v1714, %v1717
    %v1719 = vmul.f32 %v1712, %v1718
    %v1720 = vmul.f32 %v1713, %v1718
    %v1721 = vld [vmem:[%s5 + $0x7] sm:$0x1]
    %v1722 = vlaneseq
    %v1723 = vshrl.u32 %v1722, 7
    %v1724 = vsub.s32 0, %v1723
    %v1725 = vrot.slane %v1721, %v1724
    %v1726 = vadd.f32 %v1719, %v1725
    %v1727 = vadd.f32 %v1720, %v1725
    %v1728 = vpack.c.bf16 %v1727, %v1726
    %v1729 = vld [vmem:[%s4 + $0x20] sm:$0xf]
    %v1730 = vld [vmem:[%s4 + $0x24] sm:$0xf]
    %v1731 = vld [vmem:[%s4 + $0x28] sm:$0xf]
    %v1732 = vld [vmem:[%s4 + $0x2c] sm:$0xf]
    %v1733 = vld [vmem:[%s5 + $0x2] sm:$0x1]
    %v1734 = vlaneseq
    %v1735 = vshrl.u32 %v1734, 7
    %v1736 = vsub.s32 0, %v1735
    %v1737 = vrot.slane %v1733, %v1736
    %v1742 = vunpack.c.l.b16 %v1729
    %v1743 = vunpack.c.l.b16 %v1730
    %v1744 = vunpack.c.l.b16 %v1731
    %v1745 = vunpack.c.l.b16 %v1732
    %v1746 = vpack.c.b16 %v1743, %v1742
    %v1747 = vpack.c.b16 %v1745, %v1744
    %v1751 = vsel %vm62, %v1728, 0
    %1753 = vmatprep.subr.bf16.mxu0 0
    %1754 = vmatpush1.bf16.msra.mxu0 %v1746
    %1755 = vmatprep.subr.bf16.mxu0 0
    %1756 = vmatpush1.bf16.msra.mxu0 %v1747
    %1757 = vmatprep.subr.bf16.mxu0 0
    %1758 = vmatpush1.bf16.msra.mxu0 0
    %1759 = vmatprep.subr.bf16.mxu0 0
    %1760 = vmatpush1.bf16.msra.mxu0 0
    %1761 = vmatprep.subr.bf16.mxu0 0
    %1762 = vmatpush1.bf16.msra.mxu0 0
    %1763 = vmatprep.subr.bf16.mxu0 0
    %1764 = vmatpush1.bf16.msra.mxu0 0
    %1765 = vmatprep.subr.bf16.mxu0 0
    %1766 = vmatpush1.bf16.msra.mxu0 0
    %1767 = vmatprep.subr.bf16.mxu0 0
    %1768 = vmatpush1.bf16.msra.mxu0 0
    %1769 = vmatprep.subr.bf16.mxu0 0
    %1770 = vmatpush1.bf16.msra.mxu0 0
    %1771 = vmatprep.subr.bf16.mxu0 0
    %1772 = vmatpush1.bf16.msra.mxu0 0
    %1773 = vmatprep.subr.bf16.mxu0 0
    %1774 = vmatpush1.bf16.msra.mxu0 0
    %1775 = vmatprep.subr.bf16.mxu0 0
    %1776 = vmatpush1.bf16.msra.mxu0 0
    %1777 = vmatprep.subr.bf16.mxu0 0
    %1778 = vmatpush1.bf16.msra.mxu0 0
    %1779 = vmatprep.subr.bf16.mxu0 0
    %1780 = vmatpush1.bf16.msra.mxu0 0
    %1781 = vmatprep.subr.bf16.mxu0 0
    %1782 = vmatpush1.bf16.msra.mxu0 0
    %1783 = vmatprep.subr.bf16.mxu0 0
    %1784 = vmatpush1.bf16.msra.mxu0 0
    %1785 = vmatprep.mubr.bf16.mxu0 0
    %1786 = vmatmul.mubr.bf16.gmra.mrb[0].mxu0 %v1751
    %v1787 = vpop.f32.mrb[0].mxu0
    %v1788 = vadd.f32 %v1737, %v1787
    %v1789 = vpop.f32.mrb[0].mxu0
    %v1790 = vpop.f32.mrb[0].mxu0
    %v1791 = vadd.f32 %v1737, %v1790
    %v1792 = vpop.f32.mrb[0].mxu0
    %1793 = vdwg.mxu0
    %1794 = vrot.lane.b32.xlu0 %v1746, 96
    %v1795 = vpop.permute.xlu0 %1794
    %1796 = vrot.lane.b32.xlu0 %v1747, 96
    %v1797 = vpop.permute.xlu0 %1796
    %1801 = vrot.lane.b32.xlu0 %v1737, 96
    %v1802 = vpop.permute.xlu0 %1801
    %v1805 = vsel %vm62, %v34, 0
    %v1808 = vsel %vm62, %v35, 0
    %1810 = vmatprep.subr.bf16.mxu0 0
    %1811 = vmatpush1.bf16.msra.mxu0 %v1795
    %1812 = vmatprep.subr.bf16.mxu0 0
    %1813 = vmatpush1.bf16.msra.mxu0 %v1797
    %1814 = vmatprep.subr.bf16.mxu0 0
    %1815 = vmatpush1.bf16.msra.mxu0 0
    %1816 = vmatprep.subr.bf16.mxu0 0
    %1817 = vmatpush1.bf16.msra.mxu0 0
    %1818 = vmatprep.subr.bf16.mxu0 0
    %1819 = vmatpush1.bf16.msra.mxu0 0
    %1820 = vmatprep.subr.bf16.mxu0 0
    %1821 = vmatpush1.bf16.msra.mxu0 0
    %1822 = vmatprep.subr.bf16.mxu0 0
    %1823 = vmatpush1.bf16.msra.mxu0 0
    %1824 = vmatprep.subr.bf16.mxu0 0
    %1825 = vmatpush1.bf16.msra.mxu0 0
    %1826 = vmatprep.subr.bf16.mxu0 0
    %1827 = vmatpush1.bf16.msra.mxu0 0
    %1828 = vmatprep.subr.bf16.mxu0 0
    %1829 = vmatpush1.bf16.msra.mxu0 0
    %1830 = vmatprep.subr.bf16.mxu0 0
    %1831 = vmatpush1.bf16.msra.mxu0 0
    %1832 = vmatprep.subr.bf16.mxu0 0
    %1833 = vmatpush1.bf16.msra.mxu0 0
    %1834 = vmatprep.subr.bf16.mxu0 0
    %1835 = vmatpush1.bf16.msra.mxu0 0
    %1836 = vmatprep.subr.bf16.mxu0 0
    %1837 = vmatpush1.bf16.msra.mxu0 0
    %1838 = vmatprep.subr.bf16.mxu0 0
    %1839 = vmatpush1.bf16.msra.mxu0 0
    %1840 = vmatprep.subr.bf16.mxu0 0
    %1841 = vmatpush1.bf16.msra.mxu0 0
    %1842 = vmatprep.mubr.bf16.mxu0 0
    %1843 = vmatmul.mubr.bf16.gmra.mrb[0].mxu0 %v1805
    %v1844 = vpop.f32.mrb[0].mxu0
    %v1845 = vadd.f32 %v1802, %v1844
    %v1846 = vpop.f32.mrb[0].mxu0
    %v1847 = vpop.f32.mrb[0].mxu0
    %v1848 = vadd.f32 %v1802, %v1847
    %v1849 = vpop.f32.mrb[0].mxu0
    %1850 = vmatprep.mubr.bf16.mxu0 0
    %1851 = vmatmul.mubr.bf16.gmra.mrb[0].mxu0 %v1808
    %v1852 = vpop.f32.mrb[0].mxu0
    %v1853 = vadd.f32 %v1802, %v1852
    %v1854 = vpop.f32.mrb[0].mxu0
    %v1855 = vpop.f32.mrb[0].mxu0
    %v1856 = vadd.f32 %v1802, %v1855
    %v1857 = vpop.f32.mrb[0].mxu0
    %1858 = vdwg.mxu0
    %1859 = vxpose.xlu0.b32.start [1/16] %v1788, 128
    %1860 = vxpose.xlu0.b32.cont [2/16] %v1791, 128
    %1861 = vxpose.xlu0.b32.cont [3/16] 0.0, 128
    %1862 = vxpose.xlu0.b32.cont [4/16] 0.0, 128
    %1863 = vxpose.xlu0.b32.cont [5/16] 0.0, 128
    %1864 = vxpose.xlu0.b32.cont [6/16] 0.0, 128
    %1865 = vxpose.xlu0.b32.cont [7/16] 0.0, 128
    %1866 = vxpose.xlu0.b32.cont [8/16] 0.0, 128
    %1867 = vxpose.xlu0.b32.cont [9/16] 0.0, 128
    %1868 = vxpose.xlu0.b32.cont [10/16] 0.0, 128
    %1869 = vxpose.xlu0.b32.cont [11/16] 0.0, 128
    %1870 = vxpose.xlu0.b32.cont [12/16] 0.0, 128
    %1871 = vxpose.xlu0.b32.cont [13/16] 0.0, 128
    %1872 = vxpose.xlu0.b32.cont [14/16] 0.0, 128
    %1873 = vxpose.xlu0.b32.cont [15/16] 0.0, 128
    %1874 = vxpose.xlu0.b32.end [16/16] 0.0, 128
    %v1875 = vpop.trf.xlu0
    %v1876 = vpop.trf.xlu0
    %v1877 = vpop.trf.xlu0
    %v1878 = vpop.trf.xlu0
    %v1879 = vpop.trf.xlu0
    %v1880 = vpop.trf.xlu0
    %v1881 = vpop.trf.xlu0
    %v1882 = vpop.trf.xlu0
    %v1883 = vpop.trf.xlu0
    %v1884 = vpop.trf.xlu0
    %v1885 = vpop.trf.xlu0
    %v1886 = vpop.trf.xlu0
    %v1887 = vpop.trf.xlu0
    %v1888 = vpop.trf.xlu0
    %v1889 = vpop.trf.xlu0
    %v1890 = vpop.trf.xlu0
    %1891 = vxpose.xlu0.b32.start [1/16] %v1875, 128
    %1892 = vxpose.xlu0.b32.cont [2/16] 0.0, 128
    %1893 = vxpose.xlu0.b32.cont [3/16] 0.0, 128
    %1894 = vxpose.xlu0.b32.cont [4/16] 0.0, 128
    %1895 = vxpose.xlu0.b32.cont [5/16] 0.0, 128
    %1896 = vxpose.xlu0.b32.cont [6/16] 0.0, 128
    %1897 = vxpose.xlu0.b32.cont [7/16] 0.0, 128
    %1898 = vxpose.xlu0.b32.cont [8/16] 0.0, 128
    %1899 = vxpose.xlu0.b32.cont [9/16] 0.0, 128
    %1900 = vxpose.xlu0.b32.cont [10/16] 0.0, 128
    %1901 = vxpose.xlu0.b32.cont [11/16] 0.0, 128
    %1902 = vxpose.xlu0.b32.cont [12/16] 0.0, 128
    %1903 = vxpose.xlu0.b32.cont [13/16] 0.0, 128
    %1904 = vxpose.xlu0.b32.cont [14/16] 0.0, 128
    %1905 = vxpose.xlu0.b32.cont [15/16] 0.0, 128
    %1906 = vxpose.xlu0.b32.end [16/16] 0.0, 128
    %v1907 = vpop.trf.xlu0
    %v1908 = vpop.trf.xlu0
    %v1909 = vpop.trf.xlu0
    %v1910 = vpop.trf.xlu0
    %v1911 = vpop.trf.xlu0
    %v1912 = vpop.trf.xlu0
    %v1913 = vpop.trf.xlu0
    %v1914 = vpop.trf.xlu0
    %v1915 = vpop.trf.xlu0
    %v1916 = vpop.trf.xlu0
    %v1917 = vpop.trf.xlu0
    %v1918 = vpop.trf.xlu0
    %v1919 = vpop.trf.xlu0
    %v1920 = vpop.trf.xlu0
    %v1921 = vpop.trf.xlu0
    %v1922 = vpop.trf.xlu0
    %1923 = vxpose.xlu0.b32.start [1/16] %v1876, 128
    %1924 = vxpose.xlu0.b32.cont [2/16] 0.0, 128
    %1925 = vxpose.xlu0.b32.cont [3/16] 0.0, 128
    %1926 = vxpose.xlu0.b32.cont [4/16] 0.0, 128
    %1927 = vxpose.xlu0.b32.cont [5/16] 0.0, 128
    %1928 = vxpose.xlu0.b32.cont [6/16] 0.0, 128
    %1929 = vxpose.xlu0.b32.cont [7/16] 0.0, 128
    %1930 = vxpose.xlu0.b32.cont [8/16] 0.0, 128
    %1931 = vxpose.xlu0.b32.cont [9/16] 0.0, 128
    %1932 = vxpose.xlu0.b32.cont [10/16] 0.0, 128
    %1933 = vxpose.xlu0.b32.cont [11/16] 0.0, 128
    %1934 = vxpose.xlu0.b32.cont [12/16] 0.0, 128
    %1935 = vxpose.xlu0.b32.cont [13/16] 0.0, 128
    %1936 = vxpose.xlu0.b32.cont [14/16] 0.0, 128
    %1937 = vxpose.xlu0.b32.cont [15/16] 0.0, 128
    %1938 = vxpose.xlu0.b32.end [16/16] 0.0, 128
    %v1939 = vpop.trf.xlu0
    %v1940 = vpop.trf.xlu0
    %v1941 = vpop.trf.xlu0
    %v1942 = vpop.trf.xlu0
    %v1943 = vpop.trf.xlu0
    %v1944 = vpop.trf.xlu0
    %v1945 = vpop.trf.xlu0
    %v1946 = vpop.trf.xlu0
    %v1947 = vpop.trf.xlu0
    %v1948 = vpop.trf.xlu0
    %v1949 = vpop.trf.xlu0
    %v1950 = vpop.trf.xlu0
    %v1951 = vpop.trf.xlu0
    %v1952 = vpop.trf.xlu0
    %v1953 = vpop.trf.xlu0
    %v1954 = vpop.trf.xlu0
    %1955 = vxpose.xlu0.b32.start [1/16] %v1877, 128
    %1956 = vxpose.xlu0.b32.cont [2/16] 0.0, 128
    %1957 = vxpose.xlu0.b32.cont [3/16] 0.0, 128
    %1958 = vxpose.xlu0.b32.cont [4/16] 0.0, 128
    %1959 = vxpose.xlu0.b32.cont [5/16] 0.0, 128
    %1960 = vxpose.xlu0.b32.cont [6/16] 0.0, 128
    %1961 = vxpose.xlu0.b32.cont [7/16] 0.0, 128
    %1962 = vxpose.xlu0.b32.cont [8/16] 0.0, 128
    %1963 = vxpose.xlu0.b32.cont [9/16] 0.0, 128
    %1964 = vxpose.xlu0.b32.cont [10/16] 0.0, 128
    %1965 = vxpose.xlu0.b32.cont [11/16] 0.0, 128
    %1966 = vxpose.xlu0.b32.cont [12/16] 0.0, 128
    %1967 = vxpose.xlu0.b32.cont [13/16] 0.0, 128
    %1968 = vxpose.xlu0.b32.cont [14/16] 0.0, 128
    %1969 = vxpose.xlu0.b32.cont [15/16] 0.0, 128
    %1970 = vxpose.xlu0.b32.end [16/16] 0.0, 128
    %v1971 = vpop.trf.xlu0
    %v1972 = vpop.trf.xlu0
    %v1973 = vpop.trf.xlu0
    %v1974 = vpop.trf.xlu0
    %v1975 = vpop.trf.xlu0
    %v1976 = vpop.trf.xlu0
    %v1977 = vpop.trf.xlu0
    %v1978 = vpop.trf.xlu0
    %v1979 = vpop.trf.xlu0
    %v1980 = vpop.trf.xlu0
    %v1981 = vpop.trf.xlu0
    %v1982 = vpop.trf.xlu0
    %v1983 = vpop.trf.xlu0
    %v1984 = vpop.trf.xlu0
    %v1985 = vpop.trf.xlu0
    %v1986 = vpop.trf.xlu0
    %1987 = vxpose.xlu0.b32.start [1/16] %v1878, 128
    %1988 = vxpose.xlu0.b32.cont [2/16] 0.0, 128
    %1989 = vxpose.xlu0.b32.cont [3/16] 0.0, 128
    %1990 = vxpose.xlu0.b32.cont [4/16] 0.0, 128
    %1991 = vxpose.xlu0.b32.cont [5/16] 0.0, 128
    %1992 = vxpose.xlu0.b32.cont [6/16] 0.0, 128
    %1993 = vxpose.xlu0.b32.cont [7/16] 0.0, 128
    %1994 = vxpose.xlu0.b32.cont [8/16] 0.0, 128
    %1995 = vxpose.xlu0.b32.cont [9/16] 0.0, 128
    %1996 = vxpose.xlu0.b32.cont [10/16] 0.0, 128
    %1997 = vxpose.xlu0.b32.cont [11/16] 0.0, 128
    %1998 = vxpose.xlu0.b32.cont [12/16] 0.0, 128
    %1999 = vxpose.xlu0.b32.cont [13/16] 0.0, 128
    %2000 = vxpose.xlu0.b32.cont [14/16] 0.0, 128
    %2001 = vxpose.xlu0.b32.cont [15/16] 0.0, 128
    %2002 = vxpose.xlu0.b32.end [16/16] 0.0, 128
    %v2003 = vpop.trf.xlu0
    %v2004 = vpop.trf.xlu0
    %v2005 = vpop.trf.xlu0
    %v2006 = vpop.trf.xlu0
    %v2007 = vpop.trf.xlu0
    %v2008 = vpop.trf.xlu0
    %v2009 = vpop.trf.xlu0
    %v2010 = vpop.trf.xlu0
    %v2011 = vpop.trf.xlu0
    %v2012 = vpop.trf.xlu0
    %v2013 = vpop.trf.xlu0
    %v2014 = vpop.trf.xlu0
    %v2015 = vpop.trf.xlu0
    %v2016 = vpop.trf.xlu0
    %v2017 = vpop.trf.xlu0
    %v2018 = vpop.trf.xlu0
    %v2019 = vpack.c.bf16 %v1907, %v1907
    %v2020 = vpack.c.bf16 %v1908, %v1908
    %v2021 = vpack.c.bf16 %v1939, %v1939
    %v2022 = vpack.c.bf16 %v1940, %v1940
    %v2023 = vpack.c.bf16 %v1971, %v1971
    %v2024 = vpack.c.bf16 %v1972, %v1972
    %v2025 = vpack.c.bf16 %v2003, %v2003
    %v2026 = vpack.c.bf16 %v2004, %v2004
    %2027 = vxpose.xlu0.b32.start [1/16] %v1845, 128
    %2028 = vxpose.xlu0.b32.cont [2/16] %v1848, 128
    %2029 = vxpose.xlu0.b32.cont [3/16] %v1853, 128
    %2030 = vxpose.xlu0.b32.cont [4/16] %v1856, 128
    %2031 = vxpose.xlu0.b32.cont [5/16] 0.0, 128
    %2032 = vxpose.xlu0.b32.cont [6/16] 0.0, 128
    %2033 = vxpose.xlu0.b32.cont [7/16] 0.0, 128
    %2034 = vxpose.xlu0.b32.cont [8/16] 0.0, 128
    %2035 = vxpose.xlu0.b32.cont [9/16] 0.0, 128
    %2036 = vxpose.xlu0.b32.cont [10/16] 0.0, 128
    %2037 = vxpose.xlu0.b32.cont [11/16] 0.0, 128
    %2038 = vxpose.xlu0.b32.cont [12/16] 0.0, 128
    %2039 = vxpose.xlu0.b32.cont [13/16] 0.0, 128
    %2040 = vxpose.xlu0.b32.cont [14/16] 0.0, 128
    %2041 = vxpose.xlu0.b32.cont [15/16] 0.0, 128
    %2042 = vxpose.xlu0.b32.end [16/16] 0.0, 128
    %v2043 = vpop.trf.xlu0
    %v2044 = vpop.trf.xlu0
    %v2045 = vpop.trf.xlu0
    %v2046 = vpop.trf.xlu0
    %v2047 = vpop.trf.xlu0
    %v2048 = vpop.trf.xlu0
    %v2049 = vpop.trf.xlu0
    %v2050 = vpop.trf.xlu0
    %v2051 = vpop.trf.xlu0
    %v2052 = vpop.trf.xlu0
    %v2053 = vpop.trf.xlu0
    %v2054 = vpop.trf.xlu0
    %v2055 = vpop.trf.xlu0
    %v2056 = vpop.trf.xlu0
    %v2057 = vpop.trf.xlu0
    %v2058 = vpop.trf.xlu0
    %2059 = vxpose.xlu0.b32.start [1/16] %v2043, 128
    %2060 = vxpose.xlu0.b32.cont [2/16] 0.0, 128
    %2061 = vxpose.xlu0.b32.cont [3/16] 0.0, 128
    %2062 = vxpose.xlu0.b32.cont [4/16] 0.0, 128
    %2063 = vxpose.xlu0.b32.cont [5/16] 0.0, 128
    %2064 = vxpose.xlu0.b32.cont [6/16] 0.0, 128
    %2065 = vxpose.xlu0.b32.cont [7/16] 0.0, 128
    %2066 = vxpose.xlu0.b32.cont [8/16] 0.0, 128
    %2067 = vxpose.xlu0.b32.cont [9/16] 0.0, 128
    %2068 = vxpose.xlu0.b32.cont [10/16] 0.0, 128
    %2069 = vxpose.xlu0.b32.cont [11/16] 0.0, 128
    %2070 = vxpose.xlu0.b32.cont [12/16] 0.0, 128
    %2071 = vxpose.xlu0.b32.cont [13/16] 0.0, 128
    %2072 = vxpose.xlu0.b32.cont [14/16] 0.0, 128
    %2073 = vxpose.xlu0.b32.cont [15/16] 0.0, 128
    %2074 = vxpose.xlu0.b32.end [16/16] 0.0, 128
    %v2075 = vpop.trf.xlu0
    %v2076 = vpop.trf.xlu0
    %v2077 = vpop.trf.xlu0
    %v2078 = vpop.trf.xlu0
    %v2079 = vpop.trf.xlu0
    %v2080 = vpop.trf.xlu0
    %v2081 = vpop.trf.xlu0
    %v2082 = vpop.trf.xlu0
    %v2083 = vpop.trf.xlu0
    %v2084 = vpop.trf.xlu0
    %v2085 = vpop.trf.xlu0
    %v2086 = vpop.trf.xlu0
    %v2087 = vpop.trf.xlu0
    %v2088 = vpop.trf.xlu0
    %v2089 = vpop.trf.xlu0
    %v2090 = vpop.trf.xlu0
    %2091 = vxpose.xlu0.b32.start [1/16] %v2044, 128
    %2092 = vxpose.xlu0.b32.cont [2/16] 0.0, 128
    %2093 = vxpose.xlu0.b32.cont [3/16] 0.0, 128
    %2094 = vxpose.xlu0.b32.cont [4/16] 0.0, 128
    %2095 = vxpose.xlu0.b32.cont [5/16] 0.0, 128
    %2096 = vxpose.xlu0.b32.cont [6/16] 0.0, 128
    %2097 = vxpose.xlu0.b32.cont [7/16] 0.0, 128
    %2098 = vxpose.xlu0.b32.cont [8/16] 0.0, 128
    %2099 = vxpose.xlu0.b32.cont [9/16] 0.0, 128
    %2100 = vxpose.xlu0.b32.cont [10/16] 0.0, 128
    %2101 = vxpose.xlu0.b32.cont [11/16] 0.0, 128
    %2102 = vxpose.xlu0.b32.cont [12/16] 0.0, 128
    %2103 = vxpose.xlu0.b32.cont [13/16] 0.0, 128
    %2104 = vxpose.xlu0.b32.cont [14/16] 0.0, 128
    %2105 = vxpose.xlu0.b32.cont [15/16] 0.0, 128
    %2106 = vxpose.xlu0.b32.end [16/16] 0.0, 128
    %v2107 = vpop.trf.xlu0
    %v2108 = vpop.trf.xlu0
    %v2109 = vpop.trf.xlu0
    %v2110 = vpop.trf.xlu0
    %v2111 = vpop.trf.xlu0
    %v2112 = vpop.trf.xlu0
    %v2113 = vpop.trf.xlu0
    %v2114 = vpop.trf.xlu0
    %v2115 = vpop.trf.xlu0
    %v2116 = vpop.trf.xlu0
    %v2117 = vpop.trf.xlu0
    %v2118 = vpop.trf.xlu0
    %v2119 = vpop.trf.xlu0
    %v2120 = vpop.trf.xlu0
    %v2121 = vpop.trf.xlu0
    %v2122 = vpop.trf.xlu0
    %2123 = vxpose.xlu0.b32.start [1/16] %v2045, 128
    %2124 = vxpose.xlu0.b32.cont [2/16] 0.0, 128
    %2125 = vxpose.xlu0.b32.cont [3/16] 0.0, 128
    %2126 = vxpose.xlu0.b32.cont [4/16] 0.0, 128
    %2127 = vxpose.xlu0.b32.cont [5/16] 0.0, 128
    %2128 = vxpose.xlu0.b32.cont [6/16] 0.0, 128
    %2129 = vxpose.xlu0.b32.cont [7/16] 0.0, 128
    %2130 = vxpose.xlu0.b32.cont [8/16] 0.0, 128
    %2131 = vxpose.xlu0.b32.cont [9/16] 0.0, 128
    %2132 = vxpose.xlu0.b32.cont [10/16] 0.0, 128
    %2133 = vxpose.xlu0.b32.cont [11/16] 0.0, 128
    %2134 = vxpose.xlu0.b32.cont [12/16] 0.0, 128
    %2135 = vxpose.xlu0.b32.cont [13/16] 0.0, 128
    %2136 = vxpose.xlu0.b32.cont [14/16] 0.0, 128
    %2137 = vxpose.xlu0.b32.cont [15/16] 0.0, 128
    %2138 = vxpose.xlu0.b32.end [16/16] 0.0, 128
    %v2139 = vpop.trf.xlu0
    %v2140 = vpop.trf.xlu0
    %v2141 = vpop.trf.xlu0
    %v2142 = vpop.trf.xlu0
    %v2143 = vpop.trf.xlu0
    %v2144 = vpop.trf.xlu0
    %v2145 = vpop.trf.xlu0
    %v2146 = vpop.trf.xlu0
    %v2147 = vpop.trf.xlu0
    %v2148 = vpop.trf.xlu0
    %v2149 = vpop.trf.xlu0
    %v2150 = vpop.trf.xlu0
    %v2151 = vpop.trf.xlu0
    %v2152 = vpop.trf.xlu0
    %v2153 = vpop.trf.xlu0
    %v2154 = vpop.trf.xlu0
    %2155 = vxpose.xlu0.b32.start [1/16] %v2046, 128
    %2156 = vxpose.xlu0.b32.cont [2/16] 0.0, 128
    %2157 = vxpose.xlu0.b32.cont [3/16] 0.0, 128
    %2158 = vxpose.xlu0.b32.cont [4/16] 0.0, 128
    %2159 = vxpose.xlu0.b32.cont [5/16] 0.0, 128
    %2160 = vxpose.xlu0.b32.cont [6/16] 0.0, 128
    %2161 = vxpose.xlu0.b32.cont [7/16] 0.0, 128
    %2162 = vxpose.xlu0.b32.cont [8/16] 0.0, 128
    %2163 = vxpose.xlu0.b32.cont [9/16] 0.0, 128
    %2164 = vxpose.xlu0.b32.cont [10/16] 0.0, 128
    %2165 = vxpose.xlu0.b32.cont [11/16] 0.0, 128
    %2166 = vxpose.xlu0.b32.cont [12/16] 0.0, 128
    %2167 = vxpose.xlu0.b32.cont [13/16] 0.0, 128
    %2168 = vxpose.xlu0.b32.cont [14/16] 0.0, 128
    %2169 = vxpose.xlu0.b32.cont [15/16] 0.0, 128
    %2170 = vxpose.xlu0.b32.end [16/16] 0.0, 128
    %v2171 = vpop.trf.xlu0
    %v2172 = vpop.trf.xlu0
    %v2173 = vpop.trf.xlu0
    %v2174 = vpop.trf.xlu0
    %v2175 = vpop.trf.xlu0
    %v2176 = vpop.trf.xlu0
    %v2177 = vpop.trf.xlu0
    %v2178 = vpop.trf.xlu0
    %v2179 = vpop.trf.xlu0
    %v2180 = vpop.trf.xlu0
    %v2181 = vpop.trf.xlu0
    %v2182 = vpop.trf.xlu0
    %v2183 = vpop.trf.xlu0
    %v2184 = vpop.trf.xlu0
    %v2185 = vpop.trf.xlu0
    %v2186 = vpop.trf.xlu0
    %v2187 = vpack.c.bf16 %v2076, %v2075
    %v2188 = vpack.c.bf16 %v2078, %v2077
    %v2189 = vpack.c.bf16 %v2108, %v2107
    %v2190 = vpack.c.bf16 %v2110, %v2109
    %v2191 = vpack.c.bf16 %v2140, %v2139
    %v2192 = vpack.c.bf16 %v2142, %v2141
    %v2193 = vpack.c.bf16 %v2172, %v2171
    %v2194 = vpack.c.bf16 %v2174, %v2173
    %2199 = vrot.lane.b32.xlu0 %v1845, 96
    %v2200 = vpop.permute.xlu0 %2199
    %2201 = vrot.lane.b32.xlu0 %v1848, 96
    %v2202 = vpop.permute.xlu0 %2201
    %2203 = vrot.lane.b32.xlu0 %v1853, 96
    %v2204 = vpop.permute.xlu0 %2203
    %2205 = vrot.lane.b32.xlu0 %v1856, 96
    %v2206 = vpop.permute.xlu0 %2205
    %2211 = vxpose.xlu0.b32.start [1/16] %v2200, 128
    %2212 = vxpose.xlu0.b32.cont [2/16] %v2202, 128
    %2213 = vxpose.xlu0.b32.cont [3/16] %v2204, 128
    %2214 = vxpose.xlu0.b32.cont [4/16] %v2206, 128
    %2215 = vxpose.xlu0.b32.cont [5/16] 0.0, 128
    %2216 = vxpose.xlu0.b32.cont [6/16] 0.0, 128
    %2217 = vxpose.xlu0.b32.cont [7/16] 0.0, 128
    %2218 = vxpose.xlu0.b32.cont [8/16] 0.0, 128
    %2219 = vxpose.xlu0.b32.cont [9/16] 0.0, 128
    %2220 = vxpose.xlu0.b32.cont [10/16] 0.0, 128
    %2221 = vxpose.xlu0.b32.cont [11/16] 0.0, 128
    %2222 = vxpose.xlu0.b32.cont [12/16] 0.0, 128
    %2223 = vxpose.xlu0.b32.cont [13/16] 0.0, 128
    %2224 = vxpose.xlu0.b32.cont [14/16] 0.0, 128
    %2225 = vxpose.xlu0.b32.cont [15/16] 0.0, 128
    %2226 = vxpose.xlu0.b32.end [16/16] 0.0, 128
    %v2227 = vpop.trf.xlu0
    %v2228 = vpop.trf.xlu0
    %v2229 = vpop.trf.xlu0
    %v2230 = vpop.trf.xlu0
    %v2231 = vpop.trf.xlu0
    %v2232 = vpop.trf.xlu0
    %v2233 = vpop.trf.xlu0
    %v2234 = vpop.trf.xlu0
    %v2235 = vpop.trf.xlu0
    %v2236 = vpop.trf.xlu0
    %v2237 = vpop.trf.xlu0
    %v2238 = vpop.trf.xlu0
    %v2239 = vpop.trf.xlu0
    %v2240 = vpop.trf.xlu0
    %v2241 = vpop.trf.xlu0
    %v2242 = vpop.trf.xlu0
    %2243 = vxpose.xlu0.b32.start [1/16] %v2227, 128
    %2244 = vxpose.xlu0.b32.cont [2/16] 0.0, 128
    %2245 = vxpose.xlu0.b32.cont [3/16] 0.0, 128
    %2246 = vxpose.xlu0.b32.cont [4/16] 0.0, 128
    %2247 = vxpose.xlu0.b32.cont [5/16] 0.0, 128
    %2248 = vxpose.xlu0.b32.cont [6/16] 0.0, 128
    %2249 = vxpose.xlu0.b32.cont [7/16] 0.0, 128
    %2250 = vxpose.xlu0.b32.cont [8/16] 0.0, 128
    %2251 = vxpose.xlu0.b32.cont [9/16] 0.0, 128
    %2252 = vxpose.xlu0.b32.cont [10/16] 0.0, 128
    %2253 = vxpose.xlu0.b32.cont [11/16] 0.0, 128
    %2254 = vxpose.xlu0.b32.cont [12/16] 0.0, 128
    %2255 = vxpose.xlu0.b32.cont [13/16] 0.0, 128
    %2256 = vxpose.xlu0.b32.cont [14/16] 0.0, 128
    %2257 = vxpose.xlu0.b32.cont [15/16] 0.0, 128
    %2258 = vxpose.xlu0.b32.end [16/16] 0.0, 128
    %v2259 = vpop.trf.xlu0
    %v2260 = vpop.trf.xlu0
    %v2261 = vpop.trf.xlu0
    %v2262 = vpop.trf.xlu0
    %v2263 = vpop.trf.xlu0
    %v2264 = vpop.trf.xlu0
    %v2265 = vpop.trf.xlu0
    %v2266 = vpop.trf.xlu0
    %v2267 = vpop.trf.xlu0
    %v2268 = vpop.trf.xlu0
    %v2269 = vpop.trf.xlu0
    %v2270 = vpop.trf.xlu0
    %v2271 = vpop.trf.xlu0
    %v2272 = vpop.trf.xlu0
    %v2273 = vpop.trf.xlu0
    %v2274 = vpop.trf.xlu0
    %2275 = vxpose.xlu0.b32.start [1/16] %v2228, 128
    %2276 = vxpose.xlu0.b32.cont [2/16] 0.0, 128
    %2277 = vxpose.xlu0.b32.cont [3/16] 0.0, 128
    %2278 = vxpose.xlu0.b32.cont [4/16] 0.0, 128
    %2279 = vxpose.xlu0.b32.cont [5/16] 0.0, 128
    %2280 = vxpose.xlu0.b32.cont [6/16] 0.0, 128
    %2281 = vxpose.xlu0.b32.cont [7/16] 0.0, 128
    %2282 = vxpose.xlu0.b32.cont [8/16] 0.0, 128
    %2283 = vxpose.xlu0.b32.cont [9/16] 0.0, 128
    %2284 = vxpose.xlu0.b32.cont [10/16] 0.0, 128
    %2285 = vxpose.xlu0.b32.cont [11/16] 0.0, 128
    %2286 = vxpose.xlu0.b32.cont [12/16] 0.0, 128
    %2287 = vxpose.xlu0.b32.cont [13/16] 0.0, 128
    %2288 = vxpose.xlu0.b32.cont [14/16] 0.0, 128
    %2289 = vxpose.xlu0.b32.cont [15/16] 0.0, 128
    %2290 = vxpose.xlu0.b32.end [16/16] 0.0, 128
    %v2291 = vpop.trf.xlu0
    %v2292 = vpop.trf.xlu0
    %v2293 = vpop.trf.xlu0
    %v2294 = vpop.trf.xlu0
    %v2295 = vpop.trf.xlu0
    %v2296 = vpop.trf.xlu0
    %v2297 = vpop.trf.xlu0
    %v2298 = vpop.trf.xlu0
    %v2299 = vpop.trf.xlu0
    %v2300 = vpop.trf.xlu0
    %v2301 = vpop.trf.xlu0
    %v2302 = vpop.trf.xlu0
    %v2303 = vpop.trf.xlu0
    %v2304 = vpop.trf.xlu0
    %v2305 = vpop.trf.xlu0
    %v2306 = vpop.trf.xlu0
    %2307 = vxpose.xlu0.b32.start [1/16] %v2229, 128
    %2308 = vxpose.xlu0.b32.cont [2/16] 0.0, 128
    %2309 = vxpose.xlu0.b32.cont [3/16] 0.0, 128
    %2310 = vxpose.xlu0.b32.cont [4/16] 0.0, 128
    %2311 = vxpose.xlu0.b32.cont [5/16] 0.0, 128
    %2312 = vxpose.xlu0.b32.cont [6/16] 0.0, 128
    %2313 = vxpose.xlu0.b32.cont [7/16] 0.0, 128
    %2314 = vxpose.xlu0.b32.cont [8/16] 0.0, 128
    %2315 = vxpose.xlu0.b32.cont [9/16] 0.0, 128
    %2316 = vxpose.xlu0.b32.cont [10/16] 0.0, 128
    %2317 = vxpose.xlu0.b32.cont [11/16] 0.0, 128
    %2318 = vxpose.xlu0.b32.cont [12/16] 0.0, 128
    %2319 = vxpose.xlu0.b32.cont [13/16] 0.0, 128
    %2320 = vxpose.xlu0.b32.cont [14/16] 0.0, 128
    %2321 = vxpose.xlu0.b32.cont [15/16] 0.0, 128
    %2322 = vxpose.xlu0.b32.end [16/16] 0.0, 128
    %v2323 = vpop.trf.xlu0
    %v2324 = vpop.trf.xlu0
    %v2325 = vpop.trf.xlu0
    %v2326 = vpop.trf.xlu0
    %v2327 = vpop.trf.xlu0
    %v2328 = vpop.trf.xlu0
    %v2329 = vpop.trf.xlu0
    %v2330 = vpop.trf.xlu0
    %v2331 = vpop.trf.xlu0
    %v2332 = vpop.trf.xlu0
    %v2333 = vpop.trf.xlu0
    %v2334 = vpop.trf.xlu0
    %v2335 = vpop.trf.xlu0
    %v2336 = vpop.trf.xlu0
    %v2337 = vpop.trf.xlu0
    %v2338 = vpop.trf.xlu0
    %2339 = vxpose.xlu0.b32.start [1/16] %v2230, 128
    %2340 = vxpose.xlu0.b32.cont [2/16] 0.0, 128
    %2341 = vxpose.xlu0.b32.cont [3/16] 0.0, 128
    %2342 = vxpose.xlu0.b32.cont [4/16] 0.0, 128
    %2343 = vxpose.xlu0.b32.cont [5/16] 0.0, 128
    %2344 = vxpose.xlu0.b32.cont [6/16] 0.0, 128
    %2345 = vxpose.xlu0.b32.cont [7/16] 0.0, 128
    %2346 = vxpose.xlu0.b32.cont [8/16] 0.0, 128
    %2347 = vxpose.xlu0.b32.cont [9/16] 0.0, 128
    %2348 = vxpose.xlu0.b32.cont [10/16] 0.0, 128
    %2349 = vxpose.xlu0.b32.cont [11/16] 0.0, 128
    %2350 = vxpose.xlu0.b32.cont [12/16] 0.0, 128
    %2351 = vxpose.xlu0.b32.cont [13/16] 0.0, 128
    %2352 = vxpose.xlu0.b32.cont [14/16] 0.0, 128
    %2353 = vxpose.xlu0.b32.cont [15/16] 0.0, 128
    %2354 = vxpose.xlu0.b32.end [16/16] 0.0, 128
    %v2355 = vpop.trf.xlu0
    %v2356 = vpop.trf.xlu0
    %v2357 = vpop.trf.xlu0
    %v2358 = vpop.trf.xlu0
    %v2359 = vpop.trf.xlu0
    %v2360 = vpop.trf.xlu0
    %v2361 = vpop.trf.xlu0
    %v2362 = vpop.trf.xlu0
    %v2363 = vpop.trf.xlu0
    %v2364 = vpop.trf.xlu0
    %v2365 = vpop.trf.xlu0
    %v2366 = vpop.trf.xlu0
    %v2367 = vpop.trf.xlu0
    %v2368 = vpop.trf.xlu0
    %v2369 = vpop.trf.xlu0
    %v2370 = vpop.trf.xlu0
    %v2371 = vpack.c.bf16 %v2260, %v2259
    %v2372 = vpack.c.bf16 %v2262, %v2261
    %v2373 = vpack.c.bf16 %v2292, %v2291
    %v2374 = vpack.c.bf16 %v2294, %v2293
    %v2375 = vpack.c.bf16 %v2324, %v2323
    %v2376 = vpack.c.bf16 %v2326, %v2325
    %v2377 = vpack.c.bf16 %v2356, %v2355
    %v2378 = vpack.c.bf16 %v2358, %v2357
    %v2380 = vsel %vm625, %v2019, 0
    %v2383 = vsel %vm625, %v2187, 0
    %2385 = vmatprep.subr.bf16.mxu0 0
    %2386 = vmatpush1.bf16.xpose.msra.mxu0 %v2383
    %2387 = vmatprep.subr.bf16.mxu0 0
    %2388 = vmatpush1.bf16.xpose.msra.mxu0 0
    %2389 = vmatprep.subr.bf16.mxu0 0
    %2390 = vmatpush1.bf16.xpose.msra.mxu0 0
    %2391 = vmatprep.subr.bf16.mxu0 0
    %2392 = vmatpush1.bf16.xpose.msra.mxu0 0
    %2393 = vmatprep.subr.bf16.mxu0 0
    %2394 = vmatpush1.bf16.xpose.msra.mxu0 0
    %2395 = vmatprep.subr.bf16.mxu0 0
    %2396 = vmatpush1.bf16.xpose.msra.mxu0 0
    %2397 = vmatprep.subr.bf16.mxu0 0
    %2398 = vmatpush1.bf16.xpose.msra.mxu0 0
    %2399 = vmatprep.subr.bf16.mxu0 0
    %2400 = vmatpush1.bf16.xpose.msra.mxu0 0
    %2401 = vmatprep.subr.bf16.mxu0 0
    %2402 = vmatpush1.bf16.xpose.msra.mxu0 0
    %2403 = vmatprep.subr.bf16.mxu0 0
    %2404 = vmatpush1.bf16.xpose.msra.mxu0 0
    %2405 = vmatprep.subr.bf16.mxu0 0
    %2406 = vmatpush1.bf16.xpose.msra.mxu0 0
    %2407 = vmatprep.subr.bf16.mxu0 0
    %2408 = vmatpush1.bf16.xpose.msra.mxu0 0
    %2409 = vmatprep.subr.bf16.mxu0 0
    %2410 = vmatpush1.bf16.xpose.msra.mxu0 0
    %2411 = vmatprep.subr.bf16.mxu0 0
    %2412 = vmatpush1.bf16.xpose.msra.mxu0 0
    %2413 = vmatprep.subr.bf16.mxu0 0
    %2414 = vmatpush1.bf16.xpose.msra.mxu0 0
    %2415 = vmatprep.subr.bf16.mxu0 0
    %2416 = vmatpush1.bf16.xpose.msra.mxu0 0
    %2417 = vmatprep.mubr.bf16.mxu0 0
    %2418 = vmatmul.mubr.bf16.gmra.mrb[0].mxu0 %v2380
    %v2419 = vpop.f32.mrb[0].mxu0
    %v2420 = vadd.f32 %v38, %v2419
    %v2421 = vpop.f32.mrb[0].mxu0
    %v2422 = vpop.f32.mrb[0].mxu0
    %v2423 = vpop.f32.mrb[0].mxu0
    %2424 = vdwg.mxu0
    %v2426 = vsel %vm625, %v2020, 0
    %v2429 = vsel %vm625, %v2188, 0
    %2431 = vmatprep.subr.bf16.mxu0 0
    %2432 = vmatpush1.bf16.xpose.msra.mxu0 %v2429
    %2433 = vmatprep.subr.bf16.mxu0 0
    %2434 = vmatpush1.bf16.xpose.msra.mxu0 0
    %2435 = vmatprep.subr.bf16.mxu0 0
    %2436 = vmatpush1.bf16.xpose.msra.mxu0 0
    %2437 = vmatprep.subr.bf16.mxu0 0
    %2438 = vmatpush1.bf16.xpose.msra.mxu0 0
    %2439 = vmatprep.subr.bf16.mxu0 0
    %2440 = vmatpush1.bf16.xpose.msra.mxu0 0
    %2441 = vmatprep.subr.bf16.mxu0 0
    %2442 = vmatpush1.bf16.xpose.msra.mxu0 0
    %2443 = vmatprep.subr.bf16.mxu0 0
    %2444 = vmatpush1.bf16.xpose.msra.mxu0 0
    %2445 = vmatprep.subr.bf16.mxu0 0
    %2446 = vmatpush1.bf16.xpose.msra.mxu0 0
    %2447 = vmatprep.subr.bf16.mxu0 0
    %2448 = vmatpush1.bf16.xpose.msra.mxu0 0
    %2449 = vmatprep.subr.bf16.mxu0 0
    %2450 = vmatpush1.bf16.xpose.msra.mxu0 0
    %2451 = vmatprep.subr.bf16.mxu0 0
    %2452 = vmatpush1.bf16.xpose.msra.mxu0 0
    %2453 = vmatprep.subr.bf16.mxu0 0
    %2454 = vmatpush1.bf16.xpose.msra.mxu0 0
    %2455 = vmatprep.subr.bf16.mxu0 0
    %2456 = vmatpush1.bf16.xpose.msra.mxu0 0
    %2457 = vmatprep.subr.bf16.mxu0 0
    %2458 = vmatpush1.bf16.xpose.msra.mxu0 0
    %2459 = vmatprep.subr.bf16.mxu0 0
    %2460 = vmatpush1.bf16.xpose.msra.mxu0 0
    %2461 = vmatprep.subr.bf16.mxu0 0
    %2462 = vmatpush1.bf16.xpose.msra.mxu0 0
    %2463 = vmatprep.mubr.bf16.mxu0 0
    %2464 = vmatmul.mubr.bf16.gmra.mrb[0].mxu0 %v2426
    %v2465 = vpop.f32.mrb[0].mxu0
    %v2466 = vadd.f32 %v39, %v2465
    %v2467 = vpop.f32.mrb[0].mxu0
    %v2468 = vpop.f32.mrb[0].mxu0
    %v2469 = vpop.f32.mrb[0].mxu0
    %2470 = vdwg.mxu0
    %v2472 = vsel %vm625, %v2021, 0
    %v2475 = vsel %vm625, %v2189, 0
    %2477 = vmatprep.subr.bf16.mxu0 0
    %2478 = vmatpush1.bf16.xpose.msra.mxu0 %v2475
    %2479 = vmatprep.subr.bf16.mxu0 0
    %2480 = vmatpush1.bf16.xpose.msra.mxu0 0
    %2481 = vmatprep.subr.bf16.mxu0 0
    %2482 = vmatpush1.bf16.xpose.msra.mxu0 0
    %2483 = vmatprep.subr.bf16.mxu0 0
    %2484 = vmatpush1.bf16.xpose.msra.mxu0 0
    %2485 = vmatprep.subr.bf16.mxu0 0
    %2486 = vmatpush1.bf16.xpose.msra.mxu0 0
    %2487 = vmatprep.subr.bf16.mxu0 0
    %2488 = vmatpush1.bf16.xpose.msra.mxu0 0
    %2489 = vmatprep.subr.bf16.mxu0 0
    %2490 = vmatpush1.bf16.xpose.msra.mxu0 0
    %2491 = vmatprep.subr.bf16.mxu0 0
    %2492 = vmatpush1.bf16.xpose.msra.mxu0 0
    %2493 = vmatprep.subr.bf16.mxu0 0
    %2494 = vmatpush1.bf16.xpose.msra.mxu0 0
    %2495 = vmatprep.subr.bf16.mxu0 0
    %2496 = vmatpush1.bf16.xpose.msra.mxu0 0
    %2497 = vmatprep.subr.bf16.mxu0 0
    %2498 = vmatpush1.bf16.xpose.msra.mxu0 0
    %2499 = vmatprep.subr.bf16.mxu0 0
    %2500 = vmatpush1.bf16.xpose.msra.mxu0 0
    %2501 = vmatprep.subr.bf16.mxu0 0
    %2502 = vmatpush1.bf16.xpose.msra.mxu0 0
    %2503 = vmatprep.subr.bf16.mxu0 0
    %2504 = vmatpush1.bf16.xpose.msra.mxu0 0
    %2505 = vmatprep.subr.bf16.mxu0 0
    %2506 = vmatpush1.bf16.xpose.msra.mxu0 0
    %2507 = vmatprep.subr.bf16.mxu0 0
    %2508 = vmatpush1.bf16.xpose.msra.mxu0 0
    %2509 = vmatprep.mubr.bf16.mxu0 0
    %2510 = vmatmul.mubr.bf16.gmra.mrb[0].mxu0 %v2472
    %v2511 = vpop.f32.mrb[0].mxu0
    %v2512 = vadd.f32 %v38, %v2511
    %v2513 = vpop.f32.mrb[0].mxu0
    %v2514 = vpop.f32.mrb[0].mxu0
    %v2515 = vpop.f32.mrb[0].mxu0
    %2516 = vdwg.mxu0
    %v2518 = vsel %vm625, %v2022, 0
    %v2521 = vsel %vm625, %v2190, 0
    %2523 = vmatprep.subr.bf16.mxu0 0
    %2524 = vmatpush1.bf16.xpose.msra.mxu0 %v2521
    %2525 = vmatprep.subr.bf16.mxu0 0
    %2526 = vmatpush1.bf16.xpose.msra.mxu0 0
    %2527 = vmatprep.subr.bf16.mxu0 0
    %2528 = vmatpush1.bf16.xpose.msra.mxu0 0
    %2529 = vmatprep.subr.bf16.mxu0 0
    %2530 = vmatpush1.bf16.xpose.msra.mxu0 0
    %2531 = vmatprep.subr.bf16.mxu0 0
    %2532 = vmatpush1.bf16.xpose.msra.mxu0 0
    %2533 = vmatprep.subr.bf16.mxu0 0
    %2534 = vmatpush1.bf16.xpose.msra.mxu0 0
    %2535 = vmatprep.subr.bf16.mxu0 0
    %2536 = vmatpush1.bf16.xpose.msra.mxu0 0
    %2537 = vmatprep.subr.bf16.mxu0 0
    %2538 = vmatpush1.bf16.xpose.msra.mxu0 0
    %2539 = vmatprep.subr.bf16.mxu0 0
    %2540 = vmatpush1.bf16.xpose.msra.mxu0 0
    %2541 = vmatprep.subr.bf16.mxu0 0
    %2542 = vmatpush1.bf16.xpose.msra.mxu0 0
    %2543 = vmatprep.subr.bf16.mxu0 0
    %2544 = vmatpush1.bf16.xpose.msra.mxu0 0
    %2545 = vmatprep.subr.bf16.mxu0 0
    %2546 = vmatpush1.bf16.xpose.msra.mxu0 0
    %2547 = vmatprep.subr.bf16.mxu0 0
    %2548 = vmatpush1.bf16.xpose.msra.mxu0 0
    %2549 = vmatprep.subr.bf16.mxu0 0
    %2550 = vmatpush1.bf16.xpose.msra.mxu0 0
    %2551 = vmatprep.subr.bf16.mxu0 0
    %2552 = vmatpush1.bf16.xpose.msra.mxu0 0
    %2553 = vmatprep.subr.bf16.mxu0 0
    %2554 = vmatpush1.bf16.xpose.msra.mxu0 0
    %2555 = vmatprep.mubr.bf16.mxu0 0
    %2556 = vmatmul.mubr.bf16.gmra.mrb[0].mxu0 %v2518
    %v2557 = vpop.f32.mrb[0].mxu0
    %v2558 = vadd.f32 %v39, %v2557
    %v2559 = vpop.f32.mrb[0].mxu0
    %v2560 = vpop.f32.mrb[0].mxu0
    %v2561 = vpop.f32.mrb[0].mxu0
    %2562 = vdwg.mxu0
    %v2564 = vsel %vm625, %v2023, 0
    %v2567 = vsel %vm625, %v2191, 0
    %2569 = vmatprep.subr.bf16.mxu0 0
    %2570 = vmatpush1.bf16.xpose.msra.mxu0 %v2567
    %2571 = vmatprep.subr.bf16.mxu0 0
    %2572 = vmatpush1.bf16.xpose.msra.mxu0 0
    %2573 = vmatprep.subr.bf16.mxu0 0
    %2574 = vmatpush1.bf16.xpose.msra.mxu0 0
    %2575 = vmatprep.subr.bf16.mxu0 0
    %2576 = vmatpush1.bf16.xpose.msra.mxu0 0
    %2577 = vmatprep.subr.bf16.mxu0 0
    %2578 = vmatpush1.bf16.xpose.msra.mxu0 0
    %2579 = vmatprep.subr.bf16.mxu0 0
    %2580 = vmatpush1.bf16.xpose.msra.mxu0 0
    %2581 = vmatprep.subr.bf16.mxu0 0
    %2582 = vmatpush1.bf16.xpose.msra.mxu0 0
    %2583 = vmatprep.subr.bf16.mxu0 0
    %2584 = vmatpush1.bf16.xpose.msra.mxu0 0
    %2585 = vmatprep.subr.bf16.mxu0 0
    %2586 = vmatpush1.bf16.xpose.msra.mxu0 0
    %2587 = vmatprep.subr.bf16.mxu0 0
    %2588 = vmatpush1.bf16.xpose.msra.mxu0 0
    %2589 = vmatprep.subr.bf16.mxu0 0
    %2590 = vmatpush1.bf16.xpose.msra.mxu0 0
    %2591 = vmatprep.subr.bf16.mxu0 0
    %2592 = vmatpush1.bf16.xpose.msra.mxu0 0
    %2593 = vmatprep.subr.bf16.mxu0 0
    %2594 = vmatpush1.bf16.xpose.msra.mxu0 0
    %2595 = vmatprep.subr.bf16.mxu0 0
    %2596 = vmatpush1.bf16.xpose.msra.mxu0 0
    %2597 = vmatprep.subr.bf16.mxu0 0
    %2598 = vmatpush1.bf16.xpose.msra.mxu0 0
    %2599 = vmatprep.subr.bf16.mxu0 0
    %2600 = vmatpush1.bf16.xpose.msra.mxu0 0
    %2601 = vmatprep.mubr.bf16.mxu0 0
    %2602 = vmatmul.mubr.bf16.gmra.mrb[0].mxu0 %v2564
    %v2603 = vpop.f32.mrb[0].mxu0
    %v2604 = vadd.f32 %v38, %v2603
    %v2605 = vpop.f32.mrb[0].mxu0
    %v2606 = vpop.f32.mrb[0].mxu0
    %v2607 = vpop.f32.mrb[0].mxu0
    %2608 = vdwg.mxu0
    %v2610 = vsel %vm625, %v2024, 0
    %v2613 = vsel %vm625, %v2192, 0
    %2615 = vmatprep.subr.bf16.mxu0 0
    %2616 = vmatpush1.bf16.xpose.msra.mxu0 %v2613
    %2617 = vmatprep.subr.bf16.mxu0 0
    %2618 = vmatpush1.bf16.xpose.msra.mxu0 0
    %2619 = vmatprep.subr.bf16.mxu0 0
    %2620 = vmatpush1.bf16.xpose.msra.mxu0 0
    %2621 = vmatprep.subr.bf16.mxu0 0
    %2622 = vmatpush1.bf16.xpose.msra.mxu0 0
    %2623 = vmatprep.subr.bf16.mxu0 0
    %2624 = vmatpush1.bf16.xpose.msra.mxu0 0
    %2625 = vmatprep.subr.bf16.mxu0 0
    %2626 = vmatpush1.bf16.xpose.msra.mxu0 0
    %2627 = vmatprep.subr.bf16.mxu0 0
    %2628 = vmatpush1.bf16.xpose.msra.mxu0 0
    %2629 = vmatprep.subr.bf16.mxu0 0
    %2630 = vmatpush1.bf16.xpose.msra.mxu0 0
    %2631 = vmatprep.subr.bf16.mxu0 0
    %2632 = vmatpush1.bf16.xpose.msra.mxu0 0
    %2633 = vmatprep.subr.bf16.mxu0 0
    %2634 = vmatpush1.bf16.xpose.msra.mxu0 0
    %2635 = vmatprep.subr.bf16.mxu0 0
    %2636 = vmatpush1.bf16.xpose.msra.mxu0 0
    %2637 = vmatprep.subr.bf16.mxu0 0
    %2638 = vmatpush1.bf16.xpose.msra.mxu0 0
    %2639 = vmatprep.subr.bf16.mxu0 0
    %2640 = vmatpush1.bf16.xpose.msra.mxu0 0
    %2641 = vmatprep.subr.bf16.mxu0 0
    %2642 = vmatpush1.bf16.xpose.msra.mxu0 0
    %2643 = vmatprep.subr.bf16.mxu0 0
    %2644 = vmatpush1.bf16.xpose.msra.mxu0 0
    %2645 = vmatprep.subr.bf16.mxu0 0
    %2646 = vmatpush1.bf16.xpose.msra.mxu0 0
    %2647 = vmatprep.mubr.bf16.mxu0 0
    %2648 = vmatmul.mubr.bf16.gmra.mrb[0].mxu0 %v2610
    %v2649 = vpop.f32.mrb[0].mxu0
    %v2650 = vadd.f32 %v39, %v2649
    %v2651 = vpop.f32.mrb[0].mxu0
    %v2652 = vpop.f32.mrb[0].mxu0
    %v2653 = vpop.f32.mrb[0].mxu0
    %2654 = vdwg.mxu0
    %v2656 = vsel %vm625, %v2025, 0
    %v2659 = vsel %vm625, %v2193, 0
    %2661 = vmatprep.subr.bf16.mxu0 0
    %2662 = vmatpush1.bf16.xpose.msra.mxu0 %v2659
    %2663 = vmatprep.subr.bf16.mxu0 0
    %2664 = vmatpush1.bf16.xpose.msra.mxu0 0
    %2665 = vmatprep.subr.bf16.mxu0 0
    %2666 = vmatpush1.bf16.xpose.msra.mxu0 0
    %2667 = vmatprep.subr.bf16.mxu0 0
    %2668 = vmatpush1.bf16.xpose.msra.mxu0 0
    %2669 = vmatprep.subr.bf16.mxu0 0
    %2670 = vmatpush1.bf16.xpose.msra.mxu0 0
    %2671 = vmatprep.subr.bf16.mxu0 0
    %2672 = vmatpush1.bf16.xpose.msra.mxu0 0
    %2673 = vmatprep.subr.bf16.mxu0 0
    %2674 = vmatpush1.bf16.xpose.msra.mxu0 0
    %2675 = vmatprep.subr.bf16.mxu0 0
    %2676 = vmatpush1.bf16.xpose.msra.mxu0 0
    %2677 = vmatprep.subr.bf16.mxu0 0
    %2678 = vmatpush1.bf16.xpose.msra.mxu0 0
    %2679 = vmatprep.subr.bf16.mxu0 0
    %2680 = vmatpush1.bf16.xpose.msra.mxu0 0
    %2681 = vmatprep.subr.bf16.mxu0 0
    %2682 = vmatpush1.bf16.xpose.msra.mxu0 0
    %2683 = vmatprep.subr.bf16.mxu0 0
    %2684 = vmatpush1.bf16.xpose.msra.mxu0 0
    %2685 = vmatprep.subr.bf16.mxu0 0
    %2686 = vmatpush1.bf16.xpose.msra.mxu0 0
    %2687 = vmatprep.subr.bf16.mxu0 0
    %2688 = vmatpush1.bf16.xpose.msra.mxu0 0
    %2689 = vmatprep.subr.bf16.mxu0 0
    %2690 = vmatpush1.bf16.xpose.msra.mxu0 0
    %2691 = vmatprep.subr.bf16.mxu0 0
    %2692 = vmatpush1.bf16.xpose.msra.mxu0 0
    %2693 = vmatprep.mubr.bf16.mxu0 0
    %2694 = vmatmul.mubr.bf16.gmra.mrb[0].mxu0 %v2656
    %v2695 = vpop.f32.mrb[0].mxu0
    %v2696 = vadd.f32 %v38, %v2695
    %v2697 = vpop.f32.mrb[0].mxu0
    %v2698 = vpop.f32.mrb[0].mxu0
    %v2699 = vpop.f32.mrb[0].mxu0
    %2700 = vdwg.mxu0
    %v2702 = vsel %vm625, %v2026, 0
    %v2705 = vsel %vm625, %v2194, 0
    %2707 = vmatprep.subr.bf16.mxu0 0
    %2708 = vmatpush1.bf16.xpose.msra.mxu0 %v2705
    %2709 = vmatprep.subr.bf16.mxu0 0
    %2710 = vmatpush1.bf16.xpose.msra.mxu0 0
    %2711 = vmatprep.subr.bf16.mxu0 0
    %2712 = vmatpush1.bf16.xpose.msra.mxu0 0
    %2713 = vmatprep.subr.bf16.mxu0 0
    %2714 = vmatpush1.bf16.xpose.msra.mxu0 0
    %2715 = vmatprep.subr.bf16.mxu0 0
    %2716 = vmatpush1.bf16.xpose.msra.mxu0 0
    %2717 = vmatprep.subr.bf16.mxu0 0
    %2718 = vmatpush1.bf16.xpose.msra.mxu0 0
    %2719 = vmatprep.subr.bf16.mxu0 0
    %2720 = vmatpush1.bf16.xpose.msra.mxu0 0
    %2721 = vmatprep.subr.bf16.mxu0 0
    %2722 = vmatpush1.bf16.xpose.msra.mxu0 0
    %2723 = vmatprep.subr.bf16.mxu0 0
    %2724 = vmatpush1.bf16.xpose.msra.mxu0 0
    %2725 = vmatprep.subr.bf16.mxu0 0
    %2726 = vmatpush1.bf16.xpose.msra.mxu0 0
    %2727 = vmatprep.subr.bf16.mxu0 0
    %2728 = vmatpush1.bf16.xpose.msra.mxu0 0
    %2729 = vmatprep.subr.bf16.mxu0 0
    %2730 = vmatpush1.bf16.xpose.msra.mxu0 0
    %2731 = vmatprep.subr.bf16.mxu0 0
    %2732 = vmatpush1.bf16.xpose.msra.mxu0 0
    %2733 = vmatprep.subr.bf16.mxu0 0
    %2734 = vmatpush1.bf16.xpose.msra.mxu0 0
    %2735 = vmatprep.subr.bf16.mxu0 0
    %2736 = vmatpush1.bf16.xpose.msra.mxu0 0
    %2737 = vmatprep.subr.bf16.mxu0 0
    %2738 = vmatpush1.bf16.xpose.msra.mxu0 0
    %2739 = vmatprep.mubr.bf16.mxu0 0
    %2740 = vmatmul.mubr.bf16.gmra.mrb[0].mxu0 %v2702
    %v2741 = vpop.f32.mrb[0].mxu0
    %v2742 = vadd.f32 %v39, %v2741
    %v2743 = vpop.f32.mrb[0].mxu0
    %v2744 = vpop.f32.mrb[0].mxu0
    %v2745 = vpop.f32.mrb[0].mxu0
    %2746 = vdwg.mxu0
    %vm2747 = vcmask 130048
    %v2748 = vsel %vm2747, %v2420, -inf
    %2749 = vmax.xlane.f32.xlu0 %v2748
    %v2750 = vpop.xlane.xlu0 %2749
    %v2751 = vsel %vm2747, %v2466, -inf
    %2752 = vmax.xlane.f32.xlu0 %v2751
    %v2753 = vpop.xlane.xlu0 %2752
    %v2754 = vsel %vm2747, %v2512, -inf
    %2755 = vmax.xlane.f32.xlu0 %v2754
    %v2756 = vpop.xlane.xlu0 %2755
    %v2757 = vsel %vm2747, %v2558, -inf
    %2758 = vmax.xlane.f32.xlu0 %v2757
    %v2759 = vpop.xlane.xlu0 %2758
    %v2760 = vsel %vm2747, %v2604, -inf
    %2761 = vmax.xlane.f32.xlu0 %v2760
    %v2762 = vpop.xlane.xlu0 %2761
    %v2763 = vsel %vm2747, %v2650, -inf
    %2764 = vmax.xlane.f32.xlu0 %v2763
    %v2765 = vpop.xlane.xlu0 %2764
    %v2766 = vsel %vm2747, %v2696, -inf
    %2767 = vmax.xlane.f32.xlu0 %v2766
    %v2768 = vpop.xlane.xlu0 %2767
    %v2769 = vsel %vm2747, %v2742, -inf
    %2770 = vmax.xlane.f32.xlu0 %v2769
    %v2771 = vpop.xlane.xlu0 %2770
    %v2772 = vsub.f32 %v2420, %v2750
    %v2773 = vsub.f32 %v2466, %v2753
    %v2774 = vsub.f32 %v2512, %v2756
    %v2775 = vsub.f32 %v2558, %v2759
    %v2776 = vsub.f32 %v2604, %v2762
    %v2777 = vsub.f32 %v2650, %v2765
    %v2778 = vsub.f32 %v2696, %v2768
    %v2779 = vsub.f32 %v2742, %v2771
    %v2780 = vmul.f32 %v2772, 1.442695
    %v2781 = vpow.pop %v2780
    %v2782 = vmul.f32 %v2773, 1.442695
    %v2783 = vpow.pop %v2782
    %v2784 = vmul.f32 %v2774, 1.442695
    %v2785 = vpow.pop %v2784
    %v2786 = vmul.f32 %v2775, 1.442695
    %v2787 = vpow.pop %v2786
    %v2788 = vmul.f32 %v2776, 1.442695
    %v2789 = vpow.pop %v2788
    %v2790 = vmul.f32 %v2777, 1.442695
    %v2791 = vpow.pop %v2790
    %v2792 = vmul.f32 %v2778, 1.442695
    %v2793 = vpow.pop %v2792
    %v2794 = vmul.f32 %v2779, 1.442695
    %v2795 = vpow.pop %v2794
    %v2796 = vsel %vm2747, %v2781, 0.0
    %2797 = vadd.xlane.f32.xlu0 %v2796
    %v2798 = vpop.xlane.xlu0 %2797
    %v2799 = vsel %vm2747, %v2783, 0.0
    %2800 = vadd.xlane.f32.xlu0 %v2799
    %v2801 = vpop.xlane.xlu0 %2800
    %v2802 = vsel %vm2747, %v2785, 0.0
    %2803 = vadd.xlane.f32.xlu0 %v2802
    %v2804 = vpop.xlane.xlu0 %2803
    %v2805 = vsel %vm2747, %v2787, 0.0
    %2806 = vadd.xlane.f32.xlu0 %v2805
    %v2807 = vpop.xlane.xlu0 %2806
    %v2808 = vsel %vm2747, %v2789, 0.0
    %2809 = vadd.xlane.f32.xlu0 %v2808
    %v2810 = vpop.xlane.xlu0 %2809
    %v2811 = vsel %vm2747, %v2791, 0.0
    %2812 = vadd.xlane.f32.xlu0 %v2811
    %v2813 = vpop.xlane.xlu0 %2812
    %v2814 = vsel %vm2747, %v2793, 0.0
    %2815 = vadd.xlane.f32.xlu0 %v2814
    %v2816 = vpop.xlane.xlu0 %2815
    %v2817 = vsel %vm2747, %v2795, 0.0
    %2818 = vadd.xlane.f32.xlu0 %v2817
    %v2819 = vpop.xlane.xlu0 %2818
    %v2820 = vrcp.pop %v2798
    %v2821 = vrcp.pop %v2801
    %v2822 = vrcp.pop %v2804
    %v2823 = vrcp.pop %v2807
    %v2824 = vrcp.pop %v2810
    %v2825 = vrcp.pop %v2813
    %v2826 = vrcp.pop %v2816
    %v2827 = vrcp.pop %v2819
    %v2828 = vmul.f32 %v2781, %v2820
    %v2829 = vmul.f32 %v2783, %v2821
    %v2830 = vmul.f32 %v2785, %v2822
    %v2831 = vmul.f32 %v2787, %v2823
    %v2832 = vmul.f32 %v2789, %v2824
    %v2833 = vmul.f32 %v2791, %v2825
    %v2834 = vmul.f32 %v2793, %v2826
    %v2835 = vmul.f32 %v2795, %v2827
    %v2836 = vpack.c.bf16 %v2828, %v2828
    %v2837 = vpack.c.bf16 %v2829, %v2829
    %v2838 = vpack.c.bf16 %v2830, %v2830
    %v2839 = vpack.c.bf16 %v2831, %v2831
    %v2840 = vpack.c.bf16 %v2832, %v2832
    %v2841 = vpack.c.bf16 %v2833, %v2833
    %v2842 = vpack.c.bf16 %v2834, %v2834
    %v2843 = vpack.c.bf16 %v2835, %v2835
    %v2845 = vsel %vm2747, %v2836, 0
    %2847 = vmatprep.subr.bf16.mxu0 0
    %2848 = vmatpush1.bf16.msra.mxu0 %v2371
    %2849 = vmatprep.subr.bf16.mxu0 0
    %2850 = vmatpush1.bf16.msra.mxu0 0
    %2851 = vmatprep.subr.bf16.mxu0 0
    %2852 = vmatpush1.bf16.msra.mxu0 0
    %2853 = vmatprep.subr.bf16.mxu0 0
    %2854 = vmatpush1.bf16.msra.mxu0 0
    %2855 = vmatprep.subr.bf16.mxu0 0
    %2856 = vmatpush1.bf16.msra.mxu0 0
    %2857 = vmatprep.subr.bf16.mxu0 0
    %2858 = vmatpush1.bf16.msra.mxu0 0
    %2859 = vmatprep.subr.bf16.mxu0 0
    %2860 = vmatpush1.bf16.msra.mxu0 0
    %2861 = vmatprep.subr.bf16.mxu0 0
    %2862 = vmatpush1.bf16.msra.mxu0 0
    %2863 = vmatprep.subr.bf16.mxu0 0
    %2864 = vmatpush1.bf16.msra.mxu0 0
    %2865 = vmatprep.subr.bf16.mxu0 0
    %2866 = vmatpush1.bf16.msra.mxu0 0
    %2867 = vmatprep.subr.bf16.mxu0 0
    %2868 = vmatpush1.bf16.msra.mxu0 0
    %2869 = vmatprep.subr.bf16.mxu0 0
    %2870 = vmatpush1.bf16.msra.mxu0 0
    %2871 = vmatprep.subr.bf16.mxu0 0
    %2872 = vmatpush1.bf16.msra.mxu0 0
    %2873 = vmatprep.subr.bf16.mxu0 0
    %2874 = vmatpush1.bf16.msra.mxu0 0
    %2875 = vmatprep.subr.bf16.mxu0 0
    %2876 = vmatpush1.bf16.msra.mxu0 0
    %2877 = vmatprep.subr.bf16.mxu0 0
    %2878 = vmatpush1.bf16.msra.mxu0 0
    %2879 = vmatprep.mubr.bf16.mxu0 0
    %2880 = vmatmul.mubr.bf16.gmra.mrb[0].mxu0 %v2845
    %v2881 = vpop.f32.mrb[0].mxu0
    %v2882 = vadd.f32 0.0, %v2881
    %v2883 = vpop.f32.mrb[0].mxu0
    %v2884 = vpop.f32.mrb[0].mxu0
    %v2885 = vpop.f32.mrb[0].mxu0
    %2886 = vdwg.mxu0
    %v2888 = vsel %vm2747, %v2837, 0
    %2890 = vmatprep.subr.bf16.mxu0 0
    %2891 = vmatpush1.bf16.msra.mxu0 %v2372
    %2892 = vmatprep.subr.bf16.mxu0 0
    %2893 = vmatpush1.bf16.msra.mxu0 0
    %2894 = vmatprep.subr.bf16.mxu0 0
    %2895 = vmatpush1.bf16.msra.mxu0 0
    %2896 = vmatprep.subr.bf16.mxu0 0
    %2897 = vmatpush1.bf16.msra.mxu0 0
    %2898 = vmatprep.subr.bf16.mxu0 0
    %2899 = vmatpush1.bf16.msra.mxu0 0
    %2900 = vmatprep.subr.bf16.mxu0 0
    %2901 = vmatpush1.bf16.msra.mxu0 0
    %2902 = vmatprep.subr.bf16.mxu0 0
    %2903 = vmatpush1.bf16.msra.mxu0 0
    %2904 = vmatprep.subr.bf16.mxu0 0
    %2905 = vmatpush1.bf16.msra.mxu0 0
    %2906 = vmatprep.subr.bf16.mxu0 0
    %2907 = vmatpush1.bf16.msra.mxu0 0
    %2908 = vmatprep.subr.bf16.mxu0 0
    %2909 = vmatpush1.bf16.msra.mxu0 0
    %2910 = vmatprep.subr.bf16.mxu0 0
    %2911 = vmatpush1.bf16.msra.mxu0 0
    %2912 = vmatprep.subr.bf16.mxu0 0
    %2913 = vmatpush1.bf16.msra.mxu0 0
    %2914 = vmatprep.subr.bf16.mxu0 0
    %2915 = vmatpush1.bf16.msra.mxu0 0
    %2916 = vmatprep.subr.bf16.mxu0 0
    %2917 = vmatpush1.bf16.msra.mxu0 0
    %2918 = vmatprep.subr.bf16.mxu0 0
    %2919 = vmatpush1.bf16.msra.mxu0 0
    %2920 = vmatprep.subr.bf16.mxu0 0
    %2921 = vmatpush1.bf16.msra.mxu0 0
    %2922 = vmatprep.mubr.bf16.mxu0 0
    %2923 = vmatmul.mubr.bf16.gmra.mrb[0].mxu0 %v2888
    %v2924 = vpop.f32.mrb[0].mxu0
    %v2925 = vadd.f32 0.0, %v2924
    %v2926 = vpop.f32.mrb[0].mxu0
    %v2927 = vpop.f32.mrb[0].mxu0
    %v2928 = vpop.f32.mrb[0].mxu0
    %2929 = vdwg.mxu0
    %v2931 = vsel %vm2747, %v2838, 0
    %2933 = vmatprep.subr.bf16.mxu0 0
    %2934 = vmatpush1.bf16.msra.mxu0 %v2373
    %2935 = vmatprep.subr.bf16.mxu0 0
    %2936 = vmatpush1.bf16.msra.mxu0 0
    %2937 = vmatprep.subr.bf16.mxu0 0
    %2938 = vmatpush1.bf16.msra.mxu0 0
    %2939 = vmatprep.subr.bf16.mxu0 0
    %2940 = vmatpush1.bf16.msra.mxu0 0
    %2941 = vmatprep.subr.bf16.mxu0 0
    %2942 = vmatpush1.bf16.msra.mxu0 0
    %2943 = vmatprep.subr.bf16.mxu0 0
    %2944 = vmatpush1.bf16.msra.mxu0 0
    %2945 = vmatprep.subr.bf16.mxu0 0
    %2946 = vmatpush1.bf16.msra.mxu0 0
    %2947 = vmatprep.subr.bf16.mxu0 0
    %2948 = vmatpush1.bf16.msra.mxu0 0
    %2949 = vmatprep.subr.bf16.mxu0 0
    %2950 = vmatpush1.bf16.msra.mxu0 0
    %2951 = vmatprep.subr.bf16.mxu0 0
    %2952 = vmatpush1.bf16.msra.mxu0 0
    %2953 = vmatprep.subr.bf16.mxu0 0
    %2954 = vmatpush1.bf16.msra.mxu0 0
    %2955 = vmatprep.subr.bf16.mxu0 0
    %2956 = vmatpush1.bf16.msra.mxu0 0
    %2957 = vmatprep.subr.bf16.mxu0 0
    %2958 = vmatpush1.bf16.msra.mxu0 0
    %2959 = vmatprep.subr.bf16.mxu0 0
    %2960 = vmatpush1.bf16.msra.mxu0 0
    %2961 = vmatprep.subr.bf16.mxu0 0
    %2962 = vmatpush1.bf16.msra.mxu0 0
    %2963 = vmatprep.subr.bf16.mxu0 0
    %2964 = vmatpush1.bf16.msra.mxu0 0
    %2965 = vmatprep.mubr.bf16.mxu0 0
    %2966 = vmatmul.mubr.bf16.gmra.mrb[0].mxu0 %v2931
    %v2967 = vpop.f32.mrb[0].mxu0
    %v2968 = vadd.f32 0.0, %v2967
    %v2969 = vpop.f32.mrb[0].mxu0
    %v2970 = vpop.f32.mrb[0].mxu0
    %v2971 = vpop.f32.mrb[0].mxu0
    %2972 = vdwg.mxu0
    %v2974 = vsel %vm2747, %v2839, 0
    %2976 = vmatprep.subr.bf16.mxu0 0
    %2977 = vmatpush1.bf16.msra.mxu0 %v2374
    %2978 = vmatprep.subr.bf16.mxu0 0
    %2979 = vmatpush1.bf16.msra.mxu0 0
    %2980 = vmatprep.subr.bf16.mxu0 0
    %2981 = vmatpush1.bf16.msra.mxu0 0
    %2982 = vmatprep.subr.bf16.mxu0 0
    %2983 = vmatpush1.bf16.msra.mxu0 0
    %2984 = vmatprep.subr.bf16.mxu0 0
    %2985 = vmatpush1.bf16.msra.mxu0 0
    %2986 = vmatprep.subr.bf16.mxu0 0
    %2987 = vmatpush1.bf16.msra.mxu0 0
    %2988 = vmatprep.subr.bf16.mxu0 0
    %2989 = vmatpush1.bf16.msra.mxu0 0
    %2990 = vmatprep.subr.bf16.mxu0 0
    %2991 = vmatpush1.bf16.msra.mxu0 0
    %2992 = vmatprep.subr.bf16.mxu0 0
    %2993 = vmatpush1.bf16.msra.mxu0 0
    %2994 = vmatprep.subr.bf16.mxu0 0
    %2995 = vmatpush1.bf16.msra.mxu0 0
    %2996 = vmatprep.subr.bf16.mxu0 0
    %2997 = vmatpush1.bf16.msra.mxu0 0
    %2998 = vmatprep.subr.bf16.mxu0 0
    %2999 = vmatpush1.bf16.msra.mxu0 0
    %3000 = vmatprep.subr.bf16.mxu0 0
    %3001 = vmatpush1.bf16.msra.mxu0 0
    %3002 = vmatprep.subr.bf16.mxu0 0
    %3003 = vmatpush1.bf16.msra.mxu0 0
    %3004 = vmatprep.subr.bf16.mxu0 0
    %3005 = vmatpush1.bf16.msra.mxu0 0
    %3006 = vmatprep.subr.bf16.mxu0 0
    %3007 = vmatpush1.bf16.msra.mxu0 0
    %3008 = vmatprep.mubr.bf16.mxu0 0
    %3009 = vmatmul.mubr.bf16.gmra.mrb[0].mxu0 %v2974
    %v3010 = vpop.f32.mrb[0].mxu0
    %v3011 = vadd.f32 0.0, %v3010
    %v3012 = vpop.f32.mrb[0].mxu0
    %v3013 = vpop.f32.mrb[0].mxu0
    %v3014 = vpop.f32.mrb[0].mxu0
    %3015 = vdwg.mxu0
    %v3017 = vsel %vm2747, %v2840, 0
    %3019 = vmatprep.subr.bf16.mxu0 0
    %3020 = vmatpush1.bf16.msra.mxu0 %v2375
    %3021 = vmatprep.subr.bf16.mxu0 0
    %3022 = vmatpush1.bf16.msra.mxu0 0
    %3023 = vmatprep.subr.bf16.mxu0 0
    %3024 = vmatpush1.bf16.msra.mxu0 0
    %3025 = vmatprep.subr.bf16.mxu0 0
    %3026 = vmatpush1.bf16.msra.mxu0 0
    %3027 = vmatprep.subr.bf16.mxu0 0
    %3028 = vmatpush1.bf16.msra.mxu0 0
    %3029 = vmatprep.subr.bf16.mxu0 0
    %3030 = vmatpush1.bf16.msra.mxu0 0
    %3031 = vmatprep.subr.bf16.mxu0 0
    %3032 = vmatpush1.bf16.msra.mxu0 0
    %3033 = vmatprep.subr.bf16.mxu0 0
    %3034 = vmatpush1.bf16.msra.mxu0 0
    %3035 = vmatprep.subr.bf16.mxu0 0
    %3036 = vmatpush1.bf16.msra.mxu0 0
    %3037 = vmatprep.subr.bf16.mxu0 0
    %3038 = vmatpush1.bf16.msra.mxu0 0
    %3039 = vmatprep.subr.bf16.mxu0 0
    %3040 = vmatpush1.bf16.msra.mxu0 0
    %3041 = vmatprep.subr.bf16.mxu0 0
    %3042 = vmatpush1.bf16.msra.mxu0 0
    %3043 = vmatprep.subr.bf16.mxu0 0
    %3044 = vmatpush1.bf16.msra.mxu0 0
    %3045 = vmatprep.subr.bf16.mxu0 0
    %3046 = vmatpush1.bf16.msra.mxu0 0
    %3047 = vmatprep.subr.bf16.mxu0 0
    %3048 = vmatpush1.bf16.msra.mxu0 0
    %3049 = vmatprep.subr.bf16.mxu0 0
    %3050 = vmatpush1.bf16.msra.mxu0 0
    %3051 = vmatprep.mubr.bf16.mxu0 0
    %3052 = vmatmul.mubr.bf16.gmra.mrb[0].mxu0 %v3017
    %v3053 = vpop.f32.mrb[0].mxu0
    %v3054 = vadd.f32 0.0, %v3053
    %v3055 = vpop.f32.mrb[0].mxu0
    %v3056 = vpop.f32.mrb[0].mxu0
    %v3057 = vpop.f32.mrb[0].mxu0
    %3058 = vdwg.mxu0
    %v3060 = vsel %vm2747, %v2841, 0
    %3062 = vmatprep.subr.bf16.mxu0 0
    %3063 = vmatpush1.bf16.msra.mxu0 %v2376
    %3064 = vmatprep.subr.bf16.mxu0 0
    %3065 = vmatpush1.bf16.msra.mxu0 0
    %3066 = vmatprep.subr.bf16.mxu0 0
    %3067 = vmatpush1.bf16.msra.mxu0 0
    %3068 = vmatprep.subr.bf16.mxu0 0
    %3069 = vmatpush1.bf16.msra.mxu0 0
    %3070 = vmatprep.subr.bf16.mxu0 0
    %3071 = vmatpush1.bf16.msra.mxu0 0
    %3072 = vmatprep.subr.bf16.mxu0 0
    %3073 = vmatpush1.bf16.msra.mxu0 0
    %3074 = vmatprep.subr.bf16.mxu0 0
    %3075 = vmatpush1.bf16.msra.mxu0 0
    %3076 = vmatprep.subr.bf16.mxu0 0
    %3077 = vmatpush1.bf16.msra.mxu0 0
    %3078 = vmatprep.subr.bf16.mxu0 0
    %3079 = vmatpush1.bf16.msra.mxu0 0
    %3080 = vmatprep.subr.bf16.mxu0 0
    %3081 = vmatpush1.bf16.msra.mxu0 0
    %3082 = vmatprep.subr.bf16.mxu0 0
    %3083 = vmatpush1.bf16.msra.mxu0 0
    %3084 = vmatprep.subr.bf16.mxu0 0
    %3085 = vmatpush1.bf16.msra.mxu0 0
    %3086 = vmatprep.subr.bf16.mxu0 0
    %3087 = vmatpush1.bf16.msra.mxu0 0
    %3088 = vmatprep.subr.bf16.mxu0 0
    %3089 = vmatpush1.bf16.msra.mxu0 0
    %3090 = vmatprep.subr.bf16.mxu0 0
    %3091 = vmatpush1.bf16.msra.mxu0 0
    %3092 = vmatprep.subr.bf16.mxu0 0
    %3093 = vmatpush1.bf16.msra.mxu0 0
    %3094 = vmatprep.mubr.bf16.mxu0 0
    %3095 = vmatmul.mubr.bf16.gmra.mrb[0].mxu0 %v3060
    %v3096 = vpop.f32.mrb[0].mxu0
    %v3097 = vadd.f32 0.0, %v3096
    %v3098 = vpop.f32.mrb[0].mxu0
    %v3099 = vpop.f32.mrb[0].mxu0
    %v3100 = vpop.f32.mrb[0].mxu0
    %3101 = vdwg.mxu0
    %v3103 = vsel %vm2747, %v2842, 0
    %3105 = vmatprep.subr.bf16.mxu0 0
    %3106 = vmatpush1.bf16.msra.mxu0 %v2377
    %3107 = vmatprep.subr.bf16.mxu0 0
    %3108 = vmatpush1.bf16.msra.mxu0 0
    %3109 = vmatprep.subr.bf16.mxu0 0
    %3110 = vmatpush1.bf16.msra.mxu0 0
    %3111 = vmatprep.subr.bf16.mxu0 0
    %3112 = vmatpush1.bf16.msra.mxu0 0
    %3113 = vmatprep.subr.bf16.mxu0 0
    %3114 = vmatpush1.bf16.msra.mxu0 0
    %3115 = vmatprep.subr.bf16.mxu0 0
    %3116 = vmatpush1.bf16.msra.mxu0 0
    %3117 = vmatprep.subr.bf16.mxu0 0
    %3118 = vmatpush1.bf16.msra.mxu0 0
    %3119 = vmatprep.subr.bf16.mxu0 0
    %3120 = vmatpush1.bf16.msra.mxu0 0
    %3121 = vmatprep.subr.bf16.mxu0 0
    %3122 = vmatpush1.bf16.msra.mxu0 0
    %3123 = vmatprep.subr.bf16.mxu0 0
    %3124 = vmatpush1.bf16.msra.mxu0 0
    %3125 = vmatprep.subr.bf16.mxu0 0
    %3126 = vmatpush1.bf16.msra.mxu0 0
    %3127 = vmatprep.subr.bf16.mxu0 0
    %3128 = vmatpush1.bf16.msra.mxu0 0
    %3129 = vmatprep.subr.bf16.mxu0 0
    %3130 = vmatpush1.bf16.msra.mxu0 0
    %3131 = vmatprep.subr.bf16.mxu0 0
    %3132 = vmatpush1.bf16.msra.mxu0 0
    %3133 = vmatprep.subr.bf16.mxu0 0
    %3134 = vmatpush1.bf16.msra.mxu0 0
    %3135 = vmatprep.subr.bf16.mxu0 0
    %3136 = vmatpush1.bf16.msra.mxu0 0
    %3137 = vmatprep.mubr.bf16.mxu0 0
    %3138 = vmatmul.mubr.bf16.gmra.mrb[0].mxu0 %v3103
    %v3139 = vpop.f32.mrb[0].mxu0
    %v3140 = vadd.f32 0.0, %v3139
    %v3141 = vpop.f32.mrb[0].mxu0
    %v3142 = vpop.f32.mrb[0].mxu0
    %v3143 = vpop.f32.mrb[0].mxu0
    %3144 = vdwg.mxu0
    %v3146 = vsel %vm2747, %v2843, 0
    %3148 = vmatprep.subr.bf16.mxu0 0
    %3149 = vmatpush1.bf16.msra.mxu0 %v2378
    %3150 = vmatprep.subr.bf16.mxu0 0
    %3151 = vmatpush1.bf16.msra.mxu0 0
    %3152 = vmatprep.subr.bf16.mxu0 0
    %3153 = vmatpush1.bf16.msra.mxu0 0
    %3154 = vmatprep.subr.bf16.mxu0 0
    %3155 = vmatpush1.bf16.msra.mxu0 0
    %3156 = vmatprep.subr.bf16.mxu0 0
    %3157 = vmatpush1.bf16.msra.mxu0 0
    %3158 = vmatprep.subr.bf16.mxu0 0
    %3159 = vmatpush1.bf16.msra.mxu0 0
    %3160 = vmatprep.subr.bf16.mxu0 0
    %3161 = vmatpush1.bf16.msra.mxu0 0
    %3162 = vmatprep.subr.bf16.mxu0 0
    %3163 = vmatpush1.bf16.msra.mxu0 0
    %3164 = vmatprep.subr.bf16.mxu0 0
    %3165 = vmatpush1.bf16.msra.mxu0 0
    %3166 = vmatprep.subr.bf16.mxu0 0
    %3167 = vmatpush1.bf16.msra.mxu0 0
    %3168 = vmatprep.subr.bf16.mxu0 0
    %3169 = vmatpush1.bf16.msra.mxu0 0
    %3170 = vmatprep.subr.bf16.mxu0 0
    %3171 = vmatpush1.bf16.msra.mxu0 0
    %3172 = vmatprep.subr.bf16.mxu0 0
    %3173 = vmatpush1.bf16.msra.mxu0 0
    %3174 = vmatprep.subr.bf16.mxu0 0
    %3175 = vmatpush1.bf16.msra.mxu0 0
    %3176 = vmatprep.subr.bf16.mxu0 0
    %3177 = vmatpush1.bf16.msra.mxu0 0
    %3178 = vmatprep.subr.bf16.mxu0 0
    %3179 = vmatpush1.bf16.msra.mxu0 0
    %3180 = vmatprep.mubr.bf16.mxu0 0
    %3181 = vmatmul.mubr.bf16.gmra.mrb[0].mxu0 %v3146
    %v3182 = vpop.f32.mrb[0].mxu0
    %v3183 = vadd.f32 0.0, %v3182
    %v3184 = vpop.f32.mrb[0].mxu0
    %v3185 = vpop.f32.mrb[0].mxu0
    %v3186 = vpop.f32.mrb[0].mxu0
    %3187 = vdwg.mxu0
    %3188 = vxpose.xlu0.b32.start [1/16] %v2882, 128
    %3189 = vxpose.xlu0.b32.cont [2/16] %v2925, 128
    %3190 = vxpose.xlu0.b32.cont [3/16] 0.0, 128
    %3191 = vxpose.xlu0.b32.cont [4/16] 0.0, 128
    %3192 = vxpose.xlu0.b32.cont [5/16] 0.0, 128
    %3193 = vxpose.xlu0.b32.cont [6/16] 0.0, 128
    %3194 = vxpose.xlu0.b32.cont [7/16] 0.0, 128
    %3195 = vxpose.xlu0.b32.cont [8/16] 0.0, 128
    %3196 = vxpose.xlu0.b32.cont [9/16] 0.0, 128
    %3197 = vxpose.xlu0.b32.cont [10/16] 0.0, 128
    %3198 = vxpose.xlu0.b32.cont [11/16] 0.0, 128
    %3199 = vxpose.xlu0.b32.cont [12/16] 0.0, 128
    %3200 = vxpose.xlu0.b32.cont [13/16] 0.0, 128
    %3201 = vxpose.xlu0.b32.cont [14/16] 0.0, 128
    %3202 = vxpose.xlu0.b32.cont [15/16] 0.0, 128
    %3203 = vxpose.xlu0.b32.end [16/16] 0.0, 128
    %v3204 = vpop.trf.xlu0
    %v3205 = vpop.trf.xlu0
    %v3206 = vpop.trf.xlu0
    %v3207 = vpop.trf.xlu0
    %v3208 = vpop.trf.xlu0
    %v3209 = vpop.trf.xlu0
    %v3210 = vpop.trf.xlu0
    %v3211 = vpop.trf.xlu0
    %v3212 = vpop.trf.xlu0
    %v3213 = vpop.trf.xlu0
    %v3214 = vpop.trf.xlu0
    %v3215 = vpop.trf.xlu0
    %v3216 = vpop.trf.xlu0
    %v3217 = vpop.trf.xlu0
    %v3218 = vpop.trf.xlu0
    %v3219 = vpop.trf.xlu0
    %3220 = vxpose.xlu0.b32.start [1/16] %v2968, 128
    %3221 = vxpose.xlu0.b32.cont [2/16] %v3011, 128
    %3222 = vxpose.xlu0.b32.cont [3/16] 0.0, 128
    %3223 = vxpose.xlu0.b32.cont [4/16] 0.0, 128
    %3224 = vxpose.xlu0.b32.cont [5/16] 0.0, 128
    %3225 = vxpose.xlu0.b32.cont [6/16] 0.0, 128
    %3226 = vxpose.xlu0.b32.cont [7/16] 0.0, 128
    %3227 = vxpose.xlu0.b32.cont [8/16] 0.0, 128
    %3228 = vxpose.xlu0.b32.cont [9/16] 0.0, 128
    %3229 = vxpose.xlu0.b32.cont [10/16] 0.0, 128
    %3230 = vxpose.xlu0.b32.cont [11/16] 0.0, 128
    %3231 = vxpose.xlu0.b32.cont [12/16] 0.0, 128
    %3232 = vxpose.xlu0.b32.cont [13/16] 0.0, 128
    %3233 = vxpose.xlu0.b32.cont [14/16] 0.0, 128
    %3234 = vxpose.xlu0.b32.cont [15/16] 0.0, 128
    %3235 = vxpose.xlu0.b32.end [16/16] 0.0, 128
    %v3236 = vpop.trf.xlu0
    %v3237 = vpop.trf.xlu0
    %v3238 = vpop.trf.xlu0
    %v3239 = vpop.trf.xlu0
    %v3240 = vpop.trf.xlu0
    %v3241 = vpop.trf.xlu0
    %v3242 = vpop.trf.xlu0
    %v3243 = vpop.trf.xlu0
    %v3244 = vpop.trf.xlu0
    %v3245 = vpop.trf.xlu0
    %v3246 = vpop.trf.xlu0
    %v3247 = vpop.trf.xlu0
    %v3248 = vpop.trf.xlu0
    %v3249 = vpop.trf.xlu0
    %v3250 = vpop.trf.xlu0
    %v3251 = vpop.trf.xlu0
    %3252 = vxpose.xlu0.b32.start [1/16] %v3054, 128
    %3253 = vxpose.xlu0.b32.cont [2/16] %v3097, 128
    %3254 = vxpose.xlu0.b32.cont [3/16] 0.0, 128
    %3255 = vxpose.xlu0.b32.cont [4/16] 0.0, 128
    %3256 = vxpose.xlu0.b32.cont [5/16] 0.0, 128
    %3257 = vxpose.xlu0.b32.cont [6/16] 0.0, 128
    %3258 = vxpose.xlu0.b32.cont [7/16] 0.0, 128
    %3259 = vxpose.xlu0.b32.cont [8/16] 0.0, 128
    %3260 = vxpose.xlu0.b32.cont [9/16] 0.0, 128
    %3261 = vxpose.xlu0.b32.cont [10/16] 0.0, 128
    %3262 = vxpose.xlu0.b32.cont [11/16] 0.0, 128
    %3263 = vxpose.xlu0.b32.cont [12/16] 0.0, 128
    %3264 = vxpose.xlu0.b32.cont [13/16] 0.0, 128
    %3265 = vxpose.xlu0.b32.cont [14/16] 0.0, 128
    %3266 = vxpose.xlu0.b32.cont [15/16] 0.0, 128
    %3267 = vxpose.xlu0.b32.end [16/16] 0.0, 128
    %v3268 = vpop.trf.xlu0
    %v3269 = vpop.trf.xlu0
    %v3270 = vpop.trf.xlu0
    %v3271 = vpop.trf.xlu0
    %v3272 = vpop.trf.xlu0
    %v3273 = vpop.trf.xlu0
    %v3274 = vpop.trf.xlu0
    %v3275 = vpop.trf.xlu0
    %v3276 = vpop.trf.xlu0
    %v3277 = vpop.trf.xlu0
    %v3278 = vpop.trf.xlu0
    %v3279 = vpop.trf.xlu0
    %v3280 = vpop.trf.xlu0
    %v3281 = vpop.trf.xlu0
    %v3282 = vpop.trf.xlu0
    %v3283 = vpop.trf.xlu0
    %3284 = vxpose.xlu0.b32.start [1/16] %v3140, 128
    %3285 = vxpose.xlu0.b32.cont [2/16] %v3183, 128
    %3286 = vxpose.xlu0.b32.cont [3/16] 0.0, 128
    %3287 = vxpose.xlu0.b32.cont [4/16] 0.0, 128
    %3288 = vxpose.xlu0.b32.cont [5/16] 0.0, 128
    %3289 = vxpose.xlu0.b32.cont [6/16] 0.0, 128
    %3290 = vxpose.xlu0.b32.cont [7/16] 0.0, 128
    %3291 = vxpose.xlu0.b32.cont [8/16] 0.0, 128
    %3292 = vxpose.xlu0.b32.cont [9/16] 0.0, 128
    %3293 = vxpose.xlu0.b32.cont [10/16] 0.0, 128
    %3294 = vxpose.xlu0.b32.cont [11/16] 0.0, 128
    %3295 = vxpose.xlu0.b32.cont [12/16] 0.0, 128
    %3296 = vxpose.xlu0.b32.cont [13/16] 0.0, 128
    %3297 = vxpose.xlu0.b32.cont [14/16] 0.0, 128
    %3298 = vxpose.xlu0.b32.cont [15/16] 0.0, 128
    %3299 = vxpose.xlu0.b32.end [16/16] 0.0, 128
    %v3300 = vpop.trf.xlu0
    %v3301 = vpop.trf.xlu0
    %v3302 = vpop.trf.xlu0
    %v3303 = vpop.trf.xlu0
    %v3304 = vpop.trf.xlu0
    %v3305 = vpop.trf.xlu0
    %v3306 = vpop.trf.xlu0
    %v3307 = vpop.trf.xlu0
    %v3308 = vpop.trf.xlu0
    %v3309 = vpop.trf.xlu0
    %v3310 = vpop.trf.xlu0
    %v3311 = vpop.trf.xlu0
    %v3312 = vpop.trf.xlu0
    %v3313 = vpop.trf.xlu0
    %v3314 = vpop.trf.xlu0
    %v3315 = vpop.trf.xlu0
    %3316 = vxpose.xlu0.b32.start [1/16] %v3204, 128
    %3317 = vxpose.xlu0.b32.cont [2/16] %v3236, 128
    %3318 = vxpose.xlu0.b32.cont [3/16] %v3268, 128
    %3319 = vxpose.xlu0.b32.cont [4/16] %v3300, 128
    %3320 = vxpose.xlu0.b32.cont [5/16] 0.0, 128
    %3321 = vxpose.xlu0.b32.cont [6/16] 0.0, 128
    %3322 = vxpose.xlu0.b32.cont [7/16] 0.0, 128
    %3323 = vxpose.xlu0.b32.cont [8/16] 0.0, 128
    %3324 = vxpose.xlu0.b32.cont [9/16] 0.0, 128
    %3325 = vxpose.xlu0.b32.cont [10/16] 0.0, 128
    %3326 = vxpose.xlu0.b32.cont [11/16] 0.0, 128
    %3327 = vxpose.xlu0.b32.cont [12/16] 0.0, 128
    %3328 = vxpose.xlu0.b32.cont [13/16] 0.0, 128
    %3329 = vxpose.xlu0.b32.cont [14/16] 0.0, 128
    %3330 = vxpose.xlu0.b32.cont [15/16] 0.0, 128
    %3331 = vxpose.xlu0.b32.end [16/16] 0.0, 128
    %v3332 = vpop.trf.xlu0
    %v3333 = vpop.trf.xlu0
    %v3334 = vpop.trf.xlu0
    %v3335 = vpop.trf.xlu0
    %v3336 = vpop.trf.xlu0
    %v3337 = vpop.trf.xlu0
    %v3338 = vpop.trf.xlu0
    %v3339 = vpop.trf.xlu0
    %v3340 = vpop.trf.xlu0
    %v3341 = vpop.trf.xlu0
    %v3342 = vpop.trf.xlu0
    %v3343 = vpop.trf.xlu0
    %v3344 = vpop.trf.xlu0
    %v3345 = vpop.trf.xlu0
    %v3346 = vpop.trf.xlu0
    %v3347 = vpop.trf.xlu0
    %v3348 = vpack.c.bf16 %v3333, %v3332
    %v3349 = vld [vmem:[%s4 + $0x30] sm:$0xf]
    %v3350 = vld [vmem:[%s4 + $0x34] sm:$0xf]
    %v3351 = vld [vmem:[%s4 + $0x38] sm:$0xf]
    %v3352 = vld [vmem:[%s4 + $0x3c] sm:$0xf]
    %v3353 = vld [vmem:[%s5 + $0x3] sm:$0x1]
    %v3354 = vlaneseq
    %v3355 = vshrl.u32 %v3354, 7
    %v3356 = vsub.s32 0, %v3355
    %v3357 = vrot.slane %v3353, %v3356
    %v3362 = vunpack.c.l.b16 %v3349
    %v3363 = vunpack.c.l.b16 %v3350
    %v3364 = vunpack.c.l.b16 %v3351
    %v3365 = vunpack.c.l.b16 %v3352
    %v3366 = vpack.c.b16 %v3363, %v3362
    %v3367 = vpack.c.b16 %v3365, %v3364
    %v3371 = vsel %vm62, %v3348, 0
    %3373 = vmatprep.subr.bf16.mxu0 0
    %3374 = vmatpush1.bf16.msra.mxu0 %v3366
    %3375 = vmatprep.subr.bf16.mxu0 0
    %3376 = vmatpush1.bf16.msra.mxu0 %v3367
    %3377 = vmatprep.subr.bf16.mxu0 0
    %3378 = vmatpush1.bf16.msra.mxu0 0
    %3379 = vmatprep.subr.bf16.mxu0 0
    %3380 = vmatpush1.bf16.msra.mxu0 0
    %3381 = vmatprep.subr.bf16.mxu0 0
    %3382 = vmatpush1.bf16.msra.mxu0 0
    %3383 = vmatprep.subr.bf16.mxu0 0
    %3384 = vmatpush1.bf16.msra.mxu0 0
    %3385 = vmatprep.subr.bf16.mxu0 0
    %3386 = vmatpush1.bf16.msra.mxu0 0
    %3387 = vmatprep.subr.bf16.mxu0 0
    %3388 = vmatpush1.bf16.msra.mxu0 0
    %3389 = vmatprep.subr.bf16.mxu0 0
    %3390 = vmatpush1.bf16.msra.mxu0 0
    %3391 = vmatprep.subr.bf16.mxu0 0
    %3392 = vmatpush1.bf16.msra.mxu0 0
    %3393 = vmatprep.subr.bf16.mxu0 0
    %3394 = vmatpush1.bf16.msra.mxu0 0
    %3395 = vmatprep.subr.bf16.mxu0 0
    %3396 = vmatpush1.bf16.msra.mxu0 0
    %3397 = vmatprep.subr.bf16.mxu0 0
    %3398 = vmatpush1.bf16.msra.mxu0 0
    %3399 = vmatprep.subr.bf16.mxu0 0
    %3400 = vmatpush1.bf16.msra.mxu0 0
    %3401 = vmatprep.subr.bf16.mxu0 0
    %3402 = vmatpush1.bf16.msra.mxu0 0
    %3403 = vmatprep.subr.bf16.mxu0 0
    %3404 = vmatpush1.bf16.msra.mxu0 0
    %3405 = vmatprep.mubr.bf16.mxu0 0
    %3406 = vmatmul.mubr.bf16.gmra.mrb[0].mxu0 %v3371
    %v3407 = vpop.f32.mrb[0].mxu0
    %v3408 = vadd.f32 %v3357, %v3407
    %v3409 = vpop.f32.mrb[0].mxu0
    %v3410 = vpop.f32.mrb[0].mxu0
    %v3411 = vadd.f32 %v3357, %v3410
    %v3412 = vpop.f32.mrb[0].mxu0
    %3413 = vdwg.mxu0
    %v3414 = vadd.f32 %v1726, %v3408
    %v3415 = vadd.f32 %v1727, %v3411
    %v3416 = vsel %vm62, %v3414, 0.0
    %3417 = vadd.xlane.f32.xlu0 %v3416
    %v3418 = vpop.xlane.xlu0 %3417
    %v3419 = vsel %vm62, %v3415, 0.0
    %3420 = vadd.xlane.f32.xlu0 %v3419
    %v3421 = vpop.xlane.xlu0 %3420
    %v3422 = vmul.f32 %v3418, %v1693
    %v3423 = vmul.f32 %v3421, %v1693
    %v3424 = vsub.f32 %v3414, %v3422
    %v3425 = vsub.f32 %v3415, %v3423
    %v3426 = vmul.f32 %v3424, %v3424
    %v3427 = vmul.f32 %v3425, %v3425
    %v3428 = vsel %vm62, %v3426, 0.0
    %3429 = vadd.xlane.f32.xlu0 %v3428
    %v3430 = vpop.xlane.xlu0 %3429
    %v3431 = vsel %vm62, %v3427, 0.0
    %3432 = vadd.xlane.f32.xlu0 %v3431
    %v3433 = vpop.xlane.xlu0 %3432
    %v3434 = vmul.f32 %v3430, %v1693
    %v3435 = vmul.f32 %v3433, %v1693
    %v3436 = vadd.f32 %v3434, 1e-05
    %v3437 = vadd.f32 %v3435, 1e-05
    %v3438 = vrsqrt.pop %v3436
    %v3439 = vrsqrt.pop %v3437
    %v3440 = vmul.f32 %v3424, %v3438
    %v3441 = vmul.f32 %v3425, %v3439
    %v3442 = vld [vmem:[%s5 + $0x8] sm:$0x1]
    %v3443 = vlaneseq
    %v3444 = vshrl.u32 %v3443, 7
    %v3445 = vsub.s32 0, %v3444
    %v3446 = vrot.slane %v3442, %v3445
    %v3447 = vmul.f32 %v3440, %v3446
    %v3448 = vmul.f32 %v3441, %v3446
    %v3449 = vld [vmem:[%s5 + $0x9] sm:$0x1]
    %v3450 = vlaneseq
    %v3451 = vshrl.u32 %v3450, 7
    %v3452 = vsub.s32 0, %v3451
    %v3453 = vrot.slane %v3449, %v3452
    %v3454 = vadd.f32 %v3447, %v3453
    %v3455 = vadd.f32 %v3448, %v3453
    %v3456 = vpack.c.bf16 %v3455, %v3454
    %v3457 = vld [vmem:[%s4 + $0x40] sm:$0xf]
    %v3458 = vld [vmem:[%s4 + $0x44] sm:$0xf]
    %v3459 = vld [vmem:[%s4 + $0x48] sm:$0xf]
    %v3460 = vld [vmem:[%s4 + $0x4c] sm:$0xf]
    %v3461 = vld [vmem:[%s5 + $0x4] sm:$0x1]
    %v3462 = vlaneseq
    %v3463 = vshrl.u32 %v3462, 7
    %v3464 = vsub.s32 0, %v3463
    %v3465 = vrot.slane %v3461, %v3464
    %v3470 = vunpack.c.l.b16 %v3457
    %v3471 = vunpack.c.l.b16 %v3458
    %v3472 = vunpack.c.l.b16 %v3459
    %v3473 = vunpack.c.l.b16 %v3460
    %v3474 = vpack.c.b16 %v3471, %v3470
    %v3475 = vpack.c.b16 %v3473, %v3472
    %v3479 = vsel %vm62, %v3456, 0
    %3481 = vmatprep.subr.bf16.mxu0 0
    %3482 = vmatpush1.bf16.msra.mxu0 %v3474
    %3483 = vmatprep.subr.bf16.mxu0 0
    %3484 = vmatpush1.bf16.msra.mxu0 %v3475
    %3485 = vmatprep.subr.bf16.mxu0 0
    %3486 = vmatpush1.bf16.msra.mxu0 0
    %3487 = vmatprep.subr.bf16.mxu0 0
    %3488 = vmatpush1.bf16.msra.mxu0 0
    %3489 = vmatprep.subr.bf16.mxu0 0
    %3490 = vmatpush1.bf16.msra.mxu0 0
    %3491 = vmatprep.subr.bf16.mxu0 0
    %3492 = vmatpush1.bf16.msra.mxu0 0
    %3493 = vmatprep.subr.bf16.mxu0 0
    %3494 = vmatpush1.bf16.msra.mxu0 0
    %3495 = vmatprep.subr.bf16.mxu0 0
    %3496 = vmatpush1.bf16.msra.mxu0 0
    %3497 = vmatprep.subr.bf16.mxu0 0
    %3498 = vmatpush1.bf16.msra.mxu0 0
    %3499 = vmatprep.subr.bf16.mxu0 0
    %3500 = vmatpush1.bf16.msra.mxu0 0
    %3501 = vmatprep.subr.bf16.mxu0 0
    %3502 = vmatpush1.bf16.msra.mxu0 0
    %3503 = vmatprep.subr.bf16.mxu0 0
    %3504 = vmatpush1.bf16.msra.mxu0 0
    %3505 = vmatprep.subr.bf16.mxu0 0
    %3506 = vmatpush1.bf16.msra.mxu0 0
    %3507 = vmatprep.subr.bf16.mxu0 0
    %3508 = vmatpush1.bf16.msra.mxu0 0
    %3509 = vmatprep.subr.bf16.mxu0 0
    %3510 = vmatpush1.bf16.msra.mxu0 0
    %3511 = vmatprep.subr.bf16.mxu0 0
    %3512 = vmatpush1.bf16.msra.mxu0 0
    %3513 = vmatprep.mubr.bf16.mxu0 0
    %3514 = vmatmul.mubr.bf16.gmra.mrb[0].mxu0 %v3479
    %v3515 = vpop.f32.mrb[0].mxu0
    %v3516 = vadd.f32 %v3465, %v3515
    %v3517 = vpop.f32.mrb[0].mxu0
    %v3518 = vpop.f32.mrb[0].mxu0
    %v3519 = vadd.f32 %v3465, %v3518
    %v3520 = vpop.f32.mrb[0].mxu0
    %3521 = vdwg.mxu0
    %v3522 = vmax.f32 %v3516, 0.0
    %v3523 = vmax.f32 %v3519, 0.0
    %v3524 = vpack.c.bf16 %v3523, %v3522
    %v3525 = vld [vmem:[%s4 + $0x50] sm:$0xf]
    %v3526 = vld [vmem:[%s4 + $0x54] sm:$0xf]
    %v3527 = vld [vmem:[%s4 + $0x58] sm:$0xf]
    %v3528 = vld [vmem:[%s4 + $0x5c] sm:$0xf]
    %v3529 = vld [vmem:[%s4 + $0x60] sm:$0xf]
    %v3530 = vld [vmem:[%s4 + $0x64] sm:$0xf]
    %v3531 = vld [vmem:[%s4 + $0x68] sm:$0xf]
    %v3532 = vld [vmem:[%s4 + $0x6c] sm:$0xf]
    %v3533 = vld [vmem:[%s5 + $0x5] sm:$0x1]
    %v3534 = vlaneseq
    %v3535 = vshrl.u32 %v3534, 7
    %v3536 = vsub.s32 0, %v3535
    %v3537 = vrot.slane %v3533, %v3536
    %v3546 = vunpack.c.l.b16 %v3525
    %v3547 = vunpack.c.l.b16 %v3526
    %v3548 = vunpack.c.l.b16 %v3527
    %v3549 = vunpack.c.l.b16 %v3528
    %v3550 = vunpack.c.l.b16 %v3529
    %v3551 = vunpack.c.l.b16 %v3530
    %v3552 = vunpack.c.l.b16 %v3531
    %v3553 = vunpack.c.l.b16 %v3532
    %v3554 = vpack.c.b16 %v3547, %v3546
    %v3555 = vpack.c.b16 %v3549, %v3548
    %v3556 = vpack.c.b16 %v3551, %v3550
    %v3557 = vpack.c.b16 %v3553, %v3552
    %vm3562 = vcmask 523264
    %v3564 = vsel %vm3562, %v3524, 0
    %3566 = vmatprep.subr.bf16.mxu0 0
    %3567 = vmatpush1.bf16.msra.mxu0 %v3554
    %3568 = vmatprep.subr.bf16.mxu0 0
    %3569 = vmatpush1.bf16.msra.mxu0 %v3555
    %3570 = vmatprep.subr.bf16.mxu0 0
    %3571 = vmatpush1.bf16.msra.mxu0 %v3556
    %3572 = vmatprep.subr.bf16.mxu0 0
    %3573 = vmatpush1.bf16.msra.mxu0 %v3557
    %3574 = vmatprep.subr.bf16.mxu0 0
    %3575 = vmatpush1.bf16.msra.mxu0 0
    %3576 = vmatprep.subr.bf16.mxu0 0
    %3577 = vmatpush1.bf16.msra.mxu0 0
    %3578 = vmatprep.subr.bf16.mxu0 0
    %3579 = vmatpush1.bf16.msra.mxu0 0
    %3580 = vmatprep.subr.bf16.mxu0 0
    %3581 = vmatpush1.bf16.msra.mxu0 0
    %3582 = vmatprep.subr.bf16.mxu0 0
    %3583 = vmatpush1.bf16.msra.mxu0 0
    %3584 = vmatprep.subr.bf16.mxu0 0
    %3585 = vmatpush1.bf16.msra.mxu0 0
    %3586 = vmatprep.subr.bf16.mxu0 0
    %3587 = vmatpush1.bf16.msra.mxu0 0
    %3588 = vmatprep.subr.bf16.mxu0 0
    %3589 = vmatpush1.bf16.msra.mxu0 0
    %3590 = vmatprep.subr.bf16.mxu0 0
    %3591 = vmatpush1.bf16.msra.mxu0 0
    %3592 = vmatprep.subr.bf16.mxu0 0
    %3593 = vmatpush1.bf16.msra.mxu0 0
    %3594 = vmatprep.subr.bf16.mxu0 0
    %3595 = vmatpush1.bf16.msra.mxu0 0
    %3596 = vmatprep.subr.bf16.mxu0 0
    %3597 = vmatpush1.bf16.msra.mxu0 0
    %3598 = vmatprep.mubr.bf16.mxu0 0
    %3599 = vmatmul.mubr.bf16.gmra.mrb[0].mxu0 %v3564
    %v3600 = vpop.f32.mrb[0].mxu0
    %v3601 = vadd.f32 %v3537, %v3600
    %v3602 = vpop.f32.mrb[0].mxu0
    %v3603 = vpop.f32.mrb[0].mxu0
    %v3604 = vadd.f32 %v3537, %v3603
    %v3605 = vpop.f32.mrb[0].mxu0
    %3606 = vdwg.mxu0
    %v3607 = vadd.f32 %v3454, %v3601
    %v3608 = vadd.f32 %v3455, %v3604
    %v3609 = vsel %vm62, %v3607, 0.0
    %3610 = vadd.xlane.f32.xlu0 %v3609
    %v3611 = vpop.xlane.xlu0 %3610
    %v3612 = vsel %vm62, %v3608, 0.0
    %3613 = vadd.xlane.f32.xlu0 %v3612
    %v3614 = vpop.xlane.xlu0 %3613
    %v3615 = vmul.f32 %v3611, %v1693
    %v3616 = vmul.f32 %v3614, %v1693
    %v3617 = vsub.f32 %v3607, %v3615
    %v3618 = vsub.f32 %v3608, %v3616
    %v3619 = vmul.f32 %v3617, %v3617
    %v3620 = vmul.f32 %v3618, %v3618
    %v3621 = vsel %vm62, %v3619, 0.0
    %3622 = vadd.xlane.f32.xlu0 %v3621
    %v3623 = vpop.xlane.xlu0 %3622
    %v3624 = vsel %vm62, %v3620, 0.0
    %3625 = vadd.xlane.f32.xlu0 %v3624
    %v3626 = vpop.xlane.xlu0 %3625
    %v3627 = vmul.f32 %v3623, %v1693
    %v3628 = vmul.f32 %v3626, %v1693
    %v3629 = vadd.f32 %v3627, 1e-05
    %v3630 = vadd.f32 %v3628, 1e-05
    %v3631 = vrsqrt.pop %v3629
    %v3632 = vrsqrt.pop %v3630
    %v3633 = vmul.f32 %v3617, %v3631
    %v3634 = vmul.f32 %v3618, %v3632
    %v3635 = vld [vmem:[%s5 + $0xa] sm:$0x1]
    %v3636 = vlaneseq
    %v3637 = vshrl.u32 %v3636, 7
    %v3638 = vsub.s32 0, %v3637
    %v3639 = vrot.slane %v3635, %v3638
    %v3640 = vmul.f32 %v3633, %v3639
    %v3641 = vmul.f32 %v3634, %v3639
    %v3642 = vld [vmem:[%s5 + $0xb] sm:$0x1]
    %v3643 = vlaneseq
    %v3644 = vshrl.u32 %v3643, 7
    %v3645 = vsub.s32 0, %v3644
    %v3646 = vrot.slane %v3642, %v3645
    %v3647 = vadd.f32 %v3640, %v3646
    %v3648 = vadd.f32 %v3641, %v3646
    %v3649 = vpack.c.bf16 %v3648, %v3647
    %v3650 = vld [vmem:[%s4 + $0x70] sm:$0xf]
    %v3651 = vld [vmem:[%s4 + $0x74] sm:$0xf]
    %v3652 = vld [vmem:[%s4 + $0x78] sm:$0xf]
    %v3653 = vld [vmem:[%s4 + $0x7c] sm:$0xf]
    %v3654 = vld [vmem:[%s5 + $0xc] sm:$0x1]
    %v3655 = vlaneseq
    %v3656 = vshrl.u32 %v3655, 7
    %v3657 = vsub.s32 0, %v3656
    %v3658 = vrot.slane %v3654, %v3657
    %v3663 = vunpack.c.l.b16 %v3650
    %v3664 = vunpack.c.l.b16 %v3651
    %v3665 = vunpack.c.l.b16 %v3652
    %v3666 = vunpack.c.l.b16 %v3653
    %v3667 = vpack.c.b16 %v3664, %v3663
    %v3668 = vpack.c.b16 %v3666, %v3665
    %v3672 = vsel %vm62, %v3649, 0
    %3674 = vmatprep.subr.bf16.mxu0 0
    %3675 = vmatpush1.bf16.msra.mxu0 %v3667
    %3676 = vmatprep.subr.bf16.mxu0 0
    %3677 = vmatpush1.bf16.msra.mxu0 %v3668
    %3678 = vmatprep.subr.bf16.mxu0 0
    %3679 = vmatpush1.bf16.msra.mxu0 0
    %3680 = vmatprep.subr.bf16.mxu0 0
    %3681 = vmatpush1.bf16.msra.mxu0 0
    %3682 = vmatprep.subr.bf16.mxu0 0
    %3683 = vmatpush1.bf16.msra.mxu0 0
    %3684 = vmatprep.subr.bf16.mxu0 0
    %3685 = vmatpush1.bf16.msra.mxu0 0
    %3686 = vmatprep.subr.bf16.mxu0 0
    %3687 = vmatpush1.bf16.msra.mxu0 0
    %3688 = vmatprep.subr.bf16.mxu0 0
    %3689 = vmatpush1.bf16.msra.mxu0 0
    %3690 = vmatprep.subr.bf16.mxu0 0
    %3691 = vmatpush1.bf16.msra.mxu0 0
    %3692 = vmatprep.subr.bf16.mxu0 0
    %3693 = vmatpush1.bf16.msra.mxu0 0
    %3694 = vmatprep.subr.bf16.mxu0 0
    %3695 = vmatpush1.bf16.msra.mxu0 0
    %3696 = vmatprep.subr.bf16.mxu0 0
    %3697 = vmatpush1.bf16.msra.mxu0 0
    %3698 = vmatprep.subr.bf16.mxu0 0
    %3699 = vmatpush1.bf16.msra.mxu0 0
    %3700 = vmatprep.subr.bf16.mxu0 0
    %3701 = vmatpush1.bf16.msra.mxu0 0
    %3702 = vmatprep.subr.bf16.mxu0 0
    %3703 = vmatpush1.bf16.msra.mxu0 0
    %3704 = vmatprep.subr.bf16.mxu0 0
    %3705 = vmatpush1.bf16.msra.mxu0 0
    %3706 = vmatprep.mubr.bf16.mxu0 0
    %3707 = vmatmul.mubr.bf16.gmra.mrb[0].mxu0 %v3672
    %v3708 = vpop.f32.mrb[0].mxu0
    %v3709 = vadd.f32 %v3658, %v3708
    %v3710 = vpop.f32.mrb[0].mxu0
    %v3711 = vpop.f32.mrb[0].mxu0
    %v3712 = vadd.f32 %v3658, %v3711
    %v3713 = vpop.f32.mrb[0].mxu0
    %3714 = vdwg.mxu0
    %3715 = vxpose.xlu0.b32.start [1/16] %v3709, 128
    %3716 = vxpose.xlu0.b32.cont [2/16] %v3712, 128
    %3717 = vxpose.xlu0.b32.cont [3/16] 0.0, 128
    %3718 = vxpose.xlu0.b32.cont [4/16] 0.0, 128
    %3719 = vxpose.xlu0.b32.cont [5/16] 0.0, 128
    %3720 = vxpose.xlu0.b32.cont [6/16] 0.0, 128
    %3721 = vxpose.xlu0.b32.cont [7/16] 0.0, 128
    %3722 = vxpose.xlu0.b32.cont [8/16] 0.0, 128
    %3723 = vxpose.xlu0.b32.cont [9/16] 0.0, 128
    %3724 = vxpose.xlu0.b32.cont [10/16] 0.0, 128
    %3725 = vxpose.xlu0.b32.cont [11/16] 0.0, 128
    %3726 = vxpose.xlu0.b32.cont [12/16] 0.0, 128
    %3727 = vxpose.xlu0.b32.cont [13/16] 0.0, 128
    %3728 = vxpose.xlu0.b32.cont [14/16] 0.0, 128
    %3729 = vxpose.xlu0.b32.cont [15/16] 0.0, 128
    %3730 = vxpose.xlu0.b32.end [16/16] 0.0, 128
    %v3731 = vpop.trf.xlu0
    %v3732 = vpop.trf.xlu0
    %v3733 = vpop.trf.xlu0
    %v3734 = vpop.trf.xlu0
    %v3735 = vpop.trf.xlu0
    %v3736 = vpop.trf.xlu0
    %v3737 = vpop.trf.xlu0
    %v3738 = vpop.trf.xlu0
    %v3739 = vpop.trf.xlu0
    %v3740 = vpop.trf.xlu0
    %v3741 = vpop.trf.xlu0
    %v3742 = vpop.trf.xlu0
    %v3743 = vpop.trf.xlu0
    %v3744 = vpop.trf.xlu0
    %v3745 = vpop.trf.xlu0
    %v3746 = vpop.trf.xlu0
    %3747 = vxpose.xlu0.b32.start [1/16] %v3731, 128
    %3748 = vxpose.xlu0.b32.cont [2/16] 0.0, 128
    %3749 = vxpose.xlu0.b32.cont [3/16] 0.0, 128
    %3750 = vxpose.xlu0.b32.cont [4/16] 0.0, 128
    %3751 = vxpose.xlu0.b32.cont [5/16] 0.0, 128
    %3752 = vxpose.xlu0.b32.cont [6/16] 0.0, 128
    %3753 = vxpose.xlu0.b32.cont [7/16] 0.0, 128
    %3754 = vxpose.xlu0.b32.cont [8/16] 0.0, 128
    %3755 = vxpose.xlu0.b32.cont [9/16] 0.0, 128
    %3756 = vxpose.xlu0.b32.cont [10/16] 0.0, 128
    %3757 = vxpose.xlu0.b32.cont [11/16] 0.0, 128
    %3758 = vxpose.xlu0.b32.cont [12/16] 0.0, 128
    %3759 = vxpose.xlu0.b32.cont [13/16] 0.0, 128
    %3760 = vxpose.xlu0.b32.cont [14/16] 0.0, 128
    %3761 = vxpose.xlu0.b32.cont [15/16] 0.0, 128
    %3762 = vxpose.xlu0.b32.end [16/16] 0.0, 128
    %v3763 = vpop.trf.xlu0
    %v3764 = vpop.trf.xlu0
    %v3765 = vpop.trf.xlu0
    %v3766 = vpop.trf.xlu0
    %v3767 = vpop.trf.xlu0
    %v3768 = vpop.trf.xlu0
    %v3769 = vpop.trf.xlu0
    %v3770 = vpop.trf.xlu0
    %v3771 = vpop.trf.xlu0
    %v3772 = vpop.trf.xlu0
    %v3773 = vpop.trf.xlu0
    %v3774 = vpop.trf.xlu0
    %v3775 = vpop.trf.xlu0
    %v3776 = vpop.trf.xlu0
    %v3777 = vpop.trf.xlu0
    %v3778 = vpop.trf.xlu0
    %3779 = vxpose.xlu0.b32.start [1/16] %v3732, 128
    %3780 = vxpose.xlu0.b32.cont [2/16] 0.0, 128
    %3781 = vxpose.xlu0.b32.cont [3/16] 0.0, 128
    %3782 = vxpose.xlu0.b32.cont [4/16] 0.0, 128
    %3783 = vxpose.xlu0.b32.cont [5/16] 0.0, 128
    %3784 = vxpose.xlu0.b32.cont [6/16] 0.0, 128
    %3785 = vxpose.xlu0.b32.cont [7/16] 0.0, 128
    %3786 = vxpose.xlu0.b32.cont [8/16] 0.0, 128
    %3787 = vxpose.xlu0.b32.cont [9/16] 0.0, 128
    %3788 = vxpose.xlu0.b32.cont [10/16] 0.0, 128
    %3789 = vxpose.xlu0.b32.cont [11/16] 0.0, 128
    %3790 = vxpose.xlu0.b32.cont [12/16] 0.0, 128
    %3791 = vxpose.xlu0.b32.cont [13/16] 0.0, 128
    %3792 = vxpose.xlu0.b32.cont [14/16] 0.0, 128
    %3793 = vxpose.xlu0.b32.cont [15/16] 0.0, 128
    %3794 = vxpose.xlu0.b32.end [16/16] 0.0, 128
    %v3795 = vpop.trf.xlu0
    %v3796 = vpop.trf.xlu0
    %v3797 = vpop.trf.xlu0
    %v3798 = vpop.trf.xlu0
    %v3799 = vpop.trf.xlu0
    %v3800 = vpop.trf.xlu0
    %v3801 = vpop.trf.xlu0
    %v3802 = vpop.trf.xlu0
    %v3803 = vpop.trf.xlu0
    %v3804 = vpop.trf.xlu0
    %v3805 = vpop.trf.xlu0
    %v3806 = vpop.trf.xlu0
    %v3807 = vpop.trf.xlu0
    %v3808 = vpop.trf.xlu0
    %v3809 = vpop.trf.xlu0
    %v3810 = vpop.trf.xlu0
    %3811 = vxpose.xlu0.b32.start [1/16] %v3733, 128
    %3812 = vxpose.xlu0.b32.cont [2/16] 0.0, 128
    %3813 = vxpose.xlu0.b32.cont [3/16] 0.0, 128
    %3814 = vxpose.xlu0.b32.cont [4/16] 0.0, 128
    %3815 = vxpose.xlu0.b32.cont [5/16] 0.0, 128
    %3816 = vxpose.xlu0.b32.cont [6/16] 0.0, 128
    %3817 = vxpose.xlu0.b32.cont [7/16] 0.0, 128
    %3818 = vxpose.xlu0.b32.cont [8/16] 0.0, 128
    %3819 = vxpose.xlu0.b32.cont [9/16] 0.0, 128
    %3820 = vxpose.xlu0.b32.cont [10/16] 0.0, 128
    %3821 = vxpose.xlu0.b32.cont [11/16] 0.0, 128
    %3822 = vxpose.xlu0.b32.cont [12/16] 0.0, 128
    %3823 = vxpose.xlu0.b32.cont [13/16] 0.0, 128
    %3824 = vxpose.xlu0.b32.cont [14/16] 0.0, 128
    %3825 = vxpose.xlu0.b32.cont [15/16] 0.0, 128
    %3826 = vxpose.xlu0.b32.end [16/16] 0.0, 128
    %v3827 = vpop.trf.xlu0
    %v3828 = vpop.trf.xlu0
    %v3829 = vpop.trf.xlu0
    %v3830 = vpop.trf.xlu0
    %v3831 = vpop.trf.xlu0
    %v3832 = vpop.trf.xlu0
    %v3833 = vpop.trf.xlu0
    %v3834 = vpop.trf.xlu0
    %v3835 = vpop.trf.xlu0
    %v3836 = vpop.trf.xlu0
    %v3837 = vpop.trf.xlu0
    %v3838 = vpop.trf.xlu0
    %v3839 = vpop.trf.xlu0
    %v3840 = vpop.trf.xlu0
    %v3841 = vpop.trf.xlu0
    %v3842 = vpop.trf.xlu0
    %3843 = vxpose.xlu0.b32.start [1/16] %v3734, 128
    %3844 = vxpose.xlu0.b32.cont [2/16] 0.0, 128
    %3845 = vxpose.xlu0.b32.cont [3/16] 0.0, 128
    %3846 = vxpose.xlu0.b32.cont [4/16] 0.0, 128
    %3847 = vxpose.xlu0.b32.cont [5/16] 0.0, 128
    %3848 = vxpose.xlu0.b32.cont [6/16] 0.0, 128
    %3849 = vxpose.xlu0.b32.cont [7/16] 0.0, 128
    %3850 = vxpose.xlu0.b32.cont [8/16] 0.0, 128
    %3851 = vxpose.xlu0.b32.cont [9/16] 0.0, 128
    %3852 = vxpose.xlu0.b32.cont [10/16] 0.0, 128
    %3853 = vxpose.xlu0.b32.cont [11/16] 0.0, 128
    %3854 = vxpose.xlu0.b32.cont [12/16] 0.0, 128
    %3855 = vxpose.xlu0.b32.cont [13/16] 0.0, 128
    %3856 = vxpose.xlu0.b32.cont [14/16] 0.0, 128
    %3857 = vxpose.xlu0.b32.cont [15/16] 0.0, 128
    %3858 = vxpose.xlu0.b32.end [16/16] 0.0, 128
    %v3859 = vpop.trf.xlu0
    %v3860 = vpop.trf.xlu0
    %v3861 = vpop.trf.xlu0
    %v3862 = vpop.trf.xlu0
    %v3863 = vpop.trf.xlu0
    %v3864 = vpop.trf.xlu0
    %v3865 = vpop.trf.xlu0
    %v3866 = vpop.trf.xlu0
    %v3867 = vpop.trf.xlu0
    %v3868 = vpop.trf.xlu0
    %v3869 = vpop.trf.xlu0
    %v3870 = vpop.trf.xlu0
    %v3871 = vpop.trf.xlu0
    %v3872 = vpop.trf.xlu0
    %v3873 = vpop.trf.xlu0
    %v3874 = vpop.trf.xlu0
    %v3875 = vpack.c.bf16 %v3763, %v3763
    %v3876 = vpack.c.bf16 %v3764, %v3764
    %v3877 = vpack.c.bf16 %v3795, %v3795
    %v3878 = vpack.c.bf16 %v3796, %v3796
    %v3879 = vpack.c.bf16 %v3827, %v3827
    %v3880 = vpack.c.bf16 %v3828, %v3828
    %v3881 = vpack.c.bf16 %v3859, %v3859
    %v3882 = vpack.c.bf16 %v3860, %v3860
    %3885 = vrot.lane.b32.xlu0 %v3709, 96
    %v3886 = vpop.permute.xlu0 %3885
    %3887 = vrot.lane.b32.xlu0 %v3712, 96
    %v3888 = vpop.permute.xlu0 %3887
    %3891 = vxpose.xlu0.b32.start [1/16] %v3886, 128
    %3892 = vxpose.xlu0.b32.cont [2/16] %v3888, 128
    %3893 = vxpose.xlu0.b32.cont [3/16] 0.0, 128
    %3894 = vxpose.xlu0.b32.cont [4/16] 0.0, 128
    %3895 = vxpose.xlu0.b32.cont [5/16] 0.0, 128
    %3896 = vxpose.xlu0.b32.cont [6/16] 0.0, 128
    %3897 = vxpose.xlu0.b32.cont [7/16] 0.0, 128
    %3898 = vxpose.xlu0.b32.cont [8/16] 0.0, 128
    %3899 = vxpose.xlu0.b32.cont [9/16] 0.0, 128
    %3900 = vxpose.xlu0.b32.cont [10/16] 0.0, 128
    %3901 = vxpose.xlu0.b32.cont [11/16] 0.0, 128
    %3902 = vxpose.xlu0.b32.cont [12/16] 0.0, 128
    %3903 = vxpose.xlu0.b32.cont [13/16] 0.0, 128
    %3904 = vxpose.xlu0.b32.cont [14/16] 0.0, 128
    %3905 = vxpose.xlu0.b32.cont [15/16] 0.0, 128
    %3906 = vxpose.xlu0.b32.end [16/16] 0.0, 128
    %v3907 = vpop.trf.xlu0
    %v3908 = vpop.trf.xlu0
    %v3909 = vpop.trf.xlu0
    %v3910 = vpop.trf.xlu0
    %v3911 = vpop.trf.xlu0
    %v3912 = vpop.trf.xlu0
    %v3913 = vpop.trf.xlu0
    %v3914 = vpop.trf.xlu0
    %v3915 = vpop.trf.xlu0
    %v3916 = vpop.trf.xlu0
    %v3917 = vpop.trf.xlu0
    %v3918 = vpop.trf.xlu0
    %v3919 = vpop.trf.xlu0
    %v3920 = vpop.trf.xlu0
    %v3921 = vpop.trf.xlu0
    %v3922 = vpop.trf.xlu0
    %3923 = vxpose.xlu0.b32.start [1/16] %v3907, 128
    %3924 = vxpose.xlu0.b32.cont [2/16] 0.0, 128
    %3925 = vxpose.xlu0.b32.cont [3/16] 0.0, 128
    %3926 = vxpose.xlu0.b32.cont [4/16] 0.0, 128
    %3927 = vxpose.xlu0.b32.cont [5/16] 0.0, 128
    %3928 = vxpose.xlu0.b32.cont [6/16] 0.0, 128
    %3929 = vxpose.xlu0.b32.cont [7/16] 0.0, 128
    %3930 = vxpose.xlu0.b32.cont [8/16] 0.0, 128
    %3931 = vxpose.xlu0.b32.cont [9/16] 0.0, 128
    %3932 = vxpose.xlu0.b32.cont [10/16] 0.0, 128
    %3933 = vxpose.xlu0.b32.cont [11/16] 0.0, 128
    %3934 = vxpose.xlu0.b32.cont [12/16] 0.0, 128
    %3935 = vxpose.xlu0.b32.cont [13/16] 0.0, 128
    %3936 = vxpose.xlu0.b32.cont [14/16] 0.0, 128
    %3937 = vxpose.xlu0.b32.cont [15/16] 0.0, 128
    %3938 = vxpose.xlu0.b32.end [16/16] 0.0, 128
    %v3939 = vpop.trf.xlu0
    %v3940 = vpop.trf.xlu0
    %v3941 = vpop.trf.xlu0
    %v3942 = vpop.trf.xlu0
    %v3943 = vpop.trf.xlu0
    %v3944 = vpop.trf.xlu0
    %v3945 = vpop.trf.xlu0
    %v3946 = vpop.trf.xlu0
    %v3947 = vpop.trf.xlu0
    %v3948 = vpop.trf.xlu0
    %v3949 = vpop.trf.xlu0
    %v3950 = vpop.trf.xlu0
    %v3951 = vpop.trf.xlu0
    %v3952 = vpop.trf.xlu0
    %v3953 = vpop.trf.xlu0
    %v3954 = vpop.trf.xlu0
    %3955 = vxpose.xlu0.b32.start [1/16] %v3908, 128
    %3956 = vxpose.xlu0.b32.cont [2/16] 0.0, 128
    %3957 = vxpose.xlu0.b32.cont [3/16] 0.0, 128
    %3958 = vxpose.xlu0.b32.cont [4/16] 0.0, 128
    %3959 = vxpose.xlu0.b32.cont [5/16] 0.0, 128
    %3960 = vxpose.xlu0.b32.cont [6/16] 0.0, 128
    %3961 = vxpose.xlu0.b32.cont [7/16] 0.0, 128
    %3962 = vxpose.xlu0.b32.cont [8/16] 0.0, 128
    %3963 = vxpose.xlu0.b32.cont [9/16] 0.0, 128
    %3964 = vxpose.xlu0.b32.cont [10/16] 0.0, 128
    %3965 = vxpose.xlu0.b32.cont [11/16] 0.0, 128
    %3966 = vxpose.xlu0.b32.cont [12/16] 0.0, 128
    %3967 = vxpose.xlu0.b32.cont [13/16] 0.0, 128
    %3968 = vxpose.xlu0.b32.cont [14/16] 0.0, 128
    %3969 = vxpose.xlu0.b32.cont [15/16] 0.0, 128
    %3970 = vxpose.xlu0.b32.end [16/16] 0.0, 128
    %v3971 = vpop.trf.xlu0
    %v3972 = vpop.trf.xlu0
    %v3973 = vpop.trf.xlu0
    %v3974 = vpop.trf.xlu0
    %v3975 = vpop.trf.xlu0
    %v3976 = vpop.trf.xlu0
    %v3977 = vpop.trf.xlu0
    %v3978 = vpop.trf.xlu0
    %v3979 = vpop.trf.xlu0
    %v3980 = vpop.trf.xlu0
    %v3981 = vpop.trf.xlu0
    %v3982 = vpop.trf.xlu0
    %v3983 = vpop.trf.xlu0
    %v3984 = vpop.trf.xlu0
    %v3985 = vpop.trf.xlu0
    %v3986 = vpop.trf.xlu0
    %3987 = vxpose.xlu0.b32.start [1/16] %v3909, 128
    %3988 = vxpose.xlu0.b32.cont [2/16] 0.0, 128
    %3989 = vxpose.xlu0.b32.cont [3/16] 0.0, 128
    %3990 = vxpose.xlu0.b32.cont [4/16] 0.0, 128
    %3991 = vxpose.xlu0.b32.cont [5/16] 0.0, 128
    %3992 = vxpose.xlu0.b32.cont [6/16] 0.0, 128
    %3993 = vxpose.xlu0.b32.cont [7/16] 0.0, 128
    %3994 = vxpose.xlu0.b32.cont [8/16] 0.0, 128
    %3995 = vxpose.xlu0.b32.cont [9/16] 0.0, 128
    %3996 = vxpose.xlu0.b32.cont [10/16] 0.0, 128
    %3997 = vxpose.xlu0.b32.cont [11/16] 0.0, 128
    %3998 = vxpose.xlu0.b32.cont [12/16] 0.0, 128
    %3999 = vxpose.xlu0.b32.cont [13/16] 0.0, 128
    %4000 = vxpose.xlu0.b32.cont [14/16] 0.0, 128
    %4001 = vxpose.xlu0.b32.cont [15/16] 0.0, 128
    %4002 = vxpose.xlu0.b32.end [16/16] 0.0, 128
    %v4003 = vpop.trf.xlu0
    %v4004 = vpop.trf.xlu0
    %v4005 = vpop.trf.xlu0
    %v4006 = vpop.trf.xlu0
    %v4007 = vpop.trf.xlu0
    %v4008 = vpop.trf.xlu0
    %v4009 = vpop.trf.xlu0
    %v4010 = vpop.trf.xlu0
    %v4011 = vpop.trf.xlu0
    %v4012 = vpop.trf.xlu0
    %v4013 = vpop.trf.xlu0
    %v4014 = vpop.trf.xlu0
    %v4015 = vpop.trf.xlu0
    %v4016 = vpop.trf.xlu0
    %v4017 = vpop.trf.xlu0
    %v4018 = vpop.trf.xlu0
    %4019 = vxpose.xlu0.b32.start [1/16] %v3910, 128
    %4020 = vxpose.xlu0.b32.cont [2/16] 0.0, 128
    %4021 = vxpose.xlu0.b32.cont [3/16] 0.0, 128
    %4022 = vxpose.xlu0.b32.cont [4/16] 0.0, 128
    %4023 = vxpose.xlu0.b32.cont [5/16] 0.0, 128
    %4024 = vxpose.xlu0.b32.cont [6/16] 0.0, 128
    %4025 = vxpose.xlu0.b32.cont [7/16] 0.0, 128
    %4026 = vxpose.xlu0.b32.cont [8/16] 0.0, 128
    %4027 = vxpose.xlu0.b32.cont [9/16] 0.0, 128
    %4028 = vxpose.xlu0.b32.cont [10/16] 0.0, 128
    %4029 = vxpose.xlu0.b32.cont [11/16] 0.0, 128
    %4030 = vxpose.xlu0.b32.cont [12/16] 0.0, 128
    %4031 = vxpose.xlu0.b32.cont [13/16] 0.0, 128
    %4032 = vxpose.xlu0.b32.cont [14/16] 0.0, 128
    %4033 = vxpose.xlu0.b32.cont [15/16] 0.0, 128
    %4034 = vxpose.xlu0.b32.end [16/16] 0.0, 128
    %v4035 = vpop.trf.xlu0
    %v4036 = vpop.trf.xlu0
    %v4037 = vpop.trf.xlu0
    %v4038 = vpop.trf.xlu0
    %v4039 = vpop.trf.xlu0
    %v4040 = vpop.trf.xlu0
    %v4041 = vpop.trf.xlu0
    %v4042 = vpop.trf.xlu0
    %v4043 = vpop.trf.xlu0
    %v4044 = vpop.trf.xlu0
    %v4045 = vpop.trf.xlu0
    %v4046 = vpop.trf.xlu0
    %v4047 = vpop.trf.xlu0
    %v4048 = vpop.trf.xlu0
    %v4049 = vpop.trf.xlu0
    %v4050 = vpop.trf.xlu0
    %v4051 = vpack.c.bf16 %v3939, %v3939
    %v4052 = vpack.c.bf16 %v3940, %v3940
    %v4053 = vpack.c.bf16 %v3971, %v3971
    %v4054 = vpack.c.bf16 %v3972, %v3972
    %v4055 = vpack.c.bf16 %v4003, %v4003
    %v4056 = vpack.c.bf16 %v4004, %v4004
    %v4057 = vpack.c.bf16 %v4035, %v4035
    %v4058 = vpack.c.bf16 %v4036, %v4036
    %4059 = vrot.lane.b32.xlu0 %v3709, 64
    %v4060 = vpop.permute.xlu0 %4059
    %4061 = vrot.lane.b32.xlu0 %v3712, 64
    %v4062 = vpop.permute.xlu0 %4061
    %4065 = vxpose.xlu0.b32.start [1/16] %v4060, 128
    %4066 = vxpose.xlu0.b32.cont [2/16] %v4062, 128
    %4067 = vxpose.xlu0.b32.cont [3/16] 0.0, 128
    %4068 = vxpose.xlu0.b32.cont [4/16] 0.0, 128
    %4069 = vxpose.xlu0.b32.cont [5/16] 0.0, 128
    %4070 = vxpose.xlu0.b32.cont [6/16] 0.0, 128
    %4071 = vxpose.xlu0.b32.cont [7/16] 0.0, 128
    %4072 = vxpose.xlu0.b32.cont [8/16] 0.0, 128
    %4073 = vxpose.xlu0.b32.cont [9/16] 0.0, 128
    %4074 = vxpose.xlu0.b32.cont [10/16] 0.0, 128
    %4075 = vxpose.xlu0.b32.cont [11/16] 0.0, 128
    %4076 = vxpose.xlu0.b32.cont [12/16] 0.0, 128
    %4077 = vxpose.xlu0.b32.cont [13/16] 0.0, 128
    %4078 = vxpose.xlu0.b32.cont [14/16] 0.0, 128
    %4079 = vxpose.xlu0.b32.cont [15/16] 0.0, 128
    %4080 = vxpose.xlu0.b32.end [16/16] 0.0, 128
    %v4081 = vpop.trf.xlu0
    %v4082 = vpop.trf.xlu0
    %v4083 = vpop.trf.xlu0
    %v4084 = vpop.trf.xlu0
    %v4085 = vpop.trf.xlu0
    %v4086 = vpop.trf.xlu0
    %v4087 = vpop.trf.xlu0
    %v4088 = vpop.trf.xlu0
    %v4089 = vpop.trf.xlu0
    %v4090 = vpop.trf.xlu0
    %v4091 = vpop.trf.xlu0
    %v4092 = vpop.trf.xlu0
    %v4093 = vpop.trf.xlu0
    %v4094 = vpop.trf.xlu0
    %v4095 = vpop.trf.xlu0
    %v4096 = vpop.trf.xlu0
    %4097 = vxpose.xlu0.b32.start [1/16] %v4081, 128
    %4098 = vxpose.xlu0.b32.cont [2/16] 0.0, 128
    %4099 = vxpose.xlu0.b32.cont [3/16] 0.0, 128
    %4100 = vxpose.xlu0.b32.cont [4/16] 0.0, 128
    %4101 = vxpose.xlu0.b32.cont [5/16] 0.0, 128
    %4102 = vxpose.xlu0.b32.cont [6/16] 0.0, 128
    %4103 = vxpose.xlu0.b32.cont [7/16] 0.0, 128
    %4104 = vxpose.xlu0.b32.cont [8/16] 0.0, 128
    %4105 = vxpose.xlu0.b32.cont [9/16] 0.0, 128
    %4106 = vxpose.xlu0.b32.cont [10/16] 0.0, 128
    %4107 = vxpose.xlu0.b32.cont [11/16] 0.0, 128
    %4108 = vxpose.xlu0.b32.cont [12/16] 0.0, 128
    %4109 = vxpose.xlu0.b32.cont [13/16] 0.0, 128
    %4110 = vxpose.xlu0.b32.cont [14/16] 0.0, 128
    %4111 = vxpose.xlu0.b32.cont [15/16] 0.0, 128
    %4112 = vxpose.xlu0.b32.end [16/16] 0.0, 128
    %v4113 = vpop.trf.xlu0
    %v4114 = vpop.trf.xlu0
    %v4115 = vpop.trf.xlu0
    %v4116 = vpop.trf.xlu0
    %v4117 = vpop.trf.xlu0
    %v4118 = vpop.trf.xlu0
    %v4119 = vpop.trf.xlu0
    %v4120 = vpop.trf.xlu0
    %v4121 = vpop.trf.xlu0
    %v4122 = vpop.trf.xlu0
    %v4123 = vpop.trf.xlu0
    %v4124 = vpop.trf.xlu0
    %v4125 = vpop.trf.xlu0
    %v4126 = vpop.trf.xlu0
    %v4127 = vpop.trf.xlu0
    %v4128 = vpop.trf.xlu0
    %4129 = vxpose.xlu0.b32.start [1/16] %v4082, 128
    %4130 = vxpose.xlu0.b32.cont [2/16] 0.0, 128
    %4131 = vxpose.xlu0.b32.cont [3/16] 0.0, 128
    %4132 = vxpose.xlu0.b32.cont [4/16] 0.0, 128
    %4133 = vxpose.xlu0.b32.cont [5/16] 0.0, 128
    %4134 = vxpose.xlu0.b32.cont [6/16] 0.0, 128
    %4135 = vxpose.xlu0.b32.cont [7/16] 0.0, 128
    %4136 = vxpose.xlu0.b32.cont [8/16] 0.0, 128
    %4137 = vxpose.xlu0.b32.cont [9/16] 0.0, 128
    %4138 = vxpose.xlu0.b32.cont [10/16] 0.0, 128
    %4139 = vxpose.xlu0.b32.cont [11/16] 0.0, 128
    %4140 = vxpose.xlu0.b32.cont [12/16] 0.0, 128
    %4141 = vxpose.xlu0.b32.cont [13/16] 0.0, 128
    %4142 = vxpose.xlu0.b32.cont [14/16] 0.0, 128
    %4143 = vxpose.xlu0.b32.cont [15/16] 0.0, 128
    %4144 = vxpose.xlu0.b32.end [16/16] 0.0, 128
    %v4145 = vpop.trf.xlu0
    %v4146 = vpop.trf.xlu0
    %v4147 = vpop.trf.xlu0
    %v4148 = vpop.trf.xlu0
    %v4149 = vpop.trf.xlu0
    %v4150 = vpop.trf.xlu0
    %v4151 = vpop.trf.xlu0
    %v4152 = vpop.trf.xlu0
    %v4153 = vpop.trf.xlu0
    %v4154 = vpop.trf.xlu0
    %v4155 = vpop.trf.xlu0
    %v4156 = vpop.trf.xlu0
    %v4157 = vpop.trf.xlu0
    %v4158 = vpop.trf.xlu0
    %v4159 = vpop.trf.xlu0
    %v4160 = vpop.trf.xlu0
    %4161 = vxpose.xlu0.b32.start [1/16] %v4083, 128
    %4162 = vxpose.xlu0.b32.cont [2/16] 0.0, 128
    %4163 = vxpose.xlu0.b32.cont [3/16] 0.0, 128
    %4164 = vxpose.xlu0.b32.cont [4/16] 0.0, 128
    %4165 = vxpose.xlu0.b32.cont [5/16] 0.0, 128
    %4166 = vxpose.xlu0.b32.cont [6/16] 0.0, 128
    %4167 = vxpose.xlu0.b32.cont [7/16] 0.0, 128
    %4168 = vxpose.xlu0.b32.cont [8/16] 0.0, 128
    %4169 = vxpose.xlu0.b32.cont [9/16] 0.0, 128
    %4170 = vxpose.xlu0.b32.cont [10/16] 0.0, 128
    %4171 = vxpose.xlu0.b32.cont [11/16] 0.0, 128
    %4172 = vxpose.xlu0.b32.cont [12/16] 0.0, 128
    %4173 = vxpose.xlu0.b32.cont [13/16] 0.0, 128
    %4174 = vxpose.xlu0.b32.cont [14/16] 0.0, 128
    %4175 = vxpose.xlu0.b32.cont [15/16] 0.0, 128
    %4176 = vxpose.xlu0.b32.end [16/16] 0.0, 128
    %v4177 = vpop.trf.xlu0
    %v4178 = vpop.trf.xlu0
    %v4179 = vpop.trf.xlu0
    %v4180 = vpop.trf.xlu0
    %v4181 = vpop.trf.xlu0
    %v4182 = vpop.trf.xlu0
    %v4183 = vpop.trf.xlu0
    %v4184 = vpop.trf.xlu0
    %v4185 = vpop.trf.xlu0
    %v4186 = vpop.trf.xlu0
    %v4187 = vpop.trf.xlu0
    %v4188 = vpop.trf.xlu0
    %v4189 = vpop.trf.xlu0
    %v4190 = vpop.trf.xlu0
    %v4191 = vpop.trf.xlu0
    %v4192 = vpop.trf.xlu0
    %4193 = vxpose.xlu0.b32.start [1/16] %v4084, 128
    %4194 = vxpose.xlu0.b32.cont [2/16] 0.0, 128
    %4195 = vxpose.xlu0.b32.cont [3/16] 0.0, 128
    %4196 = vxpose.xlu0.b32.cont [4/16] 0.0, 128
    %4197 = vxpose.xlu0.b32.cont [5/16] 0.0, 128
    %4198 = vxpose.xlu0.b32.cont [6/16] 0.0, 128
    %4199 = vxpose.xlu0.b32.cont [7/16] 0.0, 128
    %4200 = vxpose.xlu0.b32.cont [8/16] 0.0, 128
    %4201 = vxpose.xlu0.b32.cont [9/16] 0.0, 128
    %4202 = vxpose.xlu0.b32.cont [10/16] 0.0, 128
    %4203 = vxpose.xlu0.b32.cont [11/16] 0.0, 128
    %4204 = vxpose.xlu0.b32.cont [12/16] 0.0, 128
    %4205 = vxpose.xlu0.b32.cont [13/16] 0.0, 128
    %4206 = vxpose.xlu0.b32.cont [14/16] 0.0, 128
    %4207 = vxpose.xlu0.b32.cont [15/16] 0.0, 128
    %4208 = vxpose.xlu0.b32.end [16/16] 0.0, 128
    %v4209 = vpop.trf.xlu0
    %v4210 = vpop.trf.xlu0
    %v4211 = vpop.trf.xlu0
    %v4212 = vpop.trf.xlu0
    %v4213 = vpop.trf.xlu0
    %v4214 = vpop.trf.xlu0
    %v4215 = vpop.trf.xlu0
    %v4216 = vpop.trf.xlu0
    %v4217 = vpop.trf.xlu0
    %v4218 = vpop.trf.xlu0
    %v4219 = vpop.trf.xlu0
    %v4220 = vpop.trf.xlu0
    %v4221 = vpop.trf.xlu0
    %v4222 = vpop.trf.xlu0
    %v4223 = vpop.trf.xlu0
    %v4224 = vpop.trf.xlu0
    %v4225 = vpack.c.bf16 %v4113, %v4113
    %v4226 = vpack.c.bf16 %v4114, %v4114
    %v4227 = vpack.c.bf16 %v4145, %v4145
    %v4228 = vpack.c.bf16 %v4146, %v4146
    %v4229 = vpack.c.bf16 %v4177, %v4177
    %v4230 = vpack.c.bf16 %v4178, %v4178
    %v4231 = vpack.c.bf16 %v4209, %v4209
    %v4232 = vpack.c.bf16 %v4210, %v4210
    %v4234 = vsel %vm625, %v3875, 0
    %v4237 = vsel %vm625, %v4051, 0
    %4239 = vmatprep.subr.bf16.mxu0 0
    %4240 = vmatpush1.bf16.xpose.msra.mxu0 %v4237
    %4241 = vmatprep.subr.bf16.mxu0 0
    %4242 = vmatpush1.bf16.xpose.msra.mxu0 0
    %4243 = vmatprep.subr.bf16.mxu0 0
    %4244 = vmatpush1.bf16.xpose.msra.mxu0 0
    %4245 = vmatprep.subr.bf16.mxu0 0
    %4246 = vmatpush1.bf16.xpose.msra.mxu0 0
    %4247 = vmatprep.subr.bf16.mxu0 0
    %4248 = vmatpush1.bf16.xpose.msra.mxu0 0
    %4249 = vmatprep.subr.bf16.mxu0 0
    %4250 = vmatpush1.bf16.xpose.msra.mxu0 0
    %4251 = vmatprep.subr.bf16.mxu0 0
    %4252 = vmatpush1.bf16.xpose.msra.mxu0 0
    %4253 = vmatprep.subr.bf16.mxu0 0
    %4254 = vmatpush1.bf16.xpose.msra.mxu0 0
    %4255 = vmatprep.subr.bf16.mxu0 0
    %4256 = vmatpush1.bf16.xpose.msra.mxu0 0
    %4257 = vmatprep.subr.bf16.mxu0 0
    %4258 = vmatpush1.bf16.xpose.msra.mxu0 0
    %4259 = vmatprep.subr.bf16.mxu0 0
    %4260 = vmatpush1.bf16.xpose.msra.mxu0 0
    %4261 = vmatprep.subr.bf16.mxu0 0
    %4262 = vmatpush1.bf16.xpose.msra.mxu0 0
    %4263 = vmatprep.subr.bf16.mxu0 0
    %4264 = vmatpush1.bf16.xpose.msra.mxu0 0
    %4265 = vmatprep.subr.bf16.mxu0 0
    %4266 = vmatpush1.bf16.xpose.msra.mxu0 0
    %4267 = vmatprep.subr.bf16.mxu0 0
    %4268 = vmatpush1.bf16.xpose.msra.mxu0 0
    %4269 = vmatprep.subr.bf16.mxu0 0
    %4270 = vmatpush1.bf16.xpose.msra.mxu0 0
    %4271 = vmatprep.mubr.bf16.mxu0 0
    %4272 = vmatmul.mubr.bf16.gmra.mrb[0].mxu0 %v4234
    %v4273 = vpop.f32.mrb[0].mxu0
    %v4274 = vadd.f32 %v36, %v4273
    %v4275 = vpop.f32.mrb[0].mxu0
    %v4276 = vpop.f32.mrb[0].mxu0
    %v4277 = vpop.f32.mrb[0].mxu0
    %4278 = vdwg.mxu0
    %v4280 = vsel %vm625, %v3876, 0
    %v4283 = vsel %vm625, %v4052, 0
    %4285 = vmatprep.subr.bf16.mxu0 0
    %4286 = vmatpush1.bf16.xpose.msra.mxu0 %v4283
    %4287 = vmatprep.subr.bf16.mxu0 0
    %4288 = vmatpush1.bf16.xpose.msra.mxu0 0
    %4289 = vmatprep.subr.bf16.mxu0 0
    %4290 = vmatpush1.bf16.xpose.msra.mxu0 0
    %4291 = vmatprep.subr.bf16.mxu0 0
    %4292 = vmatpush1.bf16.xpose.msra.mxu0 0
    %4293 = vmatprep.subr.bf16.mxu0 0
    %4294 = vmatpush1.bf16.xpose.msra.mxu0 0
    %4295 = vmatprep.subr.bf16.mxu0 0
    %4296 = vmatpush1.bf16.xpose.msra.mxu0 0
    %4297 = vmatprep.subr.bf16.mxu0 0
    %4298 = vmatpush1.bf16.xpose.msra.mxu0 0
    %4299 = vmatprep.subr.bf16.mxu0 0
    %4300 = vmatpush1.bf16.xpose.msra.mxu0 0
    %4301 = vmatprep.subr.bf16.mxu0 0
    %4302 = vmatpush1.bf16.xpose.msra.mxu0 0
    %4303 = vmatprep.subr.bf16.mxu0 0
    %4304 = vmatpush1.bf16.xpose.msra.mxu0 0
    %4305 = vmatprep.subr.bf16.mxu0 0
    %4306 = vmatpush1.bf16.xpose.msra.mxu0 0
    %4307 = vmatprep.subr.bf16.mxu0 0
    %4308 = vmatpush1.bf16.xpose.msra.mxu0 0
    %4309 = vmatprep.subr.bf16.mxu0 0
    %4310 = vmatpush1.bf16.xpose.msra.mxu0 0
    %4311 = vmatprep.subr.bf16.mxu0 0
    %4312 = vmatpush1.bf16.xpose.msra.mxu0 0
    %4313 = vmatprep.subr.bf16.mxu0 0
    %4314 = vmatpush1.bf16.xpose.msra.mxu0 0
    %4315 = vmatprep.subr.bf16.mxu0 0
    %4316 = vmatpush1.bf16.xpose.msra.mxu0 0
    %4317 = vmatprep.mubr.bf16.mxu0 0
    %4318 = vmatmul.mubr.bf16.gmra.mrb[0].mxu0 %v4280
    %v4319 = vpop.f32.mrb[0].mxu0
    %v4320 = vadd.f32 %v37, %v4319
    %v4321 = vpop.f32.mrb[0].mxu0
    %v4322 = vpop.f32.mrb[0].mxu0
    %v4323 = vpop.f32.mrb[0].mxu0
    %4324 = vdwg.mxu0
    %v4326 = vsel %vm625, %v3877, 0
    %v4329 = vsel %vm625, %v4053, 0
    %4331 = vmatprep.subr.bf16.mxu0 0
    %4332 = vmatpush1.bf16.xpose.msra.mxu0 %v4329
    %4333 = vmatprep.subr.bf16.mxu0 0
    %4334 = vmatpush1.bf16.xpose.msra.mxu0 0
    %4335 = vmatprep.subr.bf16.mxu0 0
    %4336 = vmatpush1.bf16.xpose.msra.mxu0 0
    %4337 = vmatprep.subr.bf16.mxu0 0
    %4338 = vmatpush1.bf16.xpose.msra.mxu0 0
    %4339 = vmatprep.subr.bf16.mxu0 0
    %4340 = vmatpush1.bf16.xpose.msra.mxu0 0
    %4341 = vmatprep.subr.bf16.mxu0 0
    %4342 = vmatpush1.bf16.xpose.msra.mxu0 0
    %4343 = vmatprep.subr.bf16.mxu0 0
    %4344 = vmatpush1.bf16.xpose.msra.mxu0 0
    %4345 = vmatprep.subr.bf16.mxu0 0
    %4346 = vmatpush1.bf16.xpose.msra.mxu0 0
    %4347 = vmatprep.subr.bf16.mxu0 0
    %4348 = vmatpush1.bf16.xpose.msra.mxu0 0
    %4349 = vmatprep.subr.bf16.mxu0 0
    %4350 = vmatpush1.bf16.xpose.msra.mxu0 0
    %4351 = vmatprep.subr.bf16.mxu0 0
    %4352 = vmatpush1.bf16.xpose.msra.mxu0 0
    %4353 = vmatprep.subr.bf16.mxu0 0
    %4354 = vmatpush1.bf16.xpose.msra.mxu0 0
    %4355 = vmatprep.subr.bf16.mxu0 0
    %4356 = vmatpush1.bf16.xpose.msra.mxu0 0
    %4357 = vmatprep.subr.bf16.mxu0 0
    %4358 = vmatpush1.bf16.xpose.msra.mxu0 0
    %4359 = vmatprep.subr.bf16.mxu0 0
    %4360 = vmatpush1.bf16.xpose.msra.mxu0 0
    %4361 = vmatprep.subr.bf16.mxu0 0
    %4362 = vmatpush1.bf16.xpose.msra.mxu0 0
    %4363 = vmatprep.mubr.bf16.mxu0 0
    %4364 = vmatmul.mubr.bf16.gmra.mrb[0].mxu0 %v4326
    %v4365 = vpop.f32.mrb[0].mxu0
    %v4366 = vadd.f32 %v36, %v4365
    %v4367 = vpop.f32.mrb[0].mxu0
    %v4368 = vpop.f32.mrb[0].mxu0
    %v4369 = vpop.f32.mrb[0].mxu0
    %4370 = vdwg.mxu0
    %v4372 = vsel %vm625, %v3878, 0
    %v4375 = vsel %vm625, %v4054, 0
    %4377 = vmatprep.subr.bf16.mxu0 0
    %4378 = vmatpush1.bf16.xpose.msra.mxu0 %v4375
    %4379 = vmatprep.subr.bf16.mxu0 0
    %4380 = vmatpush1.bf16.xpose.msra.mxu0 0
    %4381 = vmatprep.subr.bf16.mxu0 0
    %4382 = vmatpush1.bf16.xpose.msra.mxu0 0
    %4383 = vmatprep.subr.bf16.mxu0 0
    %4384 = vmatpush1.bf16.xpose.msra.mxu0 0
    %4385 = vmatprep.subr.bf16.mxu0 0
    %4386 = vmatpush1.bf16.xpose.msra.mxu0 0
    %4387 = vmatprep.subr.bf16.mxu0 0
    %4388 = vmatpush1.bf16.xpose.msra.mxu0 0
    %4389 = vmatprep.subr.bf16.mxu0 0
    %4390 = vmatpush1.bf16.xpose.msra.mxu0 0
    %4391 = vmatprep.subr.bf16.mxu0 0
    %4392 = vmatpush1.bf16.xpose.msra.mxu0 0
    %4393 = vmatprep.subr.bf16.mxu0 0
    %4394 = vmatpush1.bf16.xpose.msra.mxu0 0
    %4395 = vmatprep.subr.bf16.mxu0 0
    %4396 = vmatpush1.bf16.xpose.msra.mxu0 0
    %4397 = vmatprep.subr.bf16.mxu0 0
    %4398 = vmatpush1.bf16.xpose.msra.mxu0 0
    %4399 = vmatprep.subr.bf16.mxu0 0
    %4400 = vmatpush1.bf16.xpose.msra.mxu0 0
    %4401 = vmatprep.subr.bf16.mxu0 0
    %4402 = vmatpush1.bf16.xpose.msra.mxu0 0
    %4403 = vmatprep.subr.bf16.mxu0 0
    %4404 = vmatpush1.bf16.xpose.msra.mxu0 0
    %4405 = vmatprep.subr.bf16.mxu0 0
    %4406 = vmatpush1.bf16.xpose.msra.mxu0 0
    %4407 = vmatprep.subr.bf16.mxu0 0
    %4408 = vmatpush1.bf16.xpose.msra.mxu0 0
    %4409 = vmatprep.mubr.bf16.mxu0 0
    %4410 = vmatmul.mubr.bf16.gmra.mrb[0].mxu0 %v4372
    %v4411 = vpop.f32.mrb[0].mxu0
    %v4412 = vadd.f32 %v37, %v4411
    %v4413 = vpop.f32.mrb[0].mxu0
    %v4414 = vpop.f32.mrb[0].mxu0
    %v4415 = vpop.f32.mrb[0].mxu0
    %4416 = vdwg.mxu0
    %v4418 = vsel %vm625, %v3879, 0
    %v4421 = vsel %vm625, %v4055, 0
    %4423 = vmatprep.subr.bf16.mxu0 0
    %4424 = vmatpush1.bf16.xpose.msra.mxu0 %v4421
    %4425 = vmatprep.subr.bf16.mxu0 0
    %4426 = vmatpush1.bf16.xpose.msra.mxu0 0
    %4427 = vmatprep.subr.bf16.mxu0 0
    %4428 = vmatpush1.bf16.xpose.msra.mxu0 0
    %4429 = vmatprep.subr.bf16.mxu0 0
    %4430 = vmatpush1.bf16.xpose.msra.mxu0 0
    %4431 = vmatprep.subr.bf16.mxu0 0
    %4432 = vmatpush1.bf16.xpose.msra.mxu0 0
    %4433 = vmatprep.subr.bf16.mxu0 0
    %4434 = vmatpush1.bf16.xpose.msra.mxu0 0
    %4435 = vmatprep.subr.bf16.mxu0 0
    %4436 = vmatpush1.bf16.xpose.msra.mxu0 0
    %4437 = vmatprep.subr.bf16.mxu0 0
    %4438 = vmatpush1.bf16.xpose.msra.mxu0 0
    %4439 = vmatprep.subr.bf16.mxu0 0
    %4440 = vmatpush1.bf16.xpose.msra.mxu0 0
    %4441 = vmatprep.subr.bf16.mxu0 0
    %4442 = vmatpush1.bf16.xpose.msra.mxu0 0
    %4443 = vmatprep.subr.bf16.mxu0 0
    %4444 = vmatpush1.bf16.xpose.msra.mxu0 0
    %4445 = vmatprep.subr.bf16.mxu0 0
    %4446 = vmatpush1.bf16.xpose.msra.mxu0 0
    %4447 = vmatprep.subr.bf16.mxu0 0
    %4448 = vmatpush1.bf16.xpose.msra.mxu0 0
    %4449 = vmatprep.subr.bf16.mxu0 0
    %4450 = vmatpush1.bf16.xpose.msra.mxu0 0
    %4451 = vmatprep.subr.bf16.mxu0 0
    %4452 = vmatpush1.bf16.xpose.msra.mxu0 0
    %4453 = vmatprep.subr.bf16.mxu0 0
    %4454 = vmatpush1.bf16.xpose.msra.mxu0 0
    %4455 = vmatprep.mubr.bf16.mxu0 0
    %4456 = vmatmul.mubr.bf16.gmra.mrb[0].mxu0 %v4418
    %v4457 = vpop.f32.mrb[0].mxu0
    %v4458 = vadd.f32 %v36, %v4457
    %v4459 = vpop.f32.mrb[0].mxu0
    %v4460 = vpop.f32.mrb[0].mxu0
    %v4461 = vpop.f32.mrb[0].mxu0
    %4462 = vdwg.mxu0
    %v4464 = vsel %vm625, %v3880, 0
    %v4467 = vsel %vm625, %v4056, 0
    %4469 = vmatprep.subr.bf16.mxu0 0
    %4470 = vmatpush1.bf16.xpose.msra.mxu0 %v4467
    %4471 = vmatprep.subr.bf16.mxu0 0
    %4472 = vmatpush1.bf16.xpose.msra.mxu0 0
    %4473 = vmatprep.subr.bf16.mxu0 0
    %4474 = vmatpush1.bf16.xpose.msra.mxu0 0
    %4475 = vmatprep.subr.bf16.mxu0 0
    %4476 = vmatpush1.bf16.xpose.msra.mxu0 0
    %4477 = vmatprep.subr.bf16.mxu0 0
    %4478 = vmatpush1.bf16.xpose.msra.mxu0 0
    %4479 = vmatprep.subr.bf16.mxu0 0
    %4480 = vmatpush1.bf16.xpose.msra.mxu0 0
    %4481 = vmatprep.subr.bf16.mxu0 0
    %4482 = vmatpush1.bf16.xpose.msra.mxu0 0
    %4483 = vmatprep.subr.bf16.mxu0 0
    %4484 = vmatpush1.bf16.xpose.msra.mxu0 0
    %4485 = vmatprep.subr.bf16.mxu0 0
    %4486 = vmatpush1.bf16.xpose.msra.mxu0 0
    %4487 = vmatprep.subr.bf16.mxu0 0
    %4488 = vmatpush1.bf16.xpose.msra.mxu0 0
    %4489 = vmatprep.subr.bf16.mxu0 0
    %4490 = vmatpush1.bf16.xpose.msra.mxu0 0
    %4491 = vmatprep.subr.bf16.mxu0 0
    %4492 = vmatpush1.bf16.xpose.msra.mxu0 0
    %4493 = vmatprep.subr.bf16.mxu0 0
    %4494 = vmatpush1.bf16.xpose.msra.mxu0 0
    %4495 = vmatprep.subr.bf16.mxu0 0
    %4496 = vmatpush1.bf16.xpose.msra.mxu0 0
    %4497 = vmatprep.subr.bf16.mxu0 0
    %4498 = vmatpush1.bf16.xpose.msra.mxu0 0
    %4499 = vmatprep.subr.bf16.mxu0 0
    %4500 = vmatpush1.bf16.xpose.msra.mxu0 0
    %4501 = vmatprep.mubr.bf16.mxu0 0
    %4502 = vmatmul.mubr.bf16.gmra.mrb[0].mxu0 %v4464
    %v4503 = vpop.f32.mrb[0].mxu0
    %v4504 = vadd.f32 %v37, %v4503
    %v4505 = vpop.f32.mrb[0].mxu0
    %v4506 = vpop.f32.mrb[0].mxu0
    %v4507 = vpop.f32.mrb[0].mxu0
    %4508 = vdwg.mxu0
    %v4510 = vsel %vm625, %v3881, 0
    %v4513 = vsel %vm625, %v4057, 0
    %4515 = vmatprep.subr.bf16.mxu0 0
    %4516 = vmatpush1.bf16.xpose.msra.mxu0 %v4513
    %4517 = vmatprep.subr.bf16.mxu0 0
    %4518 = vmatpush1.bf16.xpose.msra.mxu0 0
    %4519 = vmatprep.subr.bf16.mxu0 0
    %4520 = vmatpush1.bf16.xpose.msra.mxu0 0
    %4521 = vmatprep.subr.bf16.mxu0 0
    %4522 = vmatpush1.bf16.xpose.msra.mxu0 0
    %4523 = vmatprep.subr.bf16.mxu0 0
    %4524 = vmatpush1.bf16.xpose.msra.mxu0 0
    %4525 = vmatprep.subr.bf16.mxu0 0
    %4526 = vmatpush1.bf16.xpose.msra.mxu0 0
    %4527 = vmatprep.subr.bf16.mxu0 0
    %4528 = vmatpush1.bf16.xpose.msra.mxu0 0
    %4529 = vmatprep.subr.bf16.mxu0 0
    %4530 = vmatpush1.bf16.xpose.msra.mxu0 0
    %4531 = vmatprep.subr.bf16.mxu0 0
    %4532 = vmatpush1.bf16.xpose.msra.mxu0 0
    %4533 = vmatprep.subr.bf16.mxu0 0
    %4534 = vmatpush1.bf16.xpose.msra.mxu0 0
    %4535 = vmatprep.subr.bf16.mxu0 0
    %4536 = vmatpush1.bf16.xpose.msra.mxu0 0
    %4537 = vmatprep.subr.bf16.mxu0 0
    %4538 = vmatpush1.bf16.xpose.msra.mxu0 0
    %4539 = vmatprep.subr.bf16.mxu0 0
    %4540 = vmatpush1.bf16.xpose.msra.mxu0 0
    %4541 = vmatprep.subr.bf16.mxu0 0
    %4542 = vmatpush1.bf16.xpose.msra.mxu0 0
    %4543 = vmatprep.subr.bf16.mxu0 0
    %4544 = vmatpush1.bf16.xpose.msra.mxu0 0
    %4545 = vmatprep.subr.bf16.mxu0 0
    %4546 = vmatpush1.bf16.xpose.msra.mxu0 0
    %4547 = vmatprep.mubr.bf16.mxu0 0
    %4548 = vmatmul.mubr.bf16.gmra.mrb[0].mxu0 %v4510
    %v4549 = vpop.f32.mrb[0].mxu0
    %v4550 = vadd.f32 %v36, %v4549
    %v4551 = vpop.f32.mrb[0].mxu0
    %v4552 = vpop.f32.mrb[0].mxu0
    %v4553 = vpop.f32.mrb[0].mxu0
    %4554 = vdwg.mxu0
    %v4556 = vsel %vm625, %v3882, 0
    %v4559 = vsel %vm625, %v4058, 0
    %4561 = vmatprep.subr.bf16.mxu0 0
    %4562 = vmatpush1.bf16.xpose.msra.mxu0 %v4559
    %4563 = vmatprep.subr.bf16.mxu0 0
    %4564 = vmatpush1.bf16.xpose.msra.mxu0 0
    %4565 = vmatprep.subr.bf16.mxu0 0
    %4566 = vmatpush1.bf16.xpose.msra.mxu0 0
    %4567 = vmatprep.subr.bf16.mxu0 0
    %4568 = vmatpush1.bf16.xpose.msra.mxu0 0
    %4569 = vmatprep.subr.bf16.mxu0 0
    %4570 = vmatpush1.bf16.xpose.msra.mxu0 0
    %4571 = vmatprep.subr.bf16.mxu0 0
    %4572 = vmatpush1.bf16.xpose.msra.mxu0 0
    %4573 = vmatprep.subr.bf16.mxu0 0
    %4574 = vmatpush1.bf16.xpose.msra.mxu0 0
    %4575 = vmatprep.subr.bf16.mxu0 0
    %4576 = vmatpush1.bf16.xpose.msra.mxu0 0
    %4577 = vmatprep.subr.bf16.mxu0 0
    %4578 = vmatpush1.bf16.xpose.msra.mxu0 0
    %4579 = vmatprep.subr.bf16.mxu0 0
    %4580 = vmatpush1.bf16.xpose.msra.mxu0 0
    %4581 = vmatprep.subr.bf16.mxu0 0
    %4582 = vmatpush1.bf16.xpose.msra.mxu0 0
    %4583 = vmatprep.subr.bf16.mxu0 0
    %4584 = vmatpush1.bf16.xpose.msra.mxu0 0
    %4585 = vmatprep.subr.bf16.mxu0 0
    %4586 = vmatpush1.bf16.xpose.msra.mxu0 0
    %4587 = vmatprep.subr.bf16.mxu0 0
    %4588 = vmatpush1.bf16.xpose.msra.mxu0 0
    %4589 = vmatprep.subr.bf16.mxu0 0
    %4590 = vmatpush1.bf16.xpose.msra.mxu0 0
    %4591 = vmatprep.subr.bf16.mxu0 0
    %4592 = vmatpush1.bf16.xpose.msra.mxu0 0
    %4593 = vmatprep.mubr.bf16.mxu0 0
    %4594 = vmatmul.mubr.bf16.gmra.mrb[0].mxu0 %v4556
    %v4595 = vpop.f32.mrb[0].mxu0
    %v4596 = vadd.f32 %v37, %v4595
    %v4597 = vpop.f32.mrb[0].mxu0
    %v4598 = vpop.f32.mrb[0].mxu0
    %v4599 = vpop.f32.mrb[0].mxu0
    %4600 = vdwg.mxu0
    %v4601 = vsel %vm625, %v4274, -inf
    %4602 = vmax.xlane.f32.xlu0 %v4601
    %v4603 = vpop.xlane.xlu0 %4602
    %v4604 = vsel %vm625, %v4320, -inf
    %4605 = vmax.xlane.f32.xlu0 %v4604
    %v4606 = vpop.xlane.xlu0 %4605
    %v4607 = vsel %vm625, %v4366, -inf
    %4608 = vmax.xlane.f32.xlu0 %v4607
    %v4609 = vpop.xlane.xlu0 %4608
    %v4610 = vsel %vm625, %v4412, -inf
    %4611 = vmax.xlane.f32.xlu0 %v4610
    %v4612 = vpop.xlane.xlu0 %4611
    %v4613 = vsel %vm625, %v4458, -inf
    %4614 = vmax.xlane.f32.xlu0 %v4613
    %v4615 = vpop.xlane.xlu0 %4614
    %v4616 = vsel %vm625, %v4504, -inf
    %4617 = vmax.xlane.f32.xlu0 %v4616
    %v4618 = vpop.xlane.xlu0 %4617
    %v4619 = vsel %vm625, %v4550, -inf
    %4620 = vmax.xlane.f32.xlu0 %v4619
    %v4621 = vpop.xlane.xlu0 %4620
    %v4622 = vsel %vm625, %v4596, -inf
    %4623 = vmax.xlane.f32.xlu0 %v4622
    %v4624 = vpop.xlane.xlu0 %4623
    %v4625 = vsub.f32 %v4274, %v4603
    %v4626 = vsub.f32 %v4320, %v4606
    %v4627 = vsub.f32 %v4366, %v4609
    %v4628 = vsub.f32 %v4412, %v4612
    %v4629 = vsub.f32 %v4458, %v4615
    %v4630 = vsub.f32 %v4504, %v4618
    %v4631 = vsub.f32 %v4550, %v4621
    %v4632 = vsub.f32 %v4596, %v4624
    %v4633 = vmul.f32 %v4625, 1.442695
    %v4634 = vpow.pop %v4633
    %v4635 = vmul.f32 %v4626, 1.442695
    %v4636 = vpow.pop %v4635
    %v4637 = vmul.f32 %v4627, 1.442695
    %v4638 = vpow.pop %v4637
    %v4639 = vmul.f32 %v4628, 1.442695
    %v4640 = vpow.pop %v4639
    %v4641 = vmul.f32 %v4629, 1.442695
    %v4642 = vpow.pop %v4641
    %v4643 = vmul.f32 %v4630, 1.442695
    %v4644 = vpow.pop %v4643
    %v4645 = vmul.f32 %v4631, 1.442695
    %v4646 = vpow.pop %v4645
    %v4647 = vmul.f32 %v4632, 1.442695
    %v4648 = vpow.pop %v4647
    %v4649 = vsel %vm625, %v4634, 0.0
    %4650 = vadd.xlane.f32.xlu0 %v4649
    %v4651 = vpop.xlane.xlu0 %4650
    %v4652 = vsel %vm625, %v4636, 0.0
    %4653 = vadd.xlane.f32.xlu0 %v4652
    %v4654 = vpop.xlane.xlu0 %4653
    %v4655 = vsel %vm625, %v4638, 0.0
    %4656 = vadd.xlane.f32.xlu0 %v4655
    %v4657 = vpop.xlane.xlu0 %4656
    %v4658 = vsel %vm625, %v4640, 0.0
    %4659 = vadd.xlane.f32.xlu0 %v4658
    %v4660 = vpop.xlane.xlu0 %4659
    %v4661 = vsel %vm625, %v4642, 0.0
    %4662 = vadd.xlane.f32.xlu0 %v4661
    %v4663 = vpop.xlane.xlu0 %4662
    %v4664 = vsel %vm625, %v4644, 0.0
    %4665 = vadd.xlane.f32.xlu0 %v4664
    %v4666 = vpop.xlane.xlu0 %4665
    %v4667 = vsel %vm625, %v4646, 0.0
    %4668 = vadd.xlane.f32.xlu0 %v4667
    %v4669 = vpop.xlane.xlu0 %4668
    %v4670 = vsel %vm625, %v4648, 0.0
    %4671 = vadd.xlane.f32.xlu0 %v4670
    %v4672 = vpop.xlane.xlu0 %4671
    %v4673 = vrcp.pop %v4651
    %v4674 = vrcp.pop %v4654
    %v4675 = vrcp.pop %v4657
    %v4676 = vrcp.pop %v4660
    %v4677 = vrcp.pop %v4663
    %v4678 = vrcp.pop %v4666
    %v4679 = vrcp.pop %v4669
    %v4680 = vrcp.pop %v4672
    %v4681 = vmul.f32 %v4634, %v4673
    %v4682 = vmul.f32 %v4636, %v4674
    %v4683 = vmul.f32 %v4638, %v4675
    %v4684 = vmul.f32 %v4640, %v4676
    %v4685 = vmul.f32 %v4642, %v4677
    %v4686 = vmul.f32 %v4644, %v4678
    %v4687 = vmul.f32 %v4646, %v4679
    %v4688 = vmul.f32 %v4648, %v4680
    %v4689 = vpack.c.bf16 %v4681, %v4681
    %v4690 = vpack.c.bf16 %v4682, %v4682
    %v4691 = vpack.c.bf16 %v4683, %v4683
    %v4692 = vpack.c.bf16 %v4684, %v4684
    %v4693 = vpack.c.bf16 %v4685, %v4685
    %v4694 = vpack.c.bf16 %v4686, %v4686
    %v4695 = vpack.c.bf16 %v4687, %v4687
    %v4696 = vpack.c.bf16 %v4688, %v4688
    %v4698 = vsel %vm625, %v4689, 0
    %v4701 = vsel %vm1093, %v4225, 0
    %4703 = vmatprep.subr.bf16.mxu0 0
    %4704 = vmatpush1.bf16.msra.mxu0 %v4701
    %4705 = vmatprep.subr.bf16.mxu0 0
    %4706 = vmatpush1.bf16.msra.mxu0 0
    %4707 = vmatprep.subr.bf16.mxu0 0
    %4708 = vmatpush1.bf16.msra.mxu0 0
    %4709 = vmatprep.subr.bf16.mxu0 0
    %4710 = vmatpush1.bf16.msra.mxu0 0
    %4711 = vmatprep.subr.bf16.mxu0 0
    %4712 = vmatpush1.bf16.msra.mxu0 0
    %4713 = vmatprep.subr.bf16.mxu0 0
    %4714 = vmatpush1.bf16.msra.mxu0 0
    %4715 = vmatprep.subr.bf16.mxu0 0
    %4716 = vmatpush1.bf16.msra.mxu0 0
    %4717 = vmatprep.subr.bf16.mxu0 0
    %4718 = vmatpush1.bf16.msra.mxu0 0
    %4719 = vmatprep.subr.bf16.mxu0 0
    %4720 = vmatpush1.bf16.msra.mxu0 0
    %4721 = vmatprep.subr.bf16.mxu0 0
    %4722 = vmatpush1.bf16.msra.mxu0 0
    %4723 = vmatprep.subr.bf16.mxu0 0
    %4724 = vmatpush1.bf16.msra.mxu0 0
    %4725 = vmatprep.subr.bf16.mxu0 0
    %4726 = vmatpush1.bf16.msra.mxu0 0
    %4727 = vmatprep.subr.bf16.mxu0 0
    %4728 = vmatpush1.bf16.msra.mxu0 0
    %4729 = vmatprep.subr.bf16.mxu0 0
    %4730 = vmatpush1.bf16.msra.mxu0 0
    %4731 = vmatprep.subr.bf16.mxu0 0
    %4732 = vmatpush1.bf16.msra.mxu0 0
    %4733 = vmatprep.subr.bf16.mxu0 0
    %4734 = vmatpush1.bf16.msra.mxu0 0
    %4735 = vmatprep.mubr.bf16.mxu0 0
    %4736 = vmatmul.mubr.bf16.gmra.mrb[0].mxu0 %v4698
    %v4737 = vpop.f32.mrb[0].mxu0
    %v4738 = vadd.f32 0.0, %v4737
    %v4739 = vpop.f32.mrb[0].mxu0
    %v4740 = vpop.f32.mrb[0].mxu0
    %v4741 = vpop.f32.mrb[0].mxu0
    %4742 = vdwg.mxu0
    %v4744 = vsel %vm625, %v4690, 0
    %v4747 = vsel %vm1093, %v4226, 0
    %4749 = vmatprep.subr.bf16.mxu0 0
    %4750 = vmatpush1.bf16.msra.mxu0 %v4747
    %4751 = vmatprep.subr.bf16.mxu0 0
    %4752 = vmatpush1.bf16.msra.mxu0 0
    %4753 = vmatprep.subr.bf16.mxu0 0
    %4754 = vmatpush1.bf16.msra.mxu0 0
    %4755 = vmatprep.subr.bf16.mxu0 0
    %4756 = vmatpush1.bf16.msra.mxu0 0
    %4757 = vmatprep.subr.bf16.mxu0 0
    %4758 = vmatpush1.bf16.msra.mxu0 0
    %4759 = vmatprep.subr.bf16.mxu0 0
    %4760 = vmatpush1.bf16.msra.mxu0 0
    %4761 = vmatprep.subr.bf16.mxu0 0
    %4762 = vmatpush1.bf16.msra.mxu0 0
    %4763 = vmatprep.subr.bf16.mxu0 0
    %4764 = vmatpush1.bf16.msra.mxu0 0
    %4765 = vmatprep.subr.bf16.mxu0 0
    %4766 = vmatpush1.bf16.msra.mxu0 0
    %4767 = vmatprep.subr.bf16.mxu0 0
    %4768 = vmatpush1.bf16.msra.mxu0 0
    %4769 = vmatprep.subr.bf16.mxu0 0
    %4770 = vmatpush1.bf16.msra.mxu0 0
    %4771 = vmatprep.subr.bf16.mxu0 0
    %4772 = vmatpush1.bf16.msra.mxu0 0
    %4773 = vmatprep.subr.bf16.mxu0 0
    %4774 = vmatpush1.bf16.msra.mxu0 0
    %4775 = vmatprep.subr.bf16.mxu0 0
    %4776 = vmatpush1.bf16.msra.mxu0 0
    %4777 = vmatprep.subr.bf16.mxu0 0
    %4778 = vmatpush1.bf16.msra.mxu0 0
    %4779 = vmatprep.subr.bf16.mxu0 0
    %4780 = vmatpush1.bf16.msra.mxu0 0
    %4781 = vmatprep.mubr.bf16.mxu0 0
    %4782 = vmatmul.mubr.bf16.gmra.mrb[0].mxu0 %v4744
    %v4783 = vpop.f32.mrb[0].mxu0
    %v4784 = vadd.f32 0.0, %v4783
    %v4785 = vpop.f32.mrb[0].mxu0
    %v4786 = vpop.f32.mrb[0].mxu0
    %v4787 = vpop.f32.mrb[0].mxu0
    %4788 = vdwg.mxu0
    %v4790 = vsel %vm625, %v4691, 0
    %v4793 = vsel %vm1093, %v4227, 0
    %4795 = vmatprep.subr.bf16.mxu0 0
    %4796 = vmatpush1.bf16.msra.mxu0 %v4793
    %4797 = vmatprep.subr.bf16.mxu0 0
    %4798 = vmatpush1.bf16.msra.mxu0 0
    %4799 = vmatprep.subr.bf16.mxu0 0
    %4800 = vmatpush1.bf16.msra.mxu0 0
    %4801 = vmatprep.subr.bf16.mxu0 0
    %4802 = vmatpush1.bf16.msra.mxu0 0
    %4803 = vmatprep.subr.bf16.mxu0 0
    %4804 = vmatpush1.bf16.msra.mxu0 0
    %4805 = vmatprep.subr.bf16.mxu0 0
    %4806 = vmatpush1.bf16.msra.mxu0 0
    %4807 = vmatprep.subr.bf16.mxu0 0
    %4808 = vmatpush1.bf16.msra.mxu0 0
    %4809 = vmatprep.subr.bf16.mxu0 0
    %4810 = vmatpush1.bf16.msra.mxu0 0
    %4811 = vmatprep.subr.bf16.mxu0 0
    %4812 = vmatpush1.bf16.msra.mxu0 0
    %4813 = vmatprep.subr.bf16.mxu0 0
    %4814 = vmatpush1.bf16.msra.mxu0 0
    %4815 = vmatprep.subr.bf16.mxu0 0
    %4816 = vmatpush1.bf16.msra.mxu0 0
    %4817 = vmatprep.subr.bf16.mxu0 0
    %4818 = vmatpush1.bf16.msra.mxu0 0
    %4819 = vmatprep.subr.bf16.mxu0 0
    %4820 = vmatpush1.bf16.msra.mxu0 0
    %4821 = vmatprep.subr.bf16.mxu0 0
    %4822 = vmatpush1.bf16.msra.mxu0 0
    %4823 = vmatprep.subr.bf16.mxu0 0
    %4824 = vmatpush1.bf16.msra.mxu0 0
    %4825 = vmatprep.subr.bf16.mxu0 0
    %4826 = vmatpush1.bf16.msra.mxu0 0
    %4827 = vmatprep.mubr.bf16.mxu0 0
    %4828 = vmatmul.mubr.bf16.gmra.mrb[0].mxu0 %v4790
    %v4829 = vpop.f32.mrb[0].mxu0
    %v4830 = vadd.f32 0.0, %v4829
    %v4831 = vpop.f32.mrb[0].mxu0
    %v4832 = vpop.f32.mrb[0].mxu0
    %v4833 = vpop.f32.mrb[0].mxu0
    %4834 = vdwg.mxu0
    %v4836 = vsel %vm625, %v4692, 0
    %v4839 = vsel %vm1093, %v4228, 0
    %4841 = vmatprep.subr.bf16.mxu0 0
    %4842 = vmatpush1.bf16.msra.mxu0 %v4839
    %4843 = vmatprep.subr.bf16.mxu0 0
    %4844 = vmatpush1.bf16.msra.mxu0 0
    %4845 = vmatprep.subr.bf16.mxu0 0
    %4846 = vmatpush1.bf16.msra.mxu0 0
    %4847 = vmatprep.subr.bf16.mxu0 0
    %4848 = vmatpush1.bf16.msra.mxu0 0
    %4849 = vmatprep.subr.bf16.mxu0 0
    %4850 = vmatpush1.bf16.msra.mxu0 0
    %4851 = vmatprep.subr.bf16.mxu0 0
    %4852 = vmatpush1.bf16.msra.mxu0 0
    %4853 = vmatprep.subr.bf16.mxu0 0
    %4854 = vmatpush1.bf16.msra.mxu0 0
    %4855 = vmatprep.subr.bf16.mxu0 0
    %4856 = vmatpush1.bf16.msra.mxu0 0
    %4857 = vmatprep.subr.bf16.mxu0 0
    %4858 = vmatpush1.bf16.msra.mxu0 0
    %4859 = vmatprep.subr.bf16.mxu0 0
    %4860 = vmatpush1.bf16.msra.mxu0 0
    %4861 = vmatprep.subr.bf16.mxu0 0
    %4862 = vmatpush1.bf16.msra.mxu0 0
    %4863 = vmatprep.subr.bf16.mxu0 0
    %4864 = vmatpush1.bf16.msra.mxu0 0
    %4865 = vmatprep.subr.bf16.mxu0 0
    %4866 = vmatpush1.bf16.msra.mxu0 0
    %4867 = vmatprep.subr.bf16.mxu0 0
    %4868 = vmatpush1.bf16.msra.mxu0 0
    %4869 = vmatprep.subr.bf16.mxu0 0
    %4870 = vmatpush1.bf16.msra.mxu0 0
    %4871 = vmatprep.subr.bf16.mxu0 0
    %4872 = vmatpush1.bf16.msra.mxu0 0
    %4873 = vmatprep.mubr.bf16.mxu0 0
    %4874 = vmatmul.mubr.bf16.gmra.mrb[0].mxu0 %v4836
    %v4875 = vpop.f32.mrb[0].mxu0
    %v4876 = vadd.f32 0.0, %v4875
    %v4877 = vpop.f32.mrb[0].mxu0
    %v4878 = vpop.f32.mrb[0].mxu0
    %v4879 = vpop.f32.mrb[0].mxu0
    %4880 = vdwg.mxu0
    %v4882 = vsel %vm625, %v4693, 0
    %v4885 = vsel %vm1093, %v4229, 0
    %4887 = vmatprep.subr.bf16.mxu0 0
    %4888 = vmatpush1.bf16.msra.mxu0 %v4885
    %4889 = vmatprep.subr.bf16.mxu0 0
    %4890 = vmatpush1.bf16.msra.mxu0 0
    %4891 = vmatprep.subr.bf16.mxu0 0
    %4892 = vmatpush1.bf16.msra.mxu0 0
    %4893 = vmatprep.subr.bf16.mxu0 0
    %4894 = vmatpush1.bf16.msra.mxu0 0
    %4895 = vmatprep.subr.bf16.mxu0 0
    %4896 = vmatpush1.bf16.msra.mxu0 0
    %4897 = vmatprep.subr.bf16.mxu0 0
    %4898 = vmatpush1.bf16.msra.mxu0 0
    %4899 = vmatprep.subr.bf16.mxu0 0
    %4900 = vmatpush1.bf16.msra.mxu0 0
    %4901 = vmatprep.subr.bf16.mxu0 0
    %4902 = vmatpush1.bf16.msra.mxu0 0
    %4903 = vmatprep.subr.bf16.mxu0 0
    %4904 = vmatpush1.bf16.msra.mxu0 0
    %4905 = vmatprep.subr.bf16.mxu0 0
    %4906 = vmatpush1.bf16.msra.mxu0 0
    %4907 = vmatprep.subr.bf16.mxu0 0
    %4908 = vmatpush1.bf16.msra.mxu0 0
    %4909 = vmatprep.subr.bf16.mxu0 0
    %4910 = vmatpush1.bf16.msra.mxu0 0
    %4911 = vmatprep.subr.bf16.mxu0 0
    %4912 = vmatpush1.bf16.msra.mxu0 0
    %4913 = vmatprep.subr.bf16.mxu0 0
    %4914 = vmatpush1.bf16.msra.mxu0 0
    %4915 = vmatprep.subr.bf16.mxu0 0
    %4916 = vmatpush1.bf16.msra.mxu0 0
    %4917 = vmatprep.subr.bf16.mxu0 0
    %4918 = vmatpush1.bf16.msra.mxu0 0
    %4919 = vmatprep.mubr.bf16.mxu0 0
    %4920 = vmatmul.mubr.bf16.gmra.mrb[0].mxu0 %v4882
    %v4921 = vpop.f32.mrb[0].mxu0
    %v4922 = vadd.f32 0.0, %v4921
    %v4923 = vpop.f32.mrb[0].mxu0
    %v4924 = vpop.f32.mrb[0].mxu0
    %v4925 = vpop.f32.mrb[0].mxu0
    %4926 = vdwg.mxu0
    %v4928 = vsel %vm625, %v4694, 0
    %v4931 = vsel %vm1093, %v4230, 0
    %4933 = vmatprep.subr.bf16.mxu0 0
    %4934 = vmatpush1.bf16.msra.mxu0 %v4931
    %4935 = vmatprep.subr.bf16.mxu0 0
    %4936 = vmatpush1.bf16.msra.mxu0 0
    %4937 = vmatprep.subr.bf16.mxu0 0
    %4938 = vmatpush1.bf16.msra.mxu0 0
    %4939 = vmatprep.subr.bf16.mxu0 0
    %4940 = vmatpush1.bf16.msra.mxu0 0
    %4941 = vmatprep.subr.bf16.mxu0 0
    %4942 = vmatpush1.bf16.msra.mxu0 0
    %4943 = vmatprep.subr.bf16.mxu0 0
    %4944 = vmatpush1.bf16.msra.mxu0 0
    %4945 = vmatprep.subr.bf16.mxu0 0
    %4946 = vmatpush1.bf16.msra.mxu0 0
    %4947 = vmatprep.subr.bf16.mxu0 0
    %4948 = vmatpush1.bf16.msra.mxu0 0
    %4949 = vmatprep.subr.bf16.mxu0 0
    %4950 = vmatpush1.bf16.msra.mxu0 0
    %4951 = vmatprep.subr.bf16.mxu0 0
    %4952 = vmatpush1.bf16.msra.mxu0 0
    %4953 = vmatprep.subr.bf16.mxu0 0
    %4954 = vmatpush1.bf16.msra.mxu0 0
    %4955 = vmatprep.subr.bf16.mxu0 0
    %4956 = vmatpush1.bf16.msra.mxu0 0
    %4957 = vmatprep.subr.bf16.mxu0 0
    %4958 = vmatpush1.bf16.msra.mxu0 0
    %4959 = vmatprep.subr.bf16.mxu0 0
    %4960 = vmatpush1.bf16.msra.mxu0 0
    %4961 = vmatprep.subr.bf16.mxu0 0
    %4962 = vmatpush1.bf16.msra.mxu0 0
    %4963 = vmatprep.subr.bf16.mxu0 0
    %4964 = vmatpush1.bf16.msra.mxu0 0
    %4965 = vmatprep.mubr.bf16.mxu0 0
    %4966 = vmatmul.mubr.bf16.gmra.mrb[0].mxu0 %v4928
    %v4967 = vpop.f32.mrb[0].mxu0
    %v4968 = vadd.f32 0.0, %v4967
    %v4969 = vpop.f32.mrb[0].mxu0
    %v4970 = vpop.f32.mrb[0].mxu0
    %v4971 = vpop.f32.mrb[0].mxu0
    %4972 = vdwg.mxu0
    %v4974 = vsel %vm625, %v4695, 0
    %v4977 = vsel %vm1093, %v4231, 0
    %4979 = vmatprep.subr.bf16.mxu0 0
    %4980 = vmatpush1.bf16.msra.mxu0 %v4977
    %4981 = vmatprep.subr.bf16.mxu0 0
    %4982 = vmatpush1.bf16.msra.mxu0 0
    %4983 = vmatprep.subr.bf16.mxu0 0
    %4984 = vmatpush1.bf16.msra.mxu0 0
    %4985 = vmatprep.subr.bf16.mxu0 0
    %4986 = vmatpush1.bf16.msra.mxu0 0
    %4987 = vmatprep.subr.bf16.mxu0 0
    %4988 = vmatpush1.bf16.msra.mxu0 0
    %4989 = vmatprep.subr.bf16.mxu0 0
    %4990 = vmatpush1.bf16.msra.mxu0 0
    %4991 = vmatprep.subr.bf16.mxu0 0
    %4992 = vmatpush1.bf16.msra.mxu0 0
    %4993 = vmatprep.subr.bf16.mxu0 0
    %4994 = vmatpush1.bf16.msra.mxu0 0
    %4995 = vmatprep.subr.bf16.mxu0 0
    %4996 = vmatpush1.bf16.msra.mxu0 0
    %4997 = vmatprep.subr.bf16.mxu0 0
    %4998 = vmatpush1.bf16.msra.mxu0 0
    %4999 = vmatprep.subr.bf16.mxu0 0
    %5000 = vmatpush1.bf16.msra.mxu0 0
    %5001 = vmatprep.subr.bf16.mxu0 0
    %5002 = vmatpush1.bf16.msra.mxu0 0
    %5003 = vmatprep.subr.bf16.mxu0 0
    %5004 = vmatpush1.bf16.msra.mxu0 0
    %5005 = vmatprep.subr.bf16.mxu0 0
    %5006 = vmatpush1.bf16.msra.mxu0 0
    %5007 = vmatprep.subr.bf16.mxu0 0
    %5008 = vmatpush1.bf16.msra.mxu0 0
    %5009 = vmatprep.subr.bf16.mxu0 0
    %5010 = vmatpush1.bf16.msra.mxu0 0
    %5011 = vmatprep.mubr.bf16.mxu0 0
    %5012 = vmatmul.mubr.bf16.gmra.mrb[0].mxu0 %v4974
    %v5013 = vpop.f32.mrb[0].mxu0
    %v5014 = vadd.f32 0.0, %v5013
    %v5015 = vpop.f32.mrb[0].mxu0
    %v5016 = vpop.f32.mrb[0].mxu0
    %v5017 = vpop.f32.mrb[0].mxu0
    %5018 = vdwg.mxu0
    %v5020 = vsel %vm625, %v4696, 0
    %v5023 = vsel %vm1093, %v4232, 0
    %5025 = vmatprep.subr.bf16.mxu0 0
    %5026 = vmatpush1.bf16.msra.mxu0 %v5023
    %5027 = vmatprep.subr.bf16.mxu0 0
    %5028 = vmatpush1.bf16.msra.mxu0 0
    %5029 = vmatprep.subr.bf16.mxu0 0
    %5030 = vmatpush1.bf16.msra.mxu0 0
    %5031 = vmatprep.subr.bf16.mxu0 0
    %5032 = vmatpush1.bf16.msra.mxu0 0
    %5033 = vmatprep.subr.bf16.mxu0 0
    %5034 = vmatpush1.bf16.msra.mxu0 0
    %5035 = vmatprep.subr.bf16.mxu0 0
    %5036 = vmatpush1.bf16.msra.mxu0 0
    %5037 = vmatprep.subr.bf16.mxu0 0
    %5038 = vmatpush1.bf16.msra.mxu0 0
    %5039 = vmatprep.subr.bf16.mxu0 0
    %5040 = vmatpush1.bf16.msra.mxu0 0
    %5041 = vmatprep.subr.bf16.mxu0 0
    %5042 = vmatpush1.bf16.msra.mxu0 0
    %5043 = vmatprep.subr.bf16.mxu0 0
    %5044 = vmatpush1.bf16.msra.mxu0 0
    %5045 = vmatprep.subr.bf16.mxu0 0
    %5046 = vmatpush1.bf16.msra.mxu0 0
    %5047 = vmatprep.subr.bf16.mxu0 0
    %5048 = vmatpush1.bf16.msra.mxu0 0
    %5049 = vmatprep.subr.bf16.mxu0 0
    %5050 = vmatpush1.bf16.msra.mxu0 0
    %5051 = vmatprep.subr.bf16.mxu0 0
    %5052 = vmatpush1.bf16.msra.mxu0 0
    %5053 = vmatprep.subr.bf16.mxu0 0
    %5054 = vmatpush1.bf16.msra.mxu0 0
    %5055 = vmatprep.subr.bf16.mxu0 0
    %5056 = vmatpush1.bf16.msra.mxu0 0
    %5057 = vmatprep.mubr.bf16.mxu0 0
    %5058 = vmatmul.mubr.bf16.gmra.mrb[0].mxu0 %v5020
    %v5059 = vpop.f32.mrb[0].mxu0
    %v5060 = vadd.f32 0.0, %v5059
    %v5061 = vpop.f32.mrb[0].mxu0
    %v5062 = vpop.f32.mrb[0].mxu0
    %v5063 = vpop.f32.mrb[0].mxu0
    %5064 = vdwg.mxu0
    %5065 = vxpose.xlu0.b32.start [1/16] %v4738, 128
    %5066 = vxpose.xlu0.b32.cont [2/16] %v4784, 128
    %5067 = vxpose.xlu0.b32.cont [3/16] 0.0, 128
    %5068 = vxpose.xlu0.b32.cont [4/16] 0.0, 128
    %5069 = vxpose.xlu0.b32.cont [5/16] 0.0, 128
    %5070 = vxpose.xlu0.b32.cont [6/16] 0.0, 128
    %5071 = vxpose.xlu0.b32.cont [7/16] 0.0, 128
    %5072 = vxpose.xlu0.b32.cont [8/16] 0.0, 128
    %5073 = vxpose.xlu0.b32.cont [9/16] 0.0, 128
    %5074 = vxpose.xlu0.b32.cont [10/16] 0.0, 128
    %5075 = vxpose.xlu0.b32.cont [11/16] 0.0, 128
    %5076 = vxpose.xlu0.b32.cont [12/16] 0.0, 128
    %5077 = vxpose.xlu0.b32.cont [13/16] 0.0, 128
    %5078 = vxpose.xlu0.b32.cont [14/16] 0.0, 128
    %5079 = vxpose.xlu0.b32.cont [15/16] 0.0, 128
    %5080 = vxpose.xlu0.b32.end [16/16] 0.0, 128
    %v5081 = vpop.trf.xlu0
    %v5082 = vpop.trf.xlu0
    %v5083 = vpop.trf.xlu0
    %v5084 = vpop.trf.xlu0
    %v5085 = vpop.trf.xlu0
    %v5086 = vpop.trf.xlu0
    %v5087 = vpop.trf.xlu0
    %v5088 = vpop.trf.xlu0
    %v5089 = vpop.trf.xlu0
    %v5090 = vpop.trf.xlu0
    %v5091 = vpop.trf.xlu0
    %v5092 = vpop.trf.xlu0
    %v5093 = vpop.trf.xlu0
    %v5094 = vpop.trf.xlu0
    %v5095 = vpop.trf.xlu0
    %v5096 = vpop.trf.xlu0
    %5097 = vxpose.xlu0.b32.start [1/16] %v4830, 128
    %5098 = vxpose.xlu0.b32.cont [2/16] %v4876, 128
    %5099 = vxpose.xlu0.b32.cont [3/16] 0.0, 128
    %5100 = vxpose.xlu0.b32.cont [4/16] 0.0, 128
    %5101 = vxpose.xlu0.b32.cont [5/16] 0.0, 128
    %5102 = vxpose.xlu0.b32.cont [6/16] 0.0, 128
    %5103 = vxpose.xlu0.b32.cont [7/16] 0.0, 128
    %5104 = vxpose.xlu0.b32.cont [8/16] 0.0, 128
    %5105 = vxpose.xlu0.b32.cont [9/16] 0.0, 128
    %5106 = vxpose.xlu0.b32.cont [10/16] 0.0, 128
    %5107 = vxpose.xlu0.b32.cont [11/16] 0.0, 128
    %5108 = vxpose.xlu0.b32.cont [12/16] 0.0, 128
    %5109 = vxpose.xlu0.b32.cont [13/16] 0.0, 128
    %5110 = vxpose.xlu0.b32.cont [14/16] 0.0, 128
    %5111 = vxpose.xlu0.b32.cont [15/16] 0.0, 128
    %5112 = vxpose.xlu0.b32.end [16/16] 0.0, 128
    %v5113 = vpop.trf.xlu0
    %v5114 = vpop.trf.xlu0
    %v5115 = vpop.trf.xlu0
    %v5116 = vpop.trf.xlu0
    %v5117 = vpop.trf.xlu0
    %v5118 = vpop.trf.xlu0
    %v5119 = vpop.trf.xlu0
    %v5120 = vpop.trf.xlu0
    %v5121 = vpop.trf.xlu0
    %v5122 = vpop.trf.xlu0
    %v5123 = vpop.trf.xlu0
    %v5124 = vpop.trf.xlu0
    %v5125 = vpop.trf.xlu0
    %v5126 = vpop.trf.xlu0
    %v5127 = vpop.trf.xlu0
    %v5128 = vpop.trf.xlu0
    %5129 = vxpose.xlu0.b32.start [1/16] %v4922, 128
    %5130 = vxpose.xlu0.b32.cont [2/16] %v4968, 128
    %5131 = vxpose.xlu0.b32.cont [3/16] 0.0, 128
    %5132 = vxpose.xlu0.b32.cont [4/16] 0.0, 128
    %5133 = vxpose.xlu0.b32.cont [5/16] 0.0, 128
    %5134 = vxpose.xlu0.b32.cont [6/16] 0.0, 128
    %5135 = vxpose.xlu0.b32.cont [7/16] 0.0, 128
    %5136 = vxpose.xlu0.b32.cont [8/16] 0.0, 128
    %5137 = vxpose.xlu0.b32.cont [9/16] 0.0, 128
    %5138 = vxpose.xlu0.b32.cont [10/16] 0.0, 128
    %5139 = vxpose.xlu0.b32.cont [11/16] 0.0, 128
    %5140 = vxpose.xlu0.b32.cont [12/16] 0.0, 128
    %5141 = vxpose.xlu0.b32.cont [13/16] 0.0, 128
    %5142 = vxpose.xlu0.b32.cont [14/16] 0.0, 128
    %5143 = vxpose.xlu0.b32.cont [15/16] 0.0, 128
    %5144 = vxpose.xlu0.b32.end [16/16] 0.0, 128
    %v5145 = vpop.trf.xlu0
    %v5146 = vpop.trf.xlu0
    %v5147 = vpop.trf.xlu0
    %v5148 = vpop.trf.xlu0
    %v5149 = vpop.trf.xlu0
    %v5150 = vpop.trf.xlu0
    %v5151 = vpop.trf.xlu0
    %v5152 = vpop.trf.xlu0
    %v5153 = vpop.trf.xlu0
    %v5154 = vpop.trf.xlu0
    %v5155 = vpop.trf.xlu0
    %v5156 = vpop.trf.xlu0
    %v5157 = vpop.trf.xlu0
    %v5158 = vpop.trf.xlu0
    %v5159 = vpop.trf.xlu0
    %v5160 = vpop.trf.xlu0
    %5161 = vxpose.xlu0.b32.start [1/16] %v5014, 128
    %5162 = vxpose.xlu0.b32.cont [2/16] %v5060, 128
    %5163 = vxpose.xlu0.b32.cont [3/16] 0.0, 128
    %5164 = vxpose.xlu0.b32.cont [4/16] 0.0, 128
    %5165 = vxpose.xlu0.b32.cont [5/16] 0.0, 128
    %5166 = vxpose.xlu0.b32.cont [6/16] 0.0, 128
    %5167 = vxpose.xlu0.b32.cont [7/16] 0.0, 128
    %5168 = vxpose.xlu0.b32.cont [8/16] 0.0, 128
    %5169 = vxpose.xlu0.b32.cont [9/16] 0.0, 128
    %5170 = vxpose.xlu0.b32.cont [10/16] 0.0, 128
    %5171 = vxpose.xlu0.b32.cont [11/16] 0.0, 128
    %5172 = vxpose.xlu0.b32.cont [12/16] 0.0, 128
    %5173 = vxpose.xlu0.b32.cont [13/16] 0.0, 128
    %5174 = vxpose.xlu0.b32.cont [14/16] 0.0, 128
    %5175 = vxpose.xlu0.b32.cont [15/16] 0.0, 128
    %5176 = vxpose.xlu0.b32.end [16/16] 0.0, 128
    %v5177 = vpop.trf.xlu0
    %v5178 = vpop.trf.xlu0
    %v5179 = vpop.trf.xlu0
    %v5180 = vpop.trf.xlu0
    %v5181 = vpop.trf.xlu0
    %v5182 = vpop.trf.xlu0
    %v5183 = vpop.trf.xlu0
    %v5184 = vpop.trf.xlu0
    %v5185 = vpop.trf.xlu0
    %v5186 = vpop.trf.xlu0
    %v5187 = vpop.trf.xlu0
    %v5188 = vpop.trf.xlu0
    %v5189 = vpop.trf.xlu0
    %v5190 = vpop.trf.xlu0
    %v5191 = vpop.trf.xlu0
    %v5192 = vpop.trf.xlu0
    %5193 = vxpose.xlu0.b32.start [1/16] %v5081, 128
    %5194 = vxpose.xlu0.b32.cont [2/16] %v5113, 128
    %5195 = vxpose.xlu0.b32.cont [3/16] %v5145, 128
    %5196 = vxpose.xlu0.b32.cont [4/16] %v5177, 128
    %5197 = vxpose.xlu0.b32.cont [5/16] 0.0, 128
    %5198 = vxpose.xlu0.b32.cont [6/16] 0.0, 128
    %5199 = vxpose.xlu0.b32.cont [7/16] 0.0, 128
    %5200 = vxpose.xlu0.b32.cont [8/16] 0.0, 128
    %5201 = vxpose.xlu0.b32.cont [9/16] 0.0, 128
    %5202 = vxpose.xlu0.b32.cont [10/16] 0.0, 128
    %5203 = vxpose.xlu0.b32.cont [11/16] 0.0, 128
    %5204 = vxpose.xlu0.b32.cont [12/16] 0.0, 128
    %5205 = vxpose.xlu0.b32.cont [13/16] 0.0, 128
    %5206 = vxpose.xlu0.b32.cont [14/16] 0.0, 128
    %5207 = vxpose.xlu0.b32.cont [15/16] 0.0, 128
    %5208 = vxpose.xlu0.b32.end [16/16] 0.0, 128
    %v5209 = vpop.trf.xlu0
    %v5210 = vpop.trf.xlu0
    %v5211 = vpop.trf.xlu0
    %v5212 = vpop.trf.xlu0
    %v5213 = vpop.trf.xlu0
    %v5214 = vpop.trf.xlu0
    %v5215 = vpop.trf.xlu0
    %v5216 = vpop.trf.xlu0
    %v5217 = vpop.trf.xlu0
    %v5218 = vpop.trf.xlu0
    %v5219 = vpop.trf.xlu0
    %v5220 = vpop.trf.xlu0
    %v5221 = vpop.trf.xlu0
    %v5222 = vpop.trf.xlu0
    %v5223 = vpop.trf.xlu0
    %v5224 = vpop.trf.xlu0
    %v5225 = vpack.c.bf16 %v5210, %v5209
    %v5226 = vld [vmem:[%s4 + $0x80] sm:$0xf]
    %v5227 = vld [vmem:[%s4 + $0x84] sm:$0xf]
    %v5228 = vld [vmem:[%s4 + $0x88] sm:$0xf]
    %v5229 = vld [vmem:[%s4 + $0x8c] sm:$0xf]
    %v5230 = vld [vmem:[%s5 + $0xd] sm:$0x1]
    %v5231 = vlaneseq
    %v5232 = vshrl.u32 %v5231, 7
    %v5233 = vsub.s32 0, %v5232
    %v5234 = vrot.slane %v5230, %v5233
    %v5239 = vunpack.c.l.b16 %v5226
    %v5240 = vunpack.c.l.b16 %v5227
    %v5241 = vunpack.c.l.b16 %v5228
    %v5242 = vunpack.c.l.b16 %v5229
    %v5243 = vpack.c.b16 %v5240, %v5239
    %v5244 = vpack.c.b16 %v5242, %v5241
    %v5248 = vsel %vm62, %v5225, 0
    %5250 = vmatprep.subr.bf16.mxu0 0
    %5251 = vmatpush1.bf16.msra.mxu0 %v5243
    %5252 = vmatprep.subr.bf16.mxu0 0
    %5253 = vmatpush1.bf16.msra.mxu0 %v5244
    %5254 = vmatprep.subr.bf16.mxu0 0
    %5255 = vmatpush1.bf16.msra.mxu0 0
    %5256 = vmatprep.subr.bf16.mxu0 0
    %5257 = vmatpush1.bf16.msra.mxu0 0
    %5258 = vmatprep.subr.bf16.mxu0 0
    %5259 = vmatpush1.bf16.msra.mxu0 0
    %5260 = vmatprep.subr.bf16.mxu0 0
    %5261 = vmatpush1.bf16.msra.mxu0 0
    %5262 = vmatprep.subr.bf16.mxu0 0
    %5263 = vmatpush1.bf16.msra.mxu0 0
    %5264 = vmatprep.subr.bf16.mxu0 0
    %5265 = vmatpush1.bf16.msra.mxu0 0
    %5266 = vmatprep.subr.bf16.mxu0 0
    %5267 = vmatpush1.bf16.msra.mxu0 0
    %5268 = vmatprep.subr.bf16.mxu0 0
    %5269 = vmatpush1.bf16.msra.mxu0 0
    %5270 = vmatprep.subr.bf16.mxu0 0
    %5271 = vmatpush1.bf16.msra.mxu0 0
    %5272 = vmatprep.subr.bf16.mxu0 0
    %5273 = vmatpush1.bf16.msra.mxu0 0
    %5274 = vmatprep.subr.bf16.mxu0 0
    %5275 = vmatpush1.bf16.msra.mxu0 0
    %5276 = vmatprep.subr.bf16.mxu0 0
    %5277 = vmatpush1.bf16.msra.mxu0 0
    %5278 = vmatprep.subr.bf16.mxu0 0
    %5279 = vmatpush1.bf16.msra.mxu0 0
    %5280 = vmatprep.subr.bf16.mxu0 0
    %5281 = vmatpush1.bf16.msra.mxu0 0
    %5282 = vmatprep.mubr.bf16.mxu0 0
    %5283 = vmatmul.mubr.bf16.gmra.mrb[0].mxu0 %v5248
    %v5284 = vpop.f32.mrb[0].mxu0
    %v5285 = vadd.f32 %v5234, %v5284
    %v5286 = vpop.f32.mrb[0].mxu0
    %v5287 = vpop.f32.mrb[0].mxu0
    %v5288 = vadd.f32 %v5234, %v5287
    %v5289 = vpop.f32.mrb[0].mxu0
    %5290 = vdwg.mxu0
    %v5291 = vadd.f32 %v3647, %v5285
    %v5292 = vadd.f32 %v3648, %v5288
    %v5293 = vsel %vm62, %v5291, 0.0
    %5294 = vadd.xlane.f32.xlu0 %v5293
    %v5295 = vpop.xlane.xlu0 %5294
    %v5296 = vsel %vm62, %v5292, 0.0
    %5297 = vadd.xlane.f32.xlu0 %v5296
    %v5298 = vpop.xlane.xlu0 %5297
    %v5299 = vmul.f32 %v5295, %v1693
    %v5300 = vmul.f32 %v5298, %v1693
    %v5301 = vsub.f32 %v5291, %v5299
    %v5302 = vsub.f32 %v5292, %v5300
    %v5303 = vmul.f32 %v5301, %v5301
    %v5304 = vmul.f32 %v5302, %v5302
    %v5305 = vsel %vm62, %v5303, 0.0
    %5306 = vadd.xlane.f32.xlu0 %v5305
    %v5307 = vpop.xlane.xlu0 %5306
    %v5308 = vsel %vm62, %v5304, 0.0
    %5309 = vadd.xlane.f32.xlu0 %v5308
    %v5310 = vpop.xlane.xlu0 %5309
    %v5311 = vmul.f32 %v5307, %v1693
    %v5312 = vmul.f32 %v5310, %v1693
    %v5313 = vadd.f32 %v5311, 1e-05
    %v5314 = vadd.f32 %v5312, 1e-05
    %v5315 = vrsqrt.pop %v5313
    %v5316 = vrsqrt.pop %v5314
    %v5317 = vmul.f32 %v5301, %v5315
    %v5318 = vmul.f32 %v5302, %v5316
    %v5319 = vld [vmem:[%s5 + $0x12] sm:$0x1]
    %v5320 = vlaneseq
    %v5321 = vshrl.u32 %v5320, 7
    %v5322 = vsub.s32 0, %v5321
    %v5323 = vrot.slane %v5319, %v5322
    %v5324 = vmul.f32 %v5317, %v5323
    %v5325 = vmul.f32 %v5318, %v5323
    %v5326 = vld [vmem:[%s5 + $0x13] sm:$0x1]
    %v5327 = vlaneseq
    %v5328 = vshrl.u32 %v5327, 7
    %v5329 = vsub.s32 0, %v5328
    %v5330 = vrot.slane %v5326, %v5329
    %v5331 = vadd.f32 %v5324, %v5330
    %v5332 = vadd.f32 %v5325, %v5330
    %v5333 = vpack.c.bf16 %v5332, %v5331
    %v5334 = vld [vmem:[%s4 + $0x90] sm:$0xf]
    %v5335 = vld [vmem:[%s4 + $0x94] sm:$0xf]
    %v5336 = vld [vmem:[%s4 + $0x98] sm:$0xf]
    %v5337 = vld [vmem:[%s4 + $0x9c] sm:$0xf]
    %v5338 = vld [vmem:[%s5 + $0xe] sm:$0x1]
    %v5339 = vlaneseq
    %v5340 = vshrl.u32 %v5339, 7
    %v5341 = vsub.s32 0, %v5340
    %v5342 = vrot.slane %v5338, %v5341
    %v5347 = vunpack.c.l.b16 %v5334
    %v5348 = vunpack.c.l.b16 %v5335
    %v5349 = vunpack.c.l.b16 %v5336
    %v5350 = vunpack.c.l.b16 %v5337
    %v5351 = vpack.c.b16 %v5348, %v5347
    %v5352 = vpack.c.b16 %v5350, %v5349
    %v5356 = vsel %vm62, %v5333, 0
    %5358 = vmatprep.subr.bf16.mxu0 0
    %5359 = vmatpush1.bf16.msra.mxu0 %v5351
    %5360 = vmatprep.subr.bf16.mxu0 0
    %5361 = vmatpush1.bf16.msra.mxu0 %v5352
    %5362 = vmatprep.subr.bf16.mxu0 0
    %5363 = vmatpush1.bf16.msra.mxu0 0
    %5364 = vmatprep.subr.bf16.mxu0 0
    %5365 = vmatpush1.bf16.msra.mxu0 0
    %5366 = vmatprep.subr.bf16.mxu0 0
    %5367 = vmatpush1.bf16.msra.mxu0 0
    %5368 = vmatprep.subr.bf16.mxu0 0
    %5369 = vmatpush1.bf16.msra.mxu0 0
    %5370 = vmatprep.subr.bf16.mxu0 0
    %5371 = vmatpush1.bf16.msra.mxu0 0
    %5372 = vmatprep.subr.bf16.mxu0 0
    %5373 = vmatpush1.bf16.msra.mxu0 0
    %5374 = vmatprep.subr.bf16.mxu0 0
    %5375 = vmatpush1.bf16.msra.mxu0 0
    %5376 = vmatprep.subr.bf16.mxu0 0
    %5377 = vmatpush1.bf16.msra.mxu0 0
    %5378 = vmatprep.subr.bf16.mxu0 0
    %5379 = vmatpush1.bf16.msra.mxu0 0
    %5380 = vmatprep.subr.bf16.mxu0 0
    %5381 = vmatpush1.bf16.msra.mxu0 0
    %5382 = vmatprep.subr.bf16.mxu0 0
    %5383 = vmatpush1.bf16.msra.mxu0 0
    %5384 = vmatprep.subr.bf16.mxu0 0
    %5385 = vmatpush1.bf16.msra.mxu0 0
    %5386 = vmatprep.subr.bf16.mxu0 0
    %5387 = vmatpush1.bf16.msra.mxu0 0
    %5388 = vmatprep.subr.bf16.mxu0 0
    %5389 = vmatpush1.bf16.msra.mxu0 0
    %5390 = vmatprep.mubr.bf16.mxu0 0
    %5391 = vmatmul.mubr.bf16.gmra.mrb[0].mxu0 %v5356
    %v5392 = vpop.f32.mrb[0].mxu0
    %v5393 = vadd.f32 %v5342, %v5392
    %v5394 = vpop.f32.mrb[0].mxu0
    %v5395 = vpop.f32.mrb[0].mxu0
    %v5396 = vadd.f32 %v5342, %v5395
    %v5397 = vpop.f32.mrb[0].mxu0
    %5398 = vdwg.mxu0
    %5399 = vrot.lane.b32.xlu0 %v5351, 96
    %v5400 = vpop.permute.xlu0 %5399
    %5401 = vrot.lane.b32.xlu0 %v5352, 96
    %v5402 = vpop.permute.xlu0 %5401
    %5406 = vrot.lane.b32.xlu0 %v5342, 96
    %v5407 = vpop.permute.xlu0 %5406
    %5409 = vmatprep.subr.bf16.mxu0 0
    %5410 = vmatpush1.bf16.msra.mxu0 %v5400
    %5411 = vmatprep.subr.bf16.mxu0 0
    %5412 = vmatpush1.bf16.msra.mxu0 %v5402
    %5413 = vmatprep.subr.bf16.mxu0 0
    %5414 = vmatpush1.bf16.msra.mxu0 0
    %5415 = vmatprep.subr.bf16.mxu0 0
    %5416 = vmatpush1.bf16.msra.mxu0 0
    %5417 = vmatprep.subr.bf16.mxu0 0
    %5418 = vmatpush1.bf16.msra.mxu0 0
    %5419 = vmatprep.subr.bf16.mxu0 0
    %5420 = vmatpush1.bf16.msra.mxu0 0
    %5421 = vmatprep.subr.bf16.mxu0 0
    %5422 = vmatpush1.bf16.msra.mxu0 0
    %5423 = vmatprep.subr.bf16.mxu0 0
    %5424 = vmatpush1.bf16.msra.mxu0 0
    %5425 = vmatprep.subr.bf16.mxu0 0
    %5426 = vmatpush1.bf16.msra.mxu0 0
    %5427 = vmatprep.subr.bf16.mxu0 0
    %5428 = vmatpush1.bf16.msra.mxu0 0
    %5429 = vmatprep.subr.bf16.mxu0 0
    %5430 = vmatpush1.bf16.msra.mxu0 0
    %5431 = vmatprep.subr.bf16.mxu0 0
    %5432 = vmatpush1.bf16.msra.mxu0 0
    %5433 = vmatprep.subr.bf16.mxu0 0
    %5434 = vmatpush1.bf16.msra.mxu0 0
    %5435 = vmatprep.subr.bf16.mxu0 0
    %5436 = vmatpush1.bf16.msra.mxu0 0
    %5437 = vmatprep.subr.bf16.mxu0 0
    %5438 = vmatpush1.bf16.msra.mxu0 0
    %5439 = vmatprep.subr.bf16.mxu0 0
    %5440 = vmatpush1.bf16.msra.mxu0 0
    %5441 = vmatprep.mubr.bf16.mxu0 0
    %5442 = vmatmul.mubr.bf16.gmra.mrb[0].mxu0 %v1805
    %v5443 = vpop.f32.mrb[0].mxu0
    %v5444 = vadd.f32 %v5407, %v5443
    %v5445 = vpop.f32.mrb[0].mxu0
    %v5446 = vpop.f32.mrb[0].mxu0
    %v5447 = vadd.f32 %v5407, %v5446
    %v5448 = vpop.f32.mrb[0].mxu0
    %5449 = vmatprep.mubr.bf16.mxu0 0
    %5450 = vmatmul.mubr.bf16.gmra.mrb[0].mxu0 %v1808
    %v5451 = vpop.f32.mrb[0].mxu0
    %v5452 = vadd.f32 %v5407, %v5451
    %v5453 = vpop.f32.mrb[0].mxu0
    %v5454 = vpop.f32.mrb[0].mxu0
    %v5455 = vadd.f32 %v5407, %v5454
    %v5456 = vpop.f32.mrb[0].mxu0
    %5457 = vdwg.mxu0
    %5458 = vxpose.xlu0.b32.start [1/16] %v5393, 128
    %5459 = vxpose.xlu0.b32.cont [2/16] %v5396, 128
    %5460 = vxpose.xlu0.b32.cont [3/16] 0.0, 128
    %5461 = vxpose.xlu0.b32.cont [4/16] 0.0, 128
    %5462 = vxpose.xlu0.b32.cont [5/16] 0.0, 128
    %5463 = vxpose.xlu0.b32.cont [6/16] 0.0, 128
    %5464 = vxpose.xlu0.b32.cont [7/16] 0.0, 128
    %5465 = vxpose.xlu0.b32.cont [8/16] 0.0, 128
    %5466 = vxpose.xlu0.b32.cont [9/16] 0.0, 128
    %5467 = vxpose.xlu0.b32.cont [10/16] 0.0, 128
    %5468 = vxpose.xlu0.b32.cont [11/16] 0.0, 128
    %5469 = vxpose.xlu0.b32.cont [12/16] 0.0, 128
    %5470 = vxpose.xlu0.b32.cont [13/16] 0.0, 128
    %5471 = vxpose.xlu0.b32.cont [14/16] 0.0, 128
    %5472 = vxpose.xlu0.b32.cont [15/16] 0.0, 128
    %5473 = vxpose.xlu0.b32.end [16/16] 0.0, 128
    %v5474 = vpop.trf.xlu0
    %v5475 = vpop.trf.xlu0
    %v5476 = vpop.trf.xlu0
    %v5477 = vpop.trf.xlu0
    %v5478 = vpop.trf.xlu0
    %v5479 = vpop.trf.xlu0
    %v5480 = vpop.trf.xlu0
    %v5481 = vpop.trf.xlu0
    %v5482 = vpop.trf.xlu0
    %v5483 = vpop.trf.xlu0
    %v5484 = vpop.trf.xlu0
    %v5485 = vpop.trf.xlu0
    %v5486 = vpop.trf.xlu0
    %v5487 = vpop.trf.xlu0
    %v5488 = vpop.trf.xlu0
    %v5489 = vpop.trf.xlu0
    %5490 = vxpose.xlu0.b32.start [1/16] %v5474, 128
    %5491 = vxpose.xlu0.b32.cont [2/16] 0.0, 128
    %5492 = vxpose.xlu0.b32.cont [3/16] 0.0, 128
    %5493 = vxpose.xlu0.b32.cont [4/16] 0.0, 128
    %5494 = vxpose.xlu0.b32.cont [5/16] 0.0, 128
    %5495 = vxpose.xlu0.b32.cont [6/16] 0.0, 128
    %5496 = vxpose.xlu0.b32.cont [7/16] 0.0, 128
    %5497 = vxpose.xlu0.b32.cont [8/16] 0.0, 128
    %5498 = vxpose.xlu0.b32.cont [9/16] 0.0, 128
    %5499 = vxpose.xlu0.b32.cont [10/16] 0.0, 128
    %5500 = vxpose.xlu0.b32.cont [11/16] 0.0, 128
    %5501 = vxpose.xlu0.b32.cont [12/16] 0.0, 128
    %5502 = vxpose.xlu0.b32.cont [13/16] 0.0, 128
    %5503 = vxpose.xlu0.b32.cont [14/16] 0.0, 128
    %5504 = vxpose.xlu0.b32.cont [15/16] 0.0, 128
    %5505 = vxpose.xlu0.b32.end [16/16] 0.0, 128
    %v5506 = vpop.trf.xlu0
    %v5507 = vpop.trf.xlu0
    %v5508 = vpop.trf.xlu0
    %v5509 = vpop.trf.xlu0
    %v5510 = vpop.trf.xlu0
    %v5511 = vpop.trf.xlu0
    %v5512 = vpop.trf.xlu0
    %v5513 = vpop.trf.xlu0
    %v5514 = vpop.trf.xlu0
    %v5515 = vpop.trf.xlu0
    %v5516 = vpop.trf.xlu0
    %v5517 = vpop.trf.xlu0
    %v5518 = vpop.trf.xlu0
    %v5519 = vpop.trf.xlu0
    %v5520 = vpop.trf.xlu0
    %v5521 = vpop.trf.xlu0
    %5522 = vxpose.xlu0.b32.start [1/16] %v5475, 128
    %5523 = vxpose.xlu0.b32.cont [2/16] 0.0, 128
    %5524 = vxpose.xlu0.b32.cont [3/16] 0.0, 128
    %5525 = vxpose.xlu0.b32.cont [4/16] 0.0, 128
    %5526 = vxpose.xlu0.b32.cont [5/16] 0.0, 128
    %5527 = vxpose.xlu0.b32.cont [6/16] 0.0, 128
    %5528 = vxpose.xlu0.b32.cont [7/16] 0.0, 128
    %5529 = vxpose.xlu0.b32.cont [8/16] 0.0, 128
    %5530 = vxpose.xlu0.b32.cont [9/16] 0.0, 128
    %5531 = vxpose.xlu0.b32.cont [10/16] 0.0, 128
    %5532 = vxpose.xlu0.b32.cont [11/16] 0.0, 128
    %5533 = vxpose.xlu0.b32.cont [12/16] 0.0, 128
    %5534 = vxpose.xlu0.b32.cont [13/16] 0.0, 128
    %5535 = vxpose.xlu0.b32.cont [14/16] 0.0, 128
    %5536 = vxpose.xlu0.b32.cont [15/16] 0.0, 128
    %5537 = vxpose.xlu0.b32.end [16/16] 0.0, 128
    %v5538 = vpop.trf.xlu0
    %v5539 = vpop.trf.xlu0
    %v5540 = vpop.trf.xlu0
    %v5541 = vpop.trf.xlu0
    %v5542 = vpop.trf.xlu0
    %v5543 = vpop.trf.xlu0
    %v5544 = vpop.trf.xlu0
    %v5545 = vpop.trf.xlu0
    %v5546 = vpop.trf.xlu0
    %v5547 = vpop.trf.xlu0
    %v5548 = vpop.trf.xlu0
    %v5549 = vpop.trf.xlu0
    %v5550 = vpop.trf.xlu0
    %v5551 = vpop.trf.xlu0
    %v5552 = vpop.trf.xlu0
    %v5553 = vpop.trf.xlu0
    %5554 = vxpose.xlu0.b32.start [1/16] %v5476, 128
    %5555 = vxpose.xlu0.b32.cont [2/16] 0.0, 128
    %5556 = vxpose.xlu0.b32.cont [3/16] 0.0, 128
    %5557 = vxpose.xlu0.b32.cont [4/16] 0.0, 128
    %5558 = vxpose.xlu0.b32.cont [5/16] 0.0, 128
    %5559 = vxpose.xlu0.b32.cont [6/16] 0.0, 128
    %5560 = vxpose.xlu0.b32.cont [7/16] 0.0, 128
    %5561 = vxpose.xlu0.b32.cont [8/16] 0.0, 128
    %5562 = vxpose.xlu0.b32.cont [9/16] 0.0, 128
    %5563 = vxpose.xlu0.b32.cont [10/16] 0.0, 128
    %5564 = vxpose.xlu0.b32.cont [11/16] 0.0, 128
    %5565 = vxpose.xlu0.b32.cont [12/16] 0.0, 128
    %5566 = vxpose.xlu0.b32.cont [13/16] 0.0, 128
    %5567 = vxpose.xlu0.b32.cont [14/16] 0.0, 128
    %5568 = vxpose.xlu0.b32.cont [15/16] 0.0, 128
    %5569 = vxpose.xlu0.b32.end [16/16] 0.0, 128
    %v5570 = vpop.trf.xlu0
    %v5571 = vpop.trf.xlu0
    %v5572 = vpop.trf.xlu0
    %v5573 = vpop.trf.xlu0
    %v5574 = vpop.trf.xlu0
    %v5575 = vpop.trf.xlu0
    %v5576 = vpop.trf.xlu0
    %v5577 = vpop.trf.xlu0
    %v5578 = vpop.trf.xlu0
    %v5579 = vpop.trf.xlu0
    %v5580 = vpop.trf.xlu0
    %v5581 = vpop.trf.xlu0
    %v5582 = vpop.trf.xlu0
    %v5583 = vpop.trf.xlu0
    %v5584 = vpop.trf.xlu0
    %v5585 = vpop.trf.xlu0
    %5586 = vxpose.xlu0.b32.start [1/16] %v5477, 128
    %5587 = vxpose.xlu0.b32.cont [2/16] 0.0, 128
    %5588 = vxpose.xlu0.b32.cont [3/16] 0.0, 128
    %5589 = vxpose.xlu0.b32.cont [4/16] 0.0, 128
    %5590 = vxpose.xlu0.b32.cont [5/16] 0.0, 128
    %5591 = vxpose.xlu0.b32.cont [6/16] 0.0, 128
    %5592 = vxpose.xlu0.b32.cont [7/16] 0.0, 128
    %5593 = vxpose.xlu0.b32.cont [8/16] 0.0, 128
    %5594 = vxpose.xlu0.b32.cont [9/16] 0.0, 128
    %5595 = vxpose.xlu0.b32.cont [10/16] 0.0, 128
    %5596 = vxpose.xlu0.b32.cont [11/16] 0.0, 128
    %5597 = vxpose.xlu0.b32.cont [12/16] 0.0, 128
    %5598 = vxpose.xlu0.b32.cont [13/16] 0.0, 128
    %5599 = vxpose.xlu0.b32.cont [14/16] 0.0, 128
    %5600 = vxpose.xlu0.b32.cont [15/16] 0.0, 128
    %5601 = vxpose.xlu0.b32.end [16/16] 0.0, 128
    %v5602 = vpop.trf.xlu0
    %v5603 = vpop.trf.xlu0
    %v5604 = vpop.trf.xlu0
    %v5605 = vpop.trf.xlu0
    %v5606 = vpop.trf.xlu0
    %v5607 = vpop.trf.xlu0
    %v5608 = vpop.trf.xlu0
    %v5609 = vpop.trf.xlu0
    %v5610 = vpop.trf.xlu0
    %v5611 = vpop.trf.xlu0
    %v5612 = vpop.trf.xlu0
    %v5613 = vpop.trf.xlu0
    %v5614 = vpop.trf.xlu0
    %v5615 = vpop.trf.xlu0
    %v5616 = vpop.trf.xlu0
    %v5617 = vpop.trf.xlu0
    %v5618 = vpack.c.bf16 %v5506, %v5506
    %v5619 = vpack.c.bf16 %v5507, %v5507
    %v5620 = vpack.c.bf16 %v5538, %v5538
    %v5621 = vpack.c.bf16 %v5539, %v5539
    %v5622 = vpack.c.bf16 %v5570, %v5570
    %v5623 = vpack.c.bf16 %v5571, %v5571
    %v5624 = vpack.c.bf16 %v5602, %v5602
    %v5625 = vpack.c.bf16 %v5603, %v5603
    %5626 = vxpose.xlu0.b32.start [1/16] %v5444, 128
    %5627 = vxpose.xlu0.b32.cont [2/16] %v5447, 128
    %5628 = vxpose.xlu0.b32.cont [3/16] %v5452, 128
    %5629 = vxpose.xlu0.b32.cont [4/16] %v5455, 128
    %5630 = vxpose.xlu0.b32.cont [5/16] 0.0, 128
    %5631 = vxpose.xlu0.b32.cont [6/16] 0.0, 128
    %5632 = vxpose.xlu0.b32.cont [7/16] 0.0, 128
    %5633 = vxpose.xlu0.b32.cont [8/16] 0.0, 128
    %5634 = vxpose.xlu0.b32.cont [9/16] 0.0, 128
    %5635 = vxpose.xlu0.b32.cont [10/16] 0.0, 128
    %5636 = vxpose.xlu0.b32.cont [11/16] 0.0, 128
    %5637 = vxpose.xlu0.b32.cont [12/16] 0.0, 128
    %5638 = vxpose.xlu0.b32.cont [13/16] 0.0, 128
    %5639 = vxpose.xlu0.b32.cont [14/16] 0.0, 128
    %5640 = vxpose.xlu0.b32.cont [15/16] 0.0, 128
    %5641 = vxpose.xlu0.b32.end [16/16] 0.0, 128
    %v5642 = vpop.trf.xlu0
    %v5643 = vpop.trf.xlu0
    %v5644 = vpop.trf.xlu0
    %v5645 = vpop.trf.xlu0
    %v5646 = vpop.trf.xlu0
    %v5647 = vpop.trf.xlu0
    %v5648 = vpop.trf.xlu0
    %v5649 = vpop.trf.xlu0
    %v5650 = vpop.trf.xlu0
    %v5651 = vpop.trf.xlu0
    %v5652 = vpop.trf.xlu0
    %v5653 = vpop.trf.xlu0
    %v5654 = vpop.trf.xlu0
    %v5655 = vpop.trf.xlu0
    %v5656 = vpop.trf.xlu0
    %v5657 = vpop.trf.xlu0
    %5658 = vxpose.xlu0.b32.start [1/16] %v5642, 128
    %5659 = vxpose.xlu0.b32.cont [2/16] 0.0, 128
    %5660 = vxpose.xlu0.b32.cont [3/16] 0.0, 128
    %5661 = vxpose.xlu0.b32.cont [4/16] 0.0, 128
    %5662 = vxpose.xlu0.b32.cont [5/16] 0.0, 128
    %5663 = vxpose.xlu0.b32.cont [6/16] 0.0, 128
    %5664 = vxpose.xlu0.b32.cont [7/16] 0.0, 128
    %5665 = vxpose.xlu0.b32.cont [8/16] 0.0, 128
    %5666 = vxpose.xlu0.b32.cont [9/16] 0.0, 128
    %5667 = vxpose.xlu0.b32.cont [10/16] 0.0, 128
    %5668 = vxpose.xlu0.b32.cont [11/16] 0.0, 128
    %5669 = vxpose.xlu0.b32.cont [12/16] 0.0, 128
    %5670 = vxpose.xlu0.b32.cont [13/16] 0.0, 128
    %5671 = vxpose.xlu0.b32.cont [14/16] 0.0, 128
    %5672 = vxpose.xlu0.b32.cont [15/16] 0.0, 128
    %5673 = vxpose.xlu0.b32.end [16/16] 0.0, 128
    %v5674 = vpop.trf.xlu0
    %v5675 = vpop.trf.xlu0
    %v5676 = vpop.trf.xlu0
    %v5677 = vpop.trf.xlu0
    %v5678 = vpop.trf.xlu0
    %v5679 = vpop.trf.xlu0
    %v5680 = vpop.trf.xlu0
    %v5681 = vpop.trf.xlu0
    %v5682 = vpop.trf.xlu0
    %v5683 = vpop.trf.xlu0
    %v5684 = vpop.trf.xlu0
    %v5685 = vpop.trf.xlu0
    %v5686 = vpop.trf.xlu0
    %v5687 = vpop.trf.xlu0
    %v5688 = vpop.trf.xlu0
    %v5689 = vpop.trf.xlu0
    %5690 = vxpose.xlu0.b32.start [1/16] %v5643, 128
    %5691 = vxpose.xlu0.b32.cont [2/16] 0.0, 128
    %5692 = vxpose.xlu0.b32.cont [3/16] 0.0, 128
    %5693 = vxpose.xlu0.b32.cont [4/16] 0.0, 128
    %5694 = vxpose.xlu0.b32.cont [5/16] 0.0, 128
    %5695 = vxpose.xlu0.b32.cont [6/16] 0.0, 128
    %5696 = vxpose.xlu0.b32.cont [7/16] 0.0, 128
    %5697 = vxpose.xlu0.b32.cont [8/16] 0.0, 128
    %5698 = vxpose.xlu0.b32.cont [9/16] 0.0, 128
    %5699 = vxpose.xlu0.b32.cont [10/16] 0.0, 128
    %5700 = vxpose.xlu0.b32.cont [11/16] 0.0, 128
    %5701 = vxpose.xlu0.b32.cont [12/16] 0.0, 128
    %5702 = vxpose.xlu0.b32.cont [13/16] 0.0, 128
    %5703 = vxpose.xlu0.b32.cont [14/16] 0.0, 128
    %5704 = vxpose.xlu0.b32.cont [15/16] 0.0, 128
    %5705 = vxpose.xlu0.b32.end [16/16] 0.0, 128
    %v5706 = vpop.trf.xlu0
    %v5707 = vpop.trf.xlu0
    %v5708 = vpop.trf.xlu0
    %v5709 = vpop.trf.xlu0
    %v5710 = vpop.trf.xlu0
    %v5711 = vpop.trf.xlu0
    %v5712 = vpop.trf.xlu0
    %v5713 = vpop.trf.xlu0
    %v5714 = vpop.trf.xlu0
    %v5715 = vpop.trf.xlu0
    %v5716 = vpop.trf.xlu0
    %v5717 = vpop.trf.xlu0
    %v5718 = vpop.trf.xlu0
    %v5719 = vpop.trf.xlu0
    %v5720 = vpop.trf.xlu0
    %v5721 = vpop.trf.xlu0
    %5722 = vxpose.xlu0.b32.start [1/16] %v5644, 128
    %5723 = vxpose.xlu0.b32.cont [2/16] 0.0, 128
    %5724 = vxpose.xlu0.b32.cont [3/16] 0.0, 128
    %5725 = vxpose.xlu0.b32.cont [4/16] 0.0, 128
    %5726 = vxpose.xlu0.b32.cont [5/16] 0.0, 128
    %5727 = vxpose.xlu0.b32.cont [6/16] 0.0, 128
    %5728 = vxpose.xlu0.b32.cont [7/16] 0.0, 128
    %5729 = vxpose.xlu0.b32.cont [8/16] 0.0, 128
    %5730 = vxpose.xlu0.b32.cont [9/16] 0.0, 128
    %5731 = vxpose.xlu0.b32.cont [10/16] 0.0, 128
    %5732 = vxpose.xlu0.b32.cont [11/16] 0.0, 128
    %5733 = vxpose.xlu0.b32.cont [12/16] 0.0, 128
    %5734 = vxpose.xlu0.b32.cont [13/16] 0.0, 128
    %5735 = vxpose.xlu0.b32.cont [14/16] 0.0, 128
    %5736 = vxpose.xlu0.b32.cont [15/16] 0.0, 128
    %5737 = vxpose.xlu0.b32.end [16/16] 0.0, 128
    %v5738 = vpop.trf.xlu0
    %v5739 = vpop.trf.xlu0
    %v5740 = vpop.trf.xlu0
    %v5741 = vpop.trf.xlu0
    %v5742 = vpop.trf.xlu0
    %v5743 = vpop.trf.xlu0
    %v5744 = vpop.trf.xlu0
    %v5745 = vpop.trf.xlu0
    %v5746 = vpop.trf.xlu0
    %v5747 = vpop.trf.xlu0
    %v5748 = vpop.trf.xlu0
    %v5749 = vpop.trf.xlu0
    %v5750 = vpop.trf.xlu0
    %v5751 = vpop.trf.xlu0
    %v5752 = vpop.trf.xlu0
    %v5753 = vpop.trf.xlu0
    %5754 = vxpose.xlu0.b32.start [1/16] %v5645, 128
    %5755 = vxpose.xlu0.b32.cont [2/16] 0.0, 128
    %5756 = vxpose.xlu0.b32.cont [3/16] 0.0, 128
    %5757 = vxpose.xlu0.b32.cont [4/16] 0.0, 128
    %5758 = vxpose.xlu0.b32.cont [5/16] 0.0, 128
    %5759 = vxpose.xlu0.b32.cont [6/16] 0.0, 128
    %5760 = vxpose.xlu0.b32.cont [7/16] 0.0, 128
    %5761 = vxpose.xlu0.b32.cont [8/16] 0.0, 128
    %5762 = vxpose.xlu0.b32.cont [9/16] 0.0, 128
    %5763 = vxpose.xlu0.b32.cont [10/16] 0.0, 128
    %5764 = vxpose.xlu0.b32.cont [11/16] 0.0, 128
    %5765 = vxpose.xlu0.b32.cont [12/16] 0.0, 128
    %5766 = vxpose.xlu0.b32.cont [13/16] 0.0, 128
    %5767 = vxpose.xlu0.b32.cont [14/16] 0.0, 128
    %5768 = vxpose.xlu0.b32.cont [15/16] 0.0, 128
    %5769 = vxpose.xlu0.b32.end [16/16] 0.0, 128
    %v5770 = vpop.trf.xlu0
    %v5771 = vpop.trf.xlu0
    %v5772 = vpop.trf.xlu0
    %v5773 = vpop.trf.xlu0
    %v5774 = vpop.trf.xlu0
    %v5775 = vpop.trf.xlu0
    %v5776 = vpop.trf.xlu0
    %v5777 = vpop.trf.xlu0
    %v5778 = vpop.trf.xlu0
    %v5779 = vpop.trf.xlu0
    %v5780 = vpop.trf.xlu0
    %v5781 = vpop.trf.xlu0
    %v5782 = vpop.trf.xlu0
    %v5783 = vpop.trf.xlu0
    %v5784 = vpop.trf.xlu0
    %v5785 = vpop.trf.xlu0
    %v5786 = vpack.c.bf16 %v5675, %v5674
    %v5787 = vpack.c.bf16 %v5677, %v5676
    %v5788 = vpack.c.bf16 %v5707, %v5706
    %v5789 = vpack.c.bf16 %v5709, %v5708
    %v5790 = vpack.c.bf16 %v5739, %v5738
    %v5791 = vpack.c.bf16 %v5741, %v5740
    %v5792 = vpack.c.bf16 %v5771, %v5770
    %v5793 = vpack.c.bf16 %v5773, %v5772
    %5798 = vrot.lane.b32.xlu0 %v5444, 96
    %v5799 = vpop.permute.xlu0 %5798
    %5800 = vrot.lane.b32.xlu0 %v5447, 96
    %v5801 = vpop.permute.xlu0 %5800
    %5802 = vrot.lane.b32.xlu0 %v5452, 96
    %v5803 = vpop.permute.xlu0 %5802
    %5804 = vrot.lane.b32.xlu0 %v5455, 96
    %v5805 = vpop.permute.xlu0 %5804
    %5810 = vxpose.xlu0.b32.start [1/16] %v5799, 128
    %5811 = vxpose.xlu0.b32.cont [2/16] %v5801, 128
    %5812 = vxpose.xlu0.b32.cont [3/16] %v5803, 128
    %5813 = vxpose.xlu0.b32.cont [4/16] %v5805, 128
    %5814 = vxpose.xlu0.b32.cont [5/16] 0.0, 128
    %5815 = vxpose.xlu0.b32.cont [6/16] 0.0, 128
    %5816 = vxpose.xlu0.b32.cont [7/16] 0.0, 128
    %5817 = vxpose.xlu0.b32.cont [8/16] 0.0, 128
    %5818 = vxpose.xlu0.b32.cont [9/16] 0.0, 128
    %5819 = vxpose.xlu0.b32.cont [10/16] 0.0, 128
    %5820 = vxpose.xlu0.b32.cont [11/16] 0.0, 128
    %5821 = vxpose.xlu0.b32.cont [12/16] 0.0, 128
    %5822 = vxpose.xlu0.b32.cont [13/16] 0.0, 128
    %5823 = vxpose.xlu0.b32.cont [14/16] 0.0, 128
    %5824 = vxpose.xlu0.b32.cont [15/16] 0.0, 128
    %5825 = vxpose.xlu0.b32.end [16/16] 0.0, 128
    %v5826 = vpop.trf.xlu0
    %v5827 = vpop.trf.xlu0
    %v5828 = vpop.trf.xlu0
    %v5829 = vpop.trf.xlu0
    %v5830 = vpop.trf.xlu0
    %v5831 = vpop.trf.xlu0
    %v5832 = vpop.trf.xlu0
    %v5833 = vpop.trf.xlu0
    %v5834 = vpop.trf.xlu0
    %v5835 = vpop.trf.xlu0
    %v5836 = vpop.trf.xlu0
    %v5837 = vpop.trf.xlu0
    %v5838 = vpop.trf.xlu0
    %v5839 = vpop.trf.xlu0
    %v5840 = vpop.trf.xlu0
    %v5841 = vpop.trf.xlu0
    %5842 = vxpose.xlu0.b32.start [1/16] %v5826, 128
    %5843 = vxpose.xlu0.b32.cont [2/16] 0.0, 128
    %5844 = vxpose.xlu0.b32.cont [3/16] 0.0, 128
    %5845 = vxpose.xlu0.b32.cont [4/16] 0.0, 128
    %5846 = vxpose.xlu0.b32.cont [5/16] 0.0, 128
    %5847 = vxpose.xlu0.b32.cont [6/16] 0.0, 128
    %5848 = vxpose.xlu0.b32.cont [7/16] 0.0, 128
    %5849 = vxpose.xlu0.b32.cont [8/16] 0.0, 128
    %5850 = vxpose.xlu0.b32.cont [9/16] 0.0, 128
    %5851 = vxpose.xlu0.b32.cont [10/16] 0.0, 128
    %5852 = vxpose.xlu0.b32.cont [11/16] 0.0, 128
    %5853 = vxpose.xlu0.b32.cont [12/16] 0.0, 128
    %5854 = vxpose.xlu0.b32.cont [13/16] 0.0, 128
    %5855 = vxpose.xlu0.b32.cont [14/16] 0.0, 128
    %5856 = vxpose.xlu0.b32.cont [15/16] 0.0, 128
    %5857 = vxpose.xlu0.b32.end [16/16] 0.0, 128
    %v5858 = vpop.trf.xlu0
    %v5859 = vpop.trf.xlu0
    %v5860 = vpop.trf.xlu0
    %v5861 = vpop.trf.xlu0
    %v5862 = vpop.trf.xlu0
    %v5863 = vpop.trf.xlu0
    %v5864 = vpop.trf.xlu0
    %v5865 = vpop.trf.xlu0
    %v5866 = vpop.trf.xlu0
    %v5867 = vpop.trf.xlu0
    %v5868 = vpop.trf.xlu0
    %v5869 = vpop.trf.xlu0
    %v5870 = vpop.trf.xlu0
    %v5871 = vpop.trf.xlu0
    %v5872 = vpop.trf.xlu0
    %v5873 = vpop.trf.xlu0
    %5874 = vxpose.xlu0.b32.start [1/16] %v5827, 128
    %5875 = vxpose.xlu0.b32.cont [2/16] 0.0, 128
    %5876 = vxpose.xlu0.b32.cont [3/16] 0.0, 128
    %5877 = vxpose.xlu0.b32.cont [4/16] 0.0, 128
    %5878 = vxpose.xlu0.b32.cont [5/16] 0.0, 128
    %5879 = vxpose.xlu0.b32.cont [6/16] 0.0, 128
    %5880 = vxpose.xlu0.b32.cont [7/16] 0.0, 128
    %5881 = vxpose.xlu0.b32.cont [8/16] 0.0, 128
    %5882 = vxpose.xlu0.b32.cont [9/16] 0.0, 128
    %5883 = vxpose.xlu0.b32.cont [10/16] 0.0, 128
    %5884 = vxpose.xlu0.b32.cont [11/16] 0.0, 128
    %5885 = vxpose.xlu0.b32.cont [12/16] 0.0, 128
    %5886 = vxpose.xlu0.b32.cont [13/16] 0.0, 128
    %5887 = vxpose.xlu0.b32.cont [14/16] 0.0, 128
    %5888 = vxpose.xlu0.b32.cont [15/16] 0.0, 128
    %5889 = vxpose.xlu0.b32.end [16/16] 0.0, 128
    %v5890 = vpop.trf.xlu0
    %v5891 = vpop.trf.xlu0
    %v5892 = vpop.trf.xlu0
    %v5893 = vpop.trf.xlu0
    %v5894 = vpop.trf.xlu0
    %v5895 = vpop.trf.xlu0
    %v5896 = vpop.trf.xlu0
    %v5897 = vpop.trf.xlu0
    %v5898 = vpop.trf.xlu0
    %v5899 = vpop.trf.xlu0
    %v5900 = vpop.trf.xlu0
    %v5901 = vpop.trf.xlu0
    %v5902 = vpop.trf.xlu0
    %v5903 = vpop.trf.xlu0
    %v5904 = vpop.trf.xlu0
    %v5905 = vpop.trf.xlu0
    %5906 = vxpose.xlu0.b32.start [1/16] %v5828, 128
    %5907 = vxpose.xlu0.b32.cont [2/16] 0.0, 128
    %5908 = vxpose.xlu0.b32.cont [3/16] 0.0, 128
    %5909 = vxpose.xlu0.b32.cont [4/16] 0.0, 128
    %5910 = vxpose.xlu0.b32.cont [5/16] 0.0, 128
    %5911 = vxpose.xlu0.b32.cont [6/16] 0.0, 128
    %5912 = vxpose.xlu0.b32.cont [7/16] 0.0, 128
    %5913 = vxpose.xlu0.b32.cont [8/16] 0.0, 128
    %5914 = vxpose.xlu0.b32.cont [9/16] 0.0, 128
    %5915 = vxpose.xlu0.b32.cont [10/16] 0.0, 128
    %5916 = vxpose.xlu0.b32.cont [11/16] 0.0, 128
    %5917 = vxpose.xlu0.b32.cont [12/16] 0.0, 128
    %5918 = vxpose.xlu0.b32.cont [13/16] 0.0, 128
    %5919 = vxpose.xlu0.b32.cont [14/16] 0.0, 128
    %5920 = vxpose.xlu0.b32.cont [15/16] 0.0, 128
    %5921 = vxpose.xlu0.b32.end [16/16] 0.0, 128
    %v5922 = vpop.trf.xlu0
    %v5923 = vpop.trf.xlu0
    %v5924 = vpop.trf.xlu0
    %v5925 = vpop.trf.xlu0
    %v5926 = vpop.trf.xlu0
    %v5927 = vpop.trf.xlu0
    %v5928 = vpop.trf.xlu0
    %v5929 = vpop.trf.xlu0
    %v5930 = vpop.trf.xlu0
    %v5931 = vpop.trf.xlu0
    %v5932 = vpop.trf.xlu0
    %v5933 = vpop.trf.xlu0
    %v5934 = vpop.trf.xlu0
    %v5935 = vpop.trf.xlu0
    %v5936 = vpop.trf.xlu0
    %v5937 = vpop.trf.xlu0
    %5938 = vxpose.xlu0.b32.start [1/16] %v5829, 128
    %5939 = vxpose.xlu0.b32.cont [2/16] 0.0, 128
    %5940 = vxpose.xlu0.b32.cont [3/16] 0.0, 128
    %5941 = vxpose.xlu0.b32.cont [4/16] 0.0, 128
    %5942 = vxpose.xlu0.b32.cont [5/16] 0.0, 128
    %5943 = vxpose.xlu0.b32.cont [6/16] 0.0, 128
    %5944 = vxpose.xlu0.b32.cont [7/16] 0.0, 128
    %5945 = vxpose.xlu0.b32.cont [8/16] 0.0, 128
    %5946 = vxpose.xlu0.b32.cont [9/16] 0.0, 128
    %5947 = vxpose.xlu0.b32.cont [10/16] 0.0, 128
    %5948 = vxpose.xlu0.b32.cont [11/16] 0.0, 128
    %5949 = vxpose.xlu0.b32.cont [12/16] 0.0, 128
    %5950 = vxpose.xlu0.b32.cont [13/16] 0.0, 128
    %5951 = vxpose.xlu0.b32.cont [14/16] 0.0, 128
    %5952 = vxpose.xlu0.b32.cont [15/16] 0.0, 128
    %5953 = vxpose.xlu0.b32.end [16/16] 0.0, 128
    %v5954 = vpop.trf.xlu0
    %v5955 = vpop.trf.xlu0
    %v5956 = vpop.trf.xlu0
    %v5957 = vpop.trf.xlu0
    %v5958 = vpop.trf.xlu0
    %v5959 = vpop.trf.xlu0
    %v5960 = vpop.trf.xlu0
    %v5961 = vpop.trf.xlu0
    %v5962 = vpop.trf.xlu0
    %v5963 = vpop.trf.xlu0
    %v5964 = vpop.trf.xlu0
    %v5965 = vpop.trf.xlu0
    %v5966 = vpop.trf.xlu0
    %v5967 = vpop.trf.xlu0
    %v5968 = vpop.trf.xlu0
    %v5969 = vpop.trf.xlu0
    %v5970 = vpack.c.bf16 %v5859, %v5858
    %v5971 = vpack.c.bf16 %v5861, %v5860
    %v5972 = vpack.c.bf16 %v5891, %v5890
    %v5973 = vpack.c.bf16 %v5893, %v5892
    %v5974 = vpack.c.bf16 %v5923, %v5922
    %v5975 = vpack.c.bf16 %v5925, %v5924
    %v5976 = vpack.c.bf16 %v5955, %v5954
    %v5977 = vpack.c.bf16 %v5957, %v5956
    %v5979 = vsel %vm625, %v5618, 0
    %v5982 = vsel %vm625, %v5786, 0
    %5984 = vmatprep.subr.bf16.mxu0 0
    %5985 = vmatpush1.bf16.xpose.msra.mxu0 %v5982
    %5986 = vmatprep.subr.bf16.mxu0 0
    %5987 = vmatpush1.bf16.xpose.msra.mxu0 0
    %5988 = vmatprep.subr.bf16.mxu0 0
    %5989 = vmatpush1.bf16.xpose.msra.mxu0 0
    %5990 = vmatprep.subr.bf16.mxu0 0
    %5991 = vmatpush1.bf16.xpose.msra.mxu0 0
    %5992 = vmatprep.subr.bf16.mxu0 0
    %5993 = vmatpush1.bf16.xpose.msra.mxu0 0
    %5994 = vmatprep.subr.bf16.mxu0 0
    %5995 = vmatpush1.bf16.xpose.msra.mxu0 0
    %5996 = vmatprep.subr.bf16.mxu0 0
    %5997 = vmatpush1.bf16.xpose.msra.mxu0 0
    %5998 = vmatprep.subr.bf16.mxu0 0
    %5999 = vmatpush1.bf16.xpose.msra.mxu0 0
    %6000 = vmatprep.subr.bf16.mxu0 0
    %6001 = vmatpush1.bf16.xpose.msra.mxu0 0
    %6002 = vmatprep.subr.bf16.mxu0 0
    %6003 = vmatpush1.bf16.xpose.msra.mxu0 0
    %6004 = vmatprep.subr.bf16.mxu0 0
    %6005 = vmatpush1.bf16.xpose.msra.mxu0 0
    %6006 = vmatprep.subr.bf16.mxu0 0
    %6007 = vmatpush1.bf16.xpose.msra.mxu0 0
    %6008 = vmatprep.subr.bf16.mxu0 0
    %6009 = vmatpush1.bf16.xpose.msra.mxu0 0
    %6010 = vmatprep.subr.bf16.mxu0 0
    %6011 = vmatpush1.bf16.xpose.msra.mxu0 0
    %6012 = vmatprep.subr.bf16.mxu0 0
    %6013 = vmatpush1.bf16.xpose.msra.mxu0 0
    %6014 = vmatprep.subr.bf16.mxu0 0
    %6015 = vmatpush1.bf16.xpose.msra.mxu0 0
    %6016 = vmatprep.mubr.bf16.mxu0 0
    %6017 = vmatmul.mubr.bf16.gmra.mrb[0].mxu0 %v5979
    %v6018 = vpop.f32.mrb[0].mxu0
    %v6019 = vadd.f32 %v38, %v6018
    %v6020 = vpop.f32.mrb[0].mxu0
    %v6021 = vpop.f32.mrb[0].mxu0
    %v6022 = vpop.f32.mrb[0].mxu0
    %6023 = vdwg.mxu0
    %v6025 = vsel %vm625, %v5619, 0
    %v6028 = vsel %vm625, %v5787, 0
    %6030 = vmatprep.subr.bf16.mxu0 0
    %6031 = vmatpush1.bf16.xpose.msra.mxu0 %v6028
    %6032 = vmatprep.subr.bf16.mxu0 0
    %6033 = vmatpush1.bf16.xpose.msra.mxu0 0
    %6034 = vmatprep.subr.bf16.mxu0 0
    %6035 = vmatpush1.bf16.xpose.msra.mxu0 0
    %6036 = vmatprep.subr.bf16.mxu0 0
    %6037 = vmatpush1.bf16.xpose.msra.mxu0 0
    %6038 = vmatprep.subr.bf16.mxu0 0
    %6039 = vmatpush1.bf16.xpose.msra.mxu0 0
    %6040 = vmatprep.subr.bf16.mxu0 0
    %6041 = vmatpush1.bf16.xpose.msra.mxu0 0
    %6042 = vmatprep.subr.bf16.mxu0 0
    %6043 = vmatpush1.bf16.xpose.msra.mxu0 0
    %6044 = vmatprep.subr.bf16.mxu0 0
    %6045 = vmatpush1.bf16.xpose.msra.mxu0 0
    %6046 = vmatprep.subr.bf16.mxu0 0
    %6047 = vmatpush1.bf16.xpose.msra.mxu0 0
    %6048 = vmatprep.subr.bf16.mxu0 0
    %6049 = vmatpush1.bf16.xpose.msra.mxu0 0
    %6050 = vmatprep.subr.bf16.mxu0 0
    %6051 = vmatpush1.bf16.xpose.msra.mxu0 0
    %6052 = vmatprep.subr.bf16.mxu0 0
    %6053 = vmatpush1.bf16.xpose.msra.mxu0 0
    %6054 = vmatprep.subr.bf16.mxu0 0
    %6055 = vmatpush1.bf16.xpose.msra.mxu0 0
    %6056 = vmatprep.subr.bf16.mxu0 0
    %6057 = vmatpush1.bf16.xpose.msra.mxu0 0
    %6058 = vmatprep.subr.bf16.mxu0 0
    %6059 = vmatpush1.bf16.xpose.msra.mxu0 0
    %6060 = vmatprep.subr.bf16.mxu0 0
    %6061 = vmatpush1.bf16.xpose.msra.mxu0 0
    %6062 = vmatprep.mubr.bf16.mxu0 0
    %6063 = vmatmul.mubr.bf16.gmra.mrb[0].mxu0 %v6025
    %v6064 = vpop.f32.mrb[0].mxu0
    %v6065 = vadd.f32 %v39, %v6064
    %v6066 = vpop.f32.mrb[0].mxu0
    %v6067 = vpop.f32.mrb[0].mxu0
    %v6068 = vpop.f32.mrb[0].mxu0
    %6069 = vdwg.mxu0
    %v6071 = vsel %vm625, %v5620, 0
    %v6074 = vsel %vm625, %v5788, 0
    %6076 = vmatprep.subr.bf16.mxu0 0
    %6077 = vmatpush1.bf16.xpose.msra.mxu0 %v6074
    %6078 = vmatprep.subr.bf16.mxu0 0
    %6079 = vmatpush1.bf16.xpose.msra.mxu0 0
    %6080 = vmatprep.subr.bf16.mxu0 0
    %6081 = vmatpush1.bf16.xpose.msra.mxu0 0
    %6082 = vmatprep.subr.bf16.mxu0 0
    %6083 = vmatpush1.bf16.xpose.msra.mxu0 0
    %6084 = vmatprep.subr.bf16.mxu0 0
    %6085 = vmatpush1.bf16.xpose.msra.mxu0 0
    %6086 = vmatprep.subr.bf16.mxu0 0
    %6087 = vmatpush1.bf16.xpose.msra.mxu0 0
    %6088 = vmatprep.subr.bf16.mxu0 0
    %6089 = vmatpush1.bf16.xpose.msra.mxu0 0
    %6090 = vmatprep.subr.bf16.mxu0 0
    %6091 = vmatpush1.bf16.xpose.msra.mxu0 0
    %6092 = vmatprep.subr.bf16.mxu0 0
    %6093 = vmatpush1.bf16.xpose.msra.mxu0 0
    %6094 = vmatprep.subr.bf16.mxu0 0
    %6095 = vmatpush1.bf16.xpose.msra.mxu0 0
    %6096 = vmatprep.subr.bf16.mxu0 0
    %6097 = vmatpush1.bf16.xpose.msra.mxu0 0
    %6098 = vmatprep.subr.bf16.mxu0 0
    %6099 = vmatpush1.bf16.xpose.msra.mxu0 0
    %6100 = vmatprep.subr.bf16.mxu0 0
    %6101 = vmatpush1.bf16.xpose.msra.mxu0 0
    %6102 = vmatprep.subr.bf16.mxu0 0
    %6103 = vmatpush1.bf16.xpose.msra.mxu0 0
    %6104 = vmatprep.subr.bf16.mxu0 0
    %6105 = vmatpush1.bf16.xpose.msra.mxu0 0
    %6106 = vmatprep.subr.bf16.mxu0 0
    %6107 = vmatpush1.bf16.xpose.msra.mxu0 0
    %6108 = vmatprep.mubr.bf16.mxu0 0
    %6109 = vmatmul.mubr.bf16.gmra.mrb[0].mxu0 %v6071
    %v6110 = vpop.f32.mrb[0].mxu0
    %v6111 = vadd.f32 %v38, %v6110
    %v6112 = vpop.f32.mrb[0].mxu0
    %v6113 = vpop.f32.mrb[0].mxu0
    %v6114 = vpop.f32.mrb[0].mxu0
    %6115 = vdwg.mxu0
    %v6117 = vsel %vm625, %v5621, 0
    %v6120 = vsel %vm625, %v5789, 0
    %6122 = vmatprep.subr.bf16.mxu0 0
    %6123 = vmatpush1.bf16.xpose.msra.mxu0 %v6120
    %6124 = vmatprep.subr.bf16.mxu0 0
    %6125 = vmatpush1.bf16.xpose.msra.mxu0 0
    %6126 = vmatprep.subr.bf16.mxu0 0
    %6127 = vmatpush1.bf16.xpose.msra.mxu0 0
    %6128 = vmatprep.subr.bf16.mxu0 0
    %6129 = vmatpush1.bf16.xpose.msra.mxu0 0
    %6130 = vmatprep.subr.bf16.mxu0 0
    %6131 = vmatpush1.bf16.xpose.msra.mxu0 0
    %6132 = vmatprep.subr.bf16.mxu0 0
    %6133 = vmatpush1.bf16.xpose.msra.mxu0 0
    %6134 = vmatprep.subr.bf16.mxu0 0
    %6135 = vmatpush1.bf16.xpose.msra.mxu0 0
    %6136 = vmatprep.subr.bf16.mxu0 0
    %6137 = vmatpush1.bf16.xpose.msra.mxu0 0
    %6138 = vmatprep.subr.bf16.mxu0 0
    %6139 = vmatpush1.bf16.xpose.msra.mxu0 0
    %6140 = vmatprep.subr.bf16.mxu0 0
    %6141 = vmatpush1.bf16.xpose.msra.mxu0 0
    %6142 = vmatprep.subr.bf16.mxu0 0
    %6143 = vmatpush1.bf16.xpose.msra.mxu0 0
    %6144 = vmatprep.subr.bf16.mxu0 0
    %6145 = vmatpush1.bf16.xpose.msra.mxu0 0
    %6146 = vmatprep.subr.bf16.mxu0 0
    %6147 = vmatpush1.bf16.xpose.msra.mxu0 0
    %6148 = vmatprep.subr.bf16.mxu0 0
    %6149 = vmatpush1.bf16.xpose.msra.mxu0 0
    %6150 = vmatprep.subr.bf16.mxu0 0
    %6151 = vmatpush1.bf16.xpose.msra.mxu0 0
    %6152 = vmatprep.subr.bf16.mxu0 0
    %6153 = vmatpush1.bf16.xpose.msra.mxu0 0
    %6154 = vmatprep.mubr.bf16.mxu0 0
    %6155 = vmatmul.mubr.bf16.gmra.mrb[0].mxu0 %v6117
    %v6156 = vpop.f32.mrb[0].mxu0
    %v6157 = vadd.f32 %v39, %v6156
    %v6158 = vpop.f32.mrb[0].mxu0
    %v6159 = vpop.f32.mrb[0].mxu0
    %v6160 = vpop.f32.mrb[0].mxu0
    %6161 = vdwg.mxu0
    %v6163 = vsel %vm625, %v5622, 0
    %v6166 = vsel %vm625, %v5790, 0
    %6168 = vmatprep.subr.bf16.mxu0 0
    %6169 = vmatpush1.bf16.xpose.msra.mxu0 %v6166
    %6170 = vmatprep.subr.bf16.mxu0 0
    %6171 = vmatpush1.bf16.xpose.msra.mxu0 0
    %6172 = vmatprep.subr.bf16.mxu0 0
    %6173 = vmatpush1.bf16.xpose.msra.mxu0 0
    %6174 = vmatprep.subr.bf16.mxu0 0
    %6175 = vmatpush1.bf16.xpose.msra.mxu0 0
    %6176 = vmatprep.subr.bf16.mxu0 0
    %6177 = vmatpush1.bf16.xpose.msra.mxu0 0
    %6178 = vmatprep.subr.bf16.mxu0 0
    %6179 = vmatpush1.bf16.xpose.msra.mxu0 0
    %6180 = vmatprep.subr.bf16.mxu0 0
    %6181 = vmatpush1.bf16.xpose.msra.mxu0 0
    %6182 = vmatprep.subr.bf16.mxu0 0
    %6183 = vmatpush1.bf16.xpose.msra.mxu0 0
    %6184 = vmatprep.subr.bf16.mxu0 0
    %6185 = vmatpush1.bf16.xpose.msra.mxu0 0
    %6186 = vmatprep.subr.bf16.mxu0 0
    %6187 = vmatpush1.bf16.xpose.msra.mxu0 0
    %6188 = vmatprep.subr.bf16.mxu0 0
    %6189 = vmatpush1.bf16.xpose.msra.mxu0 0
    %6190 = vmatprep.subr.bf16.mxu0 0
    %6191 = vmatpush1.bf16.xpose.msra.mxu0 0
    %6192 = vmatprep.subr.bf16.mxu0 0
    %6193 = vmatpush1.bf16.xpose.msra.mxu0 0
    %6194 = vmatprep.subr.bf16.mxu0 0
    %6195 = vmatpush1.bf16.xpose.msra.mxu0 0
    %6196 = vmatprep.subr.bf16.mxu0 0
    %6197 = vmatpush1.bf16.xpose.msra.mxu0 0
    %6198 = vmatprep.subr.bf16.mxu0 0
    %6199 = vmatpush1.bf16.xpose.msra.mxu0 0
    %6200 = vmatprep.mubr.bf16.mxu0 0
    %6201 = vmatmul.mubr.bf16.gmra.mrb[0].mxu0 %v6163
    %v6202 = vpop.f32.mrb[0].mxu0
    %v6203 = vadd.f32 %v38, %v6202
    %v6204 = vpop.f32.mrb[0].mxu0
    %v6205 = vpop.f32.mrb[0].mxu0
    %v6206 = vpop.f32.mrb[0].mxu0
    %6207 = vdwg.mxu0
    %v6209 = vsel %vm625, %v5623, 0
    %v6212 = vsel %vm625, %v5791, 0
    %6214 = vmatprep.subr.bf16.mxu0 0
    %6215 = vmatpush1.bf16.xpose.msra.mxu0 %v6212
    %6216 = vmatprep.subr.bf16.mxu0 0
    %6217 = vmatpush1.bf16.xpose.msra.mxu0 0
    %6218 = vmatprep.subr.bf16.mxu0 0
    %6219 = vmatpush1.bf16.xpose.msra.mxu0 0
    %6220 = vmatprep.subr.bf16.mxu0 0
    %6221 = vmatpush1.bf16.xpose.msra.mxu0 0
    %6222 = vmatprep.subr.bf16.mxu0 0
    %6223 = vmatpush1.bf16.xpose.msra.mxu0 0
    %6224 = vmatprep.subr.bf16.mxu0 0
    %6225 = vmatpush1.bf16.xpose.msra.mxu0 0
    %6226 = vmatprep.subr.bf16.mxu0 0
    %6227 = vmatpush1.bf16.xpose.msra.mxu0 0
    %6228 = vmatprep.subr.bf16.mxu0 0
    %6229 = vmatpush1.bf16.xpose.msra.mxu0 0
    %6230 = vmatprep.subr.bf16.mxu0 0
    %6231 = vmatpush1.bf16.xpose.msra.mxu0 0
    %6232 = vmatprep.subr.bf16.mxu0 0
    %6233 = vmatpush1.bf16.xpose.msra.mxu0 0
    %6234 = vmatprep.subr.bf16.mxu0 0
    %6235 = vmatpush1.bf16.xpose.msra.mxu0 0
    %6236 = vmatprep.subr.bf16.mxu0 0
    %6237 = vmatpush1.bf16.xpose.msra.mxu0 0
    %6238 = vmatprep.subr.bf16.mxu0 0
    %6239 = vmatpush1.bf16.xpose.msra.mxu0 0
    %6240 = vmatprep.subr.bf16.mxu0 0
    %6241 = vmatpush1.bf16.xpose.msra.mxu0 0
    %6242 = vmatprep.subr.bf16.mxu0 0
    %6243 = vmatpush1.bf16.xpose.msra.mxu0 0
    %6244 = vmatprep.subr.bf16.mxu0 0
    %6245 = vmatpush1.bf16.xpose.msra.mxu0 0
    %6246 = vmatprep.mubr.bf16.mxu0 0
    %6247 = vmatmul.mubr.bf16.gmra.mrb[0].mxu0 %v6209
    %v6248 = vpop.f32.mrb[0].mxu0
    %v6249 = vadd.f32 %v39, %v6248
    %v6250 = vpop.f32.mrb[0].mxu0
    %v6251 = vpop.f32.mrb[0].mxu0
    %v6252 = vpop.f32.mrb[0].mxu0
    %6253 = vdwg.mxu0
    %v6255 = vsel %vm625, %v5624, 0
    %v6258 = vsel %vm625, %v5792, 0
    %6260 = vmatprep.subr.bf16.mxu0 0
    %6261 = vmatpush1.bf16.xpose.msra.mxu0 %v6258
    %6262 = vmatprep.subr.bf16.mxu0 0
    %6263 = vmatpush1.bf16.xpose.msra.mxu0 0
    %6264 = vmatprep.subr.bf16.mxu0 0
    %6265 = vmatpush1.bf16.xpose.msra.mxu0 0
    %6266 = vmatprep.subr.bf16.mxu0 0
    %6267 = vmatpush1.bf16.xpose.msra.mxu0 0
    %6268 = vmatprep.subr.bf16.mxu0 0
    %6269 = vmatpush1.bf16.xpose.msra.mxu0 0
    %6270 = vmatprep.subr.bf16.mxu0 0
    %6271 = vmatpush1.bf16.xpose.msra.mxu0 0
    %6272 = vmatprep.subr.bf16.mxu0 0
    %6273 = vmatpush1.bf16.xpose.msra.mxu0 0
    %6274 = vmatprep.subr.bf16.mxu0 0
    %6275 = vmatpush1.bf16.xpose.msra.mxu0 0
    %6276 = vmatprep.subr.bf16.mxu0 0
    %6277 = vmatpush1.bf16.xpose.msra.mxu0 0
    %6278 = vmatprep.subr.bf16.mxu0 0
    %6279 = vmatpush1.bf16.xpose.msra.mxu0 0
    %6280 = vmatprep.subr.bf16.mxu0 0
    %6281 = vmatpush1.bf16.xpose.msra.mxu0 0
    %6282 = vmatprep.subr.bf16.mxu0 0
    %6283 = vmatpush1.bf16.xpose.msra.mxu0 0
    %6284 = vmatprep.subr.bf16.mxu0 0
    %6285 = vmatpush1.bf16.xpose.msra.mxu0 0
    %6286 = vmatprep.subr.bf16.mxu0 0
    %6287 = vmatpush1.bf16.xpose.msra.mxu0 0
    %6288 = vmatprep.subr.bf16.mxu0 0
    %6289 = vmatpush1.bf16.xpose.msra.mxu0 0
    %6290 = vmatprep.subr.bf16.mxu0 0
    %6291 = vmatpush1.bf16.xpose.msra.mxu0 0
    %6292 = vmatprep.mubr.bf16.mxu0 0
    %6293 = vmatmul.mubr.bf16.gmra.mrb[0].mxu0 %v6255
    %v6294 = vpop.f32.mrb[0].mxu0
    %v6295 = vadd.f32 %v38, %v6294
    %v6296 = vpop.f32.mrb[0].mxu0
    %v6297 = vpop.f32.mrb[0].mxu0
    %v6298 = vpop.f32.mrb[0].mxu0
    %6299 = vdwg.mxu0
    %v6301 = vsel %vm625, %v5625, 0
    %v6304 = vsel %vm625, %v5793, 0
    %6306 = vmatprep.subr.bf16.mxu0 0
    %6307 = vmatpush1.bf16.xpose.msra.mxu0 %v6304
    %6308 = vmatprep.subr.bf16.mxu0 0
    %6309 = vmatpush1.bf16.xpose.msra.mxu0 0
    %6310 = vmatprep.subr.bf16.mxu0 0
    %6311 = vmatpush1.bf16.xpose.msra.mxu0 0
    %6312 = vmatprep.subr.bf16.mxu0 0
    %6313 = vmatpush1.bf16.xpose.msra.mxu0 0
    %6314 = vmatprep.subr.bf16.mxu0 0
    %6315 = vmatpush1.bf16.xpose.msra.mxu0 0
    %6316 = vmatprep.subr.bf16.mxu0 0
    %6317 = vmatpush1.bf16.xpose.msra.mxu0 0
    %6318 = vmatprep.subr.bf16.mxu0 0
    %6319 = vmatpush1.bf16.xpose.msra.mxu0 0
    %6320 = vmatprep.subr.bf16.mxu0 0
    %6321 = vmatpush1.bf16.xpose.msra.mxu0 0
    %6322 = vmatprep.subr.bf16.mxu0 0
    %6323 = vmatpush1.bf16.xpose.msra.mxu0 0
    %6324 = vmatprep.subr.bf16.mxu0 0
    %6325 = vmatpush1.bf16.xpose.msra.mxu0 0
    %6326 = vmatprep.subr.bf16.mxu0 0
    %6327 = vmatpush1.bf16.xpose.msra.mxu0 0
    %6328 = vmatprep.subr.bf16.mxu0 0
    %6329 = vmatpush1.bf16.xpose.msra.mxu0 0
    %6330 = vmatprep.subr.bf16.mxu0 0
    %6331 = vmatpush1.bf16.xpose.msra.mxu0 0
    %6332 = vmatprep.subr.bf16.mxu0 0
    %6333 = vmatpush1.bf16.xpose.msra.mxu0 0
    %6334 = vmatprep.subr.bf16.mxu0 0
    %6335 = vmatpush1.bf16.xpose.msra.mxu0 0
    %6336 = vmatprep.subr.bf16.mxu0 0
    %6337 = vmatpush1.bf16.xpose.msra.mxu0 0
    %6338 = vmatprep.mubr.bf16.mxu0 0
    %6339 = vmatmul.mubr.bf16.gmra.mrb[0].mxu0 %v6301
    %v6340 = vpop.f32.mrb[0].mxu0
    %v6341 = vadd.f32 %v39, %v6340
    %v6342 = vpop.f32.mrb[0].mxu0
    %v6343 = vpop.f32.mrb[0].mxu0
    %v6344 = vpop.f32.mrb[0].mxu0
    %6345 = vdwg.mxu0
    %v6346 = vsel %vm2747, %v6019, -inf
    %6347 = vmax.xlane.f32.xlu0 %v6346
    %v6348 = vpop.xlane.xlu0 %6347
    %v6349 = vsel %vm2747, %v6065, -inf
    %6350 = vmax.xlane.f32.xlu0 %v6349
    %v6351 = vpop.xlane.xlu0 %6350
    %v6352 = vsel %vm2747, %v6111, -inf
    %6353 = vmax.xlane.f32.xlu0 %v6352
    %v6354 = vpop.xlane.xlu0 %6353
    %v6355 = vsel %vm2747, %v6157, -inf
    %6356 = vmax.xlane.f32.xlu0 %v6355
    %v6357 = vpop.xlane.xlu0 %6356
    %v6358 = vsel %vm2747, %v6203, -inf
    %6359 = vmax.xlane.f32.xlu0 %v6358
    %v6360 = vpop.xlane.xlu0 %6359
    %v6361 = vsel %vm2747, %v6249, -inf
    %6362 = vmax.xlane.f32.xlu0 %v6361
    %v6363 = vpop.xlane.xlu0 %6362
    %v6364 = vsel %vm2747, %v6295, -inf
    %6365 = vmax.xlane.f32.xlu0 %v6364
    %v6366 = vpop.xlane.xlu0 %6365
    %v6367 = vsel %vm2747, %v6341, -inf
    %6368 = vmax.xlane.f32.xlu0 %v6367
    %v6369 = vpop.xlane.xlu0 %6368
    %v6370 = vsub.f32 %v6019, %v6348
    %v6371 = vsub.f32 %v6065, %v6351
    %v6372 = vsub.f32 %v6111, %v6354
    %v6373 = vsub.f32 %v6157, %v6357
    %v6374 = vsub.f32 %v6203, %v6360
    %v6375 = vsub.f32 %v6249, %v6363
    %v6376 = vsub.f32 %v6295, %v6366
    %v6377 = vsub.f32 %v6341, %v6369
    %v6378 = vmul.f32 %v6370, 1.442695
    %v6379 = vpow.pop %v6378
    %v6380 = vmul.f32 %v6371, 1.442695
    %v6381 = vpow.pop %v6380
    %v6382 = vmul.f32 %v6372, 1.442695
    %v6383 = vpow.pop %v6382
    %v6384 = vmul.f32 %v6373, 1.442695
    %v6385 = vpow.pop %v6384
    %v6386 = vmul.f32 %v6374, 1.442695
    %v6387 = vpow.pop %v6386
    %v6388 = vmul.f32 %v6375, 1.442695
    %v6389 = vpow.pop %v6388
    %v6390 = vmul.f32 %v6376, 1.442695
    %v6391 = vpow.pop %v6390
    %v6392 = vmul.f32 %v6377, 1.442695
    %v6393 = vpow.pop %v6392
    %v6394 = vsel %vm2747, %v6379, 0.0
    %6395 = vadd.xlane.f32.xlu0 %v6394
    %v6396 = vpop.xlane.xlu0 %6395
    %v6397 = vsel %vm2747, %v6381, 0.0
    %6398 = vadd.xlane.f32.xlu0 %v6397
    %v6399 = vpop.xlane.xlu0 %6398
    %v6400 = vsel %vm2747, %v6383, 0.0
    %6401 = vadd.xlane.f32.xlu0 %v6400
    %v6402 = vpop.xlane.xlu0 %6401
    %v6403 = vsel %vm2747, %v6385, 0.0
    %6404 = vadd.xlane.f32.xlu0 %v6403
    %v6405 = vpop.xlane.xlu0 %6404
    %v6406 = vsel %vm2747, %v6387, 0.0
    %6407 = vadd.xlane.f32.xlu0 %v6406
    %v6408 = vpop.xlane.xlu0 %6407
    %v6409 = vsel %vm2747, %v6389, 0.0
    %6410 = vadd.xlane.f32.xlu0 %v6409
    %v6411 = vpop.xlane.xlu0 %6410
    %v6412 = vsel %vm2747, %v6391, 0.0
    %6413 = vadd.xlane.f32.xlu0 %v6412
    %v6414 = vpop.xlane.xlu0 %6413
    %v6415 = vsel %vm2747, %v6393, 0.0
    %6416 = vadd.xlane.f32.xlu0 %v6415
    %v6417 = vpop.xlane.xlu0 %6416
    %v6418 = vrcp.pop %v6396
    %v6419 = vrcp.pop %v6399
    %v6420 = vrcp.pop %v6402
    %v6421 = vrcp.pop %v6405
    %v6422 = vrcp.pop %v6408
    %v6423 = vrcp.pop %v6411
    %v6424 = vrcp.pop %v6414
    %v6425 = vrcp.pop %v6417
    %v6426 = vmul.f32 %v6379, %v6418
    %v6427 = vmul.f32 %v6381, %v6419
    %v6428 = vmul.f32 %v6383, %v6420
    %v6429 = vmul.f32 %v6385, %v6421
    %v6430 = vmul.f32 %v6387, %v6422
    %v6431 = vmul.f32 %v6389, %v6423
    %v6432 = vmul.f32 %v6391, %v6424
    %v6433 = vmul.f32 %v6393, %v6425
    %6434 = vst.msk [vmem:[#allocation4] sm:$0xff] %vm2747, %v6426
    %6435 = vst.msk [vmem:[#allocation4 + $0x8] sm:$0xff] %vm2747, %v6428
    %6436 = vst.msk [vmem:[#allocation4 + $0x10] sm:$0xff] %vm2747, %v6430
    %6437 = vst.msk [vmem:[#allocation4 + $0x18] sm:$0xff] %vm2747, %v6432
    %6438 = vst.msk [vmem:[#allocation4 + $0x20] sm:$0xff] %vm2747, %v6427
    %6439 = vst.msk [vmem:[#allocation4 + $0x28] sm:$0xff] %vm2747, %v6429
    %6440 = vst.msk [vmem:[#allocation4 + $0x30] sm:$0xff] %vm2747, %v6431
    %6441 = vst.msk [vmem:[#allocation4 + $0x38] sm:$0xff] %vm2747, %v6433
    %v6442 = vpack.c.bf16 %v6426, %v6426
    %v6443 = vpack.c.bf16 %v6427, %v6427
    %v6444 = vpack.c.bf16 %v6428, %v6428
    %v6445 = vpack.c.bf16 %v6429, %v6429
    %v6446 = vpack.c.bf16 %v6430, %v6430
    %v6447 = vpack.c.bf16 %v6431, %v6431
    %v6448 = vpack.c.bf16 %v6432, %v6432
    %v6449 = vpack.c.bf16 %v6433, %v6433
    %v6451 = vsel %vm2747, %v6442, 0
    %6453 = vmatprep.subr.bf16.mxu0 0
    %6454 = vmatpush1.bf16.msra.mxu0 %v5970
    %6455 = vmatprep.subr.bf16.mxu0 0
    %6456 = vmatpush1.bf16.msra.mxu0 0
    %6457 = vmatprep.subr.bf16.mxu0 0
    %6458 = vmatpush1.bf16.msra.mxu0 0
    %6459 = vmatprep.subr.bf16.mxu0 0
    %6460 = vmatpush1.bf16.msra.mxu0 0
    %6461 = vmatprep.subr.bf16.mxu0 0
    %6462 = vmatpush1.bf16.msra.mxu0 0
    %6463 = vmatprep.subr.bf16.mxu0 0
    %6464 = vmatpush1.bf16.msra.mxu0 0
    %6465 = vmatprep.subr.bf16.mxu0 0
    %6466 = vmatpush1.bf16.msra.mxu0 0
    %6467 = vmatprep.subr.bf16.mxu0 0
    %6468 = vmatpush1.bf16.msra.mxu0 0
    %6469 = vmatprep.subr.bf16.mxu0 0
    %6470 = vmatpush1.bf16.msra.mxu0 0
    %6471 = vmatprep.subr.bf16.mxu0 0
    %6472 = vmatpush1.bf16.msra.mxu0 0
    %6473 = vmatprep.subr.bf16.mxu0 0
    %6474 = vmatpush1.bf16.msra.mxu0 0
    %6475 = vmatprep.subr.bf16.mxu0 0
    %6476 = vmatpush1.bf16.msra.mxu0 0
    %6477 = vmatprep.subr.bf16.mxu0 0
    %6478 = vmatpush1.bf16.msra.mxu0 0
    %6479 = vmatprep.subr.bf16.mxu0 0
    %6480 = vmatpush1.bf16.msra.mxu0 0
    %6481 = vmatprep.subr.bf16.mxu0 0
    %6482 = vmatpush1.bf16.msra.mxu0 0
    %6483 = vmatprep.subr.bf16.mxu0 0
    %6484 = vmatpush1.bf16.msra.mxu0 0
    %6485 = vmatprep.mubr.bf16.mxu0 0
    %6486 = vmatmul.mubr.bf16.gmra.mrb[0].mxu0 %v6451
    %v6487 = vpop.f32.mrb[0].mxu0
    %v6488 = vadd.f32 0.0, %v6487
    %v6489 = vpop.f32.mrb[0].mxu0
    %v6490 = vpop.f32.mrb[0].mxu0
    %v6491 = vpop.f32.mrb[0].mxu0
    %6492 = vdwg.mxu0
    %v6494 = vsel %vm2747, %v6443, 0
    %6496 = vmatprep.subr.bf16.mxu0 0
    %6497 = vmatpush1.bf16.msra.mxu0 %v5971
    %6498 = vmatprep.subr.bf16.mxu0 0
    %6499 = vmatpush1.bf16.msra.mxu0 0
    %6500 = vmatprep.subr.bf16.mxu0 0
    %6501 = vmatpush1.bf16.msra.mxu0 0
    %6502 = vmatprep.subr.bf16.mxu0 0
    %6503 = vmatpush1.bf16.msra.mxu0 0
    %6504 = vmatprep.subr.bf16.mxu0 0
    %6505 = vmatpush1.bf16.msra.mxu0 0
    %6506 = vmatprep.subr.bf16.mxu0 0
    %6507 = vmatpush1.bf16.msra.mxu0 0
    %6508 = vmatprep.subr.bf16.mxu0 0
    %6509 = vmatpush1.bf16.msra.mxu0 0
    %6510 = vmatprep.subr.bf16.mxu0 0
    %6511 = vmatpush1.bf16.msra.mxu0 0
    %6512 = vmatprep.subr.bf16.mxu0 0
    %6513 = vmatpush1.bf16.msra.mxu0 0
    %6514 = vmatprep.subr.bf16.mxu0 0
    %6515 = vmatpush1.bf16.msra.mxu0 0
    %6516 = vmatprep.subr.bf16.mxu0 0
    %6517 = vmatpush1.bf16.msra.mxu0 0
    %6518 = vmatprep.subr.bf16.mxu0 0
    %6519 = vmatpush1.bf16.msra.mxu0 0
    %6520 = vmatprep.subr.bf16.mxu0 0
    %6521 = vmatpush1.bf16.msra.mxu0 0
    %6522 = vmatprep.subr.bf16.mxu0 0
    %6523 = vmatpush1.bf16.msra.mxu0 0
    %6524 = vmatprep.subr.bf16.mxu0 0
    %6525 = vmatpush1.bf16.msra.mxu0 0
    %6526 = vmatprep.subr.bf16.mxu0 0
    %6527 = vmatpush1.bf16.msra.mxu0 0
    %6528 = vmatprep.mubr.bf16.mxu0 0
    %6529 = vmatmul.mubr.bf16.gmra.mrb[0].mxu0 %v6494
    %v6530 = vpop.f32.mrb[0].mxu0
    %v6531 = vadd.f32 0.0, %v6530
    %v6532 = vpop.f32.mrb[0].mxu0
    %v6533 = vpop.f32.mrb[0].mxu0
    %v6534 = vpop.f32.mrb[0].mxu0
    %6535 = vdwg.mxu0
    %v6537 = vsel %vm2747, %v6444, 0
    %6539 = vmatprep.subr.bf16.mxu0 0
    %6540 = vmatpush1.bf16.msra.mxu0 %v5972
    %6541 = vmatprep.subr.bf16.mxu0 0
    %6542 = vmatpush1.bf16.msra.mxu0 0
    %6543 = vmatprep.subr.bf16.mxu0 0
    %6544 = vmatpush1.bf16.msra.mxu0 0
    %6545 = vmatprep.subr.bf16.mxu0 0
    %6546 = vmatpush1.bf16.msra.mxu0 0
    %6547 = vmatprep.subr.bf16.mxu0 0
    %6548 = vmatpush1.bf16.msra.mxu0 0
    %6549 = vmatprep.subr.bf16.mxu0 0
    %6550 = vmatpush1.bf16.msra.mxu0 0
    %6551 = vmatprep.subr.bf16.mxu0 0
    %6552 = vmatpush1.bf16.msra.mxu0 0
    %6553 = vmatprep.subr.bf16.mxu0 0
    %6554 = vmatpush1.bf16.msra.mxu0 0
    %6555 = vmatprep.subr.bf16.mxu0 0
    %6556 = vmatpush1.bf16.msra.mxu0 0
    %6557 = vmatprep.subr.bf16.mxu0 0
    %6558 = vmatpush1.bf16.msra.mxu0 0
    %6559 = vmatprep.subr.bf16.mxu0 0
    %6560 = vmatpush1.bf16.msra.mxu0 0
    %6561 = vmatprep.subr.bf16.mxu0 0
    %6562 = vmatpush1.bf16.msra.mxu0 0
    %6563 = vmatprep.subr.bf16.mxu0 0
    %6564 = vmatpush1.bf16.msra.mxu0 0
    %6565 = vmatprep.subr.bf16.mxu0 0
    %6566 = vmatpush1.bf16.msra.mxu0 0
    %6567 = vmatprep.subr.bf16.mxu0 0
    %6568 = vmatpush1.bf16.msra.mxu0 0
    %6569 = vmatprep.subr.bf16.mxu0 0
    %6570 = vmatpush1.bf16.msra.mxu0 0
    %6571 = vmatprep.mubr.bf16.mxu0 0
    %6572 = vmatmul.mubr.bf16.gmra.mrb[0].mxu0 %v6537
    %v6573 = vpop.f32.mrb[0].mxu0
    %v6574 = vadd.f32 0.0, %v6573
    %v6575 = vpop.f32.mrb[0].mxu0
    %v6576 = vpop.f32.mrb[0].mxu0
    %v6577 = vpop.f32.mrb[0].mxu0
    %6578 = vdwg.mxu0
    %v6580 = vsel %vm2747, %v6445, 0
    %6582 = vmatprep.subr.bf16.mxu0 0
    %6583 = vmatpush1.bf16.msra.mxu0 %v5973
    %6584 = vmatprep.subr.bf16.mxu0 0
    %6585 = vmatpush1.bf16.msra.mxu0 0
    %6586 = vmatprep.subr.bf16.mxu0 0
    %6587 = vmatpush1.bf16.msra.mxu0 0
    %6588 = vmatprep.subr.bf16.mxu0 0
    %6589 = vmatpush1.bf16.msra.mxu0 0
    %6590 = vmatprep.subr.bf16.mxu0 0
    %6591 = vmatpush1.bf16.msra.mxu0 0
    %6592 = vmatprep.subr.bf16.mxu0 0
    %6593 = vmatpush1.bf16.msra.mxu0 0
    %6594 = vmatprep.subr.bf16.mxu0 0
    %6595 = vmatpush1.bf16.msra.mxu0 0
    %6596 = vmatprep.subr.bf16.mxu0 0
    %6597 = vmatpush1.bf16.msra.mxu0 0
    %6598 = vmatprep.subr.bf16.mxu0 0
    %6599 = vmatpush1.bf16.msra.mxu0 0
    %6600 = vmatprep.subr.bf16.mxu0 0
    %6601 = vmatpush1.bf16.msra.mxu0 0
    %6602 = vmatprep.subr.bf16.mxu0 0
    %6603 = vmatpush1.bf16.msra.mxu0 0
    %6604 = vmatprep.subr.bf16.mxu0 0
    %6605 = vmatpush1.bf16.msra.mxu0 0
    %6606 = vmatprep.subr.bf16.mxu0 0
    %6607 = vmatpush1.bf16.msra.mxu0 0
    %6608 = vmatprep.subr.bf16.mxu0 0
    %6609 = vmatpush1.bf16.msra.mxu0 0
    %6610 = vmatprep.subr.bf16.mxu0 0
    %6611 = vmatpush1.bf16.msra.mxu0 0
    %6612 = vmatprep.subr.bf16.mxu0 0
    %6613 = vmatpush1.bf16.msra.mxu0 0
    %6614 = vmatprep.mubr.bf16.mxu0 0
    %6615 = vmatmul.mubr.bf16.gmra.mrb[0].mxu0 %v6580
    %v6616 = vpop.f32.mrb[0].mxu0
    %v6617 = vadd.f32 0.0, %v6616
    %v6618 = vpop.f32.mrb[0].mxu0
    %v6619 = vpop.f32.mrb[0].mxu0
    %v6620 = vpop.f32.mrb[0].mxu0
    %6621 = vdwg.mxu0
    %v6623 = vsel %vm2747, %v6446, 0
    %6625 = vmatprep.subr.bf16.mxu0 0
    %6626 = vmatpush1.bf16.msra.mxu0 %v5974
    %6627 = vmatprep.subr.bf16.mxu0 0
    %6628 = vmatpush1.bf16.msra.mxu0 0
    %6629 = vmatprep.subr.bf16.mxu0 0
    %6630 = vmatpush1.bf16.msra.mxu0 0
    %6631 = vmatprep.subr.bf16.mxu0 0
    %6632 = vmatpush1.bf16.msra.mxu0 0
    %6633 = vmatprep.subr.bf16.mxu0 0
    %6634 = vmatpush1.bf16.msra.mxu0 0
    %6635 = vmatprep.subr.bf16.mxu0 0
    %6636 = vmatpush1.bf16.msra.mxu0 0
    %6637 = vmatprep.subr.bf16.mxu0 0
    %6638 = vmatpush1.bf16.msra.mxu0 0
    %6639 = vmatprep.subr.bf16.mxu0 0
    %6640 = vmatpush1.bf16.msra.mxu0 0
    %6641 = vmatprep.subr.bf16.mxu0 0
    %6642 = vmatpush1.bf16.msra.mxu0 0
    %6643 = vmatprep.subr.bf16.mxu0 0
    %6644 = vmatpush1.bf16.msra.mxu0 0
    %6645 = vmatprep.subr.bf16.mxu0 0
    %6646 = vmatpush1.bf16.msra.mxu0 0
    %6647 = vmatprep.subr.bf16.mxu0 0
    %6648 = vmatpush1.bf16.msra.mxu0 0
    %6649 = vmatprep.subr.bf16.mxu0 0
    %6650 = vmatpush1.bf16.msra.mxu0 0
    %6651 = vmatprep.subr.bf16.mxu0 0
    %6652 = vmatpush1.bf16.msra.mxu0 0
    %6653 = vmatprep.subr.bf16.mxu0 0
    %6654 = vmatpush1.bf16.msra.mxu0 0
    %6655 = vmatprep.subr.bf16.mxu0 0
    %6656 = vmatpush1.bf16.msra.mxu0 0
    %6657 = vmatprep.mubr.bf16.mxu0 0
    %6658 = vmatmul.mubr.bf16.gmra.mrb[0].mxu0 %v6623
    %v6659 = vpop.f32.mrb[0].mxu0
    %v6660 = vadd.f32 0.0, %v6659
    %v6661 = vpop.f32.mrb[0].mxu0
    %v6662 = vpop.f32.mrb[0].mxu0
    %v6663 = vpop.f32.mrb[0].mxu0
    %6664 = vdwg.mxu0
    %v6666 = vsel %vm2747, %v6447, 0
    %6668 = vmatprep.subr.bf16.mxu0 0
    %6669 = vmatpush1.bf16.msra.mxu0 %v5975
    %6670 = vmatprep.subr.bf16.mxu0 0
    %6671 = vmatpush1.bf16.msra.mxu0 0
    %6672 = vmatprep.subr.bf16.mxu0 0
    %6673 = vmatpush1.bf16.msra.mxu0 0
    %6674 = vmatprep.subr.bf16.mxu0 0
    %6675 = vmatpush1.bf16.msra.mxu0 0
    %6676 = vmatprep.subr.bf16.mxu0 0
    %6677 = vmatpush1.bf16.msra.mxu0 0
    %6678 = vmatprep.subr.bf16.mxu0 0
    %6679 = vmatpush1.bf16.msra.mxu0 0
    %6680 = vmatprep.subr.bf16.mxu0 0
    %6681 = vmatpush1.bf16.msra.mxu0 0
    %6682 = vmatprep.subr.bf16.mxu0 0
    %6683 = vmatpush1.bf16.msra.mxu0 0
    %6684 = vmatprep.subr.bf16.mxu0 0
    %6685 = vmatpush1.bf16.msra.mxu0 0
    %6686 = vmatprep.subr.bf16.mxu0 0
    %6687 = vmatpush1.bf16.msra.mxu0 0
    %6688 = vmatprep.subr.bf16.mxu0 0
    %6689 = vmatpush1.bf16.msra.mxu0 0
    %6690 = vmatprep.subr.bf16.mxu0 0
    %6691 = vmatpush1.bf16.msra.mxu0 0
    %6692 = vmatprep.subr.bf16.mxu0 0
    %6693 = vmatpush1.bf16.msra.mxu0 0
    %6694 = vmatprep.subr.bf16.mxu0 0
    %6695 = vmatpush1.bf16.msra.mxu0 0
    %6696 = vmatprep.subr.bf16.mxu0 0
    %6697 = vmatpush1.bf16.msra.mxu0 0
    %6698 = vmatprep.subr.bf16.mxu0 0
    %6699 = vmatpush1.bf16.msra.mxu0 0
    %6700 = vmatprep.mubr.bf16.mxu0 0
    %6701 = vmatmul.mubr.bf16.gmra.mrb[0].mxu0 %v6666
    %v6702 = vpop.f32.mrb[0].mxu0
    %v6703 = vadd.f32 0.0, %v6702
    %v6704 = vpop.f32.mrb[0].mxu0
    %v6705 = vpop.f32.mrb[0].mxu0
    %v6706 = vpop.f32.mrb[0].mxu0
    %6707 = vdwg.mxu0
    %v6709 = vsel %vm2747, %v6448, 0
    %6711 = vmatprep.subr.bf16.mxu0 0
    %6712 = vmatpush1.bf16.msra.mxu0 %v5976
    %6713 = vmatprep.subr.bf16.mxu0 0
    %6714 = vmatpush1.bf16.msra.mxu0 0
    %6715 = vmatprep.subr.bf16.mxu0 0
    %6716 = vmatpush1.bf16.msra.mxu0 0
    %6717 = vmatprep.subr.bf16.mxu0 0
    %6718 = vmatpush1.bf16.msra.mxu0 0
    %6719 = vmatprep.subr.bf16.mxu0 0
    %6720 = vmatpush1.bf16.msra.mxu0 0
    %6721 = vmatprep.subr.bf16.mxu0 0
    %6722 = vmatpush1.bf16.msra.mxu0 0
    %6723 = vmatprep.subr.bf16.mxu0 0
    %6724 = vmatpush1.bf16.msra.mxu0 0
    %6725 = vmatprep.subr.bf16.mxu0 0
    %6726 = vmatpush1.bf16.msra.mxu0 0
    %6727 = vmatprep.subr.bf16.mxu0 0
    %6728 = vmatpush1.bf16.msra.mxu0 0
    %6729 = vmatprep.subr.bf16.mxu0 0
    %6730 = vmatpush1.bf16.msra.mxu0 0
    %6731 = vmatprep.subr.bf16.mxu0 0
    %6732 = vmatpush1.bf16.msra.mxu0 0
    %6733 = vmatprep.subr.bf16.mxu0 0
    %6734 = vmatpush1.bf16.msra.mxu0 0
    %6735 = vmatprep.subr.bf16.mxu0 0
    %6736 = vmatpush1.bf16.msra.mxu0 0
    %6737 = vmatprep.subr.bf16.mxu0 0
    %6738 = vmatpush1.bf16.msra.mxu0 0
    %6739 = vmatprep.subr.bf16.mxu0 0
    %6740 = vmatpush1.bf16.msra.mxu0 0
    %6741 = vmatprep.subr.bf16.mxu0 0
    %6742 = vmatpush1.bf16.msra.mxu0 0
    %6743 = vmatprep.mubr.bf16.mxu0 0
    %6744 = vmatmul.mubr.bf16.gmra.mrb[0].mxu0 %v6709
    %v6745 = vpop.f32.mrb[0].mxu0
    %v6746 = vadd.f32 0.0, %v6745
    %v6747 = vpop.f32.mrb[0].mxu0
    %v6748 = vpop.f32.mrb[0].mxu0
    %v6749 = vpop.f32.mrb[0].mxu0
    %6750 = vdwg.mxu0
    %v6752 = vsel %vm2747, %v6449, 0
    %6754 = vmatprep.subr.bf16.mxu0 0
    %6755 = vmatpush1.bf16.msra.mxu0 %v5977
    %6756 = vmatprep.subr.bf16.mxu0 0
    %6757 = vmatpush1.bf16.msra.mxu0 0
    %6758 = vmatprep.subr.bf16.mxu0 0
    %6759 = vmatpush1.bf16.msra.mxu0 0
    %6760 = vmatprep.subr.bf16.mxu0 0
    %6761 = vmatpush1.bf16.msra.mxu0 0
    %6762 = vmatprep.subr.bf16.mxu0 0
    %6763 = vmatpush1.bf16.msra.mxu0 0
    %6764 = vmatprep.subr.bf16.mxu0 0
    %6765 = vmatpush1.bf16.msra.mxu0 0
    %6766 = vmatprep.subr.bf16.mxu0 0
    %6767 = vmatpush1.bf16.msra.mxu0 0
    %6768 = vmatprep.subr.bf16.mxu0 0
    %6769 = vmatpush1.bf16.msra.mxu0 0
    %6770 = vmatprep.subr.bf16.mxu0 0
    %6771 = vmatpush1.bf16.msra.mxu0 0
    %6772 = vmatprep.subr.bf16.mxu0 0
    %6773 = vmatpush1.bf16.msra.mxu0 0
    %6774 = vmatprep.subr.bf16.mxu0 0
    %6775 = vmatpush1.bf16.msra.mxu0 0
    %6776 = vmatprep.subr.bf16.mxu0 0
    %6777 = vmatpush1.bf16.msra.mxu0 0
    %6778 = vmatprep.subr.bf16.mxu0 0
    %6779 = vmatpush1.bf16.msra.mxu0 0
    %6780 = vmatprep.subr.bf16.mxu0 0
    %6781 = vmatpush1.bf16.msra.mxu0 0
    %6782 = vmatprep.subr.bf16.mxu0 0
    %6783 = vmatpush1.bf16.msra.mxu0 0
    %6784 = vmatprep.subr.bf16.mxu0 0
    %6785 = vmatpush1.bf16.msra.mxu0 0
    %6786 = vmatprep.mubr.bf16.mxu0 0
    %6787 = vmatmul.mubr.bf16.gmra.mrb[0].mxu0 %v6752
    %v6788 = vpop.f32.mrb[0].mxu0
    %v6789 = vadd.f32 0.0, %v6788
    %v6790 = vpop.f32.mrb[0].mxu0
    %v6791 = vpop.f32.mrb[0].mxu0
    %v6792 = vpop.f32.mrb[0].mxu0
    %6793 = vdwg.mxu0
    %6794 = vxpose.xlu0.b32.start [1/16] %v6488, 128
    %6795 = vxpose.xlu0.b32.cont [2/16] %v6531, 128
    %6796 = vxpose.xlu0.b32.cont [3/16] 0.0, 128
    %6797 = vxpose.xlu0.b32.cont [4/16] 0.0, 128
    %6798 = vxpose.xlu0.b32.cont [5/16] 0.0, 128
    %6799 = vxpose.xlu0.b32.cont [6/16] 0.0, 128
    %6800 = vxpose.xlu0.b32.cont [7/16] 0.0, 128
    %6801 = vxpose.xlu0.b32.cont [8/16] 0.0, 128
    %6802 = vxpose.xlu0.b32.cont [9/16] 0.0, 128
    %6803 = vxpose.xlu0.b32.cont [10/16] 0.0, 128
    %6804 = vxpose.xlu0.b32.cont [11/16] 0.0, 128
    %6805 = vxpose.xlu0.b32.cont [12/16] 0.0, 128
    %6806 = vxpose.xlu0.b32.cont [13/16] 0.0, 128
    %6807 = vxpose.xlu0.b32.cont [14/16] 0.0, 128
    %6808 = vxpose.xlu0.b32.cont [15/16] 0.0, 128
    %6809 = vxpose.xlu0.b32.end [16/16] 0.0, 128
    %v6810 = vpop.trf.xlu0
    %v6811 = vpop.trf.xlu0
    %v6812 = vpop.trf.xlu0
    %v6813 = vpop.trf.xlu0
    %v6814 = vpop.trf.xlu0
    %v6815 = vpop.trf.xlu0
    %v6816 = vpop.trf.xlu0
    %v6817 = vpop.trf.xlu0
    %v6818 = vpop.trf.xlu0
    %v6819 = vpop.trf.xlu0
    %v6820 = vpop.trf.xlu0
    %v6821 = vpop.trf.xlu0
    %v6822 = vpop.trf.xlu0
    %v6823 = vpop.trf.xlu0
    %v6824 = vpop.trf.xlu0
    %v6825 = vpop.trf.xlu0
    %6826 = vxpose.xlu0.b32.start [1/16] %v6574, 128
    %6827 = vxpose.xlu0.b32.cont [2/16] %v6617, 128
    %6828 = vxpose.xlu0.b32.cont [3/16] 0.0, 128
    %6829 = vxpose.xlu0.b32.cont [4/16] 0.0, 128
    %6830 = vxpose.xlu0.b32.cont [5/16] 0.0, 128
    %6831 = vxpose.xlu0.b32.cont [6/16] 0.0, 128
    %6832 = vxpose.xlu0.b32.cont [7/16] 0.0, 128
    %6833 = vxpose.xlu0.b32.cont [8/16] 0.0, 128
    %6834 = vxpose.xlu0.b32.cont [9/16] 0.0, 128
    %6835 = vxpose.xlu0.b32.cont [10/16] 0.0, 128
    %6836 = vxpose.xlu0.b32.cont [11/16] 0.0, 128
    %6837 = vxpose.xlu0.b32.cont [12/16] 0.0, 128
    %6838 = vxpose.xlu0.b32.cont [13/16] 0.0, 128
    %6839 = vxpose.xlu0.b32.cont [14/16] 0.0, 128
    %6840 = vxpose.xlu0.b32.cont [15/16] 0.0, 128
    %6841 = vxpose.xlu0.b32.end [16/16] 0.0, 128
    %v6842 = vpop.trf.xlu0
    %v6843 = vpop.trf.xlu0
    %v6844 = vpop.trf.xlu0
    %v6845 = vpop.trf.xlu0
    %v6846 = vpop.trf.xlu0
    %v6847 = vpop.trf.xlu0
    %v6848 = vpop.trf.xlu0
    %v6849 = vpop.trf.xlu0
    %v6850 = vpop.trf.xlu0
    %v6851 = vpop.trf.xlu0
    %v6852 = vpop.trf.xlu0
    %v6853 = vpop.trf.xlu0
    %v6854 = vpop.trf.xlu0
    %v6855 = vpop.trf.xlu0
    %v6856 = vpop.trf.xlu0
    %v6857 = vpop.trf.xlu0
    %6858 = vxpose.xlu0.b32.start [1/16] %v6660, 128
    %6859 = vxpose.xlu0.b32.cont [2/16] %v6703, 128
    %6860 = vxpose.xlu0.b32.cont [3/16] 0.0, 128
    %6861 = vxpose.xlu0.b32.cont [4/16] 0.0, 128
    %6862 = vxpose.xlu0.b32.cont [5/16] 0.0, 128
    %6863 = vxpose.xlu0.b32.cont [6/16] 0.0, 128
    %6864 = vxpose.xlu0.b32.cont [7/16] 0.0, 128
    %6865 = vxpose.xlu0.b32.cont [8/16] 0.0, 128
    %6866 = vxpose.xlu0.b32.cont [9/16] 0.0, 128
    %6867 = vxpose.xlu0.b32.cont [10/16] 0.0, 128
    %6868 = vxpose.xlu0.b32.cont [11/16] 0.0, 128
    %6869 = vxpose.xlu0.b32.cont [12/16] 0.0, 128
    %6870 = vxpose.xlu0.b32.cont [13/16] 0.0, 128
    %6871 = vxpose.xlu0.b32.cont [14/16] 0.0, 128
    %6872 = vxpose.xlu0.b32.cont [15/16] 0.0, 128
    %6873 = vxpose.xlu0.b32.end [16/16] 0.0, 128
    %v6874 = vpop.trf.xlu0
    %v6875 = vpop.trf.xlu0
    %v6876 = vpop.trf.xlu0
    %v6877 = vpop.trf.xlu0
    %v6878 = vpop.trf.xlu0
    %v6879 = vpop.trf.xlu0
    %v6880 = vpop.trf.xlu0
    %v6881 = vpop.trf.xlu0
    %v6882 = vpop.trf.xlu0
    %v6883 = vpop.trf.xlu0
    %v6884 = vpop.trf.xlu0
    %v6885 = vpop.trf.xlu0
    %v6886 = vpop.trf.xlu0
    %v6887 = vpop.trf.xlu0
    %v6888 = vpop.trf.xlu0
    %v6889 = vpop.trf.xlu0
    %6890 = vxpose.xlu0.b32.start [1/16] %v6746, 128
    %6891 = vxpose.xlu0.b32.cont [2/16] %v6789, 128
    %6892 = vxpose.xlu0.b32.cont [3/16] 0.0, 128
    %6893 = vxpose.xlu0.b32.cont [4/16] 0.0, 128
    %6894 = vxpose.xlu0.b32.cont [5/16] 0.0, 128
    %6895 = vxpose.xlu0.b32.cont [6/16] 0.0, 128
    %6896 = vxpose.xlu0.b32.cont [7/16] 0.0, 128
    %6897 = vxpose.xlu0.b32.cont [8/16] 0.0, 128
    %6898 = vxpose.xlu0.b32.cont [9/16] 0.0, 128
    %6899 = vxpose.xlu0.b32.cont [10/16] 0.0, 128
    %6900 = vxpose.xlu0.b32.cont [11/16] 0.0, 128
    %6901 = vxpose.xlu0.b32.cont [12/16] 0.0, 128
    %6902 = vxpose.xlu0.b32.cont [13/16] 0.0, 128
    %6903 = vxpose.xlu0.b32.cont [14/16] 0.0, 128
    %6904 = vxpose.xlu0.b32.cont [15/16] 0.0, 128
    %6905 = vxpose.xlu0.b32.end [16/16] 0.0, 128
    %v6906 = vpop.trf.xlu0
    %v6907 = vpop.trf.xlu0
    %v6908 = vpop.trf.xlu0
    %v6909 = vpop.trf.xlu0
    %v6910 = vpop.trf.xlu0
    %v6911 = vpop.trf.xlu0
    %v6912 = vpop.trf.xlu0
    %v6913 = vpop.trf.xlu0
    %v6914 = vpop.trf.xlu0
    %v6915 = vpop.trf.xlu0
    %v6916 = vpop.trf.xlu0
    %v6917 = vpop.trf.xlu0
    %v6918 = vpop.trf.xlu0
    %v6919 = vpop.trf.xlu0
    %v6920 = vpop.trf.xlu0
    %v6921 = vpop.trf.xlu0
    %6922 = vxpose.xlu0.b32.start [1/16] %v6810, 128
    %6923 = vxpose.xlu0.b32.cont [2/16] %v6842, 128
    %6924 = vxpose.xlu0.b32.cont [3/16] %v6874, 128
    %6925 = vxpose.xlu0.b32.cont [4/16] %v6906, 128
    %6926 = vxpose.xlu0.b32.cont [5/16] 0.0, 128
    %6927 = vxpose.xlu0.b32.cont [6/16] 0.0, 128
    %6928 = vxpose.xlu0.b32.cont [7/16] 0.0, 128
    %6929 = vxpose.xlu0.b32.cont [8/16] 0.0, 128
    %6930 = vxpose.xlu0.b32.cont [9/16] 0.0, 128
    %6931 = vxpose.xlu0.b32.cont [10/16] 0.0, 128
    %6932 = vxpose.xlu0.b32.cont [11/16] 0.0, 128
    %6933 = vxpose.xlu0.b32.cont [12/16] 0.0, 128
    %6934 = vxpose.xlu0.b32.cont [13/16] 0.0, 128
    %6935 = vxpose.xlu0.b32.cont [14/16] 0.0, 128
    %6936 = vxpose.xlu0.b32.cont [15/16] 0.0, 128
    %6937 = vxpose.xlu0.b32.end [16/16] 0.0, 128
    %v6938 = vpop.trf.xlu0
    %v6939 = vpop.trf.xlu0
    %v6940 = vpop.trf.xlu0
    %v6941 = vpop.trf.xlu0
    %v6942 = vpop.trf.xlu0
    %v6943 = vpop.trf.xlu0
    %v6944 = vpop.trf.xlu0
    %v6945 = vpop.trf.xlu0
    %v6946 = vpop.trf.xlu0
    %v6947 = vpop.trf.xlu0
    %v6948 = vpop.trf.xlu0
    %v6949 = vpop.trf.xlu0
    %v6950 = vpop.trf.xlu0
    %v6951 = vpop.trf.xlu0
    %v6952 = vpop.trf.xlu0
    %v6953 = vpop.trf.xlu0
    %v6954 = vpack.c.bf16 %v6939, %v6938
    %v6955 = vld [vmem:[%s4 + $0xa0] sm:$0xf]
    %v6956 = vld [vmem:[%s4 + $0xa4] sm:$0xf]
    %v6957 = vld [vmem:[%s4 + $0xa8] sm:$0xf]
    %v6958 = vld [vmem:[%s4 + $0xac] sm:$0xf]
    %v6959 = vld [vmem:[%s5 + $0xf] sm:$0x1]
    %v6960 = vlaneseq
    %v6961 = vshrl.u32 %v6960, 7
    %v6962 = vsub.s32 0, %v6961
    %v6963 = vrot.slane %v6959, %v6962
    %v6968 = vunpack.c.l.b16 %v6955
    %v6969 = vunpack.c.l.b16 %v6956
    %v6970 = vunpack.c.l.b16 %v6957
    %v6971 = vunpack.c.l.b16 %v6958
    %v6972 = vpack.c.b16 %v6969, %v6968
    %v6973 = vpack.c.b16 %v6971, %v6970
    %v6977 = vsel %vm62, %v6954, 0
    %6979 = vmatprep.subr.bf16.mxu0 0
    %6980 = vmatpush1.bf16.msra.mxu0 %v6972
    %6981 = vmatprep.subr.bf16.mxu0 0
    %6982 = vmatpush1.bf16.msra.mxu0 %v6973
    %6983 = vmatprep.subr.bf16.mxu0 0
    %6984 = vmatpush1.bf16.msra.mxu0 0
    %6985 = vmatprep.subr.bf16.mxu0 0
    %6986 = vmatpush1.bf16.msra.mxu0 0
    %6987 = vmatprep.subr.bf16.mxu0 0
    %6988 = vmatpush1.bf16.msra.mxu0 0
    %6989 = vmatprep.subr.bf16.mxu0 0
    %6990 = vmatpush1.bf16.msra.mxu0 0
    %6991 = vmatprep.subr.bf16.mxu0 0
    %6992 = vmatpush1.bf16.msra.mxu0 0
    %6993 = vmatprep.subr.bf16.mxu0 0
    %6994 = vmatpush1.bf16.msra.mxu0 0
    %6995 = vmatprep.subr.bf16.mxu0 0
    %6996 = vmatpush1.bf16.msra.mxu0 0
    %6997 = vmatprep.subr.bf16.mxu0 0
    %6998 = vmatpush1.bf16.msra.mxu0 0
    %6999 = vmatprep.subr.bf16.mxu0 0
    %7000 = vmatpush1.bf16.msra.mxu0 0
    %7001 = vmatprep.subr.bf16.mxu0 0
    %7002 = vmatpush1.bf16.msra.mxu0 0
    %7003 = vmatprep.subr.bf16.mxu0 0
    %7004 = vmatpush1.bf16.msra.mxu0 0
    %7005 = vmatprep.subr.bf16.mxu0 0
    %7006 = vmatpush1.bf16.msra.mxu0 0
    %7007 = vmatprep.subr.bf16.mxu0 0
    %7008 = vmatpush1.bf16.msra.mxu0 0
    %7009 = vmatprep.subr.bf16.mxu0 0
    %7010 = vmatpush1.bf16.msra.mxu0 0
    %7011 = vmatprep.mubr.bf16.mxu0 0
    %7012 = vmatmul.mubr.bf16.gmra.mrb[0].mxu0 %v6977
    %v7013 = vpop.f32.mrb[0].mxu0
    %v7014 = vadd.f32 %v6963, %v7013
    %v7015 = vpop.f32.mrb[0].mxu0
    %v7016 = vpop.f32.mrb[0].mxu0
    %v7017 = vadd.f32 %v6963, %v7016
    %v7018 = vpop.f32.mrb[0].mxu0
    %7019 = vdwg.mxu0
    %v7020 = vadd.f32 %v5331, %v7014
    %v7021 = vadd.f32 %v5332, %v7017
    %v7022 = vsel %vm62, %v7020, 0.0
    %7023 = vadd.xlane.f32.xlu0 %v7022
    %v7024 = vpop.xlane.xlu0 %7023
    %v7025 = vsel %vm62, %v7021, 0.0
    %7026 = vadd.xlane.f32.xlu0 %v7025
    %v7027 = vpop.xlane.xlu0 %7026
    %v7028 = vmul.f32 %v7024, %v1693
    %v7029 = vmul.f32 %v7027, %v1693
    %v7030 = vsub.f32 %v7020, %v7028
    %v7031 = vsub.f32 %v7021, %v7029
    %v7032 = vmul.f32 %v7030, %v7030
    %v7033 = vmul.f32 %v7031, %v7031
    %v7034 = vsel %vm62, %v7032, 0.0
    %7035 = vadd.xlane.f32.xlu0 %v7034
    %v7036 = vpop.xlane.xlu0 %7035
    %v7037 = vsel %vm62, %v7033, 0.0
    %7038 = vadd.xlane.f32.xlu0 %v7037
    %v7039 = vpop.xlane.xlu0 %7038
    %v7040 = vmul.f32 %v7036, %v1693
    %v7041 = vmul.f32 %v7039, %v1693
    %v7042 = vadd.f32 %v7040, 1e-05
    %v7043 = vadd.f32 %v7041, 1e-05
    %v7044 = vrsqrt.pop %v7042
    %v7045 = vrsqrt.pop %v7043
    %v7046 = vmul.f32 %v7030, %v7044
    %v7047 = vmul.f32 %v7031, %v7045
    %v7048 = vld [vmem:[%s5 + $0x14] sm:$0x1]
    %v7049 = vlaneseq
    %v7050 = vshrl.u32 %v7049, 7
    %v7051 = vsub.s32 0, %v7050
    %v7052 = vrot.slane %v7048, %v7051
    %v7053 = vmul.f32 %v7046, %v7052
    %v7054 = vmul.f32 %v7047, %v7052
    %v7055 = vld [vmem:[%s5 + $0x15] sm:$0x1]
    %v7056 = vlaneseq
    %v7057 = vshrl.u32 %v7056, 7
    %v7058 = vsub.s32 0, %v7057
    %v7059 = vrot.slane %v7055, %v7058
    %v7060 = vadd.f32 %v7053, %v7059
    %v7061 = vadd.f32 %v7054, %v7059
    %v7062 = vpack.c.bf16 %v7061, %v7060
    %v7063 = vld [vmem:[%s4 + $0xb0] sm:$0xf]
    %v7064 = vld [vmem:[%s4 + $0xb4] sm:$0xf]
    %v7065 = vld [vmem:[%s4 + $0xb8] sm:$0xf]
    %v7066 = vld [vmem:[%s4 + $0xbc] sm:$0xf]
    %v7067 = vld [vmem:[%s5 + $0x10] sm:$0x1]
    %v7068 = vlaneseq
    %v7069 = vshrl.u32 %v7068, 7
    %v7070 = vsub.s32 0, %v7069
    %v7071 = vrot.slane %v7067, %v7070
    %v7076 = vunpack.c.l.b16 %v7063
    %v7077 = vunpack.c.l.b16 %v7064
    %v7078 = vunpack.c.l.b16 %v7065
    %v7079 = vunpack.c.l.b16 %v7066
    %v7080 = vpack.c.b16 %v7077, %v7076
    %v7081 = vpack.c.b16 %v7079, %v7078
    %v7085 = vsel %vm62, %v7062, 0
    %7087 = vmatprep.subr.bf16.mxu0 0
    %7088 = vmatpush1.bf16.msra.mxu0 %v7080
    %7089 = vmatprep.subr.bf16.mxu0 0
    %7090 = vmatpush1.bf16.msra.mxu0 %v7081
    %7091 = vmatprep.subr.bf16.mxu0 0
    %7092 = vmatpush1.bf16.msra.mxu0 0
    %7093 = vmatprep.subr.bf16.mxu0 0
    %7094 = vmatpush1.bf16.msra.mxu0 0
    %7095 = vmatprep.subr.bf16.mxu0 0
    %7096 = vmatpush1.bf16.msra.mxu0 0
    %7097 = vmatprep.subr.bf16.mxu0 0
    %7098 = vmatpush1.bf16.msra.mxu0 0
    %7099 = vmatprep.subr.bf16.mxu0 0
    %7100 = vmatpush1.bf16.msra.mxu0 0
    %7101 = vmatprep.subr.bf16.mxu0 0
    %7102 = vmatpush1.bf16.msra.mxu0 0
    %7103 = vmatprep.subr.bf16.mxu0 0
    %7104 = vmatpush1.bf16.msra.mxu0 0
    %7105 = vmatprep.subr.bf16.mxu0 0
    %7106 = vmatpush1.bf16.msra.mxu0 0
    %7107 = vmatprep.subr.bf16.mxu0 0
    %7108 = vmatpush1.bf16.msra.mxu0 0
    %7109 = vmatprep.subr.bf16.mxu0 0
    %7110 = vmatpush1.bf16.msra.mxu0 0
    %7111 = vmatprep.subr.bf16.mxu0 0
    %7112 = vmatpush1.bf16.msra.mxu0 0
    %7113 = vmatprep.subr.bf16.mxu0 0
    %7114 = vmatpush1.bf16.msra.mxu0 0
    %7115 = vmatprep.subr.bf16.mxu0 0
    %7116 = vmatpush1.bf16.msra.mxu0 0
    %7117 = vmatprep.subr.bf16.mxu0 0
    %7118 = vmatpush1.bf16.msra.mxu0 0
    %7119 = vmatprep.mubr.bf16.mxu0 0
    %7120 = vmatmul.mubr.bf16.gmra.mrb[0].mxu0 %v7085
    %v7121 = vpop.f32.mrb[0].mxu0
    %v7122 = vadd.f32 %v7071, %v7121
    %v7123 = vpop.f32.mrb[0].mxu0
    %v7124 = vpop.f32.mrb[0].mxu0
    %v7125 = vadd.f32 %v7071, %v7124
    %v7126 = vpop.f32.mrb[0].mxu0
    %7127 = vdwg.mxu0
    %v7128 = vmax.f32 %v7122, 0.0
    %v7129 = vmax.f32 %v7125, 0.0
    %v7130 = vpack.c.bf16 %v7129, %v7128
    %v7131 = vld [vmem:[%s4 + $0xc0] sm:$0xf]
    %v7132 = vld [vmem:[%s4 + $0xc4] sm:$0xf]
    %v7133 = vld [vmem:[%s4 + $0xc8] sm:$0xf]
    %v7134 = vld [vmem:[%s4 + $0xcc] sm:$0xf]
    %v7135 = vld [vmem:[%s4 + $0xd0] sm:$0xf]
    %v7136 = vld [vmem:[%s4 + $0xd4] sm:$0xf]
    %v7137 = vld [vmem:[%s4 + $0xd8] sm:$0xf]
    %v7138 = vld [vmem:[%s4 + $0xdc] sm:$0xf]
    %v7139 = vld [vmem:[%s5 + $0x11] sm:$0x1]
    %v7140 = vlaneseq
    %v7141 = vshrl.u32 %v7140, 7
    %v7142 = vsub.s32 0, %v7141
    %v7143 = vrot.slane %v7139, %v7142
    %v7152 = vunpack.c.l.b16 %v7131
    %v7153 = vunpack.c.l.b16 %v7132
    %v7154 = vunpack.c.l.b16 %v7133
    %v7155 = vunpack.c.l.b16 %v7134
    %v7156 = vunpack.c.l.b16 %v7135
    %v7157 = vunpack.c.l.b16 %v7136
    %v7158 = vunpack.c.l.b16 %v7137
    %v7159 = vunpack.c.l.b16 %v7138
    %v7160 = vpack.c.b16 %v7153, %v7152
    %v7161 = vpack.c.b16 %v7155, %v7154
    %v7162 = vpack.c.b16 %v7157, %v7156
    %v7163 = vpack.c.b16 %v7159, %v7158
    %v7169 = vsel %vm3562, %v7130, 0
    %7171 = vmatprep.subr.bf16.mxu0 0
    %7172 = vmatpush1.bf16.msra.mxu0 %v7160
    %7173 = vmatprep.subr.bf16.mxu0 0
    %7174 = vmatpush1.bf16.msra.mxu0 %v7161
    %7175 = vmatprep.subr.bf16.mxu0 0
    %7176 = vmatpush1.bf16.msra.mxu0 %v7162
    %7177 = vmatprep.subr.bf16.mxu0 0
    %7178 = vmatpush1.bf16.msra.mxu0 %v7163
    %7179 = vmatprep.subr.bf16.mxu0 0
    %7180 = vmatpush1.bf16.msra.mxu0 0
    %7181 = vmatprep.subr.bf16.mxu0 0
    %7182 = vmatpush1.bf16.msra.mxu0 0
    %7183 = vmatprep.subr.bf16.mxu0 0
    %7184 = vmatpush1.bf16.msra.mxu0 0
    %7185 = vmatprep.subr.bf16.mxu0 0
    %7186 = vmatpush1.bf16.msra.mxu0 0
    %7187 = vmatprep.subr.bf16.mxu0 0
    %7188 = vmatpush1.bf16.msra.mxu0 0
    %7189 = vmatprep.subr.bf16.mxu0 0
    %7190 = vmatpush1.bf16.msra.mxu0 0
    %7191 = vmatprep.subr.bf16.mxu0 0
    %7192 = vmatpush1.bf16.msra.mxu0 0
    %7193 = vmatprep.subr.bf16.mxu0 0
    %7194 = vmatpush1.bf16.msra.mxu0 0
    %7195 = vmatprep.subr.bf16.mxu0 0
    %7196 = vmatpush1.bf16.msra.mxu0 0
    %7197 = vmatprep.subr.bf16.mxu0 0
    %7198 = vmatpush1.bf16.msra.mxu0 0
    %7199 = vmatprep.subr.bf16.mxu0 0
    %7200 = vmatpush1.bf16.msra.mxu0 0
    %7201 = vmatprep.subr.bf16.mxu0 0
    %7202 = vmatpush1.bf16.msra.mxu0 0
    %7203 = vmatprep.mubr.bf16.mxu0 0
    %7204 = vmatmul.mubr.bf16.gmra.mrb[0].mxu0 %v7169
    %v7205 = vpop.f32.mrb[0].mxu0
    %v7206 = vadd.f32 %v7143, %v7205
    %v7207 = vpop.f32.mrb[0].mxu0
    %v7208 = vpop.f32.mrb[0].mxu0
    %v7209 = vadd.f32 %v7143, %v7208
    %v7210 = vpop.f32.mrb[0].mxu0
    %7211 = vdwg.mxu0
    %v7212 = vadd.f32 %v7060, %v7206
    %v7213 = vadd.f32 %v7061, %v7209
    %v7214 = vsel %vm62, %v7212, 0.0
    %7215 = vadd.xlane.f32.xlu0 %v7214
    %v7216 = vpop.xlane.xlu0 %7215
    %v7217 = vsel %vm62, %v7213, 0.0
    %7218 = vadd.xlane.f32.xlu0 %v7217
    %v7219 = vpop.xlane.xlu0 %7218
    %v7220 = vmul.f32 %v7216, %v1693
    %v7221 = vmul.f32 %v7219, %v1693
    %v7222 = vsub.f32 %v7212, %v7220
    %v7223 = vsub.f32 %v7213, %v7221
    %v7224 = vmul.f32 %v7222, %v7222
    %v7225 = vmul.f32 %v7223, %v7223
    %v7226 = vsel %vm62, %v7224, 0.0
    %7227 = vadd.xlane.f32.xlu0 %v7226
    %v7228 = vpop.xlane.xlu0 %7227
    %v7229 = vsel %vm62, %v7225, 0.0
    %7230 = vadd.xlane.f32.xlu0 %v7229
    %v7231 = vpop.xlane.xlu0 %7230
    %v7232 = vmul.f32 %v7228, %v1693
    %v7233 = vmul.f32 %v7231, %v1693
    %v7234 = vadd.f32 %v7232, 1e-05
    %v7235 = vadd.f32 %v7233, 1e-05
    %v7236 = vrsqrt.pop %v7234
    %v7237 = vrsqrt.pop %v7235
    %v7238 = vmul.f32 %v7222, %v7236
    %v7239 = vmul.f32 %v7223, %v7237
    %v7240 = vld [vmem:[%s5 + $0x16] sm:$0x1]
    %v7241 = vlaneseq
    %v7242 = vshrl.u32 %v7241, 7
    %v7243 = vsub.s32 0, %v7242
    %v7244 = vrot.slane %v7240, %v7243
    %v7245 = vmul.f32 %v7238, %v7244
    %v7246 = vmul.f32 %v7239, %v7244
    %v7247 = vld [vmem:[%s5 + $0x17] sm:$0x1]
    %v7248 = vlaneseq
    %v7249 = vshrl.u32 %v7248, 7
    %v7250 = vsub.s32 0, %v7249
    %v7251 = vrot.slane %v7247, %v7250
    %v7252 = vadd.f32 %v7245, %v7251
    %v7253 = vadd.f32 %v7246, %v7251
    %v7254 = vpack.c.bf16 %v7253, %v7252
    %v7255 = vld [vmem:[%s4 + $0xe0] sm:$0xf]
    %v7256 = vld [vmem:[%s4 + $0xe4] sm:$0xf]
    %v7257 = vld [vmem:[%s4 + $0xe8] sm:$0xf]
    %v7258 = vld [vmem:[%s4 + $0xec] sm:$0xf]
    %v7259 = vld [vmem:[%s5 + $0x18] sm:$0x1]
    %v7260 = vlaneseq
    %v7261 = vshrl.u32 %v7260, 7
    %v7262 = vsub.s32 0, %v7261
    %v7263 = vrot.slane %v7259, %v7262
    %v7268 = vunpack.c.l.b16 %v7255
    %v7269 = vunpack.c.l.b16 %v7256
    %v7270 = vunpack.c.l.b16 %v7257
    %v7271 = vunpack.c.l.b16 %v7258
    %v7272 = vpack.c.b16 %v7269, %v7268
    %v7273 = vpack.c.b16 %v7271, %v7270
    %v7277 = vsel %vm62, %v7254, 0
    %7279 = vmatprep.subr.bf16.mxu0 0
    %7280 = vmatpush1.bf16.msra.mxu0 %v7272
    %7281 = vmatprep.subr.bf16.mxu0 0
    %7282 = vmatpush1.bf16.msra.mxu0 %v7273
    %7283 = vmatprep.subr.bf16.mxu0 0
    %7284 = vmatpush1.bf16.msra.mxu0 0
    %7285 = vmatprep.subr.bf16.mxu0 0
    %7286 = vmatpush1.bf16.msra.mxu0 0
    %7287 = vmatprep.subr.bf16.mxu0 0
    %7288 = vmatpush1.bf16.msra.mxu0 0
    %7289 = vmatprep.subr.bf16.mxu0 0
    %7290 = vmatpush1.bf16.msra.mxu0 0
    %7291 = vmatprep.subr.bf16.mxu0 0
    %7292 = vmatpush1.bf16.msra.mxu0 0
    %7293 = vmatprep.subr.bf16.mxu0 0
    %7294 = vmatpush1.bf16.msra.mxu0 0
    %7295 = vmatprep.subr.bf16.mxu0 0
    %7296 = vmatpush1.bf16.msra.mxu0 0
    %7297 = vmatprep.subr.bf16.mxu0 0
    %7298 = vmatpush1.bf16.msra.mxu0 0
    %7299 = vmatprep.subr.bf16.mxu0 0
    %7300 = vmatpush1.bf16.msra.mxu0 0
    %7301 = vmatprep.subr.bf16.mxu0 0
    %7302 = vmatpush1.bf16.msra.mxu0 0
    %7303 = vmatprep.subr.bf16.mxu0 0
    %7304 = vmatpush1.bf16.msra.mxu0 0
    %7305 = vmatprep.subr.bf16.mxu0 0
    %7306 = vmatpush1.bf16.msra.mxu0 0
    %7307 = vmatprep.subr.bf16.mxu0 0
    %7308 = vmatpush1.bf16.msra.mxu0 0
    %7309 = vmatprep.subr.bf16.mxu0 0
    %7310 = vmatpush1.bf16.msra.mxu0 0
    %7311 = vmatprep.mubr.bf16.mxu0 0
    %7312 = vmatmul.mubr.bf16.gmra.mrb[0].mxu0 %v7277
    %v7313 = vpop.f32.mrb[0].mxu0
    %v7314 = vadd.f32 %v7263, %v7313
    %v7315 = vpop.f32.mrb[0].mxu0
    %v7316 = vpop.f32.mrb[0].mxu0
    %v7317 = vadd.f32 %v7263, %v7316
    %v7318 = vpop.f32.mrb[0].mxu0
    %7319 = vdwg.mxu0
    %7320 = vst.msk [vmem:[#allocation2] sm:$0xff] %vm62, %v7314
    %7321 = vst.msk [vmem:[#allocation2 + $0x8] sm:$0xff] %vm62, %v7317
    // Predicated region
    $region26: #{decoder_forward.1} parent=1 // pred_check
      _
    $region27: #{decoder_forward.1} parent=1 // pred_check_branch
      %7323 = sbr.rel (0) target = $region29
    $region28: #{decoder_forward.1} parent=1 // pred_region
      %s7325 = ssub.s32 256, 256
      %7326 = vsyncadd [#allocation3], %s7325
      %s7327 = sshll.u32 [#allocation2], 4
      %s7328 = int_to_ptr.vmem [resolvable:$true] %s7327
      %7333 = dma.vmem_to_hbm [thread:$0]  %s7328, 256, %s6, [#allocation3], 128, 128, 8
    $region29: #{decoder_forward.1} parent=1 // pred_fallthru
      _
    // Predicated region
    $region30: #{decoder_forward.1} parent=1 // pred_check
      _
    $region31: #{decoder_forward.1} parent=1 // pred_check_branch
      %7335 = sbr.rel (0) target = $region33
    $region32: #{decoder_forward.1} parent=1 // pred_region
      %s7337 = ssub.s32 1024, 1024
      %7338 = vsyncadd [#allocation5], %s7337
      %s7339 = sshll.u32 [#allocation4], 4
      %s7340 = int_to_ptr.vmem [resolvable:$true] %s7339
      %7345 = dma.vmem_to_hbm [thread:$0]  %s7340, 1024, %s7, [#allocation5], 128, 128, 8
    $region33: #{decoder_forward.1} parent=1 // pred_fallthru
      _
    // Predicated region
    $region34: #{decoder_forward.1} parent=1 // pred_check
      _
    $region35: #{decoder_forward.1} parent=1 // pred_check_branch
      %7347 = sbr.rel (0) target = $region37
    $region36: #{decoder_forward.1} parent=1 // pred_region
      %7348 = dma.done [#allocation3], 256
    $region37: #{decoder_forward.1} parent=1 // pred_fallthru
      _
    // Predicated region
    $region38: #{decoder_forward.1} parent=1 // pred_check
      _
    $region39: #{decoder_forward.1} parent=1 // pred_check_branch
      %7350 = sbr.rel (0) target = $region41
    $region40: #{decoder_forward.1} parent=1 // pred_region
      %7351 = dma.done [#allocation5], 1024
    $region41: #{decoder_forward.1} parent=1 // pred_fallthru
      _
    %7352 = vsyncpa [#allocation3], 1
    %7353 = vsyncpa [#allocation5], 1

</llo_original>
